<compile_context>
chip_gen: v5e
topology: v5e:2x2
jax: 0.10.0
libtpu: 0.0.40
codegen_flags: <defaults>
</compile_context>

<pallas_src>
import functools

import jax
import jax.numpy as jnp
from jax import lax
from jax.experimental import pallas as pl
from jax.experimental.pallas import tpu as pltpu

_NORM_EPS = 1e-12  # matches torch.nn.functional.normalize default eps


def _round_up(x, m):
    return ((x + m - 1) // m) * m


def _rvq_kernel(z_ref, win_ref, bin_ref, cbnt_ref, cb_ref, wout_ref, bout_ref,
                zq_ref, aux_ref, *, n_stages, cb_dim, aux_width, use_bf16_sim):
    # z_ref   : [TILE_R, Din]     input latent rows (rows = (b, t), channels-last)
    # win_ref : [N, Din, Dcb]     in_proj weights (W^T for row @ W^T)     (resident, 1-buf)
    # bin_ref : [N, 1, Dcb]       in_proj bias                            (resident, 1-buf)
    # cbnt_ref: [N, Dcb, Ncb]     l2-normalized codebook, transposed      (resident, 1-buf)
    # cb_ref  : [N, Ncb, Dcb]     raw codebook (gather + loss)            (resident, 1-buf)
    # wout_ref: [N, Dcb, Din]     out_proj weights (W^T)                  (resident, 1-buf)
    # bout_ref: [N, 1, Din]       out_proj bias                           (resident, 1-buf)
    # zq_ref  : [TILE_R, Din]     summed quantized output
    # aux_ref : [TILE_R, aux_w]   packed lane-dense slab: [latents | codes | loss | pad]
    tile_r, _ = z_ref.shape
    n_cb = cb_ref.shape[1]

    z0 = z_ref[...].astype(jnp.float32)
    residual = z0
    lane_iota = lax.broadcasted_iota(jnp.int32, (tile_r, n_cb), 1)  # hoisted out of loop

    ze_parts, idx_parts, loss_parts = [], [], []

    for i in range(n_stages):  # small static loop; all stage weights resident in VMEM
        # ---- in_proj: 1x1 weight-normalized conv == channel matmul ----
        z_e = jnp.dot(residual, win_ref[i],
                      preferred_element_type=jnp.float32) + bin_ref[i]       # [TILE_R, Dcb]

        # ---- nearest code: argmax cosine similarity.  Encoding normalization is
        #      dropped: argmax_j <z_e/||z_e||, cbn_j> == argmax_j <z_e, cbn_j>. ----
        if use_bf16_sim:
            sim = jnp.dot(z_e.astype(jnp.bfloat16), cbnt_ref[i].astype(jnp.bfloat16),
                          preferred_element_type=jnp.float32)                # [TILE_R, Ncb]
        else:
            sim = jnp.dot(z_e, cbnt_ref[i], preferred_element_type=jnp.float32)

        # first index of the maximum similarity
        best = jnp.max(sim, axis=-1, keepdims=True)
        cand = jnp.where(sim == best, lane_iota, n_cb)
        idx = jnp.min(cand, axis=-1, keepdims=True)                          # [TILE_R, 1]

        # ---- gather codebook vector via one-hot matmul (MXU), then out_proj on the
        #      tiny Dcb-wide code (no prefused Ncb x Din table) ----
        onehot = (lane_iota == idx).astype(jnp.float32)                      # [TILE_R, Ncb]
        z_q_code = jnp.dot(onehot, cb_ref[i],
                           preferred_element_type=jnp.float32)               # [TILE_R, Dcb]
        z_q_out = jnp.dot(z_q_code, wout_ref[i],
                          preferred_element_type=jnp.float32) + bout_ref[i]  # [TILE_R, Din]

        # ---- per-frame MSE (loss_per_frame=True semantics) ----
        diff = z_e - z_q_code
        loss_parts.append(jnp.mean(diff * diff, axis=-1, keepdims=True))
        ze_parts.append(z_e)
        idx_parts.append(idx.astype(jnp.float32))

        # straight-through forward value == quantized code projection
        residual = residual - z_q_out

    # z_q forward value = sum of stage outputs = z - final residual (no accumulator).
    zq_ref[...] = z0 - residual

    # Single lane-dense store of all per-stage side outputs (padded to multiple of 128).
    parts = ze_parts + idx_parts + loss_parts
    used = n_stages * (cb_dim + 2)
    if aux_width > used:
        parts.append(jnp.zeros((tile_r, aux_width - used), jnp.float32))
    aux_ref[...] = jnp.concatenate(parts, axis=-1)


def vbr_residual_vq_forward(z, params, n_quantizers=None, row_tile=512,
                            use_bf16_sim=False):
    """Forward pass of VBRResidualVectorQuantize in CBR / eval mode (fixed number of
    quantizers, importance mask == 1).  z: [B, D_in, T] (PyTorch Conv1d layout).
    Returns a dict mirroring the PyTorch module's out_dict."""
    B, d_in, T = z.shape
    w_in_t = params["w_in_t"]        # [N, Din, Dcb]
    b_in = params["b_in"]            # [N, 1, Dcb]
    codebook = params["codebook"]    # [N, Ncb, Dcb]
    w_out_t = params["w_out_t"]      # [N, Dcb, Din]
    b_out = params["b_out"]          # [N, 1, Din]

    n_codebooks = w_in_t.shape[0]
    nq = n_codebooks if n_quantizers is None else min(int(n_quantizers), n_codebooks)
    n_cb, cb_dim = codebook.shape[1], codebook.shape[2]
    bt = B * T

    # ---- grid-invariant per-stage constants, hoisted out of the kernel ----
    cb = codebook[:nq].astype(jnp.float32)
    cb_sumsq = jnp.sum(cb * cb, axis=-1, keepdims=True)
    cb_norm = cb * lax.rsqrt(jnp.maximum(cb_sumsq, _NORM_EPS * _NORM_EPS))
    cbn_t = jnp.transpose(cb_norm, (0, 2, 1))                    # [nq, Dcb, Ncb]

    win = w_in_t[:nq].astype(jnp.float32)
    bin_ = b_in[:nq].astype(jnp.float32)
    wout = w_out_t[:nq].astype(jnp.float32)
    bout = b_out[:nq].astype(jnp.float32)

    # NCW -> channels-last rows (single boundary transpose; kernel is row-tiled)
    z_flat = jnp.transpose(z, (0, 2, 1)).reshape(bt, d_in).astype(jnp.float32)

    # Robust tiling: pad rows up to a multiple of the tile instead of single-block fallback.
    tile_r = min(int(row_tile), _round_up(bt, 8))
    padded_bt = _round_up(bt, tile_r)
    if padded_bt != bt:
        z_flat = jnp.pad(z_flat, ((0, padded_bt - bt), (0, 0)))
    grid = (padded_bt // tile_r,)

    # Packed lane-dense side-output slab: [latents(nq*Dcb) | codes(nq) | loss(nq) | pad]
    aux_w = _round_up(nq * (cb_dim + 2), 128)

    def rows(last):
        return pl.BlockSpec((tile_r, last), lambda r: (r, 0))

    def resident(shape):
        nd = len(shape)
        return pl.BlockSpec(shape, lambda r, _nd=nd: (0,) * _nd,
                            pipeline_mode=pl.Buffered(1))   # grid-invariant -> 1 buffer

    out_shapes = (
        jax.ShapeDtypeStruct((padded_bt, d_in), jnp.float32),   # z_q (summed over stages)
        jax.ShapeDtypeStruct((padded_bt, aux_w), jnp.float32),  # packed latents/codes/loss
    )

    # VMEM budget derived from actual footprint (weights single-buffered, I/O 2-buffered),
    # 2x margin for Mosaic internal scratch; well under v7x's 64 MiB physical VMEM.
    weight_bytes = 4 * int(win.size + bin_.size + cbn_t.size + cb.size
                           + wout.size + bout.size)
    io_bytes = 4 * 2 * tile_r * (2 * d_in + aux_w)
    vmem_limit = int(min(96 << 20, max(16 << 20, 2 * (weight_bytes + io_bytes))))

    zq_flat, aux_flat = pl.pallas_call(
        functools.partial(_rvq_kernel, n_stages=nq, cb_dim=cb_dim,
                          aux_width=aux_w, use_bf16_sim=use_bf16_sim),
        grid=grid,
        in_specs=[
            rows(d_in),                        # z tile (pipelined, double-buffered)
            resident((nq, d_in, cb_dim)),      # in_proj weights
            resident((nq, 1, cb_dim)),         # in_proj bias
            resident((nq, cb_dim, n_cb)),      # normalized codebook^T
            resident((nq, n_cb, cb_dim)),      # raw codebook
            resident((nq, cb_dim, d_in)),      # out_proj weights
            resident((nq, 1, d_in)),           # out_proj bias
        ],
        out_specs=(rows(d_in), rows(aux_w)),
        out_shape=out_shapes,
        compiler_params=pltpu.CompilerParams(
            dimension_semantics=("parallel",),      # independent row tiles -> megacore
            vmem_limit_bytes=vmem_limit,
        ),
    )(z_flat, win, bin_, cbn_t, cb, wout, bout)

    # ---- trim padding, split packed slab, back to the PyTorch module's layouts ----
    zq_flat = zq_flat[:bt]
    aux_flat = aux_flat[:bt]
    ze_flat = aux_flat[:, :nq * cb_dim]
    idx_flat = aux_flat[:, nq * cb_dim:nq * cb_dim + nq].astype(jnp.int32)
    loss_flat = aux_flat[:, nq * cb_dim + nq:nq * (cb_dim + 2)]

    z_q = jnp.transpose(zq_flat.reshape(B, T, d_in), (0, 2, 1))             # [B, Din, T]
    latents = jnp.transpose(ze_flat.reshape(B, T, nq * cb_dim), (0, 2, 1))  # [B, nq*Dcb, T]
    codes = jnp.transpose(idx_flat.reshape(B, T, nq), (0, 2, 1))            # [B, nq, T]

    # CBR mode: importance mask is all-ones -> skip the mask multiply entirely.
    commitment_loss = jnp.mean(jnp.sum(loss_flat, axis=-1))
    # TODO(synk): forward-only — commitment vs codebook loss differ only by detach()
    # placement (gradients); a custom_vjp would be required for straight-through /
    # detach semantics under autodiff.
    codebook_loss = commitment_loss

    mask_imp = jnp.ones((B, n_codebooks, T), jnp.float32)                   # CBR: all-ones

    return {
        "z_q": z_q,
        "codes": codes,
        "latents": latents,
        "commitment_loss": commitment_loss,
        "codebook_loss": codebook_loss,
        # TODO(synk): VBR mode (ImportanceSubnet, generate_mask_ste, level scaling) and
        # training-time quantizer dropout have no clean Pallas equivalent here; CBR/eval only.
        "imp_map": None,
        "mask_imp": mask_imp,
    }


# ----------------------------------------------------------------------------------------
# Pure-JAX replay used for a tie-insensitive correctness check in __main__: re-runs the
# stage loop with the codes chosen by the kernel and checks that those codes are argmax.
# ----------------------------------------------------------------------------------------
def _replay_with_codes(z, params, codes, nq):
    B, d_in, T = z.shape
    bt = B * T
    z_flat = jnp.transpose(z, (0, 2, 1)).reshape(bt, d_in).astype(jnp.float32)
    codes_flat = jnp.transpose(codes, (0, 2, 1)).reshape(bt, nq)

    residual = z_flat
    z_q = jnp.zeros_like(z_flat)
    ze_list, loss_list = [], []
    argmax_ok = True
    for i in range(nq):
        w_in = params["w_in_t"][i]
        cb_i = params["codebook"][i]
        z_e = residual @ w_in + params["b_in"][i]
        cbn = cb_i * lax.rsqrt(jnp.maximum(jnp.sum(cb_i * cb_i, -1, keepdims=True),
                                           _NORM_EPS * _NORM_EPS))
        sim = z_e @ cbn.T
        sel = codes_flat[:, i]
        sel_sim = jnp.take_along_axis(sim, sel[:, None], axis=1)
        argmax_ok = argmax_ok and bool(jnp.all(sel_sim >= sim.max(-1, keepdims=True) - 1e-4))
        z_q_code = cb_i[sel]
        z_q_out = z_q_code @ params["w_out_t"][i] + params["b_out"][i]
        ze_list.append(z_e)
        loss_list.append(jnp.mean((z_e - z_q_code) ** 2, axis=-1))
        z_q = z_q + z_q_out
        residual = residual - z_q_out

    z_q = jnp.transpose(z_q.reshape(B, T, d_in), (0, 2, 1))
    latents = jnp.transpose(jnp.concatenate(ze_list, -1).reshape(B, T, -1), (0, 2, 1))
    commit = jnp.mean(jnp.sum(jnp.stack(loss_list, -1), axis=-1))
    return z_q, latents, commit, argmax_ok


def _weight_norm_conv1x1(v, g):
    """weight_norm(nn.Conv1d, dim=0): w = g * v / ||v||_(in,k) per out-channel.
    v: [Cout, Cin, 1], g: [Cout]. Returns dense [Cout, Cin]."""
    norm = jnp.sqrt(jnp.sum(v * v, axis=(1, 2), keepdims=True))
    return (g.reshape(-1, 1, 1) * v / norm)[..., 0]


def init_params(key, input_dim, n_codebooks, codebook_size, codebook_dim):
    w_in_t, b_in, cbs, w_out_t, b_out = [], [], [], [], []
    for k in jax.random.split(key, n_codebooks):
        ks = jax.random.split(k, 7)
        # in_proj: WNConv1d(input_dim -> codebook_dim, kernel_size=1)
        v_in = 0.1 * jax.random.normal(ks[0], (codebook_dim, input_dim, 1), jnp.float32)
        g_in = 1.0 + 0.05 * jax.random.normal(ks[1], (codebook_dim,), jnp.float32)
        bi = 0.01 * jax.random.normal(ks[2], (codebook_dim,), jnp.float32)
        w_in = _weight_norm_conv1x1(v_in, g_in)                 # [Dcb, Din]
        # out_proj: WNConv1d(codebook_dim -> input_dim, kernel_size=1)
        v_out = 0.1 * jax.random.normal(ks[3], (input_dim, codebook_dim, 1), jnp.float32)
        g_out = 1.0 + 0.05 * jax.random.normal(ks[4], (input_dim,), jnp.float32)
        bo = 0.01 * jax.random.normal(ks[5], (input_dim,), jnp.float32)
        w_out = _weight_norm_conv1x1(v_out, g_out)              # [Din, Dcb]
        # codebook: nn.Embedding(codebook_size, codebook_dim)
        cb = jax.random.normal(ks[6], (codebook_size, codebook_dim), jnp.float32)

        w_in_t.append(jnp.transpose(w_in))                      # [Din, Dcb]
        b_in.append(bi.reshape(1, codebook_dim))
        cbs.append(cb)
        w_out_t.append(jnp.transpose(w_out))                    # [Dcb, Din]
        b_out.append(bo.reshape(1, input_dim))
    return {
        "w_in_t": jnp.stack(w_in_t),     # [N, Din, Dcb]
        "b_in": jnp.stack(b_in),         # [N, 1, Dcb]
        "codebook": jnp.stack(cbs),      # [N, Ncb, Dcb]
        "w_out_t": jnp.stack(w_out_t),   # [N, Dcb, Din]
        "b_out": jnp.stack(b_out),       # [N, 1, Din]
    }


if __name__ == "__main__":
    key = jax.random.PRNGKey(0)
    B, input_dim, T = 2, 32, 256
    n_codebooks, codebook_size, codebook_dim = 4, 128, 8

    k_z, k_p = jax.random.split(key)
    z = jax.random.normal(k_z, (B, input_dim, T), jnp.float32)   # PyTorch [B, D, T]
    params = init_params(k_p, input_dim, n_codebooks, codebook_size, codebook_dim)

    # multi-tile grid (bt=512, tile=256 -> grid=(2,)) exercising the pipelined row axis
    out = vbr_residual_vq_forward(z, params, n_quantizers=n_codebooks, row_tile=256)
    out = jax.block_until_ready(out)

    assert out["z_q"].shape == (B, input_dim, T)
    assert out["codes"].shape == (B, n_codebooks, T)
    assert out["latents"].shape == (B, n_codebooks * codebook_dim, T)
    assert bool(jnp.isfinite(out["z_q"]).all())
    assert bool(jnp.isfinite(out["latents"]).all())
    assert bool(jnp.isfinite(out["commitment_loss"]))

    # tie-insensitive correctness check: replay the stage loop with the kernel's codes
    zq_ref, lat_ref, loss_ref, argmax_ok = _replay_with_codes(
        z, params, out["codes"], n_codebooks)
    assert argmax_ok
    assert bool(jnp.allclose(out["z_q"], zq_ref, atol=1e-3, rtol=1e-3))
    assert bool(jnp.allclose(out["latents"], lat_ref, atol=1e-3, rtol=1e-3))
    assert bool(jnp.allclose(out["commitment_loss"], loss_ref, atol=1e-4, rtol=1e-4))

    # exercise the row-padding path (bt not a multiple of the tile) and n_quantizers < N
    T2 = 100
    z2 = jax.random.normal(jax.random.PRNGKey(1), (B, input_dim, T2), jnp.float32)
    out2 = jax.block_until_ready(
        vbr_residual_vq_forward(z2, params, n_quantizers=2, row_tile=256))
    assert out2["z_q"].shape == (B, input_dim, T2)
    assert out2["codes"].shape == (B, 2, T2)
    assert bool(jnp.isfinite(out2["z_q"]).all())

    print("KERNEL_OK")
</pallas_src>

<mosaic_0001>
module attributes {stable_mosaic.version = 11 : i64} {
  func.func @_rvq_kernel(%arg0: i32, %arg1: memref<256x32xf32, #tpu.memory_space<vmem>>, %arg2: memref<4x32x8xf32, #tpu.memory_space<vmem>>, %arg3: memref<4x1x8xf32, #tpu.memory_space<vmem>>, %arg4: memref<4x8x128xf32, #tpu.memory_space<vmem>>, %arg5: memref<4x128x8xf32, #tpu.memory_space<vmem>>, %arg6: memref<4x8x32xf32, #tpu.memory_space<vmem>>, %arg7: memref<4x1x32xf32, #tpu.memory_space<vmem>>, %arg8: memref<256x32xf32, #tpu.memory_space<vmem>>, %arg9: memref<256x128xf32, #tpu.memory_space<vmem>>) attributes {dimension_semantics = [#tpu.dimension_semantics<parallel>], iteration_bounds = array<i64: 2>, scalar_prefetch = 0 : i64, scratch_operands = 0 : i64, tpu.core_type = #tpu.core_type<tc>, window_params = [{transform_indices = @transform_0, window_bounds = array<i64: 256, 32>}, {pipeline_mode = #tpu.pipeline_mode<synchronous>, transform_indices = @transform_1, window_bounds = array<i64: 4, 32, 8>}, {pipeline_mode = #tpu.pipeline_mode<synchronous>, transform_indices = @transform_2, window_bounds = array<i64: 4, 1, 8>}, {pipeline_mode = #tpu.pipeline_mode<synchronous>, transform_indices = @transform_3, window_bounds = array<i64: 4, 8, 128>}, {pipeline_mode = #tpu.pipeline_mode<synchronous>, transform_indices = @transform_4, window_bounds = array<i64: 4, 128, 8>}, {pipeline_mode = #tpu.pipeline_mode<synchronous>, transform_indices = @transform_5, window_bounds = array<i64: 4, 8, 32>}, {pipeline_mode = #tpu.pipeline_mode<synchronous>, transform_indices = @transform_6, window_bounds = array<i64: 4, 1, 32>}, {transform_indices = @transform_7, window_bounds = array<i64: 256, 32>}, {transform_indices = @transform_8, window_bounds = array<i64: 256, 128>}]} {
    %c0 = arith.constant 0 : index
    %c0_0 = arith.constant 0 : index
    %0 = vector.load %arg1[%c0, %c0_0] : memref<256x32xf32, #tpu.memory_space<vmem>>, vector<256x32xf32>
    %1 = tpu.iota {dimensions = array<i32: 1>} : vector<256x128xi32>
    %c0_1 = arith.constant 0 : index
    %c0_2 = arith.constant 0 : index
    %c0_3 = arith.constant 0 : index
    %2 = vector.load %arg2[%c0_1, %c0_2, %c0_3] : memref<4x32x8xf32, #tpu.memory_space<vmem>>, vector<1x32x8xf32>
    %3 = vector.shape_cast %2 : vector<1x32x8xf32> to vector<32x8xf32>
    %cst = arith.constant dense<0.000000e+00> : vector<256x8xf32>
    %4 = tpu.matmul %0, %3, %cst {dimension_numbers = #tpu.dot_dimension_numbers<[1], [0], [0], [1], [0, 0, 1, 1], [], []>} : vector<256x32xf32>, vector<32x8xf32>, vector<256x8xf32> -> vector<256x8xf32>
    %c0_4 = arith.constant 0 : index
    %c0_5 = arith.constant 0 : index
    %c0_6 = arith.constant 0 : index
    %5 = vector.load %arg3[%c0_4, %c0_5, %c0_6] : memref<4x1x8xf32, #tpu.memory_space<vmem>>, vector<1x1x8xf32>
    %6 = vector.shape_cast %5 : vector<1x1x8xf32> to vector<1x8xf32>
    %7 = vector.broadcast %6 : vector<1x8xf32> to vector<256x8xf32>
    %8 = arith.addf %4, %7 : vector<256x8xf32>
    %c0_7 = arith.constant 0 : index
    %c0_8 = arith.constant 0 : index
    %c0_9 = arith.constant 0 : index
    %9 = vector.load %arg4[%c0_7, %c0_8, %c0_9] : memref<4x8x128xf32, #tpu.memory_space<vmem>>, vector<1x8x128xf32>
    %10 = vector.shape_cast %9 : vector<1x8x128xf32> to vector<8x128xf32>
    %cst_10 = arith.constant dense<0.000000e+00> : vector<256x128xf32>
    %11 = tpu.matmul %8, %10, %cst_10 {dimension_numbers = #tpu.dot_dimension_numbers<[1], [0], [0], [1], [0, 0, 1, 1], [], []>} : vector<256x8xf32>, vector<8x128xf32>, vector<256x128xf32> -> vector<256x128xf32>
    %cst_11 = arith.constant dense<0xFF800000> : vector<256xf32>
    %12 = vector.multi_reduction <maximumf>, %11, %cst_11 [1] : vector<256x128xf32> to vector<256xf32>
    %13 = vector.shape_cast %12 : vector<256xf32> to vector<256x1xf32>
    %14 = vector.broadcast %13 : vector<256x1xf32> to vector<256x128xf32>
    %15 = arith.cmpf oeq, %11, %14 : vector<256x128xf32>
    %c128_i32 = arith.constant 128 : i32
    %16 = vector.broadcast %c128_i32 : i32 to vector<256x128xi32>
    %17 = arith.select %15, %1, %16 : vector<256x128xi1>, vector<256x128xi32>
    %cst_12 = arith.constant dense<2147483647> : vector<256xi32>
    %18 = vector.multi_reduction <minsi>, %17, %cst_12 [1] : vector<256x128xi32> to vector<256xi32>
    %19 = vector.shape_cast %18 : vector<256xi32> to vector<256x1xi32>
    %20 = vector.broadcast %19 : vector<256x1xi32> to vector<256x128xi32>
    %21 = arith.cmpi eq, %1, %20 : vector<256x128xi32>
    %22 = arith.extui %21 : vector<256x128xi1> to vector<256x128xi32>
    %23 = arith.sitofp %22 : vector<256x128xi32> to vector<256x128xf32>
    %c0_13 = arith.constant 0 : index
    %c0_14 = arith.constant 0 : index
    %c0_15 = arith.constant 0 : index
    %24 = vector.load %arg5[%c0_13, %c0_14, %c0_15] : memref<4x128x8xf32, #tpu.memory_space<vmem>>, vector<1x128x8xf32>
    %25 = vector.shape_cast %24 : vector<1x128x8xf32> to vector<128x8xf32>
    %cst_16 = arith.constant dense<0.000000e+00> : vector<256x8xf32>
    %26 = tpu.matmul %23, %25, %cst_16 {dimension_numbers = #tpu.dot_dimension_numbers<[1], [0], [0], [1], [0, 0, 1, 1], [], []>} : vector<256x128xf32>, vector<128x8xf32>, vector<256x8xf32> -> vector<256x8xf32>
    %c0_17 = arith.constant 0 : index
    %c0_18 = arith.constant 0 : index
    %c0_19 = arith.constant 0 : index
    %27 = vector.load %arg6[%c0_17, %c0_18, %c0_19] : memref<4x8x32xf32, #tpu.memory_space<vmem>>, vector<1x8x32xf32>
    %28 = vector.shape_cast %27 : vector<1x8x32xf32> to vector<8x32xf32>
    %cst_20 = arith.constant dense<0.000000e+00> : vector<256x32xf32>
    %29 = tpu.matmul %26, %28, %cst_20 {dimension_numbers = #tpu.dot_dimension_numbers<[1], [0], [0], [1], [0, 0, 1, 1], [], []>} : vector<256x8xf32>, vector<8x32xf32>, vector<256x32xf32> -> vector<256x32xf32>
    %c0_21 = arith.constant 0 : index
    %c0_22 = arith.constant 0 : index
    %c0_23 = arith.constant 0 : index
    %30 = vector.load %arg7[%c0_21, %c0_22, %c0_23] : memref<4x1x32xf32, #tpu.memory_space<vmem>>, vector<1x1x32xf32>
    %31 = vector.shape_cast %30 : vector<1x1x32xf32> to vector<1x32xf32>
    %32 = vector.broadcast %31 : vector<1x32xf32> to vector<256x32xf32>
    %33 = arith.addf %29, %32 : vector<256x32xf32>
    %34 = arith.subf %8, %26 : vector<256x8xf32>
    %35 = arith.mulf %34, %34 : vector<256x8xf32>
    %cst_24 = arith.constant dense<0.000000e+00> : vector<256xf32>
    %36 = vector.multi_reduction <add>, %35, %cst_24 [1] : vector<256x8xf32> to vector<256xf32>
    %37 = vector.shape_cast %36 : vector<256xf32> to vector<256x1xf32>
    %cst_25 = arith.constant 8.000000e+00 : f32
    %38 = vector.broadcast %cst_25 : f32 to vector<256x1xf32>
    %39 = arith.divf %37, %38 : vector<256x1xf32>
    %40 = arith.sitofp %19 : vector<256x1xi32> to vector<256x1xf32>
    %41 = arith.subf %0, %33 : vector<256x32xf32>
    %c1 = arith.constant 1 : index
    %c0_26 = arith.constant 0 : index
    %c0_27 = arith.constant 0 : index
    %42 = vector.load %arg2[%c1, %c0_26, %c0_27] : memref<4x32x8xf32, #tpu.memory_space<vmem>>, vector<1x32x8xf32>
    %43 = vector.shape_cast %42 : vector<1x32x8xf32> to vector<32x8xf32>
    %cst_28 = arith.constant dense<0.000000e+00> : vector<256x8xf32>
    %44 = tpu.matmul %41, %43, %cst_28 {dimension_numbers = #tpu.dot_dimension_numbers<[1], [0], [0], [1], [0, 0, 1, 1], [], []>} : vector<256x32xf32>, vector<32x8xf32>, vector<256x8xf32> -> vector<256x8xf32>
    %c1_29 = arith.constant 1 : index
    %c0_30 = arith.constant 0 : index
    %c0_31 = arith.constant 0 : index
    %45 = vector.load %arg3[%c1_29, %c0_30, %c0_31] : memref<4x1x8xf32, #tpu.memory_space<vmem>>, vector<1x1x8xf32>
    %46 = vector.shape_cast %45 : vector<1x1x8xf32> to vector<1x8xf32>
    %47 = vector.broadcast %46 : vector<1x8xf32> to vector<256x8xf32>
    %48 = arith.addf %44, %47 : vector<256x8xf32>
    %c1_32 = arith.constant 1 : index
    %c0_33 = arith.constant 0 : index
    %c0_34 = arith.constant 0 : index
    %49 = vector.load %arg4[%c1_32, %c0_33, %c0_34] : memref<4x8x128xf32, #tpu.memory_space<vmem>>, vector<1x8x128xf32>
    %50 = vector.shape_cast %49 : vector<1x8x128xf32> to vector<8x128xf32>
    %cst_35 = arith.constant dense<0.000000e+00> : vector<256x128xf32>
    %51 = tpu.matmul %48, %50, %cst_35 {dimension_numbers = #tpu.dot_dimension_numbers<[1], [0], [0], [1], [0, 0, 1, 1], [], []>} : vector<256x8xf32>, vector<8x128xf32>, vector<256x128xf32> -> vector<256x128xf32>
    %cst_36 = arith.constant dense<0xFF800000> : vector<256xf32>
    %52 = vector.multi_reduction <maximumf>, %51, %cst_36 [1] : vector<256x128xf32> to vector<256xf32>
    %53 = vector.shape_cast %52 : vector<256xf32> to vector<256x1xf32>
    %54 = vector.broadcast %53 : vector<256x1xf32> to vector<256x128xf32>
    %55 = arith.cmpf oeq, %51, %54 : vector<256x128xf32>
    %c128_i32_37 = arith.constant 128 : i32
    %56 = vector.broadcast %c128_i32_37 : i32 to vector<256x128xi32>
    %57 = arith.select %55, %1, %56 : vector<256x128xi1>, vector<256x128xi32>
    %cst_38 = arith.constant dense<2147483647> : vector<256xi32>
    %58 = vector.multi_reduction <minsi>, %57, %cst_38 [1] : vector<256x128xi32> to vector<256xi32>
    %59 = vector.shape_cast %58 : vector<256xi32> to vector<256x1xi32>
    %60 = vector.broadcast %59 : vector<256x1xi32> to vector<256x128xi32>
    %61 = arith.cmpi eq, %1, %60 : vector<256x128xi32>
    %62 = arith.extui %61 : vector<256x128xi1> to vector<256x128xi32>
    %63 = arith.sitofp %62 : vector<256x128xi32> to vector<256x128xf32>
    %c1_39 = arith.constant 1 : index
    %c0_40 = arith.constant 0 : index
    %c0_41 = arith.constant 0 : index
    %64 = vector.load %arg5[%c1_39, %c0_40, %c0_41] : memref<4x128x8xf32, #tpu.memory_space<vmem>>, vector<1x128x8xf32>
    %65 = vector.shape_cast %64 : vector<1x128x8xf32> to vector<128x8xf32>
    %cst_42 = arith.constant dense<0.000000e+00> : vector<256x8xf32>
    %66 = tpu.matmul %63, %65, %cst_42 {dimension_numbers = #tpu.dot_dimension_numbers<[1], [0], [0], [1], [0, 0, 1, 1], [], []>} : vector<256x128xf32>, vector<128x8xf32>, vector<256x8xf32> -> vector<256x8xf32>
    %c1_43 = arith.constant 1 : index
    %c0_44 = arith.constant 0 : index
    %c0_45 = arith.constant 0 : index
    %67 = vector.load %arg6[%c1_43, %c0_44, %c0_45] : memref<4x8x32xf32, #tpu.memory_space<vmem>>, vector<1x8x32xf32>
    %68 = vector.shape_cast %67 : vector<1x8x32xf32> to vector<8x32xf32>
    %cst_46 = arith.constant dense<0.000000e+00> : vector<256x32xf32>
    %69 = tpu.matmul %66, %68, %cst_46 {dimension_numbers = #tpu.dot_dimension_numbers<[1], [0], [0], [1], [0, 0, 1, 1], [], []>} : vector<256x8xf32>, vector<8x32xf32>, vector<256x32xf32> -> vector<256x32xf32>
    %c1_47 = arith.constant 1 : index
    %c0_48 = arith.constant 0 : index
    %c0_49 = arith.constant 0 : index
    %70 = vector.load %arg7[%c1_47, %c0_48, %c0_49] : memref<4x1x32xf32, #tpu.memory_space<vmem>>, vector<1x1x32xf32>
    %71 = vector.shape_cast %70 : vector<1x1x32xf32> to vector<1x32xf32>
    %72 = vector.broadcast %71 : vector<1x32xf32> to vector<256x32xf32>
    %73 = arith.addf %69, %72 : vector<256x32xf32>
    %74 = arith.subf %48, %66 : vector<256x8xf32>
    %75 = arith.mulf %74, %74 : vector<256x8xf32>
    %cst_50 = arith.constant dense<0.000000e+00> : vector<256xf32>
    %76 = vector.multi_reduction <add>, %75, %cst_50 [1] : vector<256x8xf32> to vector<256xf32>
    %77 = vector.shape_cast %76 : vector<256xf32> to vector<256x1xf32>
    %cst_51 = arith.constant 8.000000e+00 : f32
    %78 = vector.broadcast %cst_51 : f32 to vector<256x1xf32>
    %79 = arith.divf %77, %78 : vector<256x1xf32>
    %80 = arith.sitofp %59 : vector<256x1xi32> to vector<256x1xf32>
    %81 = arith.subf %41, %73 : vector<256x32xf32>
    %c2 = arith.constant 2 : index
    %c0_52 = arith.constant 0 : index
    %c0_53 = arith.constant 0 : index
    %82 = vector.load %arg2[%c2, %c0_52, %c0_53] : memref<4x32x8xf32, #tpu.memory_space<vmem>>, vector<1x32x8xf32>
    %83 = vector.shape_cast %82 : vector<1x32x8xf32> to vector<32x8xf32>
    %cst_54 = arith.constant dense<0.000000e+00> : vector<256x8xf32>
    %84 = tpu.matmul %81, %83, %cst_54 {dimension_numbers = #tpu.dot_dimension_numbers<[1], [0], [0], [1], [0, 0, 1, 1], [], []>} : vector<256x32xf32>, vector<32x8xf32>, vector<256x8xf32> -> vector<256x8xf32>
    %c2_55 = arith.constant 2 : index
    %c0_56 = arith.constant 0 : index
    %c0_57 = arith.constant 0 : index
    %85 = vector.load %arg3[%c2_55, %c0_56, %c0_57] : memref<4x1x8xf32, #tpu.memory_space<vmem>>, vector<1x1x8xf32>
    %86 = vector.shape_cast %85 : vector<1x1x8xf32> to vector<1x8xf32>
    %87 = vector.broadcast %86 : vector<1x8xf32> to vector<256x8xf32>
    %88 = arith.addf %84, %87 : vector<256x8xf32>
    %c2_58 = arith.constant 2 : index
    %c0_59 = arith.constant 0 : index
    %c0_60 = arith.constant 0 : index
    %89 = vector.load %arg4[%c2_58, %c0_59, %c0_60] : memref<4x8x128xf32, #tpu.memory_space<vmem>>, vector<1x8x128xf32>
    %90 = vector.shape_cast %89 : vector<1x8x128xf32> to vector<8x128xf32>
    %cst_61 = arith.constant dense<0.000000e+00> : vector<256x128xf32>
    %91 = tpu.matmul %88, %90, %cst_61 {dimension_numbers = #tpu.dot_dimension_numbers<[1], [0], [0], [1], [0, 0, 1, 1], [], []>} : vector<256x8xf32>, vector<8x128xf32>, vector<256x128xf32> -> vector<256x128xf32>
    %cst_62 = arith.constant dense<0xFF800000> : vector<256xf32>
    %92 = vector.multi_reduction <maximumf>, %91, %cst_62 [1] : vector<256x128xf32> to vector<256xf32>
    %93 = vector.shape_cast %92 : vector<256xf32> to vector<256x1xf32>
    %94 = vector.broadcast %93 : vector<256x1xf32> to vector<256x128xf32>
    %95 = arith.cmpf oeq, %91, %94 : vector<256x128xf32>
    %c128_i32_63 = arith.constant 128 : i32
    %96 = vector.broadcast %c128_i32_63 : i32 to vector<256x128xi32>
    %97 = arith.select %95, %1, %96 : vector<256x128xi1>, vector<256x128xi32>
    %cst_64 = arith.constant dense<2147483647> : vector<256xi32>
    %98 = vector.multi_reduction <minsi>, %97, %cst_64 [1] : vector<256x128xi32> to vector<256xi32>
    %99 = vector.shape_cast %98 : vector<256xi32> to vector<256x1xi32>
    %100 = vector.broadcast %99 : vector<256x1xi32> to vector<256x128xi32>
    %101 = arith.cmpi eq, %1, %100 : vector<256x128xi32>
    %102 = arith.extui %101 : vector<256x128xi1> to vector<256x128xi32>
    %103 = arith.sitofp %102 : vector<256x128xi32> to vector<256x128xf32>
    %c2_65 = arith.constant 2 : index
    %c0_66 = arith.constant 0 : index
    %c0_67 = arith.constant 0 : index
    %104 = vector.load %arg5[%c2_65, %c0_66, %c0_67] : memref<4x128x8xf32, #tpu.memory_space<vmem>>, vector<1x128x8xf32>
    %105 = vector.shape_cast %104 : vector<1x128x8xf32> to vector<128x8xf32>
    %cst_68 = arith.constant dense<0.000000e+00> : vector<256x8xf32>
    %106 = tpu.matmul %103, %105, %cst_68 {dimension_numbers = #tpu.dot_dimension_numbers<[1], [0], [0], [1], [0, 0, 1, 1], [], []>} : vector<256x128xf32>, vector<128x8xf32>, vector<256x8xf32> -> vector<256x8xf32>
    %c2_69 = arith.constant 2 : index
    %c0_70 = arith.constant 0 : index
    %c0_71 = arith.constant 0 : index
    %107 = vector.load %arg6[%c2_69, %c0_70, %c0_71] : memref<4x8x32xf32, #tpu.memory_space<vmem>>, vector<1x8x32xf32>
    %108 = vector.shape_cast %107 : vector<1x8x32xf32> to vector<8x32xf32>
    %cst_72 = arith.constant dense<0.000000e+00> : vector<256x32xf32>
    %109 = tpu.matmul %106, %108, %cst_72 {dimension_numbers = #tpu.dot_dimension_numbers<[1], [0], [0], [1], [0, 0, 1, 1], [], []>} : vector<256x8xf32>, vector<8x32xf32>, vector<256x32xf32> -> vector<256x32xf32>
    %c2_73 = arith.constant 2 : index
    %c0_74 = arith.constant 0 : index
    %c0_75 = arith.constant 0 : index
    %110 = vector.load %arg7[%c2_73, %c0_74, %c0_75] : memref<4x1x32xf32, #tpu.memory_space<vmem>>, vector<1x1x32xf32>
    %111 = vector.shape_cast %110 : vector<1x1x32xf32> to vector<1x32xf32>
    %112 = vector.broadcast %111 : vector<1x32xf32> to vector<256x32xf32>
    %113 = arith.addf %109, %112 : vector<256x32xf32>
    %114 = arith.subf %88, %106 : vector<256x8xf32>
    %115 = arith.mulf %114, %114 : vector<256x8xf32>
    %cst_76 = arith.constant dense<0.000000e+00> : vector<256xf32>
    %116 = vector.multi_reduction <add>, %115, %cst_76 [1] : vector<256x8xf32> to vector<256xf32>
    %117 = vector.shape_cast %116 : vector<256xf32> to vector<256x1xf32>
    %cst_77 = arith.constant 8.000000e+00 : f32
    %118 = vector.broadcast %cst_77 : f32 to vector<256x1xf32>
    %119 = arith.divf %117, %118 : vector<256x1xf32>
    %120 = arith.sitofp %99 : vector<256x1xi32> to vector<256x1xf32>
    %121 = arith.subf %81, %113 : vector<256x32xf32>
    %c3 = arith.constant 3 : index
    %c0_78 = arith.constant 0 : index
    %c0_79 = arith.constant 0 : index
    %122 = vector.load %arg2[%c3, %c0_78, %c0_79] : memref<4x32x8xf32, #tpu.memory_space<vmem>>, vector<1x32x8xf32>
    %123 = vector.shape_cast %122 : vector<1x32x8xf32> to vector<32x8xf32>
    %cst_80 = arith.constant dense<0.000000e+00> : vector<256x8xf32>
    %124 = tpu.matmul %121, %123, %cst_80 {dimension_numbers = #tpu.dot_dimension_numbers<[1], [0], [0], [1], [0, 0, 1, 1], [], []>} : vector<256x32xf32>, vector<32x8xf32>, vector<256x8xf32> -> vector<256x8xf32>
    %c3_81 = arith.constant 3 : index
    %c0_82 = arith.constant 0 : index
    %c0_83 = arith.constant 0 : index
    %125 = vector.load %arg3[%c3_81, %c0_82, %c0_83] : memref<4x1x8xf32, #tpu.memory_space<vmem>>, vector<1x1x8xf32>
    %126 = vector.shape_cast %125 : vector<1x1x8xf32> to vector<1x8xf32>
    %127 = vector.broadcast %126 : vector<1x8xf32> to vector<256x8xf32>
    %128 = arith.addf %124, %127 : vector<256x8xf32>
    %c3_84 = arith.constant 3 : index
    %c0_85 = arith.constant 0 : index
    %c0_86 = arith.constant 0 : index
    %129 = vector.load %arg4[%c3_84, %c0_85, %c0_86] : memref<4x8x128xf32, #tpu.memory_space<vmem>>, vector<1x8x128xf32>
    %130 = vector.shape_cast %129 : vector<1x8x128xf32> to vector<8x128xf32>
    %cst_87 = arith.constant dense<0.000000e+00> : vector<256x128xf32>
    %131 = tpu.matmul %128, %130, %cst_87 {dimension_numbers = #tpu.dot_dimension_numbers<[1], [0], [0], [1], [0, 0, 1, 1], [], []>} : vector<256x8xf32>, vector<8x128xf32>, vector<256x128xf32> -> vector<256x128xf32>
    %cst_88 = arith.constant dense<0xFF800000> : vector<256xf32>
    %132 = vector.multi_reduction <maximumf>, %131, %cst_88 [1] : vector<256x128xf32> to vector<256xf32>
    %133 = vector.shape_cast %132 : vector<256xf32> to vector<256x1xf32>
    %134 = vector.broadcast %133 : vector<256x1xf32> to vector<256x128xf32>
    %135 = arith.cmpf oeq, %131, %134 : vector<256x128xf32>
    %c128_i32_89 = arith.constant 128 : i32
    %136 = vector.broadcast %c128_i32_89 : i32 to vector<256x128xi32>
    %137 = arith.select %135, %1, %136 : vector<256x128xi1>, vector<256x128xi32>
    %cst_90 = arith.constant dense<2147483647> : vector<256xi32>
    %138 = vector.multi_reduction <minsi>, %137, %cst_90 [1] : vector<256x128xi32> to vector<256xi32>
    %139 = vector.shape_cast %138 : vector<256xi32> to vector<256x1xi32>
    %140 = vector.broadcast %139 : vector<256x1xi32> to vector<256x128xi32>
    %141 = arith.cmpi eq, %1, %140 : vector<256x128xi32>
    %142 = arith.extui %141 : vector<256x128xi1> to vector<256x128xi32>
    %143 = arith.sitofp %142 : vector<256x128xi32> to vector<256x128xf32>
    %c3_91 = arith.constant 3 : index
    %c0_92 = arith.constant 0 : index
    %c0_93 = arith.constant 0 : index
    %144 = vector.load %arg5[%c3_91, %c0_92, %c0_93] : memref<4x128x8xf32, #tpu.memory_space<vmem>>, vector<1x128x8xf32>
    %145 = vector.shape_cast %144 : vector<1x128x8xf32> to vector<128x8xf32>
    %cst_94 = arith.constant dense<0.000000e+00> : vector<256x8xf32>
    %146 = tpu.matmul %143, %145, %cst_94 {dimension_numbers = #tpu.dot_dimension_numbers<[1], [0], [0], [1], [0, 0, 1, 1], [], []>} : vector<256x128xf32>, vector<128x8xf32>, vector<256x8xf32> -> vector<256x8xf32>
    %c3_95 = arith.constant 3 : index
    %c0_96 = arith.constant 0 : index
    %c0_97 = arith.constant 0 : index
    %147 = vector.load %arg6[%c3_95, %c0_96, %c0_97] : memref<4x8x32xf32, #tpu.memory_space<vmem>>, vector<1x8x32xf32>
    %148 = vector.shape_cast %147 : vector<1x8x32xf32> to vector<8x32xf32>
    %cst_98 = arith.constant dense<0.000000e+00> : vector<256x32xf32>
    %149 = tpu.matmul %146, %148, %cst_98 {dimension_numbers = #tpu.dot_dimension_numbers<[1], [0], [0], [1], [0, 0, 1, 1], [], []>} : vector<256x8xf32>, vector<8x32xf32>, vector<256x32xf32> -> vector<256x32xf32>
    %c3_99 = arith.constant 3 : index
    %c0_100 = arith.constant 0 : index
    %c0_101 = arith.constant 0 : index
    %150 = vector.load %arg7[%c3_99, %c0_100, %c0_101] : memref<4x1x32xf32, #tpu.memory_space<vmem>>, vector<1x1x32xf32>
    %151 = vector.shape_cast %150 : vector<1x1x32xf32> to vector<1x32xf32>
    %152 = vector.broadcast %151 : vector<1x32xf32> to vector<256x32xf32>
    %153 = arith.addf %149, %152 : vector<256x32xf32>
    %154 = arith.subf %128, %146 : vector<256x8xf32>
    %155 = arith.mulf %154, %154 : vector<256x8xf32>
    %cst_102 = arith.constant dense<0.000000e+00> : vector<256xf32>
    %156 = vector.multi_reduction <add>, %155, %cst_102 [1] : vector<256x8xf32> to vector<256xf32>
    %157 = vector.shape_cast %156 : vector<256xf32> to vector<256x1xf32>
    %cst_103 = arith.constant 8.000000e+00 : f32
    %158 = vector.broadcast %cst_103 : f32 to vector<256x1xf32>
    %159 = arith.divf %157, %158 : vector<256x1xf32>
    %160 = arith.sitofp %139 : vector<256x1xi32> to vector<256x1xf32>
    %161 = arith.subf %121, %153 : vector<256x32xf32>
    %162 = arith.subf %0, %161 : vector<256x32xf32>
    %c0_104 = arith.constant 0 : index
    %c0_105 = arith.constant 0 : index
    %163 = vector.load %arg8[%c0_104, %c0_105] : memref<256x32xf32, #tpu.memory_space<vmem>>, vector<256x32xf32>
    tpu.vector_store %arg8[%c0_104, %c0_105], %162 {strides = array<i32>} : memref<256x32xf32, #tpu.memory_space<vmem>>, vector<256x32xf32>,
    %cst_106 = arith.constant 0.000000e+00 : f32
    %164 = vector.broadcast %cst_106 : f32 to vector<256x88xf32>
    %165 = tpu.concatenate %8, %48, %88, %128, %40, %80, %120, %160, %39, %79, %119, %159, %164 in 1 : vector<256x8xf32>, vector<256x8xf32>, vector<256x8xf32>, vector<256x8xf32>, vector<256x1xf32>, vector<256x1xf32>, vector<256x1xf32>, vector<256x1xf32>, vector<256x1xf32>, vector<256x1xf32>, vector<256x1xf32>, vector<256x1xf32>, vector<256x88xf32> -> vector<256x128xf32>
    %c0_107 = arith.constant 0 : index
    %c0_108 = arith.constant 0 : index
    %166 = vector.load %arg9[%c0_107, %c0_108] : memref<256x128xf32, #tpu.memory_space<vmem>>, vector<256x128xf32>
    tpu.vector_store %arg9[%c0_107, %c0_108], %165 {strides = array<i32>} : memref<256x128xf32, #tpu.memory_space<vmem>>, vector<256x128xf32>,
    return
  }
  func.func @transform_0(%arg0: i32) -> (i32, i32) {
    %c0_i32 = arith.constant 0 : i32
    %c0_i32_0 = arith.constant 0 : i32
    return %arg0, %c0_i32 : i32, i32
  }
  func.func @transform_1(%arg0: i32) -> (i32, i32, i32) {
    %c0_i32 = arith.constant 0 : i32
    %c0_i32_0 = arith.constant 0 : i32
    %c0_i32_1 = arith.constant 0 : i32
    %c0_i32_2 = arith.constant 0 : i32
    return %c0_i32, %c0_i32_0, %c0_i32_1 : i32, i32, i32
  }
  func.func @transform_2(%arg0: i32) -> (i32, i32, i32) {
    %c0_i32 = arith.constant 0 : i32
    %c0_i32_0 = arith.constant 0 : i32
    %c0_i32_1 = arith.constant 0 : i32
    %c0_i32_2 = arith.constant 0 : i32
    return %c0_i32, %c0_i32_0, %c0_i32_1 : i32, i32, i32
  }
  func.func @transform_3(%arg0: i32) -> (i32, i32, i32) {
    %c0_i32 = arith.constant 0 : i32
    %c0_i32_0 = arith.constant 0 : i32
    %c0_i32_1 = arith.constant 0 : i32
    %c0_i32_2 = arith.constant 0 : i32
    return %c0_i32, %c0_i32_0, %c0_i32_1 : i32, i32, i32
  }
  func.func @transform_4(%arg0: i32) -> (i32, i32, i32) {
    %c0_i32 = arith.constant 0 : i32
    %c0_i32_0 = arith.constant 0 : i32
    %c0_i32_1 = arith.constant 0 : i32
    %c0_i32_2 = arith.constant 0 : i32
    return %c0_i32, %c0_i32_0, %c0_i32_1 : i32, i32, i32
  }
  func.func @transform_5(%arg0: i32) -> (i32, i32, i32) {
    %c0_i32 = arith.constant 0 : i32
    %c0_i32_0 = arith.constant 0 : i32
    %c0_i32_1 = arith.constant 0 : i32
    %c0_i32_2 = arith.constant 0 : i32
    return %c0_i32, %c0_i32_0, %c0_i32_1 : i32, i32, i32
  }
  func.func @transform_6(%arg0: i32) -> (i32, i32, i32) {
    %c0_i32 = arith.constant 0 : i32
    %c0_i32_0 = arith.constant 0 : i32
    %c0_i32_1 = arith.constant 0 : i32
    %c0_i32_2 = arith.constant 0 : i32
    return %c0_i32, %c0_i32_0, %c0_i32_1 : i32, i32, i32
  }
  func.func @transform_7(%arg0: i32) -> (i32, i32) {
    %c0_i32 = arith.constant 0 : i32
    %c0_i32_0 = arith.constant 0 : i32
    return %arg0, %c0_i32 : i32, i32
  }
  func.func @transform_8(%arg0: i32) -> (i32, i32) {
    %c0_i32 = arith.constant 0 : i32
    %c0_i32_0 = arith.constant 0 : i32
    return %arg0, %c0_i32 : i32, i32
  }
}

</mosaic_0001>

<llo_original>
// kernel: tpu_custom_call.1
$region0: #{tpu_custom_call.1}
  #allocation0 [shape = 'u32[]', space=smem, size = 0x4, offset = 0x4, fixed_abs, tag = 'smem constant byte address 0x4 - core index']
  #allocation1 [shape = 'u32[72,128]{1,0:T(1,128)}', space=vmem, size = 0x9000, scoped, tag = 'internal scratch']
  %s0 = inlined_call_operand.vmem [shape: f32[512,32], index: 0, kind: input, shape index: {}]
  %s1 = inlined_call_operand.vmem [shape: f32[4,32,8], index: 1, kind: input, shape index: {}]
  %s2 = inlined_call_operand.vmem [shape: f32[4,1,8], index: 2, kind: input, shape index: {}]
  %s3 = inlined_call_operand.vmem [shape: f32[4,8,128], index: 3, kind: input, shape index: {}]
  %s4 = inlined_call_operand.vmem [shape: f32[4,128,8], index: 4, kind: input, shape index: {}]
  %s5 = inlined_call_operand.vmem [shape: f32[4,8,32], index: 5, kind: input, shape index: {}]
  %s6 = inlined_call_operand.vmem [shape: f32[4,1,32], index: 6, kind: input, shape index: {}]
  %s7 = inlined_call_operand.vmem [shape: f32[512,32], index: 7, kind: output, shape index: {0}]
  %s8 = inlined_call_operand.hbm [shape: f32[512,128], index: 8, kind: output, shape index: {1}]
  %9 = xla_tuple %s7, %s8
  %s10 = sld [smem:[#allocation0]]
  $region69: #{tpu_custom_call.1} parent=0
    _
  %s12 = ssub.s32 1, %s10
  %s13 = scalar_select 0, %s12, %s10
  $region1: #{tpu_custom_call.1} parent=0
    #allocation2 [shape = 'u8[262144]{0}', space=vmem, size = 0x40000, scoped, tag = 'output window, operand 1']
    #allocation3 [shape = 's32[2]{0}', space=sflag, size = 0x8, scoped, tag = 'scoped memory for tpu_custom_call.1']
    %14 = vsyncpa [#allocation3], 0
    %s15 = scalar_lea.sflag [#allocation3], 1
    %16 = vsyncpa %s15, 0
    loop: start=0, step=1, limit=4
    $region2: #{tpu_custom_call.1} parent=1 // loop_pre_header
      _
    $region3: #{tpu_custom_call.1} parent=1 // loop_header
      %s18 = sphi 0, %s22
      %p19 = scmp.ge.s32.totalorder %s18, 4
      %s28 = sphi 0, %s30
      %s31 = sphi 0, %s28
      %s32 = sphi 0, %s31
      %s48 = sphi 0, %s32
      %s52 = sphi 0, %s52
      %s54 = sphi 0, %s52
      %s55 = sphi 0, %s54
      %s69 = sphi 0, %s55
      %s73 = sphi 0, %s73
      %s75 = sphi 0, %s73
      %s76 = sphi 0, %s75
      %s90 = sphi 0, %s76
      %s94 = sphi 0, %s94
      %s96 = sphi 0, %s94
      %s97 = sphi 0, %s96
      %s111 = sphi 0, %s97
      %s115 = sphi 0, %s115
      %s117 = sphi 0, %s115
      %s118 = sphi 0, %s117
      %s132 = sphi 0, %s118
      %s136 = sphi 0, %s136
      %s138 = sphi 0, %s136
      %s139 = sphi 0, %s138
      %s153 = sphi 0, %s139
      %s157 = sphi 0, %s157
      %s159 = sphi 0, %s157
      %s160 = sphi 0, %s159
      %s174 = sphi 0, %s160
      %s180 = sphi 0, %s182
      %s183 = sphi 0, %s180
      %s184 = sphi 0, %s183
      %s200 = sphi 0, %s184
      %s206 = sphi 0, %s208
      %s209 = sphi 0, %s206
      %s210 = sphi 0, %s209
      %s226 = sphi 0, %s210
    $region4: #{tpu_custom_call.1} parent=1 // loop_header_branch
      %21 = sbr.rel (%p19) target = $region8
    $region5: #{tpu_custom_call.1} parent=1 // loop_body
      %s23 = ssub.s32 %s18, 1
      %s24 = ssub.s32 %s18, 2
      %s25 = sadd.s32 %s18, 1
      %s26 = ssub.s32 %s18, %s25
      %p27 = scmp.eq.s32.totalorder %s26, 0
      %s29 = sadd.s32 %s28, 1
      %s30 = scalar_select %p27, %s28, %s29
      %p33 = pneg %p27
      %p34 = scmp.eq.s32.totalorder %s18, 1
      %p35 = por %p33, %p34
      %p36 = scmp.ne.s32.totalorder %s28, %s31
      %p37 = scmp.eq.s32.totalorder %s18, 0
      %p38 = por %p36, %p37
      %p39 = scmp.ne.s32.totalorder %s28, %s31
      %p40 = scmp.eq.s32.totalorder %s23, 1
      %p41 = por %p39, %p40
      %p42 = scmp.ne.s32.totalorder %s31, %s32
      %p43 = scmp.eq.s32.totalorder %s23, 0
      %p44 = por %p42, %p43
      %p45 = scmp.ne.s32.totalorder %s31, %s32
      %p46 = scmp.eq.s32.totalorder %s24, 1
      %p47 = por %p45, %p46
      %p49 = scmp.ne.s32.totalorder %s32, %s48
      %p50 = scmp.eq.s32.totalorder %s24, 0
      %p51 = por %p49, %p50
      %s53 = sadd.s32 %s52, 1
      %p56 = scmp.eq.s32.totalorder %s18, 1
      %p57 = scmp.ne.s32.totalorder %s52, %s54
      %p58 = scmp.eq.s32.totalorder %s18, 0
      %p59 = por %p57, %p58
      %p60 = scmp.ne.s32.totalorder %s52, %s54
      %p61 = scmp.eq.s32.totalorder %s23, 1
      %p62 = por %p60, %p61
      %p63 = scmp.ne.s32.totalorder %s54, %s55
      %p64 = scmp.eq.s32.totalorder %s23, 0
      %p65 = por %p63, %p64
      %p66 = scmp.ne.s32.totalorder %s54, %s55
      %p67 = scmp.eq.s32.totalorder %s24, 1
      %p68 = por %p66, %p67
      %p70 = scmp.ne.s32.totalorder %s55, %s69
      %p71 = scmp.eq.s32.totalorder %s24, 0
      %p72 = por %p70, %p71
      %s74 = sadd.s32 %s73, 1
      %p77 = scmp.eq.s32.totalorder %s18, 1
      %p78 = scmp.ne.s32.totalorder %s73, %s75
      %p79 = scmp.eq.s32.totalorder %s18, 0
      %p80 = por %p78, %p79
      %p81 = scmp.ne.s32.totalorder %s73, %s75
      %p82 = scmp.eq.s32.totalorder %s23, 1
      %p83 = por %p81, %p82
      %p84 = scmp.ne.s32.totalorder %s75, %s76
      %p85 = scmp.eq.s32.totalorder %s23, 0
      %p86 = por %p84, %p85
      %p87 = scmp.ne.s32.totalorder %s75, %s76
      %p88 = scmp.eq.s32.totalorder %s24, 1
      %p89 = por %p87, %p88
      %p91 = scmp.ne.s32.totalorder %s76, %s90
      %p92 = scmp.eq.s32.totalorder %s24, 0
      %p93 = por %p91, %p92
      %s95 = sadd.s32 %s94, 1
      %p98 = scmp.eq.s32.totalorder %s18, 1
      %p99 = scmp.ne.s32.totalorder %s94, %s96
      %p100 = scmp.eq.s32.totalorder %s18, 0
      %p101 = por %p99, %p100
      %p102 = scmp.ne.s32.totalorder %s94, %s96
      %p103 = scmp.eq.s32.totalorder %s23, 1
      %p104 = por %p102, %p103
      %p105 = scmp.ne.s32.totalorder %s96, %s97
      %p106 = scmp.eq.s32.totalorder %s23, 0
      %p107 = por %p105, %p106
      %p108 = scmp.ne.s32.totalorder %s96, %s97
      %p109 = scmp.eq.s32.totalorder %s24, 1
      %p110 = por %p108, %p109
      %p112 = scmp.ne.s32.totalorder %s97, %s111
      %p113 = scmp.eq.s32.totalorder %s24, 0
      %p114 = por %p112, %p113
      %s116 = sadd.s32 %s115, 1
      %p119 = scmp.eq.s32.totalorder %s18, 1
      %p120 = scmp.ne.s32.totalorder %s115, %s117
      %p121 = scmp.eq.s32.totalorder %s18, 0
      %p122 = por %p120, %p121
      %p123 = scmp.ne.s32.totalorder %s115, %s117
      %p124 = scmp.eq.s32.totalorder %s23, 1
      %p125 = por %p123, %p124
      %p126 = scmp.ne.s32.totalorder %s117, %s118
      %p127 = scmp.eq.s32.totalorder %s23, 0
      %p128 = por %p126, %p127
      %p129 = scmp.ne.s32.totalorder %s117, %s118
      %p130 = scmp.eq.s32.totalorder %s24, 1
      %p131 = por %p129, %p130
      %p133 = scmp.ne.s32.totalorder %s118, %s132
      %p134 = scmp.eq.s32.totalorder %s24, 0
      %p135 = por %p133, %p134
      %s137 = sadd.s32 %s136, 1
      %p140 = scmp.eq.s32.totalorder %s18, 1
      %p141 = scmp.ne.s32.totalorder %s136, %s138
      %p142 = scmp.eq.s32.totalorder %s18, 0
      %p143 = por %p141, %p142
      %p144 = scmp.ne.s32.totalorder %s136, %s138
      %p145 = scmp.eq.s32.totalorder %s23, 1
      %p146 = por %p144, %p145
      %p147 = scmp.ne.s32.totalorder %s138, %s139
      %p148 = scmp.eq.s32.totalorder %s23, 0
      %p149 = por %p147, %p148
      %p150 = scmp.ne.s32.totalorder %s138, %s139
      %p151 = scmp.eq.s32.totalorder %s24, 1
      %p152 = por %p150, %p151
      %p154 = scmp.ne.s32.totalorder %s139, %s153
      %p155 = scmp.eq.s32.totalorder %s24, 0
      %p156 = por %p154, %p155
      %s158 = sadd.s32 %s157, 1
      %p161 = scmp.eq.s32.totalorder %s18, 1
      %p162 = scmp.ne.s32.totalorder %s157, %s159
      %p163 = scmp.eq.s32.totalorder %s18, 0
      %p164 = por %p162, %p163
      %p165 = scmp.ne.s32.totalorder %s157, %s159
      %p166 = scmp.eq.s32.totalorder %s23, 1
      %p167 = por %p165, %p166
      %p168 = scmp.ne.s32.totalorder %s159, %s160
      %p169 = scmp.eq.s32.totalorder %s23, 0
      %p170 = por %p168, %p169
      %p171 = scmp.ne.s32.totalorder %s159, %s160
      %p172 = scmp.eq.s32.totalorder %s24, 1
      %p173 = por %p171, %p172
      %p175 = scmp.ne.s32.totalorder %s160, %s174
      %p176 = scmp.eq.s32.totalorder %s24, 0
      %p177 = por %p175, %p176
      %s178 = ssub.s32 %s18, %s25
      %p179 = scmp.eq.s32.totalorder %s178, 0
      %s181 = sadd.s32 %s180, 1
      %s182 = scalar_select %p179, %s180, %s181
      %p185 = pneg %p179
      %p186 = scmp.eq.s32.totalorder %s18, 1
      %p187 = por %p185, %p186
      %p188 = scmp.ne.s32.totalorder %s180, %s183
      %p189 = scmp.eq.s32.totalorder %s18, 0
      %p190 = por %p188, %p189
      %p191 = scmp.ne.s32.totalorder %s180, %s183
      %p192 = scmp.eq.s32.totalorder %s23, 1
      %p193 = por %p191, %p192
      %p194 = scmp.ne.s32.totalorder %s183, %s184
      %p195 = scmp.eq.s32.totalorder %s23, 0
      %p196 = por %p194, %p195
      %p197 = scmp.ne.s32.totalorder %s183, %s184
      %p198 = scmp.eq.s32.totalorder %s24, 1
      %p199 = por %p197, %p198
      %p201 = scmp.ne.s32.totalorder %s184, %s200
      %p202 = scmp.eq.s32.totalorder %s24, 0
      %p203 = por %p201, %p202
      %s204 = ssub.s32 %s18, %s25
      %p205 = scmp.eq.s32.totalorder %s204, 0
      %s207 = sadd.s32 %s206, 1
      %s208 = scalar_select %p205, %s206, %s207
      %p211 = pneg %p205
      %p212 = scmp.eq.s32.totalorder %s18, 1
      %p213 = por %p211, %p212
      %p214 = scmp.ne.s32.totalorder %s206, %s209
      %p215 = scmp.eq.s32.totalorder %s18, 0
      %p216 = por %p214, %p215
      %p217 = scmp.ne.s32.totalorder %s206, %s209
      %p218 = scmp.eq.s32.totalorder %s23, 1
      %p219 = por %p217, %p218
      %p220 = scmp.ne.s32.totalorder %s209, %s210
      %p221 = scmp.eq.s32.totalorder %s23, 0
      %p222 = por %p220, %p221
      %p223 = scmp.ne.s32.totalorder %s209, %s210
      %p224 = scmp.eq.s32.totalorder %s24, 1
      %p225 = por %p223, %p224
      %p227 = scmp.ne.s32.totalorder %s210, %s226
      %p228 = scmp.eq.s32.totalorder %s24, 0
      %p229 = por %p227, %p228
      %p230 = scmp.le.s32.totalorder 1, %s18
      %p231 = scmp.lt.s32.totalorder %s18, 3
      %p232 = pnand %p230, %p231
      %p233 = pneg %p232
      // Predicated region
      $region9: #{tpu_custom_call.1} parent=5 // pred_check
        _
      $region10: #{tpu_custom_call.1} parent=5 // pred_check_branch
        %235 = sbr.rel (%p232) target = $region12
      $region11: #{tpu_custom_call.1} parent=5 // pred_region
        %s236 = ssub.s32 %s18, 1
        // Predicated region
        $region13: #{tpu_custom_call.1} parent=11 // pred_check
          %p237 = pneg %p65
        $region14: #{tpu_custom_call.1} parent=11 // pred_check_branch
          %239 = sbr.rel (%p237) target = $region16
        $region15: #{tpu_custom_call.1} parent=11 // pred_region
          _
        $region16: #{tpu_custom_call.1} parent=11 // pred_fallthru
          _
        // Predicated region
        $region17: #{tpu_custom_call.1} parent=11 // pred_check
          %p240 = pneg %p86
        $region18: #{tpu_custom_call.1} parent=11 // pred_check_branch
          %242 = sbr.rel (%p240) target = $region20
        $region19: #{tpu_custom_call.1} parent=11 // pred_region
          _
        $region20: #{tpu_custom_call.1} parent=11 // pred_fallthru
          _
        // Predicated region
        $region21: #{tpu_custom_call.1} parent=11 // pred_check
          %p243 = pneg %p107
        $region22: #{tpu_custom_call.1} parent=11 // pred_check_branch
          %245 = sbr.rel (%p243) target = $region24
        $region23: #{tpu_custom_call.1} parent=11 // pred_region
          _
        $region24: #{tpu_custom_call.1} parent=11 // pred_fallthru
          _
        // Predicated region
        $region25: #{tpu_custom_call.1} parent=11 // pred_check
          %p246 = pneg %p128
        $region26: #{tpu_custom_call.1} parent=11 // pred_check_branch
          %248 = sbr.rel (%p246) target = $region28
        $region27: #{tpu_custom_call.1} parent=11 // pred_region
          _
        $region28: #{tpu_custom_call.1} parent=11 // pred_fallthru
          _
        // Predicated region
        $region29: #{tpu_custom_call.1} parent=11 // pred_check
          %p249 = pneg %p149
        $region30: #{tpu_custom_call.1} parent=11 // pred_check_branch
          %251 = sbr.rel (%p249) target = $region32
        $region31: #{tpu_custom_call.1} parent=11 // pred_region
          _
        $region32: #{tpu_custom_call.1} parent=11 // pred_fallthru
          _
        // Predicated region
        $region33: #{tpu_custom_call.1} parent=11 // pred_check
          %p252 = pneg %p170
        $region34: #{tpu_custom_call.1} parent=11 // pred_check_branch
          %254 = sbr.rel (%p252) target = $region36
        $region35: #{tpu_custom_call.1} parent=11 // pred_region
          _
        $region36: #{tpu_custom_call.1} parent=11 // pred_fallthru
          _
      $region12: #{tpu_custom_call.1} parent=5 // pred_fallthru
        _
      %p255 = scmp.lt.s32.totalorder %s18, 2
      // Predicated region
      $region37: #{tpu_custom_call.1} parent=5 // pred_check
        %p256 = pneg %p255
      $region38: #{tpu_custom_call.1} parent=5 // pred_check_branch
        %258 = sbr.rel (%p256) target = $region40
      $region39: #{tpu_custom_call.1} parent=5 // pred_region
        // Predicated region
        $region41: #{tpu_custom_call.1} parent=39 // pred_check
          %p259 = pneg %p38
        $region42: #{tpu_custom_call.1} parent=39 // pred_check_branch
          %261 = sbr.rel (%p259) target = $region44
        $region43: #{tpu_custom_call.1} parent=39 // pred_region
          %s262 = smul.u32 32, %s18
          %p263 = scmp.lt.s32.totalorder %s262, 63
          %s264 = scalar_select %p263, %s262, 63
          %s265 = smul.addr %s264, 8
          %s266 = scalar_lea.vmem %s0, %s265
          %s267 = smul.u32 32, %s18
        $region44: #{tpu_custom_call.1} parent=39 // pred_fallthru
          _
      $region40: #{tpu_custom_call.1} parent=5 // pred_fallthru
        _
      %p268 = scmp.le.s32.totalorder 1, %s18
      %p269 = scmp.lt.s32.totalorder %s18, 3
      %p270 = pnand %p268, %p269
      %p271 = pneg %p270
      // Predicated region
      $region45: #{tpu_custom_call.1} parent=5 // pred_check
        _
      $region46: #{tpu_custom_call.1} parent=5 // pred_check_branch
        %273 = sbr.rel (%p270) target = $region48
      $region47: #{tpu_custom_call.1} parent=5 // pred_region
        %s274 = ssub.s32 %s18, 1
        %s275 = smul.u32 32, %s23
        %p276 = scmp.lt.s32.totalorder %s275, 63
        %s277 = scalar_select %p276, %s275, 63
        %s278 = smul.addr %s277, 8
        %s279 = scalar_lea.vmem %s0, %s278
        %p280 = pneg %p44
        %p281 = pneg %p41
        %p282 = pneg %p65
        %p283 = pneg %p62
        %p284 = pneg %p86
        %p285 = pneg %p83
        %p286 = pneg %p107
        %p287 = pneg %p104
        %p288 = pneg %p128
        %p289 = pneg %p125
        %p290 = pneg %p149
        %p291 = pneg %p146
        %p292 = pneg %p170
        %p293 = pneg %p167
        %p294 = pneg %p196
        %p295 = pneg %p193
        %s296 = smul.u32 32, %s23
        %p297 = scmp.lt.s32.totalorder %s296, 63
        %s298 = scalar_select %p297, %s296, 63
        %s299 = smul.addr %s298, 8
        %s300 = scalar_lea.vmem %s7, %s299
        %p301 = pneg %p222
        %p302 = pneg %p219
        %s303 = sand.u32 %s209, 1
        %s304 = scalar_lea.sflag [#allocation3], %s303
        %s305 = sand.u32 %s209, 1
        %s306 = smul.addr %s305, 256
        %s307 = scalar_lea.vmem [#allocation2], %s306
        %s308 = smul.u32 32, %s23
        %p309 = scmp.lt.s32.totalorder %s308, 63
        %s310 = scalar_select %p309, %s308, 63
        %s311 = smul.addr %s310, 8
        %s312 = scalar_lea.vmem %s0, %s311
        %s313 = smul.u32 32, %s23
        %s314 = smul.u32 32, %s23
        %p315 = scmp.lt.s32.totalorder %s314, 63
        %s316 = scalar_select %p315, %s314, 63
        %s317 = smul.addr %s316, 8
        %s318 = scalar_lea.vmem %s7, %s317
        %s319 = smul.u32 32, %s23
        %s320 = smul.u32 32, %s23
        %v321 = vld [vmem:[%s312] sm:$0xff]
        %v322 = vld [vmem:[%s312 + $0x8] sm:$0xff]
        %v323 = vld [vmem:[%s312 + $0x10] sm:$0xff]
        %v324 = vld [vmem:[%s312 + $0x18] sm:$0xff]
        %v325 = vld [vmem:[%s312 + $0x20] sm:$0xff]
        %v326 = vld [vmem:[%s312 + $0x28] sm:$0xff]
        %v327 = vld [vmem:[%s312 + $0x30] sm:$0xff]
        %v328 = vld [vmem:[%s312 + $0x38] sm:$0xff]
        %v329 = vld [vmem:[%s312 + $0x40] sm:$0xff]
        %v330 = vld [vmem:[%s312 + $0x48] sm:$0xff]
        %v331 = vld [vmem:[%s312 + $0x50] sm:$0xff]
        %v332 = vld [vmem:[%s312 + $0x58] sm:$0xff]
        %v333 = vld [vmem:[%s312 + $0x60] sm:$0xff]
        %v334 = vld [vmem:[%s312 + $0x68] sm:$0xff]
        %v335 = vld [vmem:[%s312 + $0x70] sm:$0xff]
        %v336 = vld [vmem:[%s312 + $0x78] sm:$0xff]
        %v337 = vld [vmem:[%s312 + $0x80] sm:$0xff]
        %v338 = vld [vmem:[%s312 + $0x88] sm:$0xff]
        %v339 = vld [vmem:[%s312 + $0x90] sm:$0xff]
        %v340 = vld [vmem:[%s312 + $0x98] sm:$0xff]
        %v341 = vld [vmem:[%s312 + $0xa0] sm:$0xff]
        %v342 = vld [vmem:[%s312 + $0xa8] sm:$0xff]
        %v343 = vld [vmem:[%s312 + $0xb0] sm:$0xff]
        %v344 = vld [vmem:[%s312 + $0xb8] sm:$0xff]
        %v345 = vld [vmem:[%s312 + $0xc0] sm:$0xff]
        %v346 = vld [vmem:[%s312 + $0xc8] sm:$0xff]
        %v347 = vld [vmem:[%s312 + $0xd0] sm:$0xff]
        %v348 = vld [vmem:[%s312 + $0xd8] sm:$0xff]
        %v349 = vld [vmem:[%s312 + $0xe0] sm:$0xff]
        %v350 = vld [vmem:[%s312 + $0xe8] sm:$0xff]
        %v351 = vld [vmem:[%s312 + $0xf0] sm:$0xff]
        %v352 = vld [vmem:[%s312 + $0xf8] sm:$0xff]
        %v353 = vlaneseq
        %v354 = vand.u32 %v353, 127
        %v355 = vld [vmem:[%s1] sm:$0xff]
        %v356 = vld [vmem:[%s1 + $0x8] sm:$0xff]
        %v357 = vld [vmem:[%s1 + $0x10] sm:$0xff]
        %v358 = vld [vmem:[%s1 + $0x18] sm:$0xff]
        %v359 = vld [vmem:[%s2] sm:$0x1]
        %v361 = vperm.slane %v359, 0
        %vm363 = vcmask 261120
        %v365 = vsel %vm363, %v321, 0
        %v368 = vsel %vm363, %v322, 0
        %v371 = vsel %vm363, %v323, 0
        %v374 = vsel %vm363, %v324, 0
        %v377 = vsel %vm363, %v325, 0
        %v380 = vsel %vm363, %v326, 0
        %v383 = vsel %vm363, %v327, 0
        %v386 = vsel %vm363, %v328, 0
        %v389 = vsel %vm363, %v329, 0
        %v392 = vsel %vm363, %v330, 0
        %v395 = vsel %vm363, %v331, 0
        %v398 = vsel %vm363, %v332, 0
        %v401 = vsel %vm363, %v333, 0
        %v404 = vsel %vm363, %v334, 0
        %v407 = vsel %vm363, %v335, 0
        %v410 = vsel %vm363, %v336, 0
        %v413 = vsel %vm363, %v337, 0
        %v416 = vsel %vm363, %v338, 0
        %v419 = vsel %vm363, %v339, 0
        %v422 = vsel %vm363, %v340, 0
        %v425 = vsel %vm363, %v341, 0
        %v428 = vsel %vm363, %v342, 0
        %v431 = vsel %vm363, %v343, 0
        %v434 = vsel %vm363, %v344, 0
        %v437 = vsel %vm363, %v345, 0
        %v440 = vsel %vm363, %v346, 0
        %v443 = vsel %vm363, %v347, 0
        %v446 = vsel %vm363, %v348, 0
        %v449 = vsel %vm363, %v349, 0
        %v452 = vsel %vm363, %v350, 0
        %v455 = vsel %vm363, %v351, 0
        %v458 = vsel %vm363, %v352, 0
        %460 = vmatpush.msra.mxu0 0.0
        %461 = vmatpush.msra.mxu0 0.0
        %462 = vmatpush.msra.mxu0 0.0
        %463 = vmatpush.msra.mxu0 0.0
        %464 = vmatpush.msra.mxu0 0.0
        %465 = vmatpush.msra.mxu0 0.0
        %466 = vmatpush.msra.mxu0 0.0
        %467 = vmatpush.msra.mxu0 0.0
        %468 = vmatpush.msra.mxu0 0.0
        %469 = vmatpush.msra.mxu0 0.0
        %470 = vmatpush.msra.mxu0 0.0
        %471 = vmatpush.msra.mxu0 0.0
        %472 = vmatpush.msra.mxu0 %v358
        %473 = vmatpush.msra.mxu0 %v357
        %474 = vmatpush.msra.mxu0 %v356
        %475 = vmatpush.msra.mxu0 %v355
        %476 = vmatmul.f32.gmra.mxu0 %v365
        %v477 = vpop.f32.mrf.mxu0
        %v478 = vadd.f32 %v361, %v477
        %479 = vmatmul.f32.gmra.mxu0 %v368
        %v480 = vpop.f32.mrf.mxu0
        %v481 = vadd.f32 %v361, %v480
        %482 = vmatmul.f32.gmra.mxu0 %v371
        %v483 = vpop.f32.mrf.mxu0
        %v484 = vadd.f32 %v361, %v483
        %485 = vmatmul.f32.gmra.mxu0 %v374
        %v486 = vpop.f32.mrf.mxu0
        %v487 = vadd.f32 %v361, %v486
        %488 = vmatmul.f32.gmra.mxu0 %v377
        %v489 = vpop.f32.mrf.mxu0
        %v490 = vadd.f32 %v361, %v489
        %491 = vmatmul.f32.gmra.mxu0 %v380
        %v492 = vpop.f32.mrf.mxu0
        %v493 = vadd.f32 %v361, %v492
        %494 = vmatmul.f32.gmra.mxu0 %v383
        %v495 = vpop.f32.mrf.mxu0
        %v496 = vadd.f32 %v361, %v495
        %497 = vmatmul.f32.gmra.mxu0 %v386
        %v498 = vpop.f32.mrf.mxu0
        %v499 = vadd.f32 %v361, %v498
        %500 = vmatmul.f32.gmra.mxu0 %v389
        %v501 = vpop.f32.mrf.mxu0
        %v502 = vadd.f32 %v361, %v501
        %503 = vmatmul.f32.gmra.mxu0 %v392
        %v504 = vpop.f32.mrf.mxu0
        %v505 = vadd.f32 %v361, %v504
        %506 = vmatmul.f32.gmra.mxu0 %v395
        %v507 = vpop.f32.mrf.mxu0
        %v508 = vadd.f32 %v361, %v507
        %509 = vmatmul.f32.gmra.mxu0 %v398
        %v510 = vpop.f32.mrf.mxu0
        %v511 = vadd.f32 %v361, %v510
        %512 = vmatmul.f32.gmra.mxu0 %v401
        %v513 = vpop.f32.mrf.mxu0
        %v514 = vadd.f32 %v361, %v513
        %515 = vmatmul.f32.gmra.mxu0 %v404
        %v516 = vpop.f32.mrf.mxu0
        %v517 = vadd.f32 %v361, %v516
        %518 = vmatmul.f32.gmra.mxu0 %v407
        %v519 = vpop.f32.mrf.mxu0
        %v520 = vadd.f32 %v361, %v519
        %521 = vmatmul.f32.gmra.mxu0 %v410
        %v522 = vpop.f32.mrf.mxu0
        %v523 = vadd.f32 %v361, %v522
        %524 = vmatmul.f32.gmra.mxu0 %v413
        %v525 = vpop.f32.mrf.mxu0
        %v526 = vadd.f32 %v361, %v525
        %527 = vmatmul.f32.gmra.mxu0 %v416
        %v528 = vpop.f32.mrf.mxu0
        %v529 = vadd.f32 %v361, %v528
        %530 = vmatmul.f32.gmra.mxu0 %v419
        %v531 = vpop.f32.mrf.mxu0
        %v532 = vadd.f32 %v361, %v531
        %533 = vmatmul.f32.gmra.mxu0 %v422
        %v534 = vpop.f32.mrf.mxu0
        %v535 = vadd.f32 %v361, %v534
        %536 = vmatmul.f32.gmra.mxu0 %v425
        %v537 = vpop.f32.mrf.mxu0
        %v538 = vadd.f32 %v361, %v537
        %539 = vmatmul.f32.gmra.mxu0 %v428
        %v540 = vpop.f32.mrf.mxu0
        %v541 = vadd.f32 %v361, %v540
        %542 = vmatmul.f32.gmra.mxu0 %v431
        %v543 = vpop.f32.mrf.mxu0
        %v544 = vadd.f32 %v361, %v543
        %545 = vmatmul.f32.gmra.mxu0 %v434
        %v546 = vpop.f32.mrf.mxu0
        %v547 = vadd.f32 %v361, %v546
        %548 = vmatmul.f32.gmra.mxu0 %v437
        %v549 = vpop.f32.mrf.mxu0
        %v550 = vadd.f32 %v361, %v549
        %551 = vmatmul.f32.gmra.mxu0 %v440
        %v552 = vpop.f32.mrf.mxu0
        %v553 = vadd.f32 %v361, %v552
        %554 = vmatmul.f32.gmra.mxu0 %v443
        %v555 = vpop.f32.mrf.mxu0
        %v556 = vadd.f32 %v361, %v555
        %557 = vmatmul.f32.gmra.mxu0 %v446
        %v558 = vpop.f32.mrf.mxu0
        %v559 = vadd.f32 %v361, %v558
        %560 = vmatmul.f32.gmra.mxu0 %v449
        %v561 = vpop.f32.mrf.mxu0
        %v562 = vadd.f32 %v361, %v561
        %563 = vmatmul.f32.gmra.mxu0 %v452
        %v564 = vpop.f32.mrf.mxu0
        %v565 = vadd.f32 %v361, %v564
        %566 = vmatmul.f32.gmra.mxu0 %v455
        %v567 = vpop.f32.mrf.mxu0
        %v568 = vadd.f32 %v361, %v567
        %569 = vmatmul.f32.gmra.mxu0 %v458
        %v570 = vpop.f32.mrf.mxu0
        %v571 = vadd.f32 %v361, %v570
        %572 = vdwg.mxu0
        %v573 = vld [vmem:[%s3] sm:$0xff]
        %vm574 = vcmask 64512
        %v576 = vsel %vm574, %v478, 0
        %v579 = vsel %vm574, %v481, 0
        %v582 = vsel %vm574, %v484, 0
        %v585 = vsel %vm574, %v487, 0
        %v588 = vsel %vm574, %v490, 0
        %v591 = vsel %vm574, %v493, 0
        %v594 = vsel %vm574, %v496, 0
        %v597 = vsel %vm574, %v499, 0
        %v600 = vsel %vm574, %v502, 0
        %v603 = vsel %vm574, %v505, 0
        %v606 = vsel %vm574, %v508, 0
        %v609 = vsel %vm574, %v511, 0
        %v612 = vsel %vm574, %v514, 0
        %v615 = vsel %vm574, %v517, 0
        %v618 = vsel %vm574, %v520, 0
        %v621 = vsel %vm574, %v523, 0
        %v624 = vsel %vm574, %v526, 0
        %v627 = vsel %vm574, %v529, 0
        %v630 = vsel %vm574, %v532, 0
        %v633 = vsel %vm574, %v535, 0
        %v636 = vsel %vm574, %v538, 0
        %v639 = vsel %vm574, %v541, 0
        %v642 = vsel %vm574, %v544, 0
        %v645 = vsel %vm574, %v547, 0
        %v648 = vsel %vm574, %v550, 0
        %v651 = vsel %vm574, %v553, 0
        %v654 = vsel %vm574, %v556, 0
        %v657 = vsel %vm574, %v559, 0
        %v660 = vsel %vm574, %v562, 0
        %v663 = vsel %vm574, %v565, 0
        %v666 = vsel %vm574, %v568, 0
        %v669 = vsel %vm574, %v571, 0
        %671 = vmatpush.msra.mxu0 0.0
        %672 = vmatpush.msra.mxu0 0.0
        %673 = vmatpush.msra.mxu0 0.0
        %674 = vmatpush.msra.mxu0 0.0
        %675 = vmatpush.msra.mxu0 0.0
        %676 = vmatpush.msra.mxu0 0.0
        %677 = vmatpush.msra.mxu0 0.0
        %678 = vmatpush.msra.mxu0 0.0
        %679 = vmatpush.msra.mxu0 0.0
        %680 = vmatpush.msra.mxu0 0.0
        %681 = vmatpush.msra.mxu0 0.0
        %682 = vmatpush.msra.mxu0 0.0
        %683 = vmatpush.msra.mxu0 0.0
        %684 = vmatpush.msra.mxu0 0.0
        %685 = vmatpush.msra.mxu0 0.0
        %686 = vmatpush.msra.mxu0 %v573
        %687 = vmatmul.f32.gmra.mxu0 %v576
        %v688 = vpop.f32.mrf.mxu0
        %v689 = vadd.f32 0.0, %v688
        %690 = vmatmul.f32.gmra.mxu0 %v579
        %v691 = vpop.f32.mrf.mxu0
        %v692 = vadd.f32 0.0, %v691
        %693 = vmatmul.f32.gmra.mxu0 %v582
        %v694 = vpop.f32.mrf.mxu0
        %v695 = vadd.f32 0.0, %v694
        %696 = vmatmul.f32.gmra.mxu0 %v585
        %v697 = vpop.f32.mrf.mxu0
        %v698 = vadd.f32 0.0, %v697
        %699 = vmatmul.f32.gmra.mxu0 %v588
        %v700 = vpop.f32.mrf.mxu0
        %v701 = vadd.f32 0.0, %v700
        %702 = vmatmul.f32.gmra.mxu0 %v591
        %v703 = vpop.f32.mrf.mxu0
        %v704 = vadd.f32 0.0, %v703
        %705 = vmatmul.f32.gmra.mxu0 %v594
        %v706 = vpop.f32.mrf.mxu0
        %v707 = vadd.f32 0.0, %v706
        %708 = vmatmul.f32.gmra.mxu0 %v597
        %v709 = vpop.f32.mrf.mxu0
        %v710 = vadd.f32 0.0, %v709
        %711 = vmatmul.f32.gmra.mxu0 %v600
        %v712 = vpop.f32.mrf.mxu0
        %v713 = vadd.f32 0.0, %v712
        %714 = vmatmul.f32.gmra.mxu0 %v603
        %v715 = vpop.f32.mrf.mxu0
        %v716 = vadd.f32 0.0, %v715
        %717 = vmatmul.f32.gmra.mxu0 %v606
        %v718 = vpop.f32.mrf.mxu0
        %v719 = vadd.f32 0.0, %v718
        %720 = vmatmul.f32.gmra.mxu0 %v609
        %v721 = vpop.f32.mrf.mxu0
        %v722 = vadd.f32 0.0, %v721
        %723 = vmatmul.f32.gmra.mxu0 %v612
        %v724 = vpop.f32.mrf.mxu0
        %v725 = vadd.f32 0.0, %v724
        %726 = vmatmul.f32.gmra.mxu0 %v615
        %v727 = vpop.f32.mrf.mxu0
        %v728 = vadd.f32 0.0, %v727
        %729 = vmatmul.f32.gmra.mxu0 %v618
        %v730 = vpop.f32.mrf.mxu0
        %v731 = vadd.f32 0.0, %v730
        %732 = vmatmul.f32.gmra.mxu0 %v621
        %v733 = vpop.f32.mrf.mxu0
        %v734 = vadd.f32 0.0, %v733
        %735 = vmatmul.f32.gmra.mxu0 %v624
        %v736 = vpop.f32.mrf.mxu0
        %v737 = vadd.f32 0.0, %v736
        %738 = vmatmul.f32.gmra.mxu0 %v627
        %v739 = vpop.f32.mrf.mxu0
        %v740 = vadd.f32 0.0, %v739
        %741 = vmatmul.f32.gmra.mxu0 %v630
        %v742 = vpop.f32.mrf.mxu0
        %v743 = vadd.f32 0.0, %v742
        %744 = vmatmul.f32.gmra.mxu0 %v633
        %v745 = vpop.f32.mrf.mxu0
        %v746 = vadd.f32 0.0, %v745
        %747 = vmatmul.f32.gmra.mxu0 %v636
        %v748 = vpop.f32.mrf.mxu0
        %v749 = vadd.f32 0.0, %v748
        %750 = vmatmul.f32.gmra.mxu0 %v639
        %v751 = vpop.f32.mrf.mxu0
        %v752 = vadd.f32 0.0, %v751
        %753 = vmatmul.f32.gmra.mxu0 %v642
        %v754 = vpop.f32.mrf.mxu0
        %v755 = vadd.f32 0.0, %v754
        %756 = vmatmul.f32.gmra.mxu0 %v645
        %v757 = vpop.f32.mrf.mxu0
        %v758 = vadd.f32 0.0, %v757
        %759 = vmatmul.f32.gmra.mxu0 %v648
        %v760 = vpop.f32.mrf.mxu0
        %v761 = vadd.f32 0.0, %v760
        %762 = vmatmul.f32.gmra.mxu0 %v651
        %v763 = vpop.f32.mrf.mxu0
        %v764 = vadd.f32 0.0, %v763
        %765 = vmatmul.f32.gmra.mxu0 %v654
        %v766 = vpop.f32.mrf.mxu0
        %v767 = vadd.f32 0.0, %v766
        %768 = vmatmul.f32.gmra.mxu0 %v657
        %v769 = vpop.f32.mrf.mxu0
        %v770 = vadd.f32 0.0, %v769
        %771 = vmatmul.f32.gmra.mxu0 %v660
        %v772 = vpop.f32.mrf.mxu0
        %v773 = vadd.f32 0.0, %v772
        %774 = vmatmul.f32.gmra.mxu0 %v663
        %v775 = vpop.f32.mrf.mxu0
        %v776 = vadd.f32 0.0, %v775
        %777 = vmatmul.f32.gmra.mxu0 %v666
        %v778 = vpop.f32.mrf.mxu0
        %v779 = vadd.f32 0.0, %v778
        %780 = vmatmul.f32.gmra.mxu0 %v669
        %v781 = vpop.f32.mrf.mxu0
        %v782 = vadd.f32 0.0, %v781
        %783 = vdwg.mxu0
        %784 = vmax.xlane.f32.xlu0 %v689
        %v785 = vpop.xlane.xlu0 %784
        %786 = vmax.xlane.f32.xlu0 %v692
        %v787 = vpop.xlane.xlu0 %786
        %788 = vmax.xlane.f32.xlu0 %v695
        %v789 = vpop.xlane.xlu0 %788
        %790 = vmax.xlane.f32.xlu0 %v698
        %v791 = vpop.xlane.xlu0 %790
        %792 = vmax.xlane.f32.xlu0 %v701
        %v793 = vpop.xlane.xlu0 %792
        %794 = vmax.xlane.f32.xlu0 %v704
        %v795 = vpop.xlane.xlu0 %794
        %796 = vmax.xlane.f32.xlu0 %v707
        %v797 = vpop.xlane.xlu0 %796
        %798 = vmax.xlane.f32.xlu0 %v710
        %v799 = vpop.xlane.xlu0 %798
        %800 = vmax.xlane.f32.xlu0 %v713
        %v801 = vpop.xlane.xlu0 %800
        %802 = vmax.xlane.f32.xlu0 %v716
        %v803 = vpop.xlane.xlu0 %802
        %804 = vmax.xlane.f32.xlu0 %v719
        %v805 = vpop.xlane.xlu0 %804
        %806 = vmax.xlane.f32.xlu0 %v722
        %v807 = vpop.xlane.xlu0 %806
        %808 = vmax.xlane.f32.xlu0 %v725
        %v809 = vpop.xlane.xlu0 %808
        %810 = vmax.xlane.f32.xlu0 %v728
        %v811 = vpop.xlane.xlu0 %810
        %812 = vmax.xlane.f32.xlu0 %v731
        %v813 = vpop.xlane.xlu0 %812
        %814 = vmax.xlane.f32.xlu0 %v734
        %v815 = vpop.xlane.xlu0 %814
        %816 = vmax.xlane.f32.xlu0 %v737
        %v817 = vpop.xlane.xlu0 %816
        %818 = vmax.xlane.f32.xlu0 %v740
        %v819 = vpop.xlane.xlu0 %818
        %820 = vmax.xlane.f32.xlu0 %v743
        %v821 = vpop.xlane.xlu0 %820
        %822 = vmax.xlane.f32.xlu0 %v746
        %v823 = vpop.xlane.xlu0 %822
        %824 = vmax.xlane.f32.xlu0 %v749
        %v825 = vpop.xlane.xlu0 %824
        %826 = vmax.xlane.f32.xlu0 %v752
        %v827 = vpop.xlane.xlu0 %826
        %828 = vmax.xlane.f32.xlu0 %v755
        %v829 = vpop.xlane.xlu0 %828
        %830 = vmax.xlane.f32.xlu0 %v758
        %v831 = vpop.xlane.xlu0 %830
        %832 = vmax.xlane.f32.xlu0 %v761
        %v833 = vpop.xlane.xlu0 %832
        %834 = vmax.xlane.f32.xlu0 %v764
        %v835 = vpop.xlane.xlu0 %834
        %836 = vmax.xlane.f32.xlu0 %v767
        %v837 = vpop.xlane.xlu0 %836
        %838 = vmax.xlane.f32.xlu0 %v770
        %v839 = vpop.xlane.xlu0 %838
        %840 = vmax.xlane.f32.xlu0 %v773
        %v841 = vpop.xlane.xlu0 %840
        %842 = vmax.xlane.f32.xlu0 %v776
        %v843 = vpop.xlane.xlu0 %842
        %844 = vmax.xlane.f32.xlu0 %v779
        %v845 = vpop.xlane.xlu0 %844
        %846 = vmax.xlane.f32.xlu0 %v782
        %v847 = vpop.xlane.xlu0 %846
        %vm848 = vcmp.eq.f32.partialorder %v689, %v785
        %vm849 = vcmp.eq.f32.partialorder %v692, %v787
        %vm850 = vcmp.eq.f32.partialorder %v695, %v789
        %vm851 = vcmp.eq.f32.partialorder %v698, %v791
        %vm852 = vcmp.eq.f32.partialorder %v701, %v793
        %vm853 = vcmp.eq.f32.partialorder %v704, %v795
        %vm854 = vcmp.eq.f32.partialorder %v707, %v797
        %vm855 = vcmp.eq.f32.partialorder %v710, %v799
        %vm856 = vcmp.eq.f32.partialorder %v713, %v801
        %vm857 = vcmp.eq.f32.partialorder %v716, %v803
        %vm858 = vcmp.eq.f32.partialorder %v719, %v805
        %vm859 = vcmp.eq.f32.partialorder %v722, %v807
        %vm860 = vcmp.eq.f32.partialorder %v725, %v809
        %vm861 = vcmp.eq.f32.partialorder %v728, %v811
        %vm862 = vcmp.eq.f32.partialorder %v731, %v813
        %vm863 = vcmp.eq.f32.partialorder %v734, %v815
        %vm864 = vcmp.eq.f32.partialorder %v737, %v817
        %vm865 = vcmp.eq.f32.partialorder %v740, %v819
        %vm866 = vcmp.eq.f32.partialorder %v743, %v821
        %vm867 = vcmp.eq.f32.partialorder %v746, %v823
        %vm868 = vcmp.eq.f32.partialorder %v749, %v825
        %vm869 = vcmp.eq.f32.partialorder %v752, %v827
        %vm870 = vcmp.eq.f32.partialorder %v755, %v829
        %vm871 = vcmp.eq.f32.partialorder %v758, %v831
        %vm872 = vcmp.eq.f32.partialorder %v761, %v833
        %vm873 = vcmp.eq.f32.partialorder %v764, %v835
        %vm874 = vcmp.eq.f32.partialorder %v767, %v837
        %vm875 = vcmp.eq.f32.partialorder %v770, %v839
        %vm876 = vcmp.eq.f32.partialorder %v773, %v841
        %vm877 = vcmp.eq.f32.partialorder %v776, %v843
        %vm878 = vcmp.eq.f32.partialorder %v779, %v845
        %vm879 = vcmp.eq.f32.partialorder %v782, %v847
        %v880 = vsel %vm848, %v354, 128
        %v881 = vsel %vm849, %v354, 128
        %v882 = vsel %vm850, %v354, 128
        %v883 = vsel %vm851, %v354, 128
        %v884 = vsel %vm852, %v354, 128
        %v885 = vsel %vm853, %v354, 128
        %v886 = vsel %vm854, %v354, 128
        %v887 = vsel %vm855, %v354, 128
        %v888 = vsel %vm856, %v354, 128
        %v889 = vsel %vm857, %v354, 128
        %v890 = vsel %vm858, %v354, 128
        %v891 = vsel %vm859, %v354, 128
        %v892 = vsel %vm860, %v354, 128
        %v893 = vsel %vm861, %v354, 128
        %v894 = vsel %vm862, %v354, 128
        %v895 = vsel %vm863, %v354, 128
        %v896 = vsel %vm864, %v354, 128
        %v897 = vsel %vm865, %v354, 128
        %v898 = vsel %vm866, %v354, 128
        %v899 = vsel %vm867, %v354, 128
        %v900 = vsel %vm868, %v354, 128
        %v901 = vsel %vm869, %v354, 128
        %v902 = vsel %vm870, %v354, 128
        %v903 = vsel %vm871, %v354, 128
        %v904 = vsel %vm872, %v354, 128
        %v905 = vsel %vm873, %v354, 128
        %v906 = vsel %vm874, %v354, 128
        %v907 = vsel %vm875, %v354, 128
        %v908 = vsel %vm876, %v354, 128
        %v909 = vsel %vm877, %v354, 128
        %v910 = vsel %vm878, %v354, 128
        %v911 = vsel %vm879, %v354, 128
        %v912 = vand.u32 %v880, 65535
        %v913 = vshra.s32 %v880, 16
        %v914 = vcvt.s32.f32 %v912
        %v915 = vcvt.s32.f32 %v913
        %916 = vmin.xlane.f32.xlu0 %v915
        %v917 = vpop.xlane.xlu0 %916
        %vm918 = vcmp.eq.f32.partialorder %v915, %v917
        %v919 = vsel %vm918, %v914, inf
        %920 = vmin.xlane.f32.xlu0 %v919
        %v921 = vpop.xlane.xlu0 %920
        %v922 = vcvt.f32.s32 %v921
        %v923 = vcvt.f32.s32 %v917
        %v924 = vshll.u32 %v923, 16
        %v925 = vadd.s32 %v924, %v922
        %v926 = vand.u32 %v881, 65535
        %v927 = vshra.s32 %v881, 16
        %v928 = vcvt.s32.f32 %v926
        %v929 = vcvt.s32.f32 %v927
        %930 = vmin.xlane.f32.xlu0 %v929
        %v931 = vpop.xlane.xlu0 %930
        %vm932 = vcmp.eq.f32.partialorder %v929, %v931
        %v933 = vsel %vm932, %v928, inf
        %934 = vmin.xlane.f32.xlu0 %v933
        %v935 = vpop.xlane.xlu0 %934
        %v936 = vcvt.f32.s32 %v935
        %v937 = vcvt.f32.s32 %v931
        %v938 = vshll.u32 %v937, 16
        %v939 = vadd.s32 %v938, %v936
        %v940 = vand.u32 %v882, 65535
        %v941 = vshra.s32 %v882, 16
        %v942 = vcvt.s32.f32 %v940
        %v943 = vcvt.s32.f32 %v941
        %944 = vmin.xlane.f32.xlu0 %v943
        %v945 = vpop.xlane.xlu0 %944
        %vm946 = vcmp.eq.f32.partialorder %v943, %v945
        %v947 = vsel %vm946, %v942, inf
        %948 = vmin.xlane.f32.xlu0 %v947
        %v949 = vpop.xlane.xlu0 %948
        %v950 = vcvt.f32.s32 %v949
        %v951 = vcvt.f32.s32 %v945
        %v952 = vshll.u32 %v951, 16
        %v953 = vadd.s32 %v952, %v950
        %v954 = vand.u32 %v883, 65535
        %v955 = vshra.s32 %v883, 16
        %v956 = vcvt.s32.f32 %v954
        %v957 = vcvt.s32.f32 %v955
        %958 = vmin.xlane.f32.xlu0 %v957
        %v959 = vpop.xlane.xlu0 %958
        %vm960 = vcmp.eq.f32.partialorder %v957, %v959
        %v961 = vsel %vm960, %v956, inf
        %962 = vmin.xlane.f32.xlu0 %v961
        %v963 = vpop.xlane.xlu0 %962
        %v964 = vcvt.f32.s32 %v963
        %v965 = vcvt.f32.s32 %v959
        %v966 = vshll.u32 %v965, 16
        %v967 = vadd.s32 %v966, %v964
        %v968 = vand.u32 %v884, 65535
        %v969 = vshra.s32 %v884, 16
        %v970 = vcvt.s32.f32 %v968
        %v971 = vcvt.s32.f32 %v969
        %972 = vmin.xlane.f32.xlu0 %v971
        %v973 = vpop.xlane.xlu0 %972
        %vm974 = vcmp.eq.f32.partialorder %v971, %v973
        %v975 = vsel %vm974, %v970, inf
        %976 = vmin.xlane.f32.xlu0 %v975
        %v977 = vpop.xlane.xlu0 %976
        %v978 = vcvt.f32.s32 %v977
        %v979 = vcvt.f32.s32 %v973
        %v980 = vshll.u32 %v979, 16
        %v981 = vadd.s32 %v980, %v978
        %v982 = vand.u32 %v885, 65535
        %v983 = vshra.s32 %v885, 16
        %v984 = vcvt.s32.f32 %v982
        %v985 = vcvt.s32.f32 %v983
        %986 = vmin.xlane.f32.xlu0 %v985
        %v987 = vpop.xlane.xlu0 %986
        %vm988 = vcmp.eq.f32.partialorder %v985, %v987
        %v989 = vsel %vm988, %v984, inf
        %990 = vmin.xlane.f32.xlu0 %v989
        %v991 = vpop.xlane.xlu0 %990
        %v992 = vcvt.f32.s32 %v991
        %v993 = vcvt.f32.s32 %v987
        %v994 = vshll.u32 %v993, 16
        %v995 = vadd.s32 %v994, %v992
        %v996 = vand.u32 %v886, 65535
        %v997 = vshra.s32 %v886, 16
        %v998 = vcvt.s32.f32 %v996
        %v999 = vcvt.s32.f32 %v997
        %1000 = vmin.xlane.f32.xlu0 %v999
        %v1001 = vpop.xlane.xlu0 %1000
        %vm1002 = vcmp.eq.f32.partialorder %v999, %v1001
        %v1003 = vsel %vm1002, %v998, inf
        %1004 = vmin.xlane.f32.xlu0 %v1003
        %v1005 = vpop.xlane.xlu0 %1004
        %v1006 = vcvt.f32.s32 %v1005
        %v1007 = vcvt.f32.s32 %v1001
        %v1008 = vshll.u32 %v1007, 16
        %v1009 = vadd.s32 %v1008, %v1006
        %v1010 = vand.u32 %v887, 65535
        %v1011 = vshra.s32 %v887, 16
        %v1012 = vcvt.s32.f32 %v1010
        %v1013 = vcvt.s32.f32 %v1011
        %1014 = vmin.xlane.f32.xlu0 %v1013
        %v1015 = vpop.xlane.xlu0 %1014
        %vm1016 = vcmp.eq.f32.partialorder %v1013, %v1015
        %v1017 = vsel %vm1016, %v1012, inf
        %1018 = vmin.xlane.f32.xlu0 %v1017
        %v1019 = vpop.xlane.xlu0 %1018
        %v1020 = vcvt.f32.s32 %v1019
        %v1021 = vcvt.f32.s32 %v1015
        %v1022 = vshll.u32 %v1021, 16
        %v1023 = vadd.s32 %v1022, %v1020
        %v1024 = vand.u32 %v888, 65535
        %v1025 = vshra.s32 %v888, 16
        %v1026 = vcvt.s32.f32 %v1024
        %v1027 = vcvt.s32.f32 %v1025
        %1028 = vmin.xlane.f32.xlu0 %v1027
        %v1029 = vpop.xlane.xlu0 %1028
        %vm1030 = vcmp.eq.f32.partialorder %v1027, %v1029
        %v1031 = vsel %vm1030, %v1026, inf
        %1032 = vmin.xlane.f32.xlu0 %v1031
        %v1033 = vpop.xlane.xlu0 %1032
        %v1034 = vcvt.f32.s32 %v1033
        %v1035 = vcvt.f32.s32 %v1029
        %v1036 = vshll.u32 %v1035, 16
        %v1037 = vadd.s32 %v1036, %v1034
        %v1038 = vand.u32 %v889, 65535
        %v1039 = vshra.s32 %v889, 16
        %v1040 = vcvt.s32.f32 %v1038
        %v1041 = vcvt.s32.f32 %v1039
        %1042 = vmin.xlane.f32.xlu0 %v1041
        %v1043 = vpop.xlane.xlu0 %1042
        %vm1044 = vcmp.eq.f32.partialorder %v1041, %v1043
        %v1045 = vsel %vm1044, %v1040, inf
        %1046 = vmin.xlane.f32.xlu0 %v1045
        %v1047 = vpop.xlane.xlu0 %1046
        %v1048 = vcvt.f32.s32 %v1047
        %v1049 = vcvt.f32.s32 %v1043
        %v1050 = vshll.u32 %v1049, 16
        %v1051 = vadd.s32 %v1050, %v1048
        %v1052 = vand.u32 %v890, 65535
        %v1053 = vshra.s32 %v890, 16
        %v1054 = vcvt.s32.f32 %v1052
        %v1055 = vcvt.s32.f32 %v1053
        %1056 = vmin.xlane.f32.xlu0 %v1055
        %v1057 = vpop.xlane.xlu0 %1056
        %vm1058 = vcmp.eq.f32.partialorder %v1055, %v1057
        %v1059 = vsel %vm1058, %v1054, inf
        %1060 = vmin.xlane.f32.xlu0 %v1059
        %v1061 = vpop.xlane.xlu0 %1060
        %v1062 = vcvt.f32.s32 %v1061
        %v1063 = vcvt.f32.s32 %v1057
        %v1064 = vshll.u32 %v1063, 16
        %v1065 = vadd.s32 %v1064, %v1062
        %v1066 = vand.u32 %v891, 65535
        %v1067 = vshra.s32 %v891, 16
        %v1068 = vcvt.s32.f32 %v1066
        %v1069 = vcvt.s32.f32 %v1067
        %1070 = vmin.xlane.f32.xlu0 %v1069
        %v1071 = vpop.xlane.xlu0 %1070
        %vm1072 = vcmp.eq.f32.partialorder %v1069, %v1071
        %v1073 = vsel %vm1072, %v1068, inf
        %1074 = vmin.xlane.f32.xlu0 %v1073
        %v1075 = vpop.xlane.xlu0 %1074
        %v1076 = vcvt.f32.s32 %v1075
        %v1077 = vcvt.f32.s32 %v1071
        %v1078 = vshll.u32 %v1077, 16
        %v1079 = vadd.s32 %v1078, %v1076
        %v1080 = vand.u32 %v892, 65535
        %v1081 = vshra.s32 %v892, 16
        %v1082 = vcvt.s32.f32 %v1080
        %v1083 = vcvt.s32.f32 %v1081
        %1084 = vmin.xlane.f32.xlu0 %v1083
        %v1085 = vpop.xlane.xlu0 %1084
        %vm1086 = vcmp.eq.f32.partialorder %v1083, %v1085
        %v1087 = vsel %vm1086, %v1082, inf
        %1088 = vmin.xlane.f32.xlu0 %v1087
        %v1089 = vpop.xlane.xlu0 %1088
        %v1090 = vcvt.f32.s32 %v1089
        %v1091 = vcvt.f32.s32 %v1085
        %v1092 = vshll.u32 %v1091, 16
        %v1093 = vadd.s32 %v1092, %v1090
        %v1094 = vand.u32 %v893, 65535
        %v1095 = vshra.s32 %v893, 16
        %v1096 = vcvt.s32.f32 %v1094
        %v1097 = vcvt.s32.f32 %v1095
        %1098 = vmin.xlane.f32.xlu0 %v1097
        %v1099 = vpop.xlane.xlu0 %1098
        %vm1100 = vcmp.eq.f32.partialorder %v1097, %v1099
        %v1101 = vsel %vm1100, %v1096, inf
        %1102 = vmin.xlane.f32.xlu0 %v1101
        %v1103 = vpop.xlane.xlu0 %1102
        %v1104 = vcvt.f32.s32 %v1103
        %v1105 = vcvt.f32.s32 %v1099
        %v1106 = vshll.u32 %v1105, 16
        %v1107 = vadd.s32 %v1106, %v1104
        %v1108 = vand.u32 %v894, 65535
        %v1109 = vshra.s32 %v894, 16
        %v1110 = vcvt.s32.f32 %v1108
        %v1111 = vcvt.s32.f32 %v1109
        %1112 = vmin.xlane.f32.xlu0 %v1111
        %v1113 = vpop.xlane.xlu0 %1112
        %vm1114 = vcmp.eq.f32.partialorder %v1111, %v1113
        %v1115 = vsel %vm1114, %v1110, inf
        %1116 = vmin.xlane.f32.xlu0 %v1115
        %v1117 = vpop.xlane.xlu0 %1116
        %v1118 = vcvt.f32.s32 %v1117
        %v1119 = vcvt.f32.s32 %v1113
        %v1120 = vshll.u32 %v1119, 16
        %v1121 = vadd.s32 %v1120, %v1118
        %v1122 = vand.u32 %v895, 65535
        %v1123 = vshra.s32 %v895, 16
        %v1124 = vcvt.s32.f32 %v1122
        %v1125 = vcvt.s32.f32 %v1123
        %1126 = vmin.xlane.f32.xlu0 %v1125
        %v1127 = vpop.xlane.xlu0 %1126
        %vm1128 = vcmp.eq.f32.partialorder %v1125, %v1127
        %v1129 = vsel %vm1128, %v1124, inf
        %1130 = vmin.xlane.f32.xlu0 %v1129
        %v1131 = vpop.xlane.xlu0 %1130
        %v1132 = vcvt.f32.s32 %v1131
        %v1133 = vcvt.f32.s32 %v1127
        %v1134 = vshll.u32 %v1133, 16
        %v1135 = vadd.s32 %v1134, %v1132
        %v1136 = vand.u32 %v896, 65535
        %v1137 = vshra.s32 %v896, 16
        %v1138 = vcvt.s32.f32 %v1136
        %v1139 = vcvt.s32.f32 %v1137
        %1140 = vmin.xlane.f32.xlu0 %v1139
        %v1141 = vpop.xlane.xlu0 %1140
        %vm1142 = vcmp.eq.f32.partialorder %v1139, %v1141
        %v1143 = vsel %vm1142, %v1138, inf
        %1144 = vmin.xlane.f32.xlu0 %v1143
        %v1145 = vpop.xlane.xlu0 %1144
        %v1146 = vcvt.f32.s32 %v1145
        %v1147 = vcvt.f32.s32 %v1141
        %v1148 = vshll.u32 %v1147, 16
        %v1149 = vadd.s32 %v1148, %v1146
        %v1150 = vand.u32 %v897, 65535
        %v1151 = vshra.s32 %v897, 16
        %v1152 = vcvt.s32.f32 %v1150
        %v1153 = vcvt.s32.f32 %v1151
        %1154 = vmin.xlane.f32.xlu0 %v1153
        %v1155 = vpop.xlane.xlu0 %1154
        %vm1156 = vcmp.eq.f32.partialorder %v1153, %v1155
        %v1157 = vsel %vm1156, %v1152, inf
        %1158 = vmin.xlane.f32.xlu0 %v1157
        %v1159 = vpop.xlane.xlu0 %1158
        %v1160 = vcvt.f32.s32 %v1159
        %v1161 = vcvt.f32.s32 %v1155
        %v1162 = vshll.u32 %v1161, 16
        %v1163 = vadd.s32 %v1162, %v1160
        %v1164 = vand.u32 %v898, 65535
        %v1165 = vshra.s32 %v898, 16
        %v1166 = vcvt.s32.f32 %v1164
        %v1167 = vcvt.s32.f32 %v1165
        %1168 = vmin.xlane.f32.xlu0 %v1167
        %v1169 = vpop.xlane.xlu0 %1168
        %vm1170 = vcmp.eq.f32.partialorder %v1167, %v1169
        %v1171 = vsel %vm1170, %v1166, inf
        %1172 = vmin.xlane.f32.xlu0 %v1171
        %v1173 = vpop.xlane.xlu0 %1172
        %v1174 = vcvt.f32.s32 %v1173
        %v1175 = vcvt.f32.s32 %v1169
        %v1176 = vshll.u32 %v1175, 16
        %v1177 = vadd.s32 %v1176, %v1174
        %v1178 = vand.u32 %v899, 65535
        %v1179 = vshra.s32 %v899, 16
        %v1180 = vcvt.s32.f32 %v1178
        %v1181 = vcvt.s32.f32 %v1179
        %1182 = vmin.xlane.f32.xlu0 %v1181
        %v1183 = vpop.xlane.xlu0 %1182
        %vm1184 = vcmp.eq.f32.partialorder %v1181, %v1183
        %v1185 = vsel %vm1184, %v1180, inf
        %1186 = vmin.xlane.f32.xlu0 %v1185
        %v1187 = vpop.xlane.xlu0 %1186
        %v1188 = vcvt.f32.s32 %v1187
        %v1189 = vcvt.f32.s32 %v1183
        %v1190 = vshll.u32 %v1189, 16
        %v1191 = vadd.s32 %v1190, %v1188
        %v1192 = vand.u32 %v900, 65535
        %v1193 = vshra.s32 %v900, 16
        %v1194 = vcvt.s32.f32 %v1192
        %v1195 = vcvt.s32.f32 %v1193
        %1196 = vmin.xlane.f32.xlu0 %v1195
        %v1197 = vpop.xlane.xlu0 %1196
        %vm1198 = vcmp.eq.f32.partialorder %v1195, %v1197
        %v1199 = vsel %vm1198, %v1194, inf
        %1200 = vmin.xlane.f32.xlu0 %v1199
        %v1201 = vpop.xlane.xlu0 %1200
        %v1202 = vcvt.f32.s32 %v1201
        %v1203 = vcvt.f32.s32 %v1197
        %v1204 = vshll.u32 %v1203, 16
        %v1205 = vadd.s32 %v1204, %v1202
        %v1206 = vand.u32 %v901, 65535
        %v1207 = vshra.s32 %v901, 16
        %v1208 = vcvt.s32.f32 %v1206
        %v1209 = vcvt.s32.f32 %v1207
        %1210 = vmin.xlane.f32.xlu0 %v1209
        %v1211 = vpop.xlane.xlu0 %1210
        %vm1212 = vcmp.eq.f32.partialorder %v1209, %v1211
        %v1213 = vsel %vm1212, %v1208, inf
        %1214 = vmin.xlane.f32.xlu0 %v1213
        %v1215 = vpop.xlane.xlu0 %1214
        %v1216 = vcvt.f32.s32 %v1215
        %v1217 = vcvt.f32.s32 %v1211
        %v1218 = vshll.u32 %v1217, 16
        %v1219 = vadd.s32 %v1218, %v1216
        %v1220 = vand.u32 %v902, 65535
        %v1221 = vshra.s32 %v902, 16
        %v1222 = vcvt.s32.f32 %v1220
        %v1223 = vcvt.s32.f32 %v1221
        %1224 = vmin.xlane.f32.xlu0 %v1223
        %v1225 = vpop.xlane.xlu0 %1224
        %vm1226 = vcmp.eq.f32.partialorder %v1223, %v1225
        %v1227 = vsel %vm1226, %v1222, inf
        %1228 = vmin.xlane.f32.xlu0 %v1227
        %v1229 = vpop.xlane.xlu0 %1228
        %v1230 = vcvt.f32.s32 %v1229
        %v1231 = vcvt.f32.s32 %v1225
        %v1232 = vshll.u32 %v1231, 16
        %v1233 = vadd.s32 %v1232, %v1230
        %v1234 = vand.u32 %v903, 65535
        %v1235 = vshra.s32 %v903, 16
        %v1236 = vcvt.s32.f32 %v1234
        %v1237 = vcvt.s32.f32 %v1235
        %1238 = vmin.xlane.f32.xlu0 %v1237
        %v1239 = vpop.xlane.xlu0 %1238
        %vm1240 = vcmp.eq.f32.partialorder %v1237, %v1239
        %v1241 = vsel %vm1240, %v1236, inf
        %1242 = vmin.xlane.f32.xlu0 %v1241
        %v1243 = vpop.xlane.xlu0 %1242
        %v1244 = vcvt.f32.s32 %v1243
        %v1245 = vcvt.f32.s32 %v1239
        %v1246 = vshll.u32 %v1245, 16
        %v1247 = vadd.s32 %v1246, %v1244
        %v1248 = vand.u32 %v904, 65535
        %v1249 = vshra.s32 %v904, 16
        %v1250 = vcvt.s32.f32 %v1248
        %v1251 = vcvt.s32.f32 %v1249
        %1252 = vmin.xlane.f32.xlu0 %v1251
        %v1253 = vpop.xlane.xlu0 %1252
        %vm1254 = vcmp.eq.f32.partialorder %v1251, %v1253
        %v1255 = vsel %vm1254, %v1250, inf
        %1256 = vmin.xlane.f32.xlu0 %v1255
        %v1257 = vpop.xlane.xlu0 %1256
        %v1258 = vcvt.f32.s32 %v1257
        %v1259 = vcvt.f32.s32 %v1253
        %v1260 = vshll.u32 %v1259, 16
        %v1261 = vadd.s32 %v1260, %v1258
        %v1262 = vand.u32 %v905, 65535
        %v1263 = vshra.s32 %v905, 16
        %v1264 = vcvt.s32.f32 %v1262
        %v1265 = vcvt.s32.f32 %v1263
        %1266 = vmin.xlane.f32.xlu0 %v1265
        %v1267 = vpop.xlane.xlu0 %1266
        %vm1268 = vcmp.eq.f32.partialorder %v1265, %v1267
        %v1269 = vsel %vm1268, %v1264, inf
        %1270 = vmin.xlane.f32.xlu0 %v1269
        %v1271 = vpop.xlane.xlu0 %1270
        %v1272 = vcvt.f32.s32 %v1271
        %v1273 = vcvt.f32.s32 %v1267
        %v1274 = vshll.u32 %v1273, 16
        %v1275 = vadd.s32 %v1274, %v1272
        %v1276 = vand.u32 %v906, 65535
        %v1277 = vshra.s32 %v906, 16
        %v1278 = vcvt.s32.f32 %v1276
        %v1279 = vcvt.s32.f32 %v1277
        %1280 = vmin.xlane.f32.xlu0 %v1279
        %v1281 = vpop.xlane.xlu0 %1280
        %vm1282 = vcmp.eq.f32.partialorder %v1279, %v1281
        %v1283 = vsel %vm1282, %v1278, inf
        %1284 = vmin.xlane.f32.xlu0 %v1283
        %v1285 = vpop.xlane.xlu0 %1284
        %v1286 = vcvt.f32.s32 %v1285
        %v1287 = vcvt.f32.s32 %v1281
        %v1288 = vshll.u32 %v1287, 16
        %v1289 = vadd.s32 %v1288, %v1286
        %v1290 = vand.u32 %v907, 65535
        %v1291 = vshra.s32 %v907, 16
        %v1292 = vcvt.s32.f32 %v1290
        %v1293 = vcvt.s32.f32 %v1291
        %1294 = vmin.xlane.f32.xlu0 %v1293
        %v1295 = vpop.xlane.xlu0 %1294
        %vm1296 = vcmp.eq.f32.partialorder %v1293, %v1295
        %v1297 = vsel %vm1296, %v1292, inf
        %1298 = vmin.xlane.f32.xlu0 %v1297
        %v1299 = vpop.xlane.xlu0 %1298
        %v1300 = vcvt.f32.s32 %v1299
        %v1301 = vcvt.f32.s32 %v1295
        %v1302 = vshll.u32 %v1301, 16
        %v1303 = vadd.s32 %v1302, %v1300
        %v1304 = vand.u32 %v908, 65535
        %v1305 = vshra.s32 %v908, 16
        %v1306 = vcvt.s32.f32 %v1304
        %v1307 = vcvt.s32.f32 %v1305
        %1308 = vmin.xlane.f32.xlu0 %v1307
        %v1309 = vpop.xlane.xlu0 %1308
        %vm1310 = vcmp.eq.f32.partialorder %v1307, %v1309
        %v1311 = vsel %vm1310, %v1306, inf
        %1312 = vmin.xlane.f32.xlu0 %v1311
        %v1313 = vpop.xlane.xlu0 %1312
        %v1314 = vcvt.f32.s32 %v1313
        %v1315 = vcvt.f32.s32 %v1309
        %v1316 = vshll.u32 %v1315, 16
        %v1317 = vadd.s32 %v1316, %v1314
        %v1318 = vand.u32 %v909, 65535
        %v1319 = vshra.s32 %v909, 16
        %v1320 = vcvt.s32.f32 %v1318
        %v1321 = vcvt.s32.f32 %v1319
        %1322 = vmin.xlane.f32.xlu0 %v1321
        %v1323 = vpop.xlane.xlu0 %1322
        %vm1324 = vcmp.eq.f32.partialorder %v1321, %v1323
        %v1325 = vsel %vm1324, %v1320, inf
        %1326 = vmin.xlane.f32.xlu0 %v1325
        %v1327 = vpop.xlane.xlu0 %1326
        %v1328 = vcvt.f32.s32 %v1327
        %v1329 = vcvt.f32.s32 %v1323
        %v1330 = vshll.u32 %v1329, 16
        %v1331 = vadd.s32 %v1330, %v1328
        %v1332 = vand.u32 %v910, 65535
        %v1333 = vshra.s32 %v910, 16
        %v1334 = vcvt.s32.f32 %v1332
        %v1335 = vcvt.s32.f32 %v1333
        %1336 = vmin.xlane.f32.xlu0 %v1335
        %v1337 = vpop.xlane.xlu0 %1336
        %vm1338 = vcmp.eq.f32.partialorder %v1335, %v1337
        %v1339 = vsel %vm1338, %v1334, inf
        %1340 = vmin.xlane.f32.xlu0 %v1339
        %v1341 = vpop.xlane.xlu0 %1340
        %v1342 = vcvt.f32.s32 %v1341
        %v1343 = vcvt.f32.s32 %v1337
        %v1344 = vshll.u32 %v1343, 16
        %v1345 = vadd.s32 %v1344, %v1342
        %v1346 = vand.u32 %v911, 65535
        %v1347 = vshra.s32 %v911, 16
        %v1348 = vcvt.s32.f32 %v1346
        %v1349 = vcvt.s32.f32 %v1347
        %1350 = vmin.xlane.f32.xlu0 %v1349
        %v1351 = vpop.xlane.xlu0 %1350
        %vm1352 = vcmp.eq.f32.partialorder %v1349, %v1351
        %v1353 = vsel %vm1352, %v1348, inf
        %1354 = vmin.xlane.f32.xlu0 %v1353
        %v1355 = vpop.xlane.xlu0 %1354
        %v1356 = vcvt.f32.s32 %v1355
        %v1357 = vcvt.f32.s32 %v1351
        %v1358 = vshll.u32 %v1357, 16
        %v1359 = vadd.s32 %v1358, %v1356
        %vm1360 = vcmp.eq.s32.totalorder %v354, %v925
        %vm1361 = vcmp.eq.s32.totalorder %v354, %v939
        %vm1362 = vcmp.eq.s32.totalorder %v354, %v953
        %vm1363 = vcmp.eq.s32.totalorder %v354, %v967
        %vm1364 = vcmp.eq.s32.totalorder %v354, %v981
        %vm1365 = vcmp.eq.s32.totalorder %v354, %v995
        %vm1366 = vcmp.eq.s32.totalorder %v354, %v1009
        %vm1367 = vcmp.eq.s32.totalorder %v354, %v1023
        %vm1368 = vcmp.eq.s32.totalorder %v354, %v1037
        %vm1369 = vcmp.eq.s32.totalorder %v354, %v1051
        %vm1370 = vcmp.eq.s32.totalorder %v354, %v1065
        %vm1371 = vcmp.eq.s32.totalorder %v354, %v1079
        %vm1372 = vcmp.eq.s32.totalorder %v354, %v1093
        %vm1373 = vcmp.eq.s32.totalorder %v354, %v1107
        %vm1374 = vcmp.eq.s32.totalorder %v354, %v1121
        %vm1375 = vcmp.eq.s32.totalorder %v354, %v1135
        %vm1376 = vcmp.eq.s32.totalorder %v354, %v1149
        %vm1377 = vcmp.eq.s32.totalorder %v354, %v1163
        %vm1378 = vcmp.eq.s32.totalorder %v354, %v1177
        %vm1379 = vcmp.eq.s32.totalorder %v354, %v1191
        %vm1380 = vcmp.eq.s32.totalorder %v354, %v1205
        %vm1381 = vcmp.eq.s32.totalorder %v354, %v1219
        %vm1382 = vcmp.eq.s32.totalorder %v354, %v1233
        %vm1383 = vcmp.eq.s32.totalorder %v354, %v1247
        %vm1384 = vcmp.eq.s32.totalorder %v354, %v1261
        %vm1385 = vcmp.eq.s32.totalorder %v354, %v1275
        %vm1386 = vcmp.eq.s32.totalorder %v354, %v1289
        %vm1387 = vcmp.eq.s32.totalorder %v354, %v1303
        %vm1388 = vcmp.eq.s32.totalorder %v354, %v1317
        %vm1389 = vcmp.eq.s32.totalorder %v354, %v1331
        %vm1390 = vcmp.eq.s32.totalorder %v354, %v1345
        %vm1391 = vcmp.eq.s32.totalorder %v354, %v1359
        %v1392 = vsel %vm1360, 1, 0
        %v1393 = vsel %vm1361, 1, 0
        %v1394 = vsel %vm1362, 1, 0
        %v1395 = vsel %vm1363, 1, 0
        %v1396 = vsel %vm1364, 1, 0
        %v1397 = vsel %vm1365, 1, 0
        %v1398 = vsel %vm1366, 1, 0
        %v1399 = vsel %vm1367, 1, 0
        %v1400 = vsel %vm1368, 1, 0
        %v1401 = vsel %vm1369, 1, 0
        %v1402 = vsel %vm1370, 1, 0
        %v1403 = vsel %vm1371, 1, 0
        %v1404 = vsel %vm1372, 1, 0
        %v1405 = vsel %vm1373, 1, 0
        %v1406 = vsel %vm1374, 1, 0
        %v1407 = vsel %vm1375, 1, 0
        %v1408 = vsel %vm1376, 1, 0
        %v1409 = vsel %vm1377, 1, 0
        %v1410 = vsel %vm1378, 1, 0
        %v1411 = vsel %vm1379, 1, 0
        %v1412 = vsel %vm1380, 1, 0
        %v1413 = vsel %vm1381, 1, 0
        %v1414 = vsel %vm1382, 1, 0
        %v1415 = vsel %vm1383, 1, 0
        %v1416 = vsel %vm1384, 1, 0
        %v1417 = vsel %vm1385, 1, 0
        %v1418 = vsel %vm1386, 1, 0
        %v1419 = vsel %vm1387, 1, 0
        %v1420 = vsel %vm1388, 1, 0
        %v1421 = vsel %vm1389, 1, 0
        %v1422 = vsel %vm1390, 1, 0
        %v1423 = vsel %vm1391, 1, 0
        %v1424 = vcvt.s32.f32 %v1392
        %v1425 = vcvt.s32.f32 %v1393
        %v1426 = vcvt.s32.f32 %v1394
        %v1427 = vcvt.s32.f32 %v1395
        %v1428 = vcvt.s32.f32 %v1396
        %v1429 = vcvt.s32.f32 %v1397
        %v1430 = vcvt.s32.f32 %v1398
        %v1431 = vcvt.s32.f32 %v1399
        %v1432 = vcvt.s32.f32 %v1400
        %v1433 = vcvt.s32.f32 %v1401
        %v1434 = vcvt.s32.f32 %v1402
        %v1435 = vcvt.s32.f32 %v1403
        %v1436 = vcvt.s32.f32 %v1404
        %v1437 = vcvt.s32.f32 %v1405
        %v1438 = vcvt.s32.f32 %v1406
        %v1439 = vcvt.s32.f32 %v1407
        %v1440 = vcvt.s32.f32 %v1408
        %v1441 = vcvt.s32.f32 %v1409
        %v1442 = vcvt.s32.f32 %v1410
        %v1443 = vcvt.s32.f32 %v1411
        %v1444 = vcvt.s32.f32 %v1412
        %v1445 = vcvt.s32.f32 %v1413
        %v1446 = vcvt.s32.f32 %v1414
        %v1447 = vcvt.s32.f32 %v1415
        %v1448 = vcvt.s32.f32 %v1416
        %v1449 = vcvt.s32.f32 %v1417
        %v1450 = vcvt.s32.f32 %v1418
        %v1451 = vcvt.s32.f32 %v1419
        %v1452 = vcvt.s32.f32 %v1420
        %v1453 = vcvt.s32.f32 %v1421
        %v1454 = vcvt.s32.f32 %v1422
        %v1455 = vcvt.s32.f32 %v1423
        %v1456 = vld [vmem:[%s4] sm:$0xff]
        %v1457 = vld [vmem:[%s4 + $0x8] sm:$0xff]
        %v1458 = vld [vmem:[%s4 + $0x10] sm:$0xff]
        %v1459 = vld [vmem:[%s4 + $0x18] sm:$0xff]
        %v1460 = vld [vmem:[%s4 + $0x20] sm:$0xff]
        %v1461 = vld [vmem:[%s4 + $0x28] sm:$0xff]
        %v1462 = vld [vmem:[%s4 + $0x30] sm:$0xff]
        %v1463 = vld [vmem:[%s4 + $0x38] sm:$0xff]
        %v1464 = vld [vmem:[%s4 + $0x40] sm:$0xff]
        %v1465 = vld [vmem:[%s4 + $0x48] sm:$0xff]
        %v1466 = vld [vmem:[%s4 + $0x50] sm:$0xff]
        %v1467 = vld [vmem:[%s4 + $0x58] sm:$0xff]
        %v1468 = vld [vmem:[%s4 + $0x60] sm:$0xff]
        %v1469 = vld [vmem:[%s4 + $0x68] sm:$0xff]
        %v1470 = vld [vmem:[%s4 + $0x70] sm:$0xff]
        %v1471 = vld [vmem:[%s4 + $0x78] sm:$0xff]
        %1472 = vmatpush.msra.mxu0 %v1471
        %1473 = vmatpush.msra.mxu0 %v1470
        %1474 = vmatpush.msra.mxu0 %v1469
        %1475 = vmatpush.msra.mxu0 %v1468
        %1476 = vmatpush.msra.mxu0 %v1467
        %1477 = vmatpush.msra.mxu0 %v1466
        %1478 = vmatpush.msra.mxu0 %v1465
        %1479 = vmatpush.msra.mxu0 %v1464
        %1480 = vmatpush.msra.mxu0 %v1463
        %1481 = vmatpush.msra.mxu0 %v1462
        %1482 = vmatpush.msra.mxu0 %v1461
        %1483 = vmatpush.msra.mxu0 %v1460
        %1484 = vmatpush.msra.mxu0 %v1459
        %1485 = vmatpush.msra.mxu0 %v1458
        %1486 = vmatpush.msra.mxu0 %v1457
        %1487 = vmatpush.msra.mxu0 %v1456
        %1488 = vmatmul.f32.gmra.mxu0 %v1424
        %v1489 = vpop.f32.mrf.mxu0
        %v1490 = vadd.f32 0.0, %v1489
        %1491 = vmatmul.f32.gmra.mxu0 %v1425
        %v1492 = vpop.f32.mrf.mxu0
        %v1493 = vadd.f32 0.0, %v1492
        %1494 = vmatmul.f32.gmra.mxu0 %v1426
        %v1495 = vpop.f32.mrf.mxu0
        %v1496 = vadd.f32 0.0, %v1495
        %1497 = vmatmul.f32.gmra.mxu0 %v1427
        %v1498 = vpop.f32.mrf.mxu0
        %v1499 = vadd.f32 0.0, %v1498
        %1500 = vmatmul.f32.gmra.mxu0 %v1428
        %v1501 = vpop.f32.mrf.mxu0
        %v1502 = vadd.f32 0.0, %v1501
        %1503 = vmatmul.f32.gmra.mxu0 %v1429
        %v1504 = vpop.f32.mrf.mxu0
        %v1505 = vadd.f32 0.0, %v1504
        %1506 = vmatmul.f32.gmra.mxu0 %v1430
        %v1507 = vpop.f32.mrf.mxu0
        %v1508 = vadd.f32 0.0, %v1507
        %1509 = vmatmul.f32.gmra.mxu0 %v1431
        %v1510 = vpop.f32.mrf.mxu0
        %v1511 = vadd.f32 0.0, %v1510
        %1512 = vmatmul.f32.gmra.mxu0 %v1432
        %v1513 = vpop.f32.mrf.mxu0
        %v1514 = vadd.f32 0.0, %v1513
        %1515 = vmatmul.f32.gmra.mxu0 %v1433
        %v1516 = vpop.f32.mrf.mxu0
        %v1517 = vadd.f32 0.0, %v1516
        %1518 = vmatmul.f32.gmra.mxu0 %v1434
        %v1519 = vpop.f32.mrf.mxu0
        %v1520 = vadd.f32 0.0, %v1519
        %1521 = vmatmul.f32.gmra.mxu0 %v1435
        %v1522 = vpop.f32.mrf.mxu0
        %v1523 = vadd.f32 0.0, %v1522
        %1524 = vmatmul.f32.gmra.mxu0 %v1436
        %v1525 = vpop.f32.mrf.mxu0
        %v1526 = vadd.f32 0.0, %v1525
        %1527 = vmatmul.f32.gmra.mxu0 %v1437
        %v1528 = vpop.f32.mrf.mxu0
        %v1529 = vadd.f32 0.0, %v1528
        %1530 = vmatmul.f32.gmra.mxu0 %v1438
        %v1531 = vpop.f32.mrf.mxu0
        %v1532 = vadd.f32 0.0, %v1531
        %1533 = vmatmul.f32.gmra.mxu0 %v1439
        %v1534 = vpop.f32.mrf.mxu0
        %v1535 = vadd.f32 0.0, %v1534
        %1536 = vmatmul.f32.gmra.mxu0 %v1440
        %v1537 = vpop.f32.mrf.mxu0
        %v1538 = vadd.f32 0.0, %v1537
        %1539 = vmatmul.f32.gmra.mxu0 %v1441
        %v1540 = vpop.f32.mrf.mxu0
        %v1541 = vadd.f32 0.0, %v1540
        %1542 = vmatmul.f32.gmra.mxu0 %v1442
        %v1543 = vpop.f32.mrf.mxu0
        %v1544 = vadd.f32 0.0, %v1543
        %1545 = vmatmul.f32.gmra.mxu0 %v1443
        %v1546 = vpop.f32.mrf.mxu0
        %v1547 = vadd.f32 0.0, %v1546
        %1548 = vmatmul.f32.gmra.mxu0 %v1444
        %v1549 = vpop.f32.mrf.mxu0
        %v1550 = vadd.f32 0.0, %v1549
        %1551 = vmatmul.f32.gmra.mxu0 %v1445
        %v1552 = vpop.f32.mrf.mxu0
        %v1553 = vadd.f32 0.0, %v1552
        %1554 = vmatmul.f32.gmra.mxu0 %v1446
        %v1555 = vpop.f32.mrf.mxu0
        %v1556 = vadd.f32 0.0, %v1555
        %1557 = vmatmul.f32.gmra.mxu0 %v1447
        %v1558 = vpop.f32.mrf.mxu0
        %v1559 = vadd.f32 0.0, %v1558
        %1560 = vmatmul.f32.gmra.mxu0 %v1448
        %v1561 = vpop.f32.mrf.mxu0
        %v1562 = vadd.f32 0.0, %v1561
        %1563 = vmatmul.f32.gmra.mxu0 %v1449
        %v1564 = vpop.f32.mrf.mxu0
        %v1565 = vadd.f32 0.0, %v1564
        %1566 = vmatmul.f32.gmra.mxu0 %v1450
        %v1567 = vpop.f32.mrf.mxu0
        %v1568 = vadd.f32 0.0, %v1567
        %1569 = vmatmul.f32.gmra.mxu0 %v1451
        %v1570 = vpop.f32.mrf.mxu0
        %v1571 = vadd.f32 0.0, %v1570
        %1572 = vmatmul.f32.gmra.mxu0 %v1452
        %v1573 = vpop.f32.mrf.mxu0
        %v1574 = vadd.f32 0.0, %v1573
        %1575 = vmatmul.f32.gmra.mxu0 %v1453
        %v1576 = vpop.f32.mrf.mxu0
        %v1577 = vadd.f32 0.0, %v1576
        %1578 = vmatmul.f32.gmra.mxu0 %v1454
        %v1579 = vpop.f32.mrf.mxu0
        %v1580 = vadd.f32 0.0, %v1579
        %1581 = vmatmul.f32.gmra.mxu0 %v1455
        %v1582 = vpop.f32.mrf.mxu0
        %v1583 = vadd.f32 0.0, %v1582
        %1584 = vdwg.mxu0
        %v1585 = vld [vmem:[%s5] sm:$0xff]
        %v1586 = vld [vmem:[%s6] sm:$0x1]
        %v1588 = vperm.slane %v1586, 0
        %v1591 = vsel %vm574, %v1490, 0
        %v1594 = vsel %vm574, %v1493, 0
        %v1597 = vsel %vm574, %v1496, 0
        %v1600 = vsel %vm574, %v1499, 0
        %v1603 = vsel %vm574, %v1502, 0
        %v1606 = vsel %vm574, %v1505, 0
        %v1609 = vsel %vm574, %v1508, 0
        %v1612 = vsel %vm574, %v1511, 0
        %v1615 = vsel %vm574, %v1514, 0
        %v1618 = vsel %vm574, %v1517, 0
        %v1621 = vsel %vm574, %v1520, 0
        %v1624 = vsel %vm574, %v1523, 0
        %v1627 = vsel %vm574, %v1526, 0
        %v1630 = vsel %vm574, %v1529, 0
        %v1633 = vsel %vm574, %v1532, 0
        %v1636 = vsel %vm574, %v1535, 0
        %v1639 = vsel %vm574, %v1538, 0
        %v1642 = vsel %vm574, %v1541, 0
        %v1645 = vsel %vm574, %v1544, 0
        %v1648 = vsel %vm574, %v1547, 0
        %v1651 = vsel %vm574, %v1550, 0
        %v1654 = vsel %vm574, %v1553, 0
        %v1657 = vsel %vm574, %v1556, 0
        %v1660 = vsel %vm574, %v1559, 0
        %v1663 = vsel %vm574, %v1562, 0
        %v1666 = vsel %vm574, %v1565, 0
        %v1669 = vsel %vm574, %v1568, 0
        %v1672 = vsel %vm574, %v1571, 0
        %v1675 = vsel %vm574, %v1574, 0
        %v1678 = vsel %vm574, %v1577, 0
        %v1681 = vsel %vm574, %v1580, 0
        %v1684 = vsel %vm574, %v1583, 0
        %1686 = vmatpush.msra.mxu0 0.0
        %1687 = vmatpush.msra.mxu0 0.0
        %1688 = vmatpush.msra.mxu0 0.0
        %1689 = vmatpush.msra.mxu0 0.0
        %1690 = vmatpush.msra.mxu0 0.0
        %1691 = vmatpush.msra.mxu0 0.0
        %1692 = vmatpush.msra.mxu0 0.0
        %1693 = vmatpush.msra.mxu0 0.0
        %1694 = vmatpush.msra.mxu0 0.0
        %1695 = vmatpush.msra.mxu0 0.0
        %1696 = vmatpush.msra.mxu0 0.0
        %1697 = vmatpush.msra.mxu0 0.0
        %1698 = vmatpush.msra.mxu0 0.0
        %1699 = vmatpush.msra.mxu0 0.0
        %1700 = vmatpush.msra.mxu0 0.0
        %1701 = vmatpush.msra.mxu0 %v1585
        %1702 = vmatmul.f32.gmra.mxu0 %v1591
        %v1703 = vpop.f32.mrf.mxu0
        %v1704 = vadd.f32 %v1588, %v1703
        %1705 = vmatmul.f32.gmra.mxu0 %v1594
        %v1706 = vpop.f32.mrf.mxu0
        %v1707 = vadd.f32 %v1588, %v1706
        %1708 = vmatmul.f32.gmra.mxu0 %v1597
        %v1709 = vpop.f32.mrf.mxu0
        %v1710 = vadd.f32 %v1588, %v1709
        %1711 = vmatmul.f32.gmra.mxu0 %v1600
        %v1712 = vpop.f32.mrf.mxu0
        %v1713 = vadd.f32 %v1588, %v1712
        %1714 = vmatmul.f32.gmra.mxu0 %v1603
        %v1715 = vpop.f32.mrf.mxu0
        %v1716 = vadd.f32 %v1588, %v1715
        %1717 = vmatmul.f32.gmra.mxu0 %v1606
        %v1718 = vpop.f32.mrf.mxu0
        %v1719 = vadd.f32 %v1588, %v1718
        %1720 = vmatmul.f32.gmra.mxu0 %v1609
        %v1721 = vpop.f32.mrf.mxu0
        %v1722 = vadd.f32 %v1588, %v1721
        %1723 = vmatmul.f32.gmra.mxu0 %v1612
        %v1724 = vpop.f32.mrf.mxu0
        %v1725 = vadd.f32 %v1588, %v1724
        %1726 = vmatmul.f32.gmra.mxu0 %v1615
        %v1727 = vpop.f32.mrf.mxu0
        %v1728 = vadd.f32 %v1588, %v1727
        %1729 = vmatmul.f32.gmra.mxu0 %v1618
        %v1730 = vpop.f32.mrf.mxu0
        %v1731 = vadd.f32 %v1588, %v1730
        %1732 = vmatmul.f32.gmra.mxu0 %v1621
        %v1733 = vpop.f32.mrf.mxu0
        %v1734 = vadd.f32 %v1588, %v1733
        %1735 = vmatmul.f32.gmra.mxu0 %v1624
        %v1736 = vpop.f32.mrf.mxu0
        %v1737 = vadd.f32 %v1588, %v1736
        %1738 = vmatmul.f32.gmra.mxu0 %v1627
        %v1739 = vpop.f32.mrf.mxu0
        %v1740 = vadd.f32 %v1588, %v1739
        %1741 = vmatmul.f32.gmra.mxu0 %v1630
        %v1742 = vpop.f32.mrf.mxu0
        %v1743 = vadd.f32 %v1588, %v1742
        %1744 = vmatmul.f32.gmra.mxu0 %v1633
        %v1745 = vpop.f32.mrf.mxu0
        %v1746 = vadd.f32 %v1588, %v1745
        %1747 = vmatmul.f32.gmra.mxu0 %v1636
        %v1748 = vpop.f32.mrf.mxu0
        %v1749 = vadd.f32 %v1588, %v1748
        %1750 = vmatmul.f32.gmra.mxu0 %v1639
        %v1751 = vpop.f32.mrf.mxu0
        %v1752 = vadd.f32 %v1588, %v1751
        %1753 = vmatmul.f32.gmra.mxu0 %v1642
        %v1754 = vpop.f32.mrf.mxu0
        %v1755 = vadd.f32 %v1588, %v1754
        %1756 = vmatmul.f32.gmra.mxu0 %v1645
        %v1757 = vpop.f32.mrf.mxu0
        %v1758 = vadd.f32 %v1588, %v1757
        %1759 = vmatmul.f32.gmra.mxu0 %v1648
        %v1760 = vpop.f32.mrf.mxu0
        %v1761 = vadd.f32 %v1588, %v1760
        %1762 = vmatmul.f32.gmra.mxu0 %v1651
        %v1763 = vpop.f32.mrf.mxu0
        %v1764 = vadd.f32 %v1588, %v1763
        %1765 = vmatmul.f32.gmra.mxu0 %v1654
        %v1766 = vpop.f32.mrf.mxu0
        %v1767 = vadd.f32 %v1588, %v1766
        %1768 = vmatmul.f32.gmra.mxu0 %v1657
        %v1769 = vpop.f32.mrf.mxu0
        %v1770 = vadd.f32 %v1588, %v1769
        %1771 = vmatmul.f32.gmra.mxu0 %v1660
        %v1772 = vpop.f32.mrf.mxu0
        %v1773 = vadd.f32 %v1588, %v1772
        %1774 = vmatmul.f32.gmra.mxu0 %v1663
        %v1775 = vpop.f32.mrf.mxu0
        %v1776 = vadd.f32 %v1588, %v1775
        %1777 = vmatmul.f32.gmra.mxu0 %v1666
        %v1778 = vpop.f32.mrf.mxu0
        %v1779 = vadd.f32 %v1588, %v1778
        %1780 = vmatmul.f32.gmra.mxu0 %v1669
        %v1781 = vpop.f32.mrf.mxu0
        %v1782 = vadd.f32 %v1588, %v1781
        %1783 = vmatmul.f32.gmra.mxu0 %v1672
        %v1784 = vpop.f32.mrf.mxu0
        %v1785 = vadd.f32 %v1588, %v1784
        %1786 = vmatmul.f32.gmra.mxu0 %v1675
        %v1787 = vpop.f32.mrf.mxu0
        %v1788 = vadd.f32 %v1588, %v1787
        %1789 = vmatmul.f32.gmra.mxu0 %v1678
        %v1790 = vpop.f32.mrf.mxu0
        %v1791 = vadd.f32 %v1588, %v1790
        %1792 = vmatmul.f32.gmra.mxu0 %v1681
        %v1793 = vpop.f32.mrf.mxu0
        %v1794 = vadd.f32 %v1588, %v1793
        %1795 = vmatmul.f32.gmra.mxu0 %v1684
        %v1796 = vpop.f32.mrf.mxu0
        %v1797 = vadd.f32 %v1588, %v1796
        %1798 = vdwg.mxu0
        %v1799 = vsub.f32 %v478, %v1490
        %v1800 = vsub.f32 %v481, %v1493
        %v1801 = vsub.f32 %v484, %v1496
        %v1802 = vsub.f32 %v487, %v1499
        %v1803 = vsub.f32 %v490, %v1502
        %v1804 = vsub.f32 %v493, %v1505
        %v1805 = vsub.f32 %v496, %v1508
        %v1806 = vsub.f32 %v499, %v1511
        %v1807 = vsub.f32 %v502, %v1514
        %v1808 = vsub.f32 %v505, %v1517
        %v1809 = vsub.f32 %v508, %v1520
        %v1810 = vsub.f32 %v511, %v1523
        %v1811 = vsub.f32 %v514, %v1526
        %v1812 = vsub.f32 %v517, %v1529
        %v1813 = vsub.f32 %v520, %v1532
        %v1814 = vsub.f32 %v523, %v1535
        %v1815 = vsub.f32 %v526, %v1538
        %v1816 = vsub.f32 %v529, %v1541
        %v1817 = vsub.f32 %v532, %v1544
        %v1818 = vsub.f32 %v535, %v1547
        %v1819 = vsub.f32 %v538, %v1550
        %v1820 = vsub.f32 %v541, %v1553
        %v1821 = vsub.f32 %v544, %v1556
        %v1822 = vsub.f32 %v547, %v1559
        %v1823 = vsub.f32 %v550, %v1562
        %v1824 = vsub.f32 %v553, %v1565
        %v1825 = vsub.f32 %v556, %v1568
        %v1826 = vsub.f32 %v559, %v1571
        %v1827 = vsub.f32 %v562, %v1574
        %v1828 = vsub.f32 %v565, %v1577
        %v1829 = vsub.f32 %v568, %v1580
        %v1830 = vsub.f32 %v571, %v1583
        %v1831 = vmul.f32 %v1799, %v1799
        %v1832 = vmul.f32 %v1800, %v1800
        %v1833 = vmul.f32 %v1801, %v1801
        %v1834 = vmul.f32 %v1802, %v1802
        %v1835 = vmul.f32 %v1803, %v1803
        %v1836 = vmul.f32 %v1804, %v1804
        %v1837 = vmul.f32 %v1805, %v1805
        %v1838 = vmul.f32 %v1806, %v1806
        %v1839 = vmul.f32 %v1807, %v1807
        %v1840 = vmul.f32 %v1808, %v1808
        %v1841 = vmul.f32 %v1809, %v1809
        %v1842 = vmul.f32 %v1810, %v1810
        %v1843 = vmul.f32 %v1811, %v1811
        %v1844 = vmul.f32 %v1812, %v1812
        %v1845 = vmul.f32 %v1813, %v1813
        %v1846 = vmul.f32 %v1814, %v1814
        %v1847 = vmul.f32 %v1815, %v1815
        %v1848 = vmul.f32 %v1816, %v1816
        %v1849 = vmul.f32 %v1817, %v1817
        %v1850 = vmul.f32 %v1818, %v1818
        %v1851 = vmul.f32 %v1819, %v1819
        %v1852 = vmul.f32 %v1820, %v1820
        %v1853 = vmul.f32 %v1821, %v1821
        %v1854 = vmul.f32 %v1822, %v1822
        %v1855 = vmul.f32 %v1823, %v1823
        %v1856 = vmul.f32 %v1824, %v1824
        %v1857 = vmul.f32 %v1825, %v1825
        %v1858 = vmul.f32 %v1826, %v1826
        %v1859 = vmul.f32 %v1827, %v1827
        %v1860 = vmul.f32 %v1828, %v1828
        %v1861 = vmul.f32 %v1829, %v1829
        %v1862 = vmul.f32 %v1830, %v1830
        %v1863 = vsel %vm574, %v1831, 0.0
        %1864 = vadd.xlane.f32.xlu0 %v1863
        %v1865 = vpop.xlane.xlu0 %1864
        %v1866 = vsel %vm574, %v1832, 0.0
        %1867 = vadd.xlane.f32.xlu0 %v1866
        %v1868 = vpop.xlane.xlu0 %1867
        %v1869 = vsel %vm574, %v1833, 0.0
        %1870 = vadd.xlane.f32.xlu0 %v1869
        %v1871 = vpop.xlane.xlu0 %1870
        %v1872 = vsel %vm574, %v1834, 0.0
        %1873 = vadd.xlane.f32.xlu0 %v1872
        %v1874 = vpop.xlane.xlu0 %1873
        %v1875 = vsel %vm574, %v1835, 0.0
        %1876 = vadd.xlane.f32.xlu0 %v1875
        %v1877 = vpop.xlane.xlu0 %1876
        %v1878 = vsel %vm574, %v1836, 0.0
        %1879 = vadd.xlane.f32.xlu0 %v1878
        %v1880 = vpop.xlane.xlu0 %1879
        %v1881 = vsel %vm574, %v1837, 0.0
        %1882 = vadd.xlane.f32.xlu0 %v1881
        %v1883 = vpop.xlane.xlu0 %1882
        %v1884 = vsel %vm574, %v1838, 0.0
        %1885 = vadd.xlane.f32.xlu0 %v1884
        %v1886 = vpop.xlane.xlu0 %1885
        %v1887 = vsel %vm574, %v1839, 0.0
        %1888 = vadd.xlane.f32.xlu0 %v1887
        %v1889 = vpop.xlane.xlu0 %1888
        %v1890 = vsel %vm574, %v1840, 0.0
        %1891 = vadd.xlane.f32.xlu0 %v1890
        %v1892 = vpop.xlane.xlu0 %1891
        %v1893 = vsel %vm574, %v1841, 0.0
        %1894 = vadd.xlane.f32.xlu0 %v1893
        %v1895 = vpop.xlane.xlu0 %1894
        %v1896 = vsel %vm574, %v1842, 0.0
        %1897 = vadd.xlane.f32.xlu0 %v1896
        %v1898 = vpop.xlane.xlu0 %1897
        %v1899 = vsel %vm574, %v1843, 0.0
        %1900 = vadd.xlane.f32.xlu0 %v1899
        %v1901 = vpop.xlane.xlu0 %1900
        %v1902 = vsel %vm574, %v1844, 0.0
        %1903 = vadd.xlane.f32.xlu0 %v1902
        %v1904 = vpop.xlane.xlu0 %1903
        %v1905 = vsel %vm574, %v1845, 0.0
        %1906 = vadd.xlane.f32.xlu0 %v1905
        %v1907 = vpop.xlane.xlu0 %1906
        %v1908 = vsel %vm574, %v1846, 0.0
        %1909 = vadd.xlane.f32.xlu0 %v1908
        %v1910 = vpop.xlane.xlu0 %1909
        %v1911 = vsel %vm574, %v1847, 0.0
        %1912 = vadd.xlane.f32.xlu0 %v1911
        %v1913 = vpop.xlane.xlu0 %1912
        %v1914 = vsel %vm574, %v1848, 0.0
        %1915 = vadd.xlane.f32.xlu0 %v1914
        %v1916 = vpop.xlane.xlu0 %1915
        %v1917 = vsel %vm574, %v1849, 0.0
        %1918 = vadd.xlane.f32.xlu0 %v1917
        %v1919 = vpop.xlane.xlu0 %1918
        %v1920 = vsel %vm574, %v1850, 0.0
        %1921 = vadd.xlane.f32.xlu0 %v1920
        %v1922 = vpop.xlane.xlu0 %1921
        %v1923 = vsel %vm574, %v1851, 0.0
        %1924 = vadd.xlane.f32.xlu0 %v1923
        %v1925 = vpop.xlane.xlu0 %1924
        %v1926 = vsel %vm574, %v1852, 0.0
        %1927 = vadd.xlane.f32.xlu0 %v1926
        %v1928 = vpop.xlane.xlu0 %1927
        %v1929 = vsel %vm574, %v1853, 0.0
        %1930 = vadd.xlane.f32.xlu0 %v1929
        %v1931 = vpop.xlane.xlu0 %1930
        %v1932 = vsel %vm574, %v1854, 0.0
        %1933 = vadd.xlane.f32.xlu0 %v1932
        %v1934 = vpop.xlane.xlu0 %1933
        %v1935 = vsel %vm574, %v1855, 0.0
        %1936 = vadd.xlane.f32.xlu0 %v1935
        %v1937 = vpop.xlane.xlu0 %1936
        %v1938 = vsel %vm574, %v1856, 0.0
        %1939 = vadd.xlane.f32.xlu0 %v1938
        %v1940 = vpop.xlane.xlu0 %1939
        %v1941 = vsel %vm574, %v1857, 0.0
        %1942 = vadd.xlane.f32.xlu0 %v1941
        %v1943 = vpop.xlane.xlu0 %1942
        %v1944 = vsel %vm574, %v1858, 0.0
        %1945 = vadd.xlane.f32.xlu0 %v1944
        %v1946 = vpop.xlane.xlu0 %1945
        %v1947 = vsel %vm574, %v1859, 0.0
        %1948 = vadd.xlane.f32.xlu0 %v1947
        %v1949 = vpop.xlane.xlu0 %1948
        %v1950 = vsel %vm574, %v1860, 0.0
        %1951 = vadd.xlane.f32.xlu0 %v1950
        %v1952 = vpop.xlane.xlu0 %1951
        %v1953 = vsel %vm574, %v1861, 0.0
        %1954 = vadd.xlane.f32.xlu0 %v1953
        %v1955 = vpop.xlane.xlu0 %1954
        %v1956 = vsel %vm574, %v1862, 0.0
        %1957 = vadd.xlane.f32.xlu0 %v1956
        %v1958 = vpop.xlane.xlu0 %1957
        %v1959 = vrcp.pop 8.0
        %v1960 = vmul.f32 8.0, %v1959
        %v1961 = vsub.f32 1.0, %v1960
        %v1962 = vmul.f32 %v1959, %v1961
        %v1963 = vadd.f32 %v1959, %v1962
        %vm1964 = vweird.f32 %v1959
        %v1965 = vsel %vm1964, %v1959, %v1963
        %v1966 = vmul.f32 %v1865, %v1965
        %v1967 = vmul.f32 %v1868, %v1965
        %v1968 = vmul.f32 %v1871, %v1965
        %v1969 = vmul.f32 %v1874, %v1965
        %v1970 = vmul.f32 %v1877, %v1965
        %v1971 = vmul.f32 %v1880, %v1965
        %v1972 = vmul.f32 %v1883, %v1965
        %v1973 = vmul.f32 %v1886, %v1965
        %v1974 = vmul.f32 %v1889, %v1965
        %v1975 = vmul.f32 %v1892, %v1965
        %v1976 = vmul.f32 %v1895, %v1965
        %v1977 = vmul.f32 %v1898, %v1965
        %v1978 = vmul.f32 %v1901, %v1965
        %v1979 = vmul.f32 %v1904, %v1965
        %v1980 = vmul.f32 %v1907, %v1965
        %v1981 = vmul.f32 %v1910, %v1965
        %v1982 = vmul.f32 %v1913, %v1965
        %v1983 = vmul.f32 %v1916, %v1965
        %v1984 = vmul.f32 %v1919, %v1965
        %v1985 = vmul.f32 %v1922, %v1965
        %v1986 = vmul.f32 %v1925, %v1965
        %v1987 = vmul.f32 %v1928, %v1965
        %v1988 = vmul.f32 %v1931, %v1965
        %v1989 = vmul.f32 %v1934, %v1965
        %v1990 = vmul.f32 %v1937, %v1965
        %v1991 = vmul.f32 %v1940, %v1965
        %v1992 = vmul.f32 %v1943, %v1965
        %v1993 = vmul.f32 %v1946, %v1965
        %v1994 = vmul.f32 %v1949, %v1965
        %v1995 = vmul.f32 %v1952, %v1965
        %v1996 = vmul.f32 %v1955, %v1965
        %v1997 = vmul.f32 %v1958, %v1965
        %v1998 = vcvt.s32.f32 %v925
        %v1999 = vcvt.s32.f32 %v939
        %v2000 = vcvt.s32.f32 %v953
        %v2001 = vcvt.s32.f32 %v967
        %v2002 = vcvt.s32.f32 %v981
        %v2003 = vcvt.s32.f32 %v995
        %v2004 = vcvt.s32.f32 %v1009
        %v2005 = vcvt.s32.f32 %v1023
        %v2006 = vcvt.s32.f32 %v1037
        %v2007 = vcvt.s32.f32 %v1051
        %v2008 = vcvt.s32.f32 %v1065
        %v2009 = vcvt.s32.f32 %v1079
        %v2010 = vcvt.s32.f32 %v1093
        %v2011 = vcvt.s32.f32 %v1107
        %v2012 = vcvt.s32.f32 %v1121
        %v2013 = vcvt.s32.f32 %v1135
        %v2014 = vcvt.s32.f32 %v1149
        %v2015 = vcvt.s32.f32 %v1163
        %v2016 = vcvt.s32.f32 %v1177
        %v2017 = vcvt.s32.f32 %v1191
        %v2018 = vcvt.s32.f32 %v1205
        %v2019 = vcvt.s32.f32 %v1219
        %v2020 = vcvt.s32.f32 %v1233
        %v2021 = vcvt.s32.f32 %v1247
        %v2022 = vcvt.s32.f32 %v1261
        %v2023 = vcvt.s32.f32 %v1275
        %v2024 = vcvt.s32.f32 %v1289
        %v2025 = vcvt.s32.f32 %v1303
        %v2026 = vcvt.s32.f32 %v1317
        %v2027 = vcvt.s32.f32 %v1331
        %v2028 = vcvt.s32.f32 %v1345
        %v2029 = vcvt.s32.f32 %v1359
        %v2030 = vsub.f32 %v321, %v1704
        %v2031 = vsub.f32 %v322, %v1707
        %v2032 = vsub.f32 %v323, %v1710
        %v2033 = vsub.f32 %v324, %v1713
        %v2034 = vsub.f32 %v325, %v1716
        %v2035 = vsub.f32 %v326, %v1719
        %v2036 = vsub.f32 %v327, %v1722
        %v2037 = vsub.f32 %v328, %v1725
        %v2038 = vsub.f32 %v329, %v1728
        %v2039 = vsub.f32 %v330, %v1731
        %v2040 = vsub.f32 %v331, %v1734
        %v2041 = vsub.f32 %v332, %v1737
        %v2042 = vsub.f32 %v333, %v1740
        %v2043 = vsub.f32 %v334, %v1743
        %v2044 = vsub.f32 %v335, %v1746
        %v2045 = vsub.f32 %v336, %v1749
        %v2046 = vsub.f32 %v337, %v1752
        %v2047 = vsub.f32 %v338, %v1755
        %v2048 = vsub.f32 %v339, %v1758
        %v2049 = vsub.f32 %v340, %v1761
        %v2050 = vsub.f32 %v341, %v1764
        %v2051 = vsub.f32 %v342, %v1767
        %v2052 = vsub.f32 %v343, %v1770
        %v2053 = vsub.f32 %v344, %v1773
        %v2054 = vsub.f32 %v345, %v1776
        %v2055 = vsub.f32 %v346, %v1779
        %v2056 = vsub.f32 %v347, %v1782
        %v2057 = vsub.f32 %v348, %v1785
        %v2058 = vsub.f32 %v349, %v1788
        %v2059 = vsub.f32 %v350, %v1791
        %v2060 = vsub.f32 %v351, %v1794
        %v2061 = vsub.f32 %v352, %v1797
        %s2062 = scalar_lea.vmem %s1, 32
        %v2063 = vld [vmem:[%s2062] sm:$0xff]
        %v2064 = vld [vmem:[%s2062 + $0x8] sm:$0xff]
        %v2065 = vld [vmem:[%s2062 + $0x10] sm:$0xff]
        %v2066 = vld [vmem:[%s2062 + $0x18] sm:$0xff]
        %s2067 = scalar_lea.vmem %s2, 1
        %v2068 = vld [vmem:[%s2067] sm:$0x1]
        %v2070 = vperm.slane %v2068, 0
        %v2073 = vsel %vm363, %v2030, 0
        %v2076 = vsel %vm363, %v2031, 0
        %v2079 = vsel %vm363, %v2032, 0
        %v2082 = vsel %vm363, %v2033, 0
        %v2085 = vsel %vm363, %v2034, 0
        %v2088 = vsel %vm363, %v2035, 0
        %v2091 = vsel %vm363, %v2036, 0
        %v2094 = vsel %vm363, %v2037, 0
        %v2097 = vsel %vm363, %v2038, 0
        %v2100 = vsel %vm363, %v2039, 0
        %v2103 = vsel %vm363, %v2040, 0
        %v2106 = vsel %vm363, %v2041, 0
        %v2109 = vsel %vm363, %v2042, 0
        %v2112 = vsel %vm363, %v2043, 0
        %v2115 = vsel %vm363, %v2044, 0
        %v2118 = vsel %vm363, %v2045, 0
        %v2121 = vsel %vm363, %v2046, 0
        %v2124 = vsel %vm363, %v2047, 0
        %v2127 = vsel %vm363, %v2048, 0
        %v2130 = vsel %vm363, %v2049, 0
        %v2133 = vsel %vm363, %v2050, 0
        %v2136 = vsel %vm363, %v2051, 0
        %v2139 = vsel %vm363, %v2052, 0
        %v2142 = vsel %vm363, %v2053, 0
        %v2145 = vsel %vm363, %v2054, 0
        %v2148 = vsel %vm363, %v2055, 0
        %v2151 = vsel %vm363, %v2056, 0
        %v2154 = vsel %vm363, %v2057, 0
        %v2157 = vsel %vm363, %v2058, 0
        %v2160 = vsel %vm363, %v2059, 0
        %v2163 = vsel %vm363, %v2060, 0
        %v2166 = vsel %vm363, %v2061, 0
        %2168 = vmatpush.msra.mxu0 0.0
        %2169 = vmatpush.msra.mxu0 0.0
        %2170 = vmatpush.msra.mxu0 0.0
        %2171 = vmatpush.msra.mxu0 0.0
        %2172 = vmatpush.msra.mxu0 0.0
        %2173 = vmatpush.msra.mxu0 0.0
        %2174 = vmatpush.msra.mxu0 0.0
        %2175 = vmatpush.msra.mxu0 0.0
        %2176 = vmatpush.msra.mxu0 0.0
        %2177 = vmatpush.msra.mxu0 0.0
        %2178 = vmatpush.msra.mxu0 0.0
        %2179 = vmatpush.msra.mxu0 0.0
        %2180 = vmatpush.msra.mxu0 %v2066
        %2181 = vmatpush.msra.mxu0 %v2065
        %2182 = vmatpush.msra.mxu0 %v2064
        %2183 = vmatpush.msra.mxu0 %v2063
        %2184 = vmatmul.f32.gmra.mxu0 %v2073
        %v2185 = vpop.f32.mrf.mxu0
        %v2186 = vadd.f32 %v2070, %v2185
        %2187 = vmatmul.f32.gmra.mxu0 %v2076
        %v2188 = vpop.f32.mrf.mxu0
        %v2189 = vadd.f32 %v2070, %v2188
        %2190 = vmatmul.f32.gmra.mxu0 %v2079
        %v2191 = vpop.f32.mrf.mxu0
        %v2192 = vadd.f32 %v2070, %v2191
        %2193 = vmatmul.f32.gmra.mxu0 %v2082
        %v2194 = vpop.f32.mrf.mxu0
        %v2195 = vadd.f32 %v2070, %v2194
        %2196 = vmatmul.f32.gmra.mxu0 %v2085
        %v2197 = vpop.f32.mrf.mxu0
        %v2198 = vadd.f32 %v2070, %v2197
        %2199 = vmatmul.f32.gmra.mxu0 %v2088
        %v2200 = vpop.f32.mrf.mxu0
        %v2201 = vadd.f32 %v2070, %v2200
        %2202 = vmatmul.f32.gmra.mxu0 %v2091
        %v2203 = vpop.f32.mrf.mxu0
        %v2204 = vadd.f32 %v2070, %v2203
        %2205 = vmatmul.f32.gmra.mxu0 %v2094
        %v2206 = vpop.f32.mrf.mxu0
        %v2207 = vadd.f32 %v2070, %v2206
        %2208 = vmatmul.f32.gmra.mxu0 %v2097
        %v2209 = vpop.f32.mrf.mxu0
        %v2210 = vadd.f32 %v2070, %v2209
        %2211 = vmatmul.f32.gmra.mxu0 %v2100
        %v2212 = vpop.f32.mrf.mxu0
        %v2213 = vadd.f32 %v2070, %v2212
        %2214 = vmatmul.f32.gmra.mxu0 %v2103
        %v2215 = vpop.f32.mrf.mxu0
        %v2216 = vadd.f32 %v2070, %v2215
        %2217 = vmatmul.f32.gmra.mxu0 %v2106
        %v2218 = vpop.f32.mrf.mxu0
        %v2219 = vadd.f32 %v2070, %v2218
        %2220 = vmatmul.f32.gmra.mxu0 %v2109
        %v2221 = vpop.f32.mrf.mxu0
        %v2222 = vadd.f32 %v2070, %v2221
        %2223 = vmatmul.f32.gmra.mxu0 %v2112
        %v2224 = vpop.f32.mrf.mxu0
        %v2225 = vadd.f32 %v2070, %v2224
        %2226 = vmatmul.f32.gmra.mxu0 %v2115
        %v2227 = vpop.f32.mrf.mxu0
        %v2228 = vadd.f32 %v2070, %v2227
        %2229 = vmatmul.f32.gmra.mxu0 %v2118
        %v2230 = vpop.f32.mrf.mxu0
        %v2231 = vadd.f32 %v2070, %v2230
        %2232 = vmatmul.f32.gmra.mxu0 %v2121
        %v2233 = vpop.f32.mrf.mxu0
        %v2234 = vadd.f32 %v2070, %v2233
        %2235 = vmatmul.f32.gmra.mxu0 %v2124
        %v2236 = vpop.f32.mrf.mxu0
        %v2237 = vadd.f32 %v2070, %v2236
        %2238 = vmatmul.f32.gmra.mxu0 %v2127
        %v2239 = vpop.f32.mrf.mxu0
        %v2240 = vadd.f32 %v2070, %v2239
        %2241 = vmatmul.f32.gmra.mxu0 %v2130
        %v2242 = vpop.f32.mrf.mxu0
        %v2243 = vadd.f32 %v2070, %v2242
        %2244 = vmatmul.f32.gmra.mxu0 %v2133
        %v2245 = vpop.f32.mrf.mxu0
        %v2246 = vadd.f32 %v2070, %v2245
        %2247 = vmatmul.f32.gmra.mxu0 %v2136
        %v2248 = vpop.f32.mrf.mxu0
        %v2249 = vadd.f32 %v2070, %v2248
        %2250 = vmatmul.f32.gmra.mxu0 %v2139
        %v2251 = vpop.f32.mrf.mxu0
        %v2252 = vadd.f32 %v2070, %v2251
        %2253 = vmatmul.f32.gmra.mxu0 %v2142
        %v2254 = vpop.f32.mrf.mxu0
        %v2255 = vadd.f32 %v2070, %v2254
        %2256 = vmatmul.f32.gmra.mxu0 %v2145
        %v2257 = vpop.f32.mrf.mxu0
        %v2258 = vadd.f32 %v2070, %v2257
        %2259 = vmatmul.f32.gmra.mxu0 %v2148
        %v2260 = vpop.f32.mrf.mxu0
        %v2261 = vadd.f32 %v2070, %v2260
        %2262 = vmatmul.f32.gmra.mxu0 %v2151
        %v2263 = vpop.f32.mrf.mxu0
        %v2264 = vadd.f32 %v2070, %v2263
        %2265 = vmatmul.f32.gmra.mxu0 %v2154
        %v2266 = vpop.f32.mrf.mxu0
        %v2267 = vadd.f32 %v2070, %v2266
        %2268 = vmatmul.f32.gmra.mxu0 %v2157
        %v2269 = vpop.f32.mrf.mxu0
        %v2270 = vadd.f32 %v2070, %v2269
        %2271 = vmatmul.f32.gmra.mxu0 %v2160
        %v2272 = vpop.f32.mrf.mxu0
        %v2273 = vadd.f32 %v2070, %v2272
        %2274 = vmatmul.f32.gmra.mxu0 %v2163
        %v2275 = vpop.f32.mrf.mxu0
        %v2276 = vadd.f32 %v2070, %v2275
        %2277 = vmatmul.f32.gmra.mxu0 %v2166
        %v2278 = vpop.f32.mrf.mxu0
        %v2279 = vadd.f32 %v2070, %v2278
        %2280 = vdwg.mxu0
        %s2281 = scalar_lea.vmem %s3, 8
        %v2282 = vld [vmem:[%s2281] sm:$0xff]
        %v2284 = vsel %vm574, %v2186, 0
        %v2287 = vsel %vm574, %v2189, 0
        %v2290 = vsel %vm574, %v2192, 0
        %v2293 = vsel %vm574, %v2195, 0
        %v2296 = vsel %vm574, %v2198, 0
        %v2299 = vsel %vm574, %v2201, 0
        %v2302 = vsel %vm574, %v2204, 0
        %v2305 = vsel %vm574, %v2207, 0
        %v2308 = vsel %vm574, %v2210, 0
        %v2311 = vsel %vm574, %v2213, 0
        %v2314 = vsel %vm574, %v2216, 0
        %v2317 = vsel %vm574, %v2219, 0
        %v2320 = vsel %vm574, %v2222, 0
        %v2323 = vsel %vm574, %v2225, 0
        %v2326 = vsel %vm574, %v2228, 0
        %v2329 = vsel %vm574, %v2231, 0
        %v2332 = vsel %vm574, %v2234, 0
        %v2335 = vsel %vm574, %v2237, 0
        %v2338 = vsel %vm574, %v2240, 0
        %v2341 = vsel %vm574, %v2243, 0
        %v2344 = vsel %vm574, %v2246, 0
        %v2347 = vsel %vm574, %v2249, 0
        %v2350 = vsel %vm574, %v2252, 0
        %v2353 = vsel %vm574, %v2255, 0
        %v2356 = vsel %vm574, %v2258, 0
        %v2359 = vsel %vm574, %v2261, 0
        %v2362 = vsel %vm574, %v2264, 0
        %v2365 = vsel %vm574, %v2267, 0
        %v2368 = vsel %vm574, %v2270, 0
        %v2371 = vsel %vm574, %v2273, 0
        %v2374 = vsel %vm574, %v2276, 0
        %v2377 = vsel %vm574, %v2279, 0
        %2379 = vmatpush.msra.mxu0 0.0
        %2380 = vmatpush.msra.mxu0 0.0
        %2381 = vmatpush.msra.mxu0 0.0
        %2382 = vmatpush.msra.mxu0 0.0
        %2383 = vmatpush.msra.mxu0 0.0
        %2384 = vmatpush.msra.mxu0 0.0
        %2385 = vmatpush.msra.mxu0 0.0
        %2386 = vmatpush.msra.mxu0 0.0
        %2387 = vmatpush.msra.mxu0 0.0
        %2388 = vmatpush.msra.mxu0 0.0
        %2389 = vmatpush.msra.mxu0 0.0
        %2390 = vmatpush.msra.mxu0 0.0
        %2391 = vmatpush.msra.mxu0 0.0
        %2392 = vmatpush.msra.mxu0 0.0
        %2393 = vmatpush.msra.mxu0 0.0
        %2394 = vmatpush.msra.mxu0 %v2282
        %2395 = vmatmul.f32.gmra.mxu0 %v2284
        %v2396 = vpop.f32.mrf.mxu0
        %v2397 = vadd.f32 0.0, %v2396
        %2398 = vmatmul.f32.gmra.mxu0 %v2287
        %v2399 = vpop.f32.mrf.mxu0
        %v2400 = vadd.f32 0.0, %v2399
        %2401 = vmatmul.f32.gmra.mxu0 %v2290
        %v2402 = vpop.f32.mrf.mxu0
        %v2403 = vadd.f32 0.0, %v2402
        %2404 = vmatmul.f32.gmra.mxu0 %v2293
        %v2405 = vpop.f32.mrf.mxu0
        %v2406 = vadd.f32 0.0, %v2405
        %2407 = vmatmul.f32.gmra.mxu0 %v2296
        %v2408 = vpop.f32.mrf.mxu0
        %v2409 = vadd.f32 0.0, %v2408
        %2410 = vmatmul.f32.gmra.mxu0 %v2299
        %v2411 = vpop.f32.mrf.mxu0
        %v2412 = vadd.f32 0.0, %v2411
        %2413 = vmatmul.f32.gmra.mxu0 %v2302
        %v2414 = vpop.f32.mrf.mxu0
        %v2415 = vadd.f32 0.0, %v2414
        %2416 = vmatmul.f32.gmra.mxu0 %v2305
        %v2417 = vpop.f32.mrf.mxu0
        %v2418 = vadd.f32 0.0, %v2417
        %2419 = vmatmul.f32.gmra.mxu0 %v2308
        %v2420 = vpop.f32.mrf.mxu0
        %v2421 = vadd.f32 0.0, %v2420
        %2422 = vmatmul.f32.gmra.mxu0 %v2311
        %v2423 = vpop.f32.mrf.mxu0
        %v2424 = vadd.f32 0.0, %v2423
        %2425 = vmatmul.f32.gmra.mxu0 %v2314
        %v2426 = vpop.f32.mrf.mxu0
        %v2427 = vadd.f32 0.0, %v2426
        %2428 = vmatmul.f32.gmra.mxu0 %v2317
        %v2429 = vpop.f32.mrf.mxu0
        %v2430 = vadd.f32 0.0, %v2429
        %2431 = vmatmul.f32.gmra.mxu0 %v2320
        %v2432 = vpop.f32.mrf.mxu0
        %v2433 = vadd.f32 0.0, %v2432
        %2434 = vmatmul.f32.gmra.mxu0 %v2323
        %v2435 = vpop.f32.mrf.mxu0
        %v2436 = vadd.f32 0.0, %v2435
        %2437 = vmatmul.f32.gmra.mxu0 %v2326
        %v2438 = vpop.f32.mrf.mxu0
        %v2439 = vadd.f32 0.0, %v2438
        %2440 = vmatmul.f32.gmra.mxu0 %v2329
        %v2441 = vpop.f32.mrf.mxu0
        %v2442 = vadd.f32 0.0, %v2441
        %2443 = vmatmul.f32.gmra.mxu0 %v2332
        %v2444 = vpop.f32.mrf.mxu0
        %v2445 = vadd.f32 0.0, %v2444
        %2446 = vmatmul.f32.gmra.mxu0 %v2335
        %v2447 = vpop.f32.mrf.mxu0
        %v2448 = vadd.f32 0.0, %v2447
        %2449 = vmatmul.f32.gmra.mxu0 %v2338
        %v2450 = vpop.f32.mrf.mxu0
        %v2451 = vadd.f32 0.0, %v2450
        %2452 = vmatmul.f32.gmra.mxu0 %v2341
        %v2453 = vpop.f32.mrf.mxu0
        %v2454 = vadd.f32 0.0, %v2453
        %2455 = vmatmul.f32.gmra.mxu0 %v2344
        %v2456 = vpop.f32.mrf.mxu0
        %v2457 = vadd.f32 0.0, %v2456
        %2458 = vmatmul.f32.gmra.mxu0 %v2347
        %v2459 = vpop.f32.mrf.mxu0
        %v2460 = vadd.f32 0.0, %v2459
        %2461 = vmatmul.f32.gmra.mxu0 %v2350
        %v2462 = vpop.f32.mrf.mxu0
        %v2463 = vadd.f32 0.0, %v2462
        %2464 = vmatmul.f32.gmra.mxu0 %v2353
        %v2465 = vpop.f32.mrf.mxu0
        %v2466 = vadd.f32 0.0, %v2465
        %2467 = vmatmul.f32.gmra.mxu0 %v2356
        %v2468 = vpop.f32.mrf.mxu0
        %v2469 = vadd.f32 0.0, %v2468
        %2470 = vmatmul.f32.gmra.mxu0 %v2359
        %v2471 = vpop.f32.mrf.mxu0
        %v2472 = vadd.f32 0.0, %v2471
        %2473 = vmatmul.f32.gmra.mxu0 %v2362
        %v2474 = vpop.f32.mrf.mxu0
        %v2475 = vadd.f32 0.0, %v2474
        %2476 = vmatmul.f32.gmra.mxu0 %v2365
        %v2477 = vpop.f32.mrf.mxu0
        %v2478 = vadd.f32 0.0, %v2477
        %2479 = vmatmul.f32.gmra.mxu0 %v2368
        %v2480 = vpop.f32.mrf.mxu0
        %v2481 = vadd.f32 0.0, %v2480
        %2482 = vmatmul.f32.gmra.mxu0 %v2371
        %v2483 = vpop.f32.mrf.mxu0
        %v2484 = vadd.f32 0.0, %v2483
        %2485 = vmatmul.f32.gmra.mxu0 %v2374
        %v2486 = vpop.f32.mrf.mxu0
        %v2487 = vadd.f32 0.0, %v2486
        %2488 = vmatmul.f32.gmra.mxu0 %v2377
        %v2489 = vpop.f32.mrf.mxu0
        %v2490 = vadd.f32 0.0, %v2489
        %2491 = vdwg.mxu0
        %2492 = vmax.xlane.f32.xlu0 %v2397
        %v2493 = vpop.xlane.xlu0 %2492
        %2494 = vmax.xlane.f32.xlu0 %v2400
        %v2495 = vpop.xlane.xlu0 %2494
        %2496 = vmax.xlane.f32.xlu0 %v2403
        %v2497 = vpop.xlane.xlu0 %2496
        %2498 = vmax.xlane.f32.xlu0 %v2406
        %v2499 = vpop.xlane.xlu0 %2498
        %2500 = vmax.xlane.f32.xlu0 %v2409
        %v2501 = vpop.xlane.xlu0 %2500
        %2502 = vmax.xlane.f32.xlu0 %v2412
        %v2503 = vpop.xlane.xlu0 %2502
        %2504 = vmax.xlane.f32.xlu0 %v2415
        %v2505 = vpop.xlane.xlu0 %2504
        %2506 = vmax.xlane.f32.xlu0 %v2418
        %v2507 = vpop.xlane.xlu0 %2506
        %2508 = vmax.xlane.f32.xlu0 %v2421
        %v2509 = vpop.xlane.xlu0 %2508
        %2510 = vmax.xlane.f32.xlu0 %v2424
        %v2511 = vpop.xlane.xlu0 %2510
        %2512 = vmax.xlane.f32.xlu0 %v2427
        %v2513 = vpop.xlane.xlu0 %2512
        %2514 = vmax.xlane.f32.xlu0 %v2430
        %v2515 = vpop.xlane.xlu0 %2514
        %2516 = vmax.xlane.f32.xlu0 %v2433
        %v2517 = vpop.xlane.xlu0 %2516
        %2518 = vmax.xlane.f32.xlu0 %v2436
        %v2519 = vpop.xlane.xlu0 %2518
        %2520 = vmax.xlane.f32.xlu0 %v2439
        %v2521 = vpop.xlane.xlu0 %2520
        %2522 = vmax.xlane.f32.xlu0 %v2442
        %v2523 = vpop.xlane.xlu0 %2522
        %2524 = vmax.xlane.f32.xlu0 %v2445
        %v2525 = vpop.xlane.xlu0 %2524
        %2526 = vmax.xlane.f32.xlu0 %v2448
        %v2527 = vpop.xlane.xlu0 %2526
        %2528 = vmax.xlane.f32.xlu0 %v2451
        %v2529 = vpop.xlane.xlu0 %2528
        %2530 = vmax.xlane.f32.xlu0 %v2454
        %v2531 = vpop.xlane.xlu0 %2530
        %2532 = vmax.xlane.f32.xlu0 %v2457
        %v2533 = vpop.xlane.xlu0 %2532
        %2534 = vmax.xlane.f32.xlu0 %v2460
        %v2535 = vpop.xlane.xlu0 %2534
        %2536 = vmax.xlane.f32.xlu0 %v2463
        %v2537 = vpop.xlane.xlu0 %2536
        %2538 = vmax.xlane.f32.xlu0 %v2466
        %v2539 = vpop.xlane.xlu0 %2538
        %2540 = vmax.xlane.f32.xlu0 %v2469
        %v2541 = vpop.xlane.xlu0 %2540
        %2542 = vmax.xlane.f32.xlu0 %v2472
        %v2543 = vpop.xlane.xlu0 %2542
        %2544 = vmax.xlane.f32.xlu0 %v2475
        %v2545 = vpop.xlane.xlu0 %2544
        %2546 = vmax.xlane.f32.xlu0 %v2478
        %v2547 = vpop.xlane.xlu0 %2546
        %2548 = vmax.xlane.f32.xlu0 %v2481
        %v2549 = vpop.xlane.xlu0 %2548
        %2550 = vmax.xlane.f32.xlu0 %v2484
        %v2551 = vpop.xlane.xlu0 %2550
        %2552 = vmax.xlane.f32.xlu0 %v2487
        %v2553 = vpop.xlane.xlu0 %2552
        %2554 = vmax.xlane.f32.xlu0 %v2490
        %v2555 = vpop.xlane.xlu0 %2554
        %vm2556 = vcmp.eq.f32.partialorder %v2397, %v2493
        %vm2557 = vcmp.eq.f32.partialorder %v2400, %v2495
        %vm2558 = vcmp.eq.f32.partialorder %v2403, %v2497
        %vm2559 = vcmp.eq.f32.partialorder %v2406, %v2499
        %vm2560 = vcmp.eq.f32.partialorder %v2409, %v2501
        %vm2561 = vcmp.eq.f32.partialorder %v2412, %v2503
        %vm2562 = vcmp.eq.f32.partialorder %v2415, %v2505
        %vm2563 = vcmp.eq.f32.partialorder %v2418, %v2507
        %vm2564 = vcmp.eq.f32.partialorder %v2421, %v2509
        %vm2565 = vcmp.eq.f32.partialorder %v2424, %v2511
        %vm2566 = vcmp.eq.f32.partialorder %v2427, %v2513
        %vm2567 = vcmp.eq.f32.partialorder %v2430, %v2515
        %vm2568 = vcmp.eq.f32.partialorder %v2433, %v2517
        %vm2569 = vcmp.eq.f32.partialorder %v2436, %v2519
        %vm2570 = vcmp.eq.f32.partialorder %v2439, %v2521
        %vm2571 = vcmp.eq.f32.partialorder %v2442, %v2523
        %vm2572 = vcmp.eq.f32.partialorder %v2445, %v2525
        %vm2573 = vcmp.eq.f32.partialorder %v2448, %v2527
        %vm2574 = vcmp.eq.f32.partialorder %v2451, %v2529
        %vm2575 = vcmp.eq.f32.partialorder %v2454, %v2531
        %vm2576 = vcmp.eq.f32.partialorder %v2457, %v2533
        %vm2577 = vcmp.eq.f32.partialorder %v2460, %v2535
        %vm2578 = vcmp.eq.f32.partialorder %v2463, %v2537
        %vm2579 = vcmp.eq.f32.partialorder %v2466, %v2539
        %vm2580 = vcmp.eq.f32.partialorder %v2469, %v2541
        %vm2581 = vcmp.eq.f32.partialorder %v2472, %v2543
        %vm2582 = vcmp.eq.f32.partialorder %v2475, %v2545
        %vm2583 = vcmp.eq.f32.partialorder %v2478, %v2547
        %vm2584 = vcmp.eq.f32.partialorder %v2481, %v2549
        %vm2585 = vcmp.eq.f32.partialorder %v2484, %v2551
        %vm2586 = vcmp.eq.f32.partialorder %v2487, %v2553
        %vm2587 = vcmp.eq.f32.partialorder %v2490, %v2555
        %v2588 = vsel %vm2556, %v354, 128
        %v2589 = vsel %vm2557, %v354, 128
        %v2590 = vsel %vm2558, %v354, 128
        %v2591 = vsel %vm2559, %v354, 128
        %v2592 = vsel %vm2560, %v354, 128
        %v2593 = vsel %vm2561, %v354, 128
        %v2594 = vsel %vm2562, %v354, 128
        %v2595 = vsel %vm2563, %v354, 128
        %v2596 = vsel %vm2564, %v354, 128
        %v2597 = vsel %vm2565, %v354, 128
        %v2598 = vsel %vm2566, %v354, 128
        %v2599 = vsel %vm2567, %v354, 128
        %v2600 = vsel %vm2568, %v354, 128
        %v2601 = vsel %vm2569, %v354, 128
        %v2602 = vsel %vm2570, %v354, 128
        %v2603 = vsel %vm2571, %v354, 128
        %v2604 = vsel %vm2572, %v354, 128
        %v2605 = vsel %vm2573, %v354, 128
        %v2606 = vsel %vm2574, %v354, 128
        %v2607 = vsel %vm2575, %v354, 128
        %v2608 = vsel %vm2576, %v354, 128
        %v2609 = vsel %vm2577, %v354, 128
        %v2610 = vsel %vm2578, %v354, 128
        %v2611 = vsel %vm2579, %v354, 128
        %v2612 = vsel %vm2580, %v354, 128
        %v2613 = vsel %vm2581, %v354, 128
        %v2614 = vsel %vm2582, %v354, 128
        %v2615 = vsel %vm2583, %v354, 128
        %v2616 = vsel %vm2584, %v354, 128
        %v2617 = vsel %vm2585, %v354, 128
        %v2618 = vsel %vm2586, %v354, 128
        %v2619 = vsel %vm2587, %v354, 128
        %v2620 = vand.u32 %v2588, 65535
        %v2621 = vshra.s32 %v2588, 16
        %v2622 = vcvt.s32.f32 %v2620
        %v2623 = vcvt.s32.f32 %v2621
        %2624 = vmin.xlane.f32.xlu0 %v2623
        %v2625 = vpop.xlane.xlu0 %2624
        %vm2626 = vcmp.eq.f32.partialorder %v2623, %v2625
        %v2627 = vsel %vm2626, %v2622, inf
        %2628 = vmin.xlane.f32.xlu0 %v2627
        %v2629 = vpop.xlane.xlu0 %2628
        %v2630 = vcvt.f32.s32 %v2629
        %v2631 = vcvt.f32.s32 %v2625
        %v2632 = vshll.u32 %v2631, 16
        %v2633 = vadd.s32 %v2632, %v2630
        %v2634 = vand.u32 %v2589, 65535
        %v2635 = vshra.s32 %v2589, 16
        %v2636 = vcvt.s32.f32 %v2634
        %v2637 = vcvt.s32.f32 %v2635
        %2638 = vmin.xlane.f32.xlu0 %v2637
        %v2639 = vpop.xlane.xlu0 %2638
        %vm2640 = vcmp.eq.f32.partialorder %v2637, %v2639
        %v2641 = vsel %vm2640, %v2636, inf
        %2642 = vmin.xlane.f32.xlu0 %v2641
        %v2643 = vpop.xlane.xlu0 %2642
        %v2644 = vcvt.f32.s32 %v2643
        %v2645 = vcvt.f32.s32 %v2639
        %v2646 = vshll.u32 %v2645, 16
        %v2647 = vadd.s32 %v2646, %v2644
        %v2648 = vand.u32 %v2590, 65535
        %v2649 = vshra.s32 %v2590, 16
        %v2650 = vcvt.s32.f32 %v2648
        %v2651 = vcvt.s32.f32 %v2649
        %2652 = vmin.xlane.f32.xlu0 %v2651
        %v2653 = vpop.xlane.xlu0 %2652
        %vm2654 = vcmp.eq.f32.partialorder %v2651, %v2653
        %v2655 = vsel %vm2654, %v2650, inf
        %2656 = vmin.xlane.f32.xlu0 %v2655
        %v2657 = vpop.xlane.xlu0 %2656
        %v2658 = vcvt.f32.s32 %v2657
        %v2659 = vcvt.f32.s32 %v2653
        %v2660 = vshll.u32 %v2659, 16
        %v2661 = vadd.s32 %v2660, %v2658
        %v2662 = vand.u32 %v2591, 65535
        %v2663 = vshra.s32 %v2591, 16
        %v2664 = vcvt.s32.f32 %v2662
        %v2665 = vcvt.s32.f32 %v2663
        %2666 = vmin.xlane.f32.xlu0 %v2665
        %v2667 = vpop.xlane.xlu0 %2666
        %vm2668 = vcmp.eq.f32.partialorder %v2665, %v2667
        %v2669 = vsel %vm2668, %v2664, inf
        %2670 = vmin.xlane.f32.xlu0 %v2669
        %v2671 = vpop.xlane.xlu0 %2670
        %v2672 = vcvt.f32.s32 %v2671
        %v2673 = vcvt.f32.s32 %v2667
        %v2674 = vshll.u32 %v2673, 16
        %v2675 = vadd.s32 %v2674, %v2672
        %v2676 = vand.u32 %v2592, 65535
        %v2677 = vshra.s32 %v2592, 16
        %v2678 = vcvt.s32.f32 %v2676
        %v2679 = vcvt.s32.f32 %v2677
        %2680 = vmin.xlane.f32.xlu0 %v2679
        %v2681 = vpop.xlane.xlu0 %2680
        %vm2682 = vcmp.eq.f32.partialorder %v2679, %v2681
        %v2683 = vsel %vm2682, %v2678, inf
        %2684 = vmin.xlane.f32.xlu0 %v2683
        %v2685 = vpop.xlane.xlu0 %2684
        %v2686 = vcvt.f32.s32 %v2685
        %v2687 = vcvt.f32.s32 %v2681
        %v2688 = vshll.u32 %v2687, 16
        %v2689 = vadd.s32 %v2688, %v2686
        %v2690 = vand.u32 %v2593, 65535
        %v2691 = vshra.s32 %v2593, 16
        %v2692 = vcvt.s32.f32 %v2690
        %v2693 = vcvt.s32.f32 %v2691
        %2694 = vmin.xlane.f32.xlu0 %v2693
        %v2695 = vpop.xlane.xlu0 %2694
        %vm2696 = vcmp.eq.f32.partialorder %v2693, %v2695
        %v2697 = vsel %vm2696, %v2692, inf
        %2698 = vmin.xlane.f32.xlu0 %v2697
        %v2699 = vpop.xlane.xlu0 %2698
        %v2700 = vcvt.f32.s32 %v2699
        %v2701 = vcvt.f32.s32 %v2695
        %v2702 = vshll.u32 %v2701, 16
        %v2703 = vadd.s32 %v2702, %v2700
        %v2704 = vand.u32 %v2594, 65535
        %v2705 = vshra.s32 %v2594, 16
        %v2706 = vcvt.s32.f32 %v2704
        %v2707 = vcvt.s32.f32 %v2705
        %2708 = vmin.xlane.f32.xlu0 %v2707
        %v2709 = vpop.xlane.xlu0 %2708
        %vm2710 = vcmp.eq.f32.partialorder %v2707, %v2709
        %v2711 = vsel %vm2710, %v2706, inf
        %2712 = vmin.xlane.f32.xlu0 %v2711
        %v2713 = vpop.xlane.xlu0 %2712
        %v2714 = vcvt.f32.s32 %v2713
        %v2715 = vcvt.f32.s32 %v2709
        %v2716 = vshll.u32 %v2715, 16
        %v2717 = vadd.s32 %v2716, %v2714
        %v2718 = vand.u32 %v2595, 65535
        %v2719 = vshra.s32 %v2595, 16
        %v2720 = vcvt.s32.f32 %v2718
        %v2721 = vcvt.s32.f32 %v2719
        %2722 = vmin.xlane.f32.xlu0 %v2721
        %v2723 = vpop.xlane.xlu0 %2722
        %vm2724 = vcmp.eq.f32.partialorder %v2721, %v2723
        %v2725 = vsel %vm2724, %v2720, inf
        %2726 = vmin.xlane.f32.xlu0 %v2725
        %v2727 = vpop.xlane.xlu0 %2726
        %v2728 = vcvt.f32.s32 %v2727
        %v2729 = vcvt.f32.s32 %v2723
        %v2730 = vshll.u32 %v2729, 16
        %v2731 = vadd.s32 %v2730, %v2728
        %v2732 = vand.u32 %v2596, 65535
        %v2733 = vshra.s32 %v2596, 16
        %v2734 = vcvt.s32.f32 %v2732
        %v2735 = vcvt.s32.f32 %v2733
        %2736 = vmin.xlane.f32.xlu0 %v2735
        %v2737 = vpop.xlane.xlu0 %2736
        %vm2738 = vcmp.eq.f32.partialorder %v2735, %v2737
        %v2739 = vsel %vm2738, %v2734, inf
        %2740 = vmin.xlane.f32.xlu0 %v2739
        %v2741 = vpop.xlane.xlu0 %2740
        %v2742 = vcvt.f32.s32 %v2741
        %v2743 = vcvt.f32.s32 %v2737
        %v2744 = vshll.u32 %v2743, 16
        %v2745 = vadd.s32 %v2744, %v2742
        %v2746 = vand.u32 %v2597, 65535
        %v2747 = vshra.s32 %v2597, 16
        %v2748 = vcvt.s32.f32 %v2746
        %v2749 = vcvt.s32.f32 %v2747
        %2750 = vmin.xlane.f32.xlu0 %v2749
        %v2751 = vpop.xlane.xlu0 %2750
        %vm2752 = vcmp.eq.f32.partialorder %v2749, %v2751
        %v2753 = vsel %vm2752, %v2748, inf
        %2754 = vmin.xlane.f32.xlu0 %v2753
        %v2755 = vpop.xlane.xlu0 %2754
        %v2756 = vcvt.f32.s32 %v2755
        %v2757 = vcvt.f32.s32 %v2751
        %v2758 = vshll.u32 %v2757, 16
        %v2759 = vadd.s32 %v2758, %v2756
        %v2760 = vand.u32 %v2598, 65535
        %v2761 = vshra.s32 %v2598, 16
        %v2762 = vcvt.s32.f32 %v2760
        %v2763 = vcvt.s32.f32 %v2761
        %2764 = vmin.xlane.f32.xlu0 %v2763
        %v2765 = vpop.xlane.xlu0 %2764
        %vm2766 = vcmp.eq.f32.partialorder %v2763, %v2765
        %v2767 = vsel %vm2766, %v2762, inf
        %2768 = vmin.xlane.f32.xlu0 %v2767
        %v2769 = vpop.xlane.xlu0 %2768
        %v2770 = vcvt.f32.s32 %v2769
        %v2771 = vcvt.f32.s32 %v2765
        %v2772 = vshll.u32 %v2771, 16
        %v2773 = vadd.s32 %v2772, %v2770
        %v2774 = vand.u32 %v2599, 65535
        %v2775 = vshra.s32 %v2599, 16
        %v2776 = vcvt.s32.f32 %v2774
        %v2777 = vcvt.s32.f32 %v2775
        %2778 = vmin.xlane.f32.xlu0 %v2777
        %v2779 = vpop.xlane.xlu0 %2778
        %vm2780 = vcmp.eq.f32.partialorder %v2777, %v2779
        %v2781 = vsel %vm2780, %v2776, inf
        %2782 = vmin.xlane.f32.xlu0 %v2781
        %v2783 = vpop.xlane.xlu0 %2782
        %v2784 = vcvt.f32.s32 %v2783
        %v2785 = vcvt.f32.s32 %v2779
        %v2786 = vshll.u32 %v2785, 16
        %v2787 = vadd.s32 %v2786, %v2784
        %v2788 = vand.u32 %v2600, 65535
        %v2789 = vshra.s32 %v2600, 16
        %v2790 = vcvt.s32.f32 %v2788
        %v2791 = vcvt.s32.f32 %v2789
        %2792 = vmin.xlane.f32.xlu0 %v2791
        %v2793 = vpop.xlane.xlu0 %2792
        %vm2794 = vcmp.eq.f32.partialorder %v2791, %v2793
        %v2795 = vsel %vm2794, %v2790, inf
        %2796 = vmin.xlane.f32.xlu0 %v2795
        %v2797 = vpop.xlane.xlu0 %2796
        %v2798 = vcvt.f32.s32 %v2797
        %v2799 = vcvt.f32.s32 %v2793
        %v2800 = vshll.u32 %v2799, 16
        %v2801 = vadd.s32 %v2800, %v2798
        %v2802 = vand.u32 %v2601, 65535
        %v2803 = vshra.s32 %v2601, 16
        %v2804 = vcvt.s32.f32 %v2802
        %v2805 = vcvt.s32.f32 %v2803
        %2806 = vmin.xlane.f32.xlu0 %v2805
        %v2807 = vpop.xlane.xlu0 %2806
        %vm2808 = vcmp.eq.f32.partialorder %v2805, %v2807
        %v2809 = vsel %vm2808, %v2804, inf
        %2810 = vmin.xlane.f32.xlu0 %v2809
        %v2811 = vpop.xlane.xlu0 %2810
        %v2812 = vcvt.f32.s32 %v2811
        %v2813 = vcvt.f32.s32 %v2807
        %v2814 = vshll.u32 %v2813, 16
        %v2815 = vadd.s32 %v2814, %v2812
        %v2816 = vand.u32 %v2602, 65535
        %v2817 = vshra.s32 %v2602, 16
        %v2818 = vcvt.s32.f32 %v2816
        %v2819 = vcvt.s32.f32 %v2817
        %2820 = vmin.xlane.f32.xlu0 %v2819
        %v2821 = vpop.xlane.xlu0 %2820
        %vm2822 = vcmp.eq.f32.partialorder %v2819, %v2821
        %v2823 = vsel %vm2822, %v2818, inf
        %2824 = vmin.xlane.f32.xlu0 %v2823
        %v2825 = vpop.xlane.xlu0 %2824
        %v2826 = vcvt.f32.s32 %v2825
        %v2827 = vcvt.f32.s32 %v2821
        %v2828 = vshll.u32 %v2827, 16
        %v2829 = vadd.s32 %v2828, %v2826
        %v2830 = vand.u32 %v2603, 65535
        %v2831 = vshra.s32 %v2603, 16
        %v2832 = vcvt.s32.f32 %v2830
        %v2833 = vcvt.s32.f32 %v2831
        %2834 = vmin.xlane.f32.xlu0 %v2833
        %v2835 = vpop.xlane.xlu0 %2834
        %vm2836 = vcmp.eq.f32.partialorder %v2833, %v2835
        %v2837 = vsel %vm2836, %v2832, inf
        %2838 = vmin.xlane.f32.xlu0 %v2837
        %v2839 = vpop.xlane.xlu0 %2838
        %v2840 = vcvt.f32.s32 %v2839
        %v2841 = vcvt.f32.s32 %v2835
        %v2842 = vshll.u32 %v2841, 16
        %v2843 = vadd.s32 %v2842, %v2840
        %v2844 = vand.u32 %v2604, 65535
        %v2845 = vshra.s32 %v2604, 16
        %v2846 = vcvt.s32.f32 %v2844
        %v2847 = vcvt.s32.f32 %v2845
        %2848 = vmin.xlane.f32.xlu0 %v2847
        %v2849 = vpop.xlane.xlu0 %2848
        %vm2850 = vcmp.eq.f32.partialorder %v2847, %v2849
        %v2851 = vsel %vm2850, %v2846, inf
        %2852 = vmin.xlane.f32.xlu0 %v2851
        %v2853 = vpop.xlane.xlu0 %2852
        %v2854 = vcvt.f32.s32 %v2853
        %v2855 = vcvt.f32.s32 %v2849
        %v2856 = vshll.u32 %v2855, 16
        %v2857 = vadd.s32 %v2856, %v2854
        %v2858 = vand.u32 %v2605, 65535
        %v2859 = vshra.s32 %v2605, 16
        %v2860 = vcvt.s32.f32 %v2858
        %v2861 = vcvt.s32.f32 %v2859
        %2862 = vmin.xlane.f32.xlu0 %v2861
        %v2863 = vpop.xlane.xlu0 %2862
        %vm2864 = vcmp.eq.f32.partialorder %v2861, %v2863
        %v2865 = vsel %vm2864, %v2860, inf
        %2866 = vmin.xlane.f32.xlu0 %v2865
        %v2867 = vpop.xlane.xlu0 %2866
        %v2868 = vcvt.f32.s32 %v2867
        %v2869 = vcvt.f32.s32 %v2863
        %v2870 = vshll.u32 %v2869, 16
        %v2871 = vadd.s32 %v2870, %v2868
        %v2872 = vand.u32 %v2606, 65535
        %v2873 = vshra.s32 %v2606, 16
        %v2874 = vcvt.s32.f32 %v2872
        %v2875 = vcvt.s32.f32 %v2873
        %2876 = vmin.xlane.f32.xlu0 %v2875
        %v2877 = vpop.xlane.xlu0 %2876
        %vm2878 = vcmp.eq.f32.partialorder %v2875, %v2877
        %v2879 = vsel %vm2878, %v2874, inf
        %2880 = vmin.xlane.f32.xlu0 %v2879
        %v2881 = vpop.xlane.xlu0 %2880
        %v2882 = vcvt.f32.s32 %v2881
        %v2883 = vcvt.f32.s32 %v2877
        %v2884 = vshll.u32 %v2883, 16
        %v2885 = vadd.s32 %v2884, %v2882
        %v2886 = vand.u32 %v2607, 65535
        %v2887 = vshra.s32 %v2607, 16
        %v2888 = vcvt.s32.f32 %v2886
        %v2889 = vcvt.s32.f32 %v2887
        %2890 = vmin.xlane.f32.xlu0 %v2889
        %v2891 = vpop.xlane.xlu0 %2890
        %vm2892 = vcmp.eq.f32.partialorder %v2889, %v2891
        %v2893 = vsel %vm2892, %v2888, inf
        %2894 = vmin.xlane.f32.xlu0 %v2893
        %v2895 = vpop.xlane.xlu0 %2894
        %v2896 = vcvt.f32.s32 %v2895
        %v2897 = vcvt.f32.s32 %v2891
        %v2898 = vshll.u32 %v2897, 16
        %v2899 = vadd.s32 %v2898, %v2896
        %v2900 = vand.u32 %v2608, 65535
        %v2901 = vshra.s32 %v2608, 16
        %v2902 = vcvt.s32.f32 %v2900
        %v2903 = vcvt.s32.f32 %v2901
        %2904 = vmin.xlane.f32.xlu0 %v2903
        %v2905 = vpop.xlane.xlu0 %2904
        %vm2906 = vcmp.eq.f32.partialorder %v2903, %v2905
        %v2907 = vsel %vm2906, %v2902, inf
        %2908 = vmin.xlane.f32.xlu0 %v2907
        %v2909 = vpop.xlane.xlu0 %2908
        %v2910 = vcvt.f32.s32 %v2909
        %v2911 = vcvt.f32.s32 %v2905
        %v2912 = vshll.u32 %v2911, 16
        %v2913 = vadd.s32 %v2912, %v2910
        %v2914 = vand.u32 %v2609, 65535
        %v2915 = vshra.s32 %v2609, 16
        %v2916 = vcvt.s32.f32 %v2914
        %v2917 = vcvt.s32.f32 %v2915
        %2918 = vmin.xlane.f32.xlu0 %v2917
        %v2919 = vpop.xlane.xlu0 %2918
        %vm2920 = vcmp.eq.f32.partialorder %v2917, %v2919
        %v2921 = vsel %vm2920, %v2916, inf
        %2922 = vmin.xlane.f32.xlu0 %v2921
        %v2923 = vpop.xlane.xlu0 %2922
        %v2924 = vcvt.f32.s32 %v2923
        %v2925 = vcvt.f32.s32 %v2919
        %v2926 = vshll.u32 %v2925, 16
        %v2927 = vadd.s32 %v2926, %v2924
        %v2928 = vand.u32 %v2610, 65535
        %v2929 = vshra.s32 %v2610, 16
        %v2930 = vcvt.s32.f32 %v2928
        %v2931 = vcvt.s32.f32 %v2929
        %2932 = vmin.xlane.f32.xlu0 %v2931
        %v2933 = vpop.xlane.xlu0 %2932
        %vm2934 = vcmp.eq.f32.partialorder %v2931, %v2933
        %v2935 = vsel %vm2934, %v2930, inf
        %2936 = vmin.xlane.f32.xlu0 %v2935
        %v2937 = vpop.xlane.xlu0 %2936
        %v2938 = vcvt.f32.s32 %v2937
        %v2939 = vcvt.f32.s32 %v2933
        %v2940 = vshll.u32 %v2939, 16
        %v2941 = vadd.s32 %v2940, %v2938
        %v2942 = vand.u32 %v2611, 65535
        %v2943 = vshra.s32 %v2611, 16
        %v2944 = vcvt.s32.f32 %v2942
        %v2945 = vcvt.s32.f32 %v2943
        %2946 = vmin.xlane.f32.xlu0 %v2945
        %v2947 = vpop.xlane.xlu0 %2946
        %vm2948 = vcmp.eq.f32.partialorder %v2945, %v2947
        %v2949 = vsel %vm2948, %v2944, inf
        %2950 = vmin.xlane.f32.xlu0 %v2949
        %v2951 = vpop.xlane.xlu0 %2950
        %v2952 = vcvt.f32.s32 %v2951
        %v2953 = vcvt.f32.s32 %v2947
        %v2954 = vshll.u32 %v2953, 16
        %v2955 = vadd.s32 %v2954, %v2952
        %v2956 = vand.u32 %v2612, 65535
        %v2957 = vshra.s32 %v2612, 16
        %v2958 = vcvt.s32.f32 %v2956
        %v2959 = vcvt.s32.f32 %v2957
        %2960 = vmin.xlane.f32.xlu0 %v2959
        %v2961 = vpop.xlane.xlu0 %2960
        %vm2962 = vcmp.eq.f32.partialorder %v2959, %v2961
        %v2963 = vsel %vm2962, %v2958, inf
        %2964 = vmin.xlane.f32.xlu0 %v2963
        %v2965 = vpop.xlane.xlu0 %2964
        %v2966 = vcvt.f32.s32 %v2965
        %v2967 = vcvt.f32.s32 %v2961
        %v2968 = vshll.u32 %v2967, 16
        %v2969 = vadd.s32 %v2968, %v2966
        %v2970 = vand.u32 %v2613, 65535
        %v2971 = vshra.s32 %v2613, 16
        %v2972 = vcvt.s32.f32 %v2970
        %v2973 = vcvt.s32.f32 %v2971
        %2974 = vmin.xlane.f32.xlu0 %v2973
        %v2975 = vpop.xlane.xlu0 %2974
        %vm2976 = vcmp.eq.f32.partialorder %v2973, %v2975
        %v2977 = vsel %vm2976, %v2972, inf
        %2978 = vmin.xlane.f32.xlu0 %v2977
        %v2979 = vpop.xlane.xlu0 %2978
        %v2980 = vcvt.f32.s32 %v2979
        %v2981 = vcvt.f32.s32 %v2975
        %v2982 = vshll.u32 %v2981, 16
        %v2983 = vadd.s32 %v2982, %v2980
        %v2984 = vand.u32 %v2614, 65535
        %v2985 = vshra.s32 %v2614, 16
        %v2986 = vcvt.s32.f32 %v2984
        %v2987 = vcvt.s32.f32 %v2985
        %2988 = vmin.xlane.f32.xlu0 %v2987
        %v2989 = vpop.xlane.xlu0 %2988
        %vm2990 = vcmp.eq.f32.partialorder %v2987, %v2989
        %v2991 = vsel %vm2990, %v2986, inf
        %2992 = vmin.xlane.f32.xlu0 %v2991
        %v2993 = vpop.xlane.xlu0 %2992
        %v2994 = vcvt.f32.s32 %v2993
        %v2995 = vcvt.f32.s32 %v2989
        %v2996 = vshll.u32 %v2995, 16
        %v2997 = vadd.s32 %v2996, %v2994
        %v2998 = vand.u32 %v2615, 65535
        %v2999 = vshra.s32 %v2615, 16
        %v3000 = vcvt.s32.f32 %v2998
        %v3001 = vcvt.s32.f32 %v2999
        %3002 = vmin.xlane.f32.xlu0 %v3001
        %v3003 = vpop.xlane.xlu0 %3002
        %vm3004 = vcmp.eq.f32.partialorder %v3001, %v3003
        %v3005 = vsel %vm3004, %v3000, inf
        %3006 = vmin.xlane.f32.xlu0 %v3005
        %v3007 = vpop.xlane.xlu0 %3006
        %v3008 = vcvt.f32.s32 %v3007
        %v3009 = vcvt.f32.s32 %v3003
        %v3010 = vshll.u32 %v3009, 16
        %v3011 = vadd.s32 %v3010, %v3008
        %v3012 = vand.u32 %v2616, 65535
        %v3013 = vshra.s32 %v2616, 16
        %v3014 = vcvt.s32.f32 %v3012
        %v3015 = vcvt.s32.f32 %v3013
        %3016 = vmin.xlane.f32.xlu0 %v3015
        %v3017 = vpop.xlane.xlu0 %3016
        %vm3018 = vcmp.eq.f32.partialorder %v3015, %v3017
        %v3019 = vsel %vm3018, %v3014, inf
        %3020 = vmin.xlane.f32.xlu0 %v3019
        %v3021 = vpop.xlane.xlu0 %3020
        %v3022 = vcvt.f32.s32 %v3021
        %v3023 = vcvt.f32.s32 %v3017
        %v3024 = vshll.u32 %v3023, 16
        %v3025 = vadd.s32 %v3024, %v3022
        %v3026 = vand.u32 %v2617, 65535
        %v3027 = vshra.s32 %v2617, 16
        %v3028 = vcvt.s32.f32 %v3026
        %v3029 = vcvt.s32.f32 %v3027
        %3030 = vmin.xlane.f32.xlu0 %v3029
        %v3031 = vpop.xlane.xlu0 %3030
        %vm3032 = vcmp.eq.f32.partialorder %v3029, %v3031
        %v3033 = vsel %vm3032, %v3028, inf
        %3034 = vmin.xlane.f32.xlu0 %v3033
        %v3035 = vpop.xlane.xlu0 %3034
        %v3036 = vcvt.f32.s32 %v3035
        %v3037 = vcvt.f32.s32 %v3031
        %v3038 = vshll.u32 %v3037, 16
        %v3039 = vadd.s32 %v3038, %v3036
        %v3040 = vand.u32 %v2618, 65535
        %v3041 = vshra.s32 %v2618, 16
        %v3042 = vcvt.s32.f32 %v3040
        %v3043 = vcvt.s32.f32 %v3041
        %3044 = vmin.xlane.f32.xlu0 %v3043
        %v3045 = vpop.xlane.xlu0 %3044
        %vm3046 = vcmp.eq.f32.partialorder %v3043, %v3045
        %v3047 = vsel %vm3046, %v3042, inf
        %3048 = vmin.xlane.f32.xlu0 %v3047
        %v3049 = vpop.xlane.xlu0 %3048
        %v3050 = vcvt.f32.s32 %v3049
        %v3051 = vcvt.f32.s32 %v3045
        %v3052 = vshll.u32 %v3051, 16
        %v3053 = vadd.s32 %v3052, %v3050
        %v3054 = vand.u32 %v2619, 65535
        %v3055 = vshra.s32 %v2619, 16
        %v3056 = vcvt.s32.f32 %v3054
        %v3057 = vcvt.s32.f32 %v3055
        %3058 = vmin.xlane.f32.xlu0 %v3057
        %v3059 = vpop.xlane.xlu0 %3058
        %vm3060 = vcmp.eq.f32.partialorder %v3057, %v3059
        %v3061 = vsel %vm3060, %v3056, inf
        %3062 = vmin.xlane.f32.xlu0 %v3061
        %v3063 = vpop.xlane.xlu0 %3062
        %v3064 = vcvt.f32.s32 %v3063
        %v3065 = vcvt.f32.s32 %v3059
        %v3066 = vshll.u32 %v3065, 16
        %v3067 = vadd.s32 %v3066, %v3064
        %vm3068 = vcmp.eq.s32.totalorder %v354, %v2633
        %vm3069 = vcmp.eq.s32.totalorder %v354, %v2647
        %vm3070 = vcmp.eq.s32.totalorder %v354, %v2661
        %vm3071 = vcmp.eq.s32.totalorder %v354, %v2675
        %vm3072 = vcmp.eq.s32.totalorder %v354, %v2689
        %vm3073 = vcmp.eq.s32.totalorder %v354, %v2703
        %vm3074 = vcmp.eq.s32.totalorder %v354, %v2717
        %vm3075 = vcmp.eq.s32.totalorder %v354, %v2731
        %vm3076 = vcmp.eq.s32.totalorder %v354, %v2745
        %vm3077 = vcmp.eq.s32.totalorder %v354, %v2759
        %vm3078 = vcmp.eq.s32.totalorder %v354, %v2773
        %vm3079 = vcmp.eq.s32.totalorder %v354, %v2787
        %vm3080 = vcmp.eq.s32.totalorder %v354, %v2801
        %vm3081 = vcmp.eq.s32.totalorder %v354, %v2815
        %vm3082 = vcmp.eq.s32.totalorder %v354, %v2829
        %vm3083 = vcmp.eq.s32.totalorder %v354, %v2843
        %vm3084 = vcmp.eq.s32.totalorder %v354, %v2857
        %vm3085 = vcmp.eq.s32.totalorder %v354, %v2871
        %vm3086 = vcmp.eq.s32.totalorder %v354, %v2885
        %vm3087 = vcmp.eq.s32.totalorder %v354, %v2899
        %vm3088 = vcmp.eq.s32.totalorder %v354, %v2913
        %vm3089 = vcmp.eq.s32.totalorder %v354, %v2927
        %vm3090 = vcmp.eq.s32.totalorder %v354, %v2941
        %vm3091 = vcmp.eq.s32.totalorder %v354, %v2955
        %vm3092 = vcmp.eq.s32.totalorder %v354, %v2969
        %vm3093 = vcmp.eq.s32.totalorder %v354, %v2983
        %vm3094 = vcmp.eq.s32.totalorder %v354, %v2997
        %vm3095 = vcmp.eq.s32.totalorder %v354, %v3011
        %vm3096 = vcmp.eq.s32.totalorder %v354, %v3025
        %vm3097 = vcmp.eq.s32.totalorder %v354, %v3039
        %vm3098 = vcmp.eq.s32.totalorder %v354, %v3053
        %vm3099 = vcmp.eq.s32.totalorder %v354, %v3067
        %v3100 = vsel %vm3068, 1, 0
        %v3101 = vsel %vm3069, 1, 0
        %v3102 = vsel %vm3070, 1, 0
        %v3103 = vsel %vm3071, 1, 0
        %v3104 = vsel %vm3072, 1, 0
        %v3105 = vsel %vm3073, 1, 0
        %v3106 = vsel %vm3074, 1, 0
        %v3107 = vsel %vm3075, 1, 0
        %v3108 = vsel %vm3076, 1, 0
        %v3109 = vsel %vm3077, 1, 0
        %v3110 = vsel %vm3078, 1, 0
        %v3111 = vsel %vm3079, 1, 0
        %v3112 = vsel %vm3080, 1, 0
        %v3113 = vsel %vm3081, 1, 0
        %v3114 = vsel %vm3082, 1, 0
        %v3115 = vsel %vm3083, 1, 0
        %v3116 = vsel %vm3084, 1, 0
        %v3117 = vsel %vm3085, 1, 0
        %v3118 = vsel %vm3086, 1, 0
        %v3119 = vsel %vm3087, 1, 0
        %v3120 = vsel %vm3088, 1, 0
        %v3121 = vsel %vm3089, 1, 0
        %v3122 = vsel %vm3090, 1, 0
        %v3123 = vsel %vm3091, 1, 0
        %v3124 = vsel %vm3092, 1, 0
        %v3125 = vsel %vm3093, 1, 0
        %v3126 = vsel %vm3094, 1, 0
        %v3127 = vsel %vm3095, 1, 0
        %v3128 = vsel %vm3096, 1, 0
        %v3129 = vsel %vm3097, 1, 0
        %v3130 = vsel %vm3098, 1, 0
        %v3131 = vsel %vm3099, 1, 0
        %v3132 = vcvt.s32.f32 %v3100
        %v3133 = vcvt.s32.f32 %v3101
        %v3134 = vcvt.s32.f32 %v3102
        %v3135 = vcvt.s32.f32 %v3103
        %v3136 = vcvt.s32.f32 %v3104
        %v3137 = vcvt.s32.f32 %v3105
        %v3138 = vcvt.s32.f32 %v3106
        %v3139 = vcvt.s32.f32 %v3107
        %v3140 = vcvt.s32.f32 %v3108
        %v3141 = vcvt.s32.f32 %v3109
        %v3142 = vcvt.s32.f32 %v3110
        %v3143 = vcvt.s32.f32 %v3111
        %v3144 = vcvt.s32.f32 %v3112
        %v3145 = vcvt.s32.f32 %v3113
        %v3146 = vcvt.s32.f32 %v3114
        %v3147 = vcvt.s32.f32 %v3115
        %v3148 = vcvt.s32.f32 %v3116
        %v3149 = vcvt.s32.f32 %v3117
        %v3150 = vcvt.s32.f32 %v3118
        %v3151 = vcvt.s32.f32 %v3119
        %v3152 = vcvt.s32.f32 %v3120
        %v3153 = vcvt.s32.f32 %v3121
        %v3154 = vcvt.s32.f32 %v3122
        %v3155 = vcvt.s32.f32 %v3123
        %v3156 = vcvt.s32.f32 %v3124
        %v3157 = vcvt.s32.f32 %v3125
        %v3158 = vcvt.s32.f32 %v3126
        %v3159 = vcvt.s32.f32 %v3127
        %v3160 = vcvt.s32.f32 %v3128
        %v3161 = vcvt.s32.f32 %v3129
        %v3162 = vcvt.s32.f32 %v3130
        %v3163 = vcvt.s32.f32 %v3131
        %s3164 = scalar_lea.vmem %s4, 128
        %v3165 = vld [vmem:[%s3164] sm:$0xff]
        %v3166 = vld [vmem:[%s3164 + $0x8] sm:$0xff]
        %v3167 = vld [vmem:[%s3164 + $0x10] sm:$0xff]
        %v3168 = vld [vmem:[%s3164 + $0x18] sm:$0xff]
        %v3169 = vld [vmem:[%s3164 + $0x20] sm:$0xff]
        %v3170 = vld [vmem:[%s3164 + $0x28] sm:$0xff]
        %v3171 = vld [vmem:[%s3164 + $0x30] sm:$0xff]
        %v3172 = vld [vmem:[%s3164 + $0x38] sm:$0xff]
        %v3173 = vld [vmem:[%s3164 + $0x40] sm:$0xff]
        %v3174 = vld [vmem:[%s3164 + $0x48] sm:$0xff]
        %v3175 = vld [vmem:[%s3164 + $0x50] sm:$0xff]
        %v3176 = vld [vmem:[%s3164 + $0x58] sm:$0xff]
        %v3177 = vld [vmem:[%s3164 + $0x60] sm:$0xff]
        %v3178 = vld [vmem:[%s3164 + $0x68] sm:$0xff]
        %v3179 = vld [vmem:[%s3164 + $0x70] sm:$0xff]
        %v3180 = vld [vmem:[%s3164 + $0x78] sm:$0xff]
        %3181 = vmatpush.msra.mxu0 %v3180
        %3182 = vmatpush.msra.mxu0 %v3179
        %3183 = vmatpush.msra.mxu0 %v3178
        %3184 = vmatpush.msra.mxu0 %v3177
        %3185 = vmatpush.msra.mxu0 %v3176
        %3186 = vmatpush.msra.mxu0 %v3175
        %3187 = vmatpush.msra.mxu0 %v3174
        %3188 = vmatpush.msra.mxu0 %v3173
        %3189 = vmatpush.msra.mxu0 %v3172
        %3190 = vmatpush.msra.mxu0 %v3171
        %3191 = vmatpush.msra.mxu0 %v3170
        %3192 = vmatpush.msra.mxu0 %v3169
        %3193 = vmatpush.msra.mxu0 %v3168
        %3194 = vmatpush.msra.mxu0 %v3167
        %3195 = vmatpush.msra.mxu0 %v3166
        %3196 = vmatpush.msra.mxu0 %v3165
        %3197 = vmatmul.f32.gmra.mxu0 %v3132
        %v3198 = vpop.f32.mrf.mxu0
        %v3199 = vadd.f32 0.0, %v3198
        %3200 = vmatmul.f32.gmra.mxu0 %v3133
        %v3201 = vpop.f32.mrf.mxu0
        %v3202 = vadd.f32 0.0, %v3201
        %3203 = vmatmul.f32.gmra.mxu0 %v3134
        %v3204 = vpop.f32.mrf.mxu0
        %v3205 = vadd.f32 0.0, %v3204
        %3206 = vmatmul.f32.gmra.mxu0 %v3135
        %v3207 = vpop.f32.mrf.mxu0
        %v3208 = vadd.f32 0.0, %v3207
        %3209 = vmatmul.f32.gmra.mxu0 %v3136
        %v3210 = vpop.f32.mrf.mxu0
        %v3211 = vadd.f32 0.0, %v3210
        %3212 = vmatmul.f32.gmra.mxu0 %v3137
        %v3213 = vpop.f32.mrf.mxu0
        %v3214 = vadd.f32 0.0, %v3213
        %3215 = vmatmul.f32.gmra.mxu0 %v3138
        %v3216 = vpop.f32.mrf.mxu0
        %v3217 = vadd.f32 0.0, %v3216
        %3218 = vmatmul.f32.gmra.mxu0 %v3139
        %v3219 = vpop.f32.mrf.mxu0
        %v3220 = vadd.f32 0.0, %v3219
        %3221 = vmatmul.f32.gmra.mxu0 %v3140
        %v3222 = vpop.f32.mrf.mxu0
        %v3223 = vadd.f32 0.0, %v3222
        %3224 = vmatmul.f32.gmra.mxu0 %v3141
        %v3225 = vpop.f32.mrf.mxu0
        %v3226 = vadd.f32 0.0, %v3225
        %3227 = vmatmul.f32.gmra.mxu0 %v3142
        %v3228 = vpop.f32.mrf.mxu0
        %v3229 = vadd.f32 0.0, %v3228
        %3230 = vmatmul.f32.gmra.mxu0 %v3143
        %v3231 = vpop.f32.mrf.mxu0
        %v3232 = vadd.f32 0.0, %v3231
        %3233 = vmatmul.f32.gmra.mxu0 %v3144
        %v3234 = vpop.f32.mrf.mxu0
        %v3235 = vadd.f32 0.0, %v3234
        %3236 = vmatmul.f32.gmra.mxu0 %v3145
        %v3237 = vpop.f32.mrf.mxu0
        %v3238 = vadd.f32 0.0, %v3237
        %3239 = vmatmul.f32.gmra.mxu0 %v3146
        %v3240 = vpop.f32.mrf.mxu0
        %v3241 = vadd.f32 0.0, %v3240
        %3242 = vmatmul.f32.gmra.mxu0 %v3147
        %v3243 = vpop.f32.mrf.mxu0
        %v3244 = vadd.f32 0.0, %v3243
        %3245 = vmatmul.f32.gmra.mxu0 %v3148
        %v3246 = vpop.f32.mrf.mxu0
        %v3247 = vadd.f32 0.0, %v3246
        %3248 = vmatmul.f32.gmra.mxu0 %v3149
        %v3249 = vpop.f32.mrf.mxu0
        %v3250 = vadd.f32 0.0, %v3249
        %3251 = vmatmul.f32.gmra.mxu0 %v3150
        %v3252 = vpop.f32.mrf.mxu0
        %v3253 = vadd.f32 0.0, %v3252
        %3254 = vmatmul.f32.gmra.mxu0 %v3151
        %v3255 = vpop.f32.mrf.mxu0
        %v3256 = vadd.f32 0.0, %v3255
        %3257 = vmatmul.f32.gmra.mxu0 %v3152
        %v3258 = vpop.f32.mrf.mxu0
        %v3259 = vadd.f32 0.0, %v3258
        %3260 = vmatmul.f32.gmra.mxu0 %v3153
        %v3261 = vpop.f32.mrf.mxu0
        %v3262 = vadd.f32 0.0, %v3261
        %3263 = vmatmul.f32.gmra.mxu0 %v3154
        %v3264 = vpop.f32.mrf.mxu0
        %v3265 = vadd.f32 0.0, %v3264
        %3266 = vmatmul.f32.gmra.mxu0 %v3155
        %v3267 = vpop.f32.mrf.mxu0
        %v3268 = vadd.f32 0.0, %v3267
        %3269 = vmatmul.f32.gmra.mxu0 %v3156
        %v3270 = vpop.f32.mrf.mxu0
        %v3271 = vadd.f32 0.0, %v3270
        %3272 = vmatmul.f32.gmra.mxu0 %v3157
        %v3273 = vpop.f32.mrf.mxu0
        %v3274 = vadd.f32 0.0, %v3273
        %3275 = vmatmul.f32.gmra.mxu0 %v3158
        %v3276 = vpop.f32.mrf.mxu0
        %v3277 = vadd.f32 0.0, %v3276
        %3278 = vmatmul.f32.gmra.mxu0 %v3159
        %v3279 = vpop.f32.mrf.mxu0
        %v3280 = vadd.f32 0.0, %v3279
        %3281 = vmatmul.f32.gmra.mxu0 %v3160
        %v3282 = vpop.f32.mrf.mxu0
        %v3283 = vadd.f32 0.0, %v3282
        %3284 = vmatmul.f32.gmra.mxu0 %v3161
        %v3285 = vpop.f32.mrf.mxu0
        %v3286 = vadd.f32 0.0, %v3285
        %3287 = vmatmul.f32.gmra.mxu0 %v3162
        %v3288 = vpop.f32.mrf.mxu0
        %v3289 = vadd.f32 0.0, %v3288
        %3290 = vmatmul.f32.gmra.mxu0 %v3163
        %v3291 = vpop.f32.mrf.mxu0
        %v3292 = vadd.f32 0.0, %v3291
        %3293 = vdwg.mxu0
        %s3294 = scalar_lea.vmem %s5, 8
        %v3295 = vld [vmem:[%s3294] sm:$0xff]
        %s3296 = scalar_lea.vmem %s6, 1
        %v3297 = vld [vmem:[%s3296] sm:$0x1]
        %v3299 = vperm.slane %v3297, 0
        %v3302 = vsel %vm574, %v3199, 0
        %v3305 = vsel %vm574, %v3202, 0
        %v3308 = vsel %vm574, %v3205, 0
        %v3311 = vsel %vm574, %v3208, 0
        %v3314 = vsel %vm574, %v3211, 0
        %v3317 = vsel %vm574, %v3214, 0
        %v3320 = vsel %vm574, %v3217, 0
        %v3323 = vsel %vm574, %v3220, 0
        %v3326 = vsel %vm574, %v3223, 0
        %v3329 = vsel %vm574, %v3226, 0
        %v3332 = vsel %vm574, %v3229, 0
        %v3335 = vsel %vm574, %v3232, 0
        %v3338 = vsel %vm574, %v3235, 0
        %v3341 = vsel %vm574, %v3238, 0
        %v3344 = vsel %vm574, %v3241, 0
        %v3347 = vsel %vm574, %v3244, 0
        %v3350 = vsel %vm574, %v3247, 0
        %v3353 = vsel %vm574, %v3250, 0
        %v3356 = vsel %vm574, %v3253, 0
        %v3359 = vsel %vm574, %v3256, 0
        %v3362 = vsel %vm574, %v3259, 0
        %v3365 = vsel %vm574, %v3262, 0
        %v3368 = vsel %vm574, %v3265, 0
        %v3371 = vsel %vm574, %v3268, 0
        %v3374 = vsel %vm574, %v3271, 0
        %v3377 = vsel %vm574, %v3274, 0
        %v3380 = vsel %vm574, %v3277, 0
        %v3383 = vsel %vm574, %v3280, 0
        %v3386 = vsel %vm574, %v3283, 0
        %v3389 = vsel %vm574, %v3286, 0
        %v3392 = vsel %vm574, %v3289, 0
        %v3395 = vsel %vm574, %v3292, 0
        %3397 = vmatpush.msra.mxu0 0.0
        %3398 = vmatpush.msra.mxu0 0.0
        %3399 = vmatpush.msra.mxu0 0.0
        %3400 = vmatpush.msra.mxu0 0.0
        %3401 = vmatpush.msra.mxu0 0.0
        %3402 = vmatpush.msra.mxu0 0.0
        %3403 = vmatpush.msra.mxu0 0.0
        %3404 = vmatpush.msra.mxu0 0.0
        %3405 = vmatpush.msra.mxu0 0.0
        %3406 = vmatpush.msra.mxu0 0.0
        %3407 = vmatpush.msra.mxu0 0.0
        %3408 = vmatpush.msra.mxu0 0.0
        %3409 = vmatpush.msra.mxu0 0.0
        %3410 = vmatpush.msra.mxu0 0.0
        %3411 = vmatpush.msra.mxu0 0.0
        %3412 = vmatpush.msra.mxu0 %v3295
        %3413 = vmatmul.f32.gmra.mxu0 %v3302
        %v3414 = vpop.f32.mrf.mxu0
        %v3415 = vadd.f32 %v3299, %v3414
        %3416 = vmatmul.f32.gmra.mxu0 %v3305
        %v3417 = vpop.f32.mrf.mxu0
        %v3418 = vadd.f32 %v3299, %v3417
        %3419 = vmatmul.f32.gmra.mxu0 %v3308
        %v3420 = vpop.f32.mrf.mxu0
        %v3421 = vadd.f32 %v3299, %v3420
        %3422 = vmatmul.f32.gmra.mxu0 %v3311
        %v3423 = vpop.f32.mrf.mxu0
        %v3424 = vadd.f32 %v3299, %v3423
        %3425 = vmatmul.f32.gmra.mxu0 %v3314
        %v3426 = vpop.f32.mrf.mxu0
        %v3427 = vadd.f32 %v3299, %v3426
        %3428 = vmatmul.f32.gmra.mxu0 %v3317
        %v3429 = vpop.f32.mrf.mxu0
        %v3430 = vadd.f32 %v3299, %v3429
        %3431 = vmatmul.f32.gmra.mxu0 %v3320
        %v3432 = vpop.f32.mrf.mxu0
        %v3433 = vadd.f32 %v3299, %v3432
        %3434 = vmatmul.f32.gmra.mxu0 %v3323
        %v3435 = vpop.f32.mrf.mxu0
        %v3436 = vadd.f32 %v3299, %v3435
        %3437 = vmatmul.f32.gmra.mxu0 %v3326
        %v3438 = vpop.f32.mrf.mxu0
        %v3439 = vadd.f32 %v3299, %v3438
        %3440 = vmatmul.f32.gmra.mxu0 %v3329
        %v3441 = vpop.f32.mrf.mxu0
        %v3442 = vadd.f32 %v3299, %v3441
        %3443 = vmatmul.f32.gmra.mxu0 %v3332
        %v3444 = vpop.f32.mrf.mxu0
        %v3445 = vadd.f32 %v3299, %v3444
        %3446 = vmatmul.f32.gmra.mxu0 %v3335
        %v3447 = vpop.f32.mrf.mxu0
        %v3448 = vadd.f32 %v3299, %v3447
        %3449 = vmatmul.f32.gmra.mxu0 %v3338
        %v3450 = vpop.f32.mrf.mxu0
        %v3451 = vadd.f32 %v3299, %v3450
        %3452 = vmatmul.f32.gmra.mxu0 %v3341
        %v3453 = vpop.f32.mrf.mxu0
        %v3454 = vadd.f32 %v3299, %v3453
        %3455 = vmatmul.f32.gmra.mxu0 %v3344
        %v3456 = vpop.f32.mrf.mxu0
        %v3457 = vadd.f32 %v3299, %v3456
        %3458 = vmatmul.f32.gmra.mxu0 %v3347
        %v3459 = vpop.f32.mrf.mxu0
        %v3460 = vadd.f32 %v3299, %v3459
        %3461 = vmatmul.f32.gmra.mxu0 %v3350
        %v3462 = vpop.f32.mrf.mxu0
        %v3463 = vadd.f32 %v3299, %v3462
        %3464 = vmatmul.f32.gmra.mxu0 %v3353
        %v3465 = vpop.f32.mrf.mxu0
        %v3466 = vadd.f32 %v3299, %v3465
        %3467 = vmatmul.f32.gmra.mxu0 %v3356
        %v3468 = vpop.f32.mrf.mxu0
        %v3469 = vadd.f32 %v3299, %v3468
        %3470 = vmatmul.f32.gmra.mxu0 %v3359
        %v3471 = vpop.f32.mrf.mxu0
        %v3472 = vadd.f32 %v3299, %v3471
        %3473 = vmatmul.f32.gmra.mxu0 %v3362
        %v3474 = vpop.f32.mrf.mxu0
        %v3475 = vadd.f32 %v3299, %v3474
        %3476 = vmatmul.f32.gmra.mxu0 %v3365
        %v3477 = vpop.f32.mrf.mxu0
        %v3478 = vadd.f32 %v3299, %v3477
        %3479 = vmatmul.f32.gmra.mxu0 %v3368
        %v3480 = vpop.f32.mrf.mxu0
        %v3481 = vadd.f32 %v3299, %v3480
        %3482 = vmatmul.f32.gmra.mxu0 %v3371
        %v3483 = vpop.f32.mrf.mxu0
        %v3484 = vadd.f32 %v3299, %v3483
        %3485 = vmatmul.f32.gmra.mxu0 %v3374
        %v3486 = vpop.f32.mrf.mxu0
        %v3487 = vadd.f32 %v3299, %v3486
        %3488 = vmatmul.f32.gmra.mxu0 %v3377
        %v3489 = vpop.f32.mrf.mxu0
        %v3490 = vadd.f32 %v3299, %v3489
        %3491 = vmatmul.f32.gmra.mxu0 %v3380
        %v3492 = vpop.f32.mrf.mxu0
        %v3493 = vadd.f32 %v3299, %v3492
        %3494 = vmatmul.f32.gmra.mxu0 %v3383
        %v3495 = vpop.f32.mrf.mxu0
        %v3496 = vadd.f32 %v3299, %v3495
        %3497 = vmatmul.f32.gmra.mxu0 %v3386
        %v3498 = vpop.f32.mrf.mxu0
        %v3499 = vadd.f32 %v3299, %v3498
        %3500 = vmatmul.f32.gmra.mxu0 %v3389
        %v3501 = vpop.f32.mrf.mxu0
        %v3502 = vadd.f32 %v3299, %v3501
        %3503 = vmatmul.f32.gmra.mxu0 %v3392
        %v3504 = vpop.f32.mrf.mxu0
        %v3505 = vadd.f32 %v3299, %v3504
        %3506 = vmatmul.f32.gmra.mxu0 %v3395
        %v3507 = vpop.f32.mrf.mxu0
        %v3508 = vadd.f32 %v3299, %v3507
        %3509 = vdwg.mxu0
        %v3510 = vsub.f32 %v2186, %v3199
        %v3511 = vsub.f32 %v2189, %v3202
        %v3512 = vsub.f32 %v2192, %v3205
        %v3513 = vsub.f32 %v2195, %v3208
        %v3514 = vsub.f32 %v2198, %v3211
        %v3515 = vsub.f32 %v2201, %v3214
        %v3516 = vsub.f32 %v2204, %v3217
        %v3517 = vsub.f32 %v2207, %v3220
        %v3518 = vsub.f32 %v2210, %v3223
        %v3519 = vsub.f32 %v2213, %v3226
        %v3520 = vsub.f32 %v2216, %v3229
        %v3521 = vsub.f32 %v2219, %v3232
        %v3522 = vsub.f32 %v2222, %v3235
        %v3523 = vsub.f32 %v2225, %v3238
        %v3524 = vsub.f32 %v2228, %v3241
        %v3525 = vsub.f32 %v2231, %v3244
        %v3526 = vsub.f32 %v2234, %v3247
        %v3527 = vsub.f32 %v2237, %v3250
        %v3528 = vsub.f32 %v2240, %v3253
        %v3529 = vsub.f32 %v2243, %v3256
        %v3530 = vsub.f32 %v2246, %v3259
        %v3531 = vsub.f32 %v2249, %v3262
        %v3532 = vsub.f32 %v2252, %v3265
        %v3533 = vsub.f32 %v2255, %v3268
        %v3534 = vsub.f32 %v2258, %v3271
        %v3535 = vsub.f32 %v2261, %v3274
        %v3536 = vsub.f32 %v2264, %v3277
        %v3537 = vsub.f32 %v2267, %v3280
        %v3538 = vsub.f32 %v2270, %v3283
        %v3539 = vsub.f32 %v2273, %v3286
        %v3540 = vsub.f32 %v2276, %v3289
        %v3541 = vsub.f32 %v2279, %v3292
        %v3542 = vmul.f32 %v3510, %v3510
        %v3543 = vmul.f32 %v3511, %v3511
        %v3544 = vmul.f32 %v3512, %v3512
        %v3545 = vmul.f32 %v3513, %v3513
        %v3546 = vmul.f32 %v3514, %v3514
        %v3547 = vmul.f32 %v3515, %v3515
        %v3548 = vmul.f32 %v3516, %v3516
        %v3549 = vmul.f32 %v3517, %v3517
        %v3550 = vmul.f32 %v3518, %v3518
        %v3551 = vmul.f32 %v3519, %v3519
        %v3552 = vmul.f32 %v3520, %v3520
        %v3553 = vmul.f32 %v3521, %v3521
        %v3554 = vmul.f32 %v3522, %v3522
        %v3555 = vmul.f32 %v3523, %v3523
        %v3556 = vmul.f32 %v3524, %v3524
        %v3557 = vmul.f32 %v3525, %v3525
        %v3558 = vmul.f32 %v3526, %v3526
        %v3559 = vmul.f32 %v3527, %v3527
        %v3560 = vmul.f32 %v3528, %v3528
        %v3561 = vmul.f32 %v3529, %v3529
        %v3562 = vmul.f32 %v3530, %v3530
        %v3563 = vmul.f32 %v3531, %v3531
        %v3564 = vmul.f32 %v3532, %v3532
        %v3565 = vmul.f32 %v3533, %v3533
        %v3566 = vmul.f32 %v3534, %v3534
        %v3567 = vmul.f32 %v3535, %v3535
        %v3568 = vmul.f32 %v3536, %v3536
        %v3569 = vmul.f32 %v3537, %v3537
        %v3570 = vmul.f32 %v3538, %v3538
        %v3571 = vmul.f32 %v3539, %v3539
        %v3572 = vmul.f32 %v3540, %v3540
        %v3573 = vmul.f32 %v3541, %v3541
        %v3574 = vsel %vm574, %v3542, 0.0
        %3575 = vadd.xlane.f32.xlu0 %v3574
        %v3576 = vpop.xlane.xlu0 %3575
        %v3577 = vsel %vm574, %v3543, 0.0
        %3578 = vadd.xlane.f32.xlu0 %v3577
        %v3579 = vpop.xlane.xlu0 %3578
        %v3580 = vsel %vm574, %v3544, 0.0
        %3581 = vadd.xlane.f32.xlu0 %v3580
        %v3582 = vpop.xlane.xlu0 %3581
        %v3583 = vsel %vm574, %v3545, 0.0
        %3584 = vadd.xlane.f32.xlu0 %v3583
        %v3585 = vpop.xlane.xlu0 %3584
        %v3586 = vsel %vm574, %v3546, 0.0
        %3587 = vadd.xlane.f32.xlu0 %v3586
        %v3588 = vpop.xlane.xlu0 %3587
        %v3589 = vsel %vm574, %v3547, 0.0
        %3590 = vadd.xlane.f32.xlu0 %v3589
        %v3591 = vpop.xlane.xlu0 %3590
        %v3592 = vsel %vm574, %v3548, 0.0
        %3593 = vadd.xlane.f32.xlu0 %v3592
        %v3594 = vpop.xlane.xlu0 %3593
        %v3595 = vsel %vm574, %v3549, 0.0
        %3596 = vadd.xlane.f32.xlu0 %v3595
        %v3597 = vpop.xlane.xlu0 %3596
        %v3598 = vsel %vm574, %v3550, 0.0
        %3599 = vadd.xlane.f32.xlu0 %v3598
        %v3600 = vpop.xlane.xlu0 %3599
        %v3601 = vsel %vm574, %v3551, 0.0
        %3602 = vadd.xlane.f32.xlu0 %v3601
        %v3603 = vpop.xlane.xlu0 %3602
        %v3604 = vsel %vm574, %v3552, 0.0
        %3605 = vadd.xlane.f32.xlu0 %v3604
        %v3606 = vpop.xlane.xlu0 %3605
        %v3607 = vsel %vm574, %v3553, 0.0
        %3608 = vadd.xlane.f32.xlu0 %v3607
        %v3609 = vpop.xlane.xlu0 %3608
        %v3610 = vsel %vm574, %v3554, 0.0
        %3611 = vadd.xlane.f32.xlu0 %v3610
        %v3612 = vpop.xlane.xlu0 %3611
        %v3613 = vsel %vm574, %v3555, 0.0
        %3614 = vadd.xlane.f32.xlu0 %v3613
        %v3615 = vpop.xlane.xlu0 %3614
        %v3616 = vsel %vm574, %v3556, 0.0
        %3617 = vadd.xlane.f32.xlu0 %v3616
        %v3618 = vpop.xlane.xlu0 %3617
        %v3619 = vsel %vm574, %v3557, 0.0
        %3620 = vadd.xlane.f32.xlu0 %v3619
        %v3621 = vpop.xlane.xlu0 %3620
        %v3622 = vsel %vm574, %v3558, 0.0
        %3623 = vadd.xlane.f32.xlu0 %v3622
        %v3624 = vpop.xlane.xlu0 %3623
        %v3625 = vsel %vm574, %v3559, 0.0
        %3626 = vadd.xlane.f32.xlu0 %v3625
        %v3627 = vpop.xlane.xlu0 %3626
        %v3628 = vsel %vm574, %v3560, 0.0
        %3629 = vadd.xlane.f32.xlu0 %v3628
        %v3630 = vpop.xlane.xlu0 %3629
        %v3631 = vsel %vm574, %v3561, 0.0
        %3632 = vadd.xlane.f32.xlu0 %v3631
        %v3633 = vpop.xlane.xlu0 %3632
        %v3634 = vsel %vm574, %v3562, 0.0
        %3635 = vadd.xlane.f32.xlu0 %v3634
        %v3636 = vpop.xlane.xlu0 %3635
        %v3637 = vsel %vm574, %v3563, 0.0
        %3638 = vadd.xlane.f32.xlu0 %v3637
        %v3639 = vpop.xlane.xlu0 %3638
        %v3640 = vsel %vm574, %v3564, 0.0
        %3641 = vadd.xlane.f32.xlu0 %v3640
        %v3642 = vpop.xlane.xlu0 %3641
        %v3643 = vsel %vm574, %v3565, 0.0
        %3644 = vadd.xlane.f32.xlu0 %v3643
        %v3645 = vpop.xlane.xlu0 %3644
        %v3646 = vsel %vm574, %v3566, 0.0
        %3647 = vadd.xlane.f32.xlu0 %v3646
        %v3648 = vpop.xlane.xlu0 %3647
        %v3649 = vsel %vm574, %v3567, 0.0
        %3650 = vadd.xlane.f32.xlu0 %v3649
        %v3651 = vpop.xlane.xlu0 %3650
        %v3652 = vsel %vm574, %v3568, 0.0
        %3653 = vadd.xlane.f32.xlu0 %v3652
        %v3654 = vpop.xlane.xlu0 %3653
        %v3655 = vsel %vm574, %v3569, 0.0
        %3656 = vadd.xlane.f32.xlu0 %v3655
        %v3657 = vpop.xlane.xlu0 %3656
        %v3658 = vsel %vm574, %v3570, 0.0
        %3659 = vadd.xlane.f32.xlu0 %v3658
        %v3660 = vpop.xlane.xlu0 %3659
        %v3661 = vsel %vm574, %v3571, 0.0
        %3662 = vadd.xlane.f32.xlu0 %v3661
        %v3663 = vpop.xlane.xlu0 %3662
        %v3664 = vsel %vm574, %v3572, 0.0
        %3665 = vadd.xlane.f32.xlu0 %v3664
        %v3666 = vpop.xlane.xlu0 %3665
        %v3667 = vsel %vm574, %v3573, 0.0
        %3668 = vadd.xlane.f32.xlu0 %v3667
        %v3669 = vpop.xlane.xlu0 %3668
        %v3670 = vmul.f32 %v3576, %v1965
        %v3671 = vmul.f32 %v3579, %v1965
        %v3672 = vmul.f32 %v3582, %v1965
        %v3673 = vmul.f32 %v3585, %v1965
        %v3674 = vmul.f32 %v3588, %v1965
        %v3675 = vmul.f32 %v3591, %v1965
        %v3676 = vmul.f32 %v3594, %v1965
        %v3677 = vmul.f32 %v3597, %v1965
        %v3678 = vmul.f32 %v3600, %v1965
        %v3679 = vmul.f32 %v3603, %v1965
        %v3680 = vmul.f32 %v3606, %v1965
        %v3681 = vmul.f32 %v3609, %v1965
        %v3682 = vmul.f32 %v3612, %v1965
        %v3683 = vmul.f32 %v3615, %v1965
        %v3684 = vmul.f32 %v3618, %v1965
        %v3685 = vmul.f32 %v3621, %v1965
        %v3686 = vmul.f32 %v3624, %v1965
        %v3687 = vmul.f32 %v3627, %v1965
        %v3688 = vmul.f32 %v3630, %v1965
        %v3689 = vmul.f32 %v3633, %v1965
        %v3690 = vmul.f32 %v3636, %v1965
        %v3691 = vmul.f32 %v3639, %v1965
        %v3692 = vmul.f32 %v3642, %v1965
        %v3693 = vmul.f32 %v3645, %v1965
        %v3694 = vmul.f32 %v3648, %v1965
        %v3695 = vmul.f32 %v3651, %v1965
        %v3696 = vmul.f32 %v3654, %v1965
        %v3697 = vmul.f32 %v3657, %v1965
        %v3698 = vmul.f32 %v3660, %v1965
        %v3699 = vmul.f32 %v3663, %v1965
        %v3700 = vmul.f32 %v3666, %v1965
        %v3701 = vmul.f32 %v3669, %v1965
        %v3702 = vcvt.s32.f32 %v2633
        %v3703 = vcvt.s32.f32 %v2647
        %v3704 = vcvt.s32.f32 %v2661
        %v3705 = vcvt.s32.f32 %v2675
        %v3706 = vcvt.s32.f32 %v2689
        %v3707 = vcvt.s32.f32 %v2703
        %v3708 = vcvt.s32.f32 %v2717
        %v3709 = vcvt.s32.f32 %v2731
        %v3710 = vcvt.s32.f32 %v2745
        %v3711 = vcvt.s32.f32 %v2759
        %v3712 = vcvt.s32.f32 %v2773
        %v3713 = vcvt.s32.f32 %v2787
        %v3714 = vcvt.s32.f32 %v2801
        %v3715 = vcvt.s32.f32 %v2815
        %v3716 = vcvt.s32.f32 %v2829
        %v3717 = vcvt.s32.f32 %v2843
        %v3718 = vcvt.s32.f32 %v2857
        %v3719 = vcvt.s32.f32 %v2871
        %v3720 = vcvt.s32.f32 %v2885
        %v3721 = vcvt.s32.f32 %v2899
        %v3722 = vcvt.s32.f32 %v2913
        %v3723 = vcvt.s32.f32 %v2927
        %v3724 = vcvt.s32.f32 %v2941
        %v3725 = vcvt.s32.f32 %v2955
        %v3726 = vcvt.s32.f32 %v2969
        %v3727 = vcvt.s32.f32 %v2983
        %v3728 = vcvt.s32.f32 %v2997
        %v3729 = vcvt.s32.f32 %v3011
        %v3730 = vcvt.s32.f32 %v3025
        %v3731 = vcvt.s32.f32 %v3039
        %v3732 = vcvt.s32.f32 %v3053
        %v3733 = vcvt.s32.f32 %v3067
        %v3734 = vsub.f32 %v2030, %v3415
        %v3735 = vsub.f32 %v2031, %v3418
        %v3736 = vsub.f32 %v2032, %v3421
        %v3737 = vsub.f32 %v2033, %v3424
        %v3738 = vsub.f32 %v2034, %v3427
        %v3739 = vsub.f32 %v2035, %v3430
        %v3740 = vsub.f32 %v2036, %v3433
        %v3741 = vsub.f32 %v2037, %v3436
        %v3742 = vsub.f32 %v2038, %v3439
        %v3743 = vsub.f32 %v2039, %v3442
        %v3744 = vsub.f32 %v2040, %v3445
        %v3745 = vsub.f32 %v2041, %v3448
        %v3746 = vsub.f32 %v2042, %v3451
        %v3747 = vsub.f32 %v2043, %v3454
        %v3748 = vsub.f32 %v2044, %v3457
        %v3749 = vsub.f32 %v2045, %v3460
        %v3750 = vsub.f32 %v2046, %v3463
        %v3751 = vsub.f32 %v2047, %v3466
        %v3752 = vsub.f32 %v2048, %v3469
        %v3753 = vsub.f32 %v2049, %v3472
        %v3754 = vsub.f32 %v2050, %v3475
        %v3755 = vsub.f32 %v2051, %v3478
        %v3756 = vsub.f32 %v2052, %v3481
        %v3757 = vsub.f32 %v2053, %v3484
        %v3758 = vsub.f32 %v2054, %v3487
        %v3759 = vsub.f32 %v2055, %v3490
        %v3760 = vsub.f32 %v2056, %v3493
        %v3761 = vsub.f32 %v2057, %v3496
        %v3762 = vsub.f32 %v2058, %v3499
        %v3763 = vsub.f32 %v2059, %v3502
        %v3764 = vsub.f32 %v2060, %v3505
        %v3765 = vsub.f32 %v2061, %v3508
        %s3766 = scalar_lea.vmem %s1, 64
        %v3767 = vld [vmem:[%s3766] sm:$0xff]
        %v3768 = vld [vmem:[%s3766 + $0x8] sm:$0xff]
        %v3769 = vld [vmem:[%s3766 + $0x10] sm:$0xff]
        %v3770 = vld [vmem:[%s3766 + $0x18] sm:$0xff]
        %s3771 = scalar_lea.vmem %s2, 2
        %v3772 = vld [vmem:[%s3771] sm:$0x1]
        %v3774 = vperm.slane %v3772, 0
        %v3777 = vsel %vm363, %v3734, 0
        %v3780 = vsel %vm363, %v3735, 0
        %v3783 = vsel %vm363, %v3736, 0
        %v3786 = vsel %vm363, %v3737, 0
        %v3789 = vsel %vm363, %v3738, 0
        %v3792 = vsel %vm363, %v3739, 0
        %v3795 = vsel %vm363, %v3740, 0
        %v3798 = vsel %vm363, %v3741, 0
        %v3801 = vsel %vm363, %v3742, 0
        %v3804 = vsel %vm363, %v3743, 0
        %v3807 = vsel %vm363, %v3744, 0
        %v3810 = vsel %vm363, %v3745, 0
        %v3813 = vsel %vm363, %v3746, 0
        %v3816 = vsel %vm363, %v3747, 0
        %v3819 = vsel %vm363, %v3748, 0
        %v3822 = vsel %vm363, %v3749, 0
        %v3825 = vsel %vm363, %v3750, 0
        %v3828 = vsel %vm363, %v3751, 0
        %v3831 = vsel %vm363, %v3752, 0
        %v3834 = vsel %vm363, %v3753, 0
        %v3837 = vsel %vm363, %v3754, 0
        %v3840 = vsel %vm363, %v3755, 0
        %v3843 = vsel %vm363, %v3756, 0
        %v3846 = vsel %vm363, %v3757, 0
        %v3849 = vsel %vm363, %v3758, 0
        %v3852 = vsel %vm363, %v3759, 0
        %v3855 = vsel %vm363, %v3760, 0
        %v3858 = vsel %vm363, %v3761, 0
        %v3861 = vsel %vm363, %v3762, 0
        %v3864 = vsel %vm363, %v3763, 0
        %v3867 = vsel %vm363, %v3764, 0
        %v3870 = vsel %vm363, %v3765, 0
        %3872 = vmatpush.msra.mxu0 0.0
        %3873 = vmatpush.msra.mxu0 0.0
        %3874 = vmatpush.msra.mxu0 0.0
        %3875 = vmatpush.msra.mxu0 0.0
        %3876 = vmatpush.msra.mxu0 0.0
        %3877 = vmatpush.msra.mxu0 0.0
        %3878 = vmatpush.msra.mxu0 0.0
        %3879 = vmatpush.msra.mxu0 0.0
        %3880 = vmatpush.msra.mxu0 0.0
        %3881 = vmatpush.msra.mxu0 0.0
        %3882 = vmatpush.msra.mxu0 0.0
        %3883 = vmatpush.msra.mxu0 0.0
        %3884 = vmatpush.msra.mxu0 %v3770
        %3885 = vmatpush.msra.mxu0 %v3769
        %3886 = vmatpush.msra.mxu0 %v3768
        %3887 = vmatpush.msra.mxu0 %v3767
        %3888 = vmatmul.f32.gmra.mxu0 %v3777
        %v3889 = vpop.f32.mrf.mxu0
        %v3890 = vadd.f32 %v3774, %v3889
        %3891 = vmatmul.f32.gmra.mxu0 %v3780
        %v3892 = vpop.f32.mrf.mxu0
        %v3893 = vadd.f32 %v3774, %v3892
        %3894 = vmatmul.f32.gmra.mxu0 %v3783
        %v3895 = vpop.f32.mrf.mxu0
        %v3896 = vadd.f32 %v3774, %v3895
        %3897 = vmatmul.f32.gmra.mxu0 %v3786
        %v3898 = vpop.f32.mrf.mxu0
        %v3899 = vadd.f32 %v3774, %v3898
        %3900 = vmatmul.f32.gmra.mxu0 %v3789
        %v3901 = vpop.f32.mrf.mxu0
        %v3902 = vadd.f32 %v3774, %v3901
        %3903 = vmatmul.f32.gmra.mxu0 %v3792
        %v3904 = vpop.f32.mrf.mxu0
        %v3905 = vadd.f32 %v3774, %v3904
        %3906 = vmatmul.f32.gmra.mxu0 %v3795
        %v3907 = vpop.f32.mrf.mxu0
        %v3908 = vadd.f32 %v3774, %v3907
        %3909 = vmatmul.f32.gmra.mxu0 %v3798
        %v3910 = vpop.f32.mrf.mxu0
        %v3911 = vadd.f32 %v3774, %v3910
        %3912 = vmatmul.f32.gmra.mxu0 %v3801
        %v3913 = vpop.f32.mrf.mxu0
        %v3914 = vadd.f32 %v3774, %v3913
        %3915 = vmatmul.f32.gmra.mxu0 %v3804
        %v3916 = vpop.f32.mrf.mxu0
        %v3917 = vadd.f32 %v3774, %v3916
        %3918 = vmatmul.f32.gmra.mxu0 %v3807
        %v3919 = vpop.f32.mrf.mxu0
        %v3920 = vadd.f32 %v3774, %v3919
        %3921 = vmatmul.f32.gmra.mxu0 %v3810
        %v3922 = vpop.f32.mrf.mxu0
        %v3923 = vadd.f32 %v3774, %v3922
        %3924 = vmatmul.f32.gmra.mxu0 %v3813
        %v3925 = vpop.f32.mrf.mxu0
        %v3926 = vadd.f32 %v3774, %v3925
        %3927 = vmatmul.f32.gmra.mxu0 %v3816
        %v3928 = vpop.f32.mrf.mxu0
        %v3929 = vadd.f32 %v3774, %v3928
        %3930 = vmatmul.f32.gmra.mxu0 %v3819
        %v3931 = vpop.f32.mrf.mxu0
        %v3932 = vadd.f32 %v3774, %v3931
        %3933 = vmatmul.f32.gmra.mxu0 %v3822
        %v3934 = vpop.f32.mrf.mxu0
        %v3935 = vadd.f32 %v3774, %v3934
        %3936 = vmatmul.f32.gmra.mxu0 %v3825
        %v3937 = vpop.f32.mrf.mxu0
        %v3938 = vadd.f32 %v3774, %v3937
        %3939 = vmatmul.f32.gmra.mxu0 %v3828
        %v3940 = vpop.f32.mrf.mxu0
        %v3941 = vadd.f32 %v3774, %v3940
        %3942 = vmatmul.f32.gmra.mxu0 %v3831
        %v3943 = vpop.f32.mrf.mxu0
        %v3944 = vadd.f32 %v3774, %v3943
        %3945 = vmatmul.f32.gmra.mxu0 %v3834
        %v3946 = vpop.f32.mrf.mxu0
        %v3947 = vadd.f32 %v3774, %v3946
        %3948 = vmatmul.f32.gmra.mxu0 %v3837
        %v3949 = vpop.f32.mrf.mxu0
        %v3950 = vadd.f32 %v3774, %v3949
        %3951 = vmatmul.f32.gmra.mxu0 %v3840
        %v3952 = vpop.f32.mrf.mxu0
        %v3953 = vadd.f32 %v3774, %v3952
        %3954 = vmatmul.f32.gmra.mxu0 %v3843
        %v3955 = vpop.f32.mrf.mxu0
        %v3956 = vadd.f32 %v3774, %v3955
        %3957 = vmatmul.f32.gmra.mxu0 %v3846
        %v3958 = vpop.f32.mrf.mxu0
        %v3959 = vadd.f32 %v3774, %v3958
        %3960 = vmatmul.f32.gmra.mxu0 %v3849
        %v3961 = vpop.f32.mrf.mxu0
        %v3962 = vadd.f32 %v3774, %v3961
        %3963 = vmatmul.f32.gmra.mxu0 %v3852
        %v3964 = vpop.f32.mrf.mxu0
        %v3965 = vadd.f32 %v3774, %v3964
        %3966 = vmatmul.f32.gmra.mxu0 %v3855
        %v3967 = vpop.f32.mrf.mxu0
        %v3968 = vadd.f32 %v3774, %v3967
        %3969 = vmatmul.f32.gmra.mxu0 %v3858
        %v3970 = vpop.f32.mrf.mxu0
        %v3971 = vadd.f32 %v3774, %v3970
        %3972 = vmatmul.f32.gmra.mxu0 %v3861
        %v3973 = vpop.f32.mrf.mxu0
        %v3974 = vadd.f32 %v3774, %v3973
        %3975 = vmatmul.f32.gmra.mxu0 %v3864
        %v3976 = vpop.f32.mrf.mxu0
        %v3977 = vadd.f32 %v3774, %v3976
        %3978 = vmatmul.f32.gmra.mxu0 %v3867
        %v3979 = vpop.f32.mrf.mxu0
        %v3980 = vadd.f32 %v3774, %v3979
        %3981 = vmatmul.f32.gmra.mxu0 %v3870
        %v3982 = vpop.f32.mrf.mxu0
        %v3983 = vadd.f32 %v3774, %v3982
        %3984 = vdwg.mxu0
        %s3985 = scalar_lea.vmem %s3, 16
        %v3986 = vld [vmem:[%s3985] sm:$0xff]
        %v3988 = vsel %vm574, %v3890, 0
        %v3991 = vsel %vm574, %v3893, 0
        %v3994 = vsel %vm574, %v3896, 0
        %v3997 = vsel %vm574, %v3899, 0
        %v4000 = vsel %vm574, %v3902, 0
        %v4003 = vsel %vm574, %v3905, 0
        %v4006 = vsel %vm574, %v3908, 0
        %v4009 = vsel %vm574, %v3911, 0
        %v4012 = vsel %vm574, %v3914, 0
        %v4015 = vsel %vm574, %v3917, 0
        %v4018 = vsel %vm574, %v3920, 0
        %v4021 = vsel %vm574, %v3923, 0
        %v4024 = vsel %vm574, %v3926, 0
        %v4027 = vsel %vm574, %v3929, 0
        %v4030 = vsel %vm574, %v3932, 0
        %v4033 = vsel %vm574, %v3935, 0
        %v4036 = vsel %vm574, %v3938, 0
        %v4039 = vsel %vm574, %v3941, 0
        %v4042 = vsel %vm574, %v3944, 0
        %v4045 = vsel %vm574, %v3947, 0
        %v4048 = vsel %vm574, %v3950, 0
        %v4051 = vsel %vm574, %v3953, 0
        %v4054 = vsel %vm574, %v3956, 0
        %v4057 = vsel %vm574, %v3959, 0
        %v4060 = vsel %vm574, %v3962, 0
        %v4063 = vsel %vm574, %v3965, 0
        %v4066 = vsel %vm574, %v3968, 0
        %v4069 = vsel %vm574, %v3971, 0
        %v4072 = vsel %vm574, %v3974, 0
        %v4075 = vsel %vm574, %v3977, 0
        %v4078 = vsel %vm574, %v3980, 0
        %v4081 = vsel %vm574, %v3983, 0
        %4083 = vmatpush.msra.mxu0 0.0
        %4084 = vmatpush.msra.mxu0 0.0
        %4085 = vmatpush.msra.mxu0 0.0
        %4086 = vmatpush.msra.mxu0 0.0
        %4087 = vmatpush.msra.mxu0 0.0
        %4088 = vmatpush.msra.mxu0 0.0
        %4089 = vmatpush.msra.mxu0 0.0
        %4090 = vmatpush.msra.mxu0 0.0
        %4091 = vmatpush.msra.mxu0 0.0
        %4092 = vmatpush.msra.mxu0 0.0
        %4093 = vmatpush.msra.mxu0 0.0
        %4094 = vmatpush.msra.mxu0 0.0
        %4095 = vmatpush.msra.mxu0 0.0
        %4096 = vmatpush.msra.mxu0 0.0
        %4097 = vmatpush.msra.mxu0 0.0
        %4098 = vmatpush.msra.mxu0 %v3986
        %4099 = vmatmul.f32.gmra.mxu0 %v3988
        %v4100 = vpop.f32.mrf.mxu0
        %v4101 = vadd.f32 0.0, %v4100
        %4102 = vmatmul.f32.gmra.mxu0 %v3991
        %v4103 = vpop.f32.mrf.mxu0
        %v4104 = vadd.f32 0.0, %v4103
        %4105 = vmatmul.f32.gmra.mxu0 %v3994
        %v4106 = vpop.f32.mrf.mxu0
        %v4107 = vadd.f32 0.0, %v4106
        %4108 = vmatmul.f32.gmra.mxu0 %v3997
        %v4109 = vpop.f32.mrf.mxu0
        %v4110 = vadd.f32 0.0, %v4109
        %4111 = vmatmul.f32.gmra.mxu0 %v4000
        %v4112 = vpop.f32.mrf.mxu0
        %v4113 = vadd.f32 0.0, %v4112
        %4114 = vmatmul.f32.gmra.mxu0 %v4003
        %v4115 = vpop.f32.mrf.mxu0
        %v4116 = vadd.f32 0.0, %v4115
        %4117 = vmatmul.f32.gmra.mxu0 %v4006
        %v4118 = vpop.f32.mrf.mxu0
        %v4119 = vadd.f32 0.0, %v4118
        %4120 = vmatmul.f32.gmra.mxu0 %v4009
        %v4121 = vpop.f32.mrf.mxu0
        %v4122 = vadd.f32 0.0, %v4121
        %4123 = vmatmul.f32.gmra.mxu0 %v4012
        %v4124 = vpop.f32.mrf.mxu0
        %v4125 = vadd.f32 0.0, %v4124
        %4126 = vmatmul.f32.gmra.mxu0 %v4015
        %v4127 = vpop.f32.mrf.mxu0
        %v4128 = vadd.f32 0.0, %v4127
        %4129 = vmatmul.f32.gmra.mxu0 %v4018
        %v4130 = vpop.f32.mrf.mxu0
        %v4131 = vadd.f32 0.0, %v4130
        %4132 = vmatmul.f32.gmra.mxu0 %v4021
        %v4133 = vpop.f32.mrf.mxu0
        %v4134 = vadd.f32 0.0, %v4133
        %4135 = vmatmul.f32.gmra.mxu0 %v4024
        %v4136 = vpop.f32.mrf.mxu0
        %v4137 = vadd.f32 0.0, %v4136
        %4138 = vmatmul.f32.gmra.mxu0 %v4027
        %v4139 = vpop.f32.mrf.mxu0
        %v4140 = vadd.f32 0.0, %v4139
        %4141 = vmatmul.f32.gmra.mxu0 %v4030
        %v4142 = vpop.f32.mrf.mxu0
        %v4143 = vadd.f32 0.0, %v4142
        %4144 = vmatmul.f32.gmra.mxu0 %v4033
        %v4145 = vpop.f32.mrf.mxu0
        %v4146 = vadd.f32 0.0, %v4145
        %4147 = vmatmul.f32.gmra.mxu0 %v4036
        %v4148 = vpop.f32.mrf.mxu0
        %v4149 = vadd.f32 0.0, %v4148
        %4150 = vmatmul.f32.gmra.mxu0 %v4039
        %v4151 = vpop.f32.mrf.mxu0
        %v4152 = vadd.f32 0.0, %v4151
        %4153 = vmatmul.f32.gmra.mxu0 %v4042
        %v4154 = vpop.f32.mrf.mxu0
        %v4155 = vadd.f32 0.0, %v4154
        %4156 = vmatmul.f32.gmra.mxu0 %v4045
        %v4157 = vpop.f32.mrf.mxu0
        %v4158 = vadd.f32 0.0, %v4157
        %4159 = vmatmul.f32.gmra.mxu0 %v4048
        %v4160 = vpop.f32.mrf.mxu0
        %v4161 = vadd.f32 0.0, %v4160
        %4162 = vmatmul.f32.gmra.mxu0 %v4051
        %v4163 = vpop.f32.mrf.mxu0
        %v4164 = vadd.f32 0.0, %v4163
        %4165 = vmatmul.f32.gmra.mxu0 %v4054
        %v4166 = vpop.f32.mrf.mxu0
        %v4167 = vadd.f32 0.0, %v4166
        %4168 = vmatmul.f32.gmra.mxu0 %v4057
        %v4169 = vpop.f32.mrf.mxu0
        %v4170 = vadd.f32 0.0, %v4169
        %4171 = vmatmul.f32.gmra.mxu0 %v4060
        %v4172 = vpop.f32.mrf.mxu0
        %v4173 = vadd.f32 0.0, %v4172
        %4174 = vmatmul.f32.gmra.mxu0 %v4063
        %v4175 = vpop.f32.mrf.mxu0
        %v4176 = vadd.f32 0.0, %v4175
        %4177 = vmatmul.f32.gmra.mxu0 %v4066
        %v4178 = vpop.f32.mrf.mxu0
        %v4179 = vadd.f32 0.0, %v4178
        %4180 = vmatmul.f32.gmra.mxu0 %v4069
        %v4181 = vpop.f32.mrf.mxu0
        %v4182 = vadd.f32 0.0, %v4181
        %4183 = vmatmul.f32.gmra.mxu0 %v4072
        %v4184 = vpop.f32.mrf.mxu0
        %v4185 = vadd.f32 0.0, %v4184
        %4186 = vmatmul.f32.gmra.mxu0 %v4075
        %v4187 = vpop.f32.mrf.mxu0
        %v4188 = vadd.f32 0.0, %v4187
        %4189 = vmatmul.f32.gmra.mxu0 %v4078
        %v4190 = vpop.f32.mrf.mxu0
        %v4191 = vadd.f32 0.0, %v4190
        %4192 = vmatmul.f32.gmra.mxu0 %v4081
        %v4193 = vpop.f32.mrf.mxu0
        %v4194 = vadd.f32 0.0, %v4193
        %4195 = vdwg.mxu0
        %4196 = vmax.xlane.f32.xlu0 %v4101
        %v4197 = vpop.xlane.xlu0 %4196
        %4198 = vmax.xlane.f32.xlu0 %v4104
        %v4199 = vpop.xlane.xlu0 %4198
        %4200 = vmax.xlane.f32.xlu0 %v4107
        %v4201 = vpop.xlane.xlu0 %4200
        %4202 = vmax.xlane.f32.xlu0 %v4110
        %v4203 = vpop.xlane.xlu0 %4202
        %4204 = vmax.xlane.f32.xlu0 %v4113
        %v4205 = vpop.xlane.xlu0 %4204
        %4206 = vmax.xlane.f32.xlu0 %v4116
        %v4207 = vpop.xlane.xlu0 %4206
        %4208 = vmax.xlane.f32.xlu0 %v4119
        %v4209 = vpop.xlane.xlu0 %4208
        %4210 = vmax.xlane.f32.xlu0 %v4122
        %v4211 = vpop.xlane.xlu0 %4210
        %4212 = vmax.xlane.f32.xlu0 %v4125
        %v4213 = vpop.xlane.xlu0 %4212
        %4214 = vmax.xlane.f32.xlu0 %v4128
        %v4215 = vpop.xlane.xlu0 %4214
        %4216 = vmax.xlane.f32.xlu0 %v4131
        %v4217 = vpop.xlane.xlu0 %4216
        %4218 = vmax.xlane.f32.xlu0 %v4134
        %v4219 = vpop.xlane.xlu0 %4218
        %4220 = vmax.xlane.f32.xlu0 %v4137
        %v4221 = vpop.xlane.xlu0 %4220
        %4222 = vmax.xlane.f32.xlu0 %v4140
        %v4223 = vpop.xlane.xlu0 %4222
        %4224 = vmax.xlane.f32.xlu0 %v4143
        %v4225 = vpop.xlane.xlu0 %4224
        %4226 = vmax.xlane.f32.xlu0 %v4146
        %v4227 = vpop.xlane.xlu0 %4226
        %4228 = vmax.xlane.f32.xlu0 %v4149
        %v4229 = vpop.xlane.xlu0 %4228
        %4230 = vmax.xlane.f32.xlu0 %v4152
        %v4231 = vpop.xlane.xlu0 %4230
        %4232 = vmax.xlane.f32.xlu0 %v4155
        %v4233 = vpop.xlane.xlu0 %4232
        %4234 = vmax.xlane.f32.xlu0 %v4158
        %v4235 = vpop.xlane.xlu0 %4234
        %4236 = vmax.xlane.f32.xlu0 %v4161
        %v4237 = vpop.xlane.xlu0 %4236
        %4238 = vmax.xlane.f32.xlu0 %v4164
        %v4239 = vpop.xlane.xlu0 %4238
        %4240 = vmax.xlane.f32.xlu0 %v4167
        %v4241 = vpop.xlane.xlu0 %4240
        %4242 = vmax.xlane.f32.xlu0 %v4170
        %v4243 = vpop.xlane.xlu0 %4242
        %4244 = vmax.xlane.f32.xlu0 %v4173
        %v4245 = vpop.xlane.xlu0 %4244
        %4246 = vmax.xlane.f32.xlu0 %v4176
        %v4247 = vpop.xlane.xlu0 %4246
        %4248 = vmax.xlane.f32.xlu0 %v4179
        %v4249 = vpop.xlane.xlu0 %4248
        %4250 = vmax.xlane.f32.xlu0 %v4182
        %v4251 = vpop.xlane.xlu0 %4250
        %4252 = vmax.xlane.f32.xlu0 %v4185
        %v4253 = vpop.xlane.xlu0 %4252
        %4254 = vmax.xlane.f32.xlu0 %v4188
        %v4255 = vpop.xlane.xlu0 %4254
        %4256 = vmax.xlane.f32.xlu0 %v4191
        %v4257 = vpop.xlane.xlu0 %4256
        %4258 = vmax.xlane.f32.xlu0 %v4194
        %v4259 = vpop.xlane.xlu0 %4258
        %vm4260 = vcmp.eq.f32.partialorder %v4101, %v4197
        %vm4261 = vcmp.eq.f32.partialorder %v4104, %v4199
        %vm4262 = vcmp.eq.f32.partialorder %v4107, %v4201
        %vm4263 = vcmp.eq.f32.partialorder %v4110, %v4203
        %vm4264 = vcmp.eq.f32.partialorder %v4113, %v4205
        %vm4265 = vcmp.eq.f32.partialorder %v4116, %v4207
        %vm4266 = vcmp.eq.f32.partialorder %v4119, %v4209
        %vm4267 = vcmp.eq.f32.partialorder %v4122, %v4211
        %vm4268 = vcmp.eq.f32.partialorder %v4125, %v4213
        %vm4269 = vcmp.eq.f32.partialorder %v4128, %v4215
        %vm4270 = vcmp.eq.f32.partialorder %v4131, %v4217
        %vm4271 = vcmp.eq.f32.partialorder %v4134, %v4219
        %vm4272 = vcmp.eq.f32.partialorder %v4137, %v4221
        %vm4273 = vcmp.eq.f32.partialorder %v4140, %v4223
        %vm4274 = vcmp.eq.f32.partialorder %v4143, %v4225
        %vm4275 = vcmp.eq.f32.partialorder %v4146, %v4227
        %vm4276 = vcmp.eq.f32.partialorder %v4149, %v4229
        %vm4277 = vcmp.eq.f32.partialorder %v4152, %v4231
        %vm4278 = vcmp.eq.f32.partialorder %v4155, %v4233
        %vm4279 = vcmp.eq.f32.partialorder %v4158, %v4235
        %vm4280 = vcmp.eq.f32.partialorder %v4161, %v4237
        %vm4281 = vcmp.eq.f32.partialorder %v4164, %v4239
        %vm4282 = vcmp.eq.f32.partialorder %v4167, %v4241
        %vm4283 = vcmp.eq.f32.partialorder %v4170, %v4243
        %vm4284 = vcmp.eq.f32.partialorder %v4173, %v4245
        %vm4285 = vcmp.eq.f32.partialorder %v4176, %v4247
        %vm4286 = vcmp.eq.f32.partialorder %v4179, %v4249
        %vm4287 = vcmp.eq.f32.partialorder %v4182, %v4251
        %vm4288 = vcmp.eq.f32.partialorder %v4185, %v4253
        %vm4289 = vcmp.eq.f32.partialorder %v4188, %v4255
        %vm4290 = vcmp.eq.f32.partialorder %v4191, %v4257
        %vm4291 = vcmp.eq.f32.partialorder %v4194, %v4259
        %v4292 = vsel %vm4260, %v354, 128
        %v4293 = vsel %vm4261, %v354, 128
        %v4294 = vsel %vm4262, %v354, 128
        %v4295 = vsel %vm4263, %v354, 128
        %v4296 = vsel %vm4264, %v354, 128
        %v4297 = vsel %vm4265, %v354, 128
        %v4298 = vsel %vm4266, %v354, 128
        %v4299 = vsel %vm4267, %v354, 128
        %v4300 = vsel %vm4268, %v354, 128
        %v4301 = vsel %vm4269, %v354, 128
        %v4302 = vsel %vm4270, %v354, 128
        %v4303 = vsel %vm4271, %v354, 128
        %v4304 = vsel %vm4272, %v354, 128
        %v4305 = vsel %vm4273, %v354, 128
        %v4306 = vsel %vm4274, %v354, 128
        %v4307 = vsel %vm4275, %v354, 128
        %v4308 = vsel %vm4276, %v354, 128
        %v4309 = vsel %vm4277, %v354, 128
        %v4310 = vsel %vm4278, %v354, 128
        %v4311 = vsel %vm4279, %v354, 128
        %v4312 = vsel %vm4280, %v354, 128
        %v4313 = vsel %vm4281, %v354, 128
        %v4314 = vsel %vm4282, %v354, 128
        %v4315 = vsel %vm4283, %v354, 128
        %v4316 = vsel %vm4284, %v354, 128
        %v4317 = vsel %vm4285, %v354, 128
        %v4318 = vsel %vm4286, %v354, 128
        %v4319 = vsel %vm4287, %v354, 128
        %v4320 = vsel %vm4288, %v354, 128
        %v4321 = vsel %vm4289, %v354, 128
        %v4322 = vsel %vm4290, %v354, 128
        %v4323 = vsel %vm4291, %v354, 128
        %v4324 = vand.u32 %v4292, 65535
        %v4325 = vshra.s32 %v4292, 16
        %v4326 = vcvt.s32.f32 %v4324
        %v4327 = vcvt.s32.f32 %v4325
        %4328 = vmin.xlane.f32.xlu0 %v4327
        %v4329 = vpop.xlane.xlu0 %4328
        %vm4330 = vcmp.eq.f32.partialorder %v4327, %v4329
        %v4331 = vsel %vm4330, %v4326, inf
        %4332 = vmin.xlane.f32.xlu0 %v4331
        %v4333 = vpop.xlane.xlu0 %4332
        %v4334 = vcvt.f32.s32 %v4333
        %v4335 = vcvt.f32.s32 %v4329
        %v4336 = vshll.u32 %v4335, 16
        %v4337 = vadd.s32 %v4336, %v4334
        %v4338 = vand.u32 %v4293, 65535
        %v4339 = vshra.s32 %v4293, 16
        %v4340 = vcvt.s32.f32 %v4338
        %v4341 = vcvt.s32.f32 %v4339
        %4342 = vmin.xlane.f32.xlu0 %v4341
        %v4343 = vpop.xlane.xlu0 %4342
        %vm4344 = vcmp.eq.f32.partialorder %v4341, %v4343
        %v4345 = vsel %vm4344, %v4340, inf
        %4346 = vmin.xlane.f32.xlu0 %v4345
        %v4347 = vpop.xlane.xlu0 %4346
        %v4348 = vcvt.f32.s32 %v4347
        %v4349 = vcvt.f32.s32 %v4343
        %v4350 = vshll.u32 %v4349, 16
        %v4351 = vadd.s32 %v4350, %v4348
        %v4352 = vand.u32 %v4294, 65535
        %v4353 = vshra.s32 %v4294, 16
        %v4354 = vcvt.s32.f32 %v4352
        %v4355 = vcvt.s32.f32 %v4353
        %4356 = vmin.xlane.f32.xlu0 %v4355
        %v4357 = vpop.xlane.xlu0 %4356
        %vm4358 = vcmp.eq.f32.partialorder %v4355, %v4357
        %v4359 = vsel %vm4358, %v4354, inf
        %4360 = vmin.xlane.f32.xlu0 %v4359
        %v4361 = vpop.xlane.xlu0 %4360
        %v4362 = vcvt.f32.s32 %v4361
        %v4363 = vcvt.f32.s32 %v4357
        %v4364 = vshll.u32 %v4363, 16
        %v4365 = vadd.s32 %v4364, %v4362
        %v4366 = vand.u32 %v4295, 65535
        %v4367 = vshra.s32 %v4295, 16
        %v4368 = vcvt.s32.f32 %v4366
        %v4369 = vcvt.s32.f32 %v4367
        %4370 = vmin.xlane.f32.xlu0 %v4369
        %v4371 = vpop.xlane.xlu0 %4370
        %vm4372 = vcmp.eq.f32.partialorder %v4369, %v4371
        %v4373 = vsel %vm4372, %v4368, inf
        %4374 = vmin.xlane.f32.xlu0 %v4373
        %v4375 = vpop.xlane.xlu0 %4374
        %v4376 = vcvt.f32.s32 %v4375
        %v4377 = vcvt.f32.s32 %v4371
        %v4378 = vshll.u32 %v4377, 16
        %v4379 = vadd.s32 %v4378, %v4376
        %v4380 = vand.u32 %v4296, 65535
        %v4381 = vshra.s32 %v4296, 16
        %v4382 = vcvt.s32.f32 %v4380
        %v4383 = vcvt.s32.f32 %v4381
        %4384 = vmin.xlane.f32.xlu0 %v4383
        %v4385 = vpop.xlane.xlu0 %4384
        %vm4386 = vcmp.eq.f32.partialorder %v4383, %v4385
        %v4387 = vsel %vm4386, %v4382, inf
        %4388 = vmin.xlane.f32.xlu0 %v4387
        %v4389 = vpop.xlane.xlu0 %4388
        %v4390 = vcvt.f32.s32 %v4389
        %v4391 = vcvt.f32.s32 %v4385
        %v4392 = vshll.u32 %v4391, 16
        %v4393 = vadd.s32 %v4392, %v4390
        %v4394 = vand.u32 %v4297, 65535
        %v4395 = vshra.s32 %v4297, 16
        %v4396 = vcvt.s32.f32 %v4394
        %v4397 = vcvt.s32.f32 %v4395
        %4398 = vmin.xlane.f32.xlu0 %v4397
        %v4399 = vpop.xlane.xlu0 %4398
        %vm4400 = vcmp.eq.f32.partialorder %v4397, %v4399
        %v4401 = vsel %vm4400, %v4396, inf
        %4402 = vmin.xlane.f32.xlu0 %v4401
        %v4403 = vpop.xlane.xlu0 %4402
        %v4404 = vcvt.f32.s32 %v4403
        %v4405 = vcvt.f32.s32 %v4399
        %v4406 = vshll.u32 %v4405, 16
        %v4407 = vadd.s32 %v4406, %v4404
        %v4408 = vand.u32 %v4298, 65535
        %v4409 = vshra.s32 %v4298, 16
        %v4410 = vcvt.s32.f32 %v4408
        %v4411 = vcvt.s32.f32 %v4409
        %4412 = vmin.xlane.f32.xlu0 %v4411
        %v4413 = vpop.xlane.xlu0 %4412
        %vm4414 = vcmp.eq.f32.partialorder %v4411, %v4413
        %v4415 = vsel %vm4414, %v4410, inf
        %4416 = vmin.xlane.f32.xlu0 %v4415
        %v4417 = vpop.xlane.xlu0 %4416
        %v4418 = vcvt.f32.s32 %v4417
        %v4419 = vcvt.f32.s32 %v4413
        %v4420 = vshll.u32 %v4419, 16
        %v4421 = vadd.s32 %v4420, %v4418
        %v4422 = vand.u32 %v4299, 65535
        %v4423 = vshra.s32 %v4299, 16
        %v4424 = vcvt.s32.f32 %v4422
        %v4425 = vcvt.s32.f32 %v4423
        %4426 = vmin.xlane.f32.xlu0 %v4425
        %v4427 = vpop.xlane.xlu0 %4426
        %vm4428 = vcmp.eq.f32.partialorder %v4425, %v4427
        %v4429 = vsel %vm4428, %v4424, inf
        %4430 = vmin.xlane.f32.xlu0 %v4429
        %v4431 = vpop.xlane.xlu0 %4430
        %v4432 = vcvt.f32.s32 %v4431
        %v4433 = vcvt.f32.s32 %v4427
        %v4434 = vshll.u32 %v4433, 16
        %v4435 = vadd.s32 %v4434, %v4432
        %v4436 = vand.u32 %v4300, 65535
        %v4437 = vshra.s32 %v4300, 16
        %v4438 = vcvt.s32.f32 %v4436
        %v4439 = vcvt.s32.f32 %v4437
        %4440 = vmin.xlane.f32.xlu0 %v4439
        %v4441 = vpop.xlane.xlu0 %4440
        %vm4442 = vcmp.eq.f32.partialorder %v4439, %v4441
        %v4443 = vsel %vm4442, %v4438, inf
        %4444 = vmin.xlane.f32.xlu0 %v4443
        %v4445 = vpop.xlane.xlu0 %4444
        %v4446 = vcvt.f32.s32 %v4445
        %v4447 = vcvt.f32.s32 %v4441
        %v4448 = vshll.u32 %v4447, 16
        %v4449 = vadd.s32 %v4448, %v4446
        %v4450 = vand.u32 %v4301, 65535
        %v4451 = vshra.s32 %v4301, 16
        %v4452 = vcvt.s32.f32 %v4450
        %v4453 = vcvt.s32.f32 %v4451
        %4454 = vmin.xlane.f32.xlu0 %v4453
        %v4455 = vpop.xlane.xlu0 %4454
        %vm4456 = vcmp.eq.f32.partialorder %v4453, %v4455
        %v4457 = vsel %vm4456, %v4452, inf
        %4458 = vmin.xlane.f32.xlu0 %v4457
        %v4459 = vpop.xlane.xlu0 %4458
        %v4460 = vcvt.f32.s32 %v4459
        %v4461 = vcvt.f32.s32 %v4455
        %v4462 = vshll.u32 %v4461, 16
        %v4463 = vadd.s32 %v4462, %v4460
        %v4464 = vand.u32 %v4302, 65535
        %v4465 = vshra.s32 %v4302, 16
        %v4466 = vcvt.s32.f32 %v4464
        %v4467 = vcvt.s32.f32 %v4465
        %4468 = vmin.xlane.f32.xlu0 %v4467
        %v4469 = vpop.xlane.xlu0 %4468
        %vm4470 = vcmp.eq.f32.partialorder %v4467, %v4469
        %v4471 = vsel %vm4470, %v4466, inf
        %4472 = vmin.xlane.f32.xlu0 %v4471
        %v4473 = vpop.xlane.xlu0 %4472
        %v4474 = vcvt.f32.s32 %v4473
        %v4475 = vcvt.f32.s32 %v4469
        %v4476 = vshll.u32 %v4475, 16
        %v4477 = vadd.s32 %v4476, %v4474
        %v4478 = vand.u32 %v4303, 65535
        %v4479 = vshra.s32 %v4303, 16
        %v4480 = vcvt.s32.f32 %v4478
        %v4481 = vcvt.s32.f32 %v4479
        %4482 = vmin.xlane.f32.xlu0 %v4481
        %v4483 = vpop.xlane.xlu0 %4482
        %vm4484 = vcmp.eq.f32.partialorder %v4481, %v4483
        %v4485 = vsel %vm4484, %v4480, inf
        %4486 = vmin.xlane.f32.xlu0 %v4485
        %v4487 = vpop.xlane.xlu0 %4486
        %v4488 = vcvt.f32.s32 %v4487
        %v4489 = vcvt.f32.s32 %v4483
        %v4490 = vshll.u32 %v4489, 16
        %v4491 = vadd.s32 %v4490, %v4488
        %v4492 = vand.u32 %v4304, 65535
        %v4493 = vshra.s32 %v4304, 16
        %v4494 = vcvt.s32.f32 %v4492
        %v4495 = vcvt.s32.f32 %v4493
        %4496 = vmin.xlane.f32.xlu0 %v4495
        %v4497 = vpop.xlane.xlu0 %4496
        %vm4498 = vcmp.eq.f32.partialorder %v4495, %v4497
        %v4499 = vsel %vm4498, %v4494, inf
        %4500 = vmin.xlane.f32.xlu0 %v4499
        %v4501 = vpop.xlane.xlu0 %4500
        %v4502 = vcvt.f32.s32 %v4501
        %v4503 = vcvt.f32.s32 %v4497
        %v4504 = vshll.u32 %v4503, 16
        %v4505 = vadd.s32 %v4504, %v4502
        %v4506 = vand.u32 %v4305, 65535
        %v4507 = vshra.s32 %v4305, 16
        %v4508 = vcvt.s32.f32 %v4506
        %v4509 = vcvt.s32.f32 %v4507
        %4510 = vmin.xlane.f32.xlu0 %v4509
        %v4511 = vpop.xlane.xlu0 %4510
        %vm4512 = vcmp.eq.f32.partialorder %v4509, %v4511
        %v4513 = vsel %vm4512, %v4508, inf
        %4514 = vmin.xlane.f32.xlu0 %v4513
        %v4515 = vpop.xlane.xlu0 %4514
        %v4516 = vcvt.f32.s32 %v4515
        %v4517 = vcvt.f32.s32 %v4511
        %v4518 = vshll.u32 %v4517, 16
        %v4519 = vadd.s32 %v4518, %v4516
        %v4520 = vand.u32 %v4306, 65535
        %v4521 = vshra.s32 %v4306, 16
        %v4522 = vcvt.s32.f32 %v4520
        %v4523 = vcvt.s32.f32 %v4521
        %4524 = vmin.xlane.f32.xlu0 %v4523
        %v4525 = vpop.xlane.xlu0 %4524
        %vm4526 = vcmp.eq.f32.partialorder %v4523, %v4525
        %v4527 = vsel %vm4526, %v4522, inf
        %4528 = vmin.xlane.f32.xlu0 %v4527
        %v4529 = vpop.xlane.xlu0 %4528
        %v4530 = vcvt.f32.s32 %v4529
        %v4531 = vcvt.f32.s32 %v4525
        %v4532 = vshll.u32 %v4531, 16
        %v4533 = vadd.s32 %v4532, %v4530
        %v4534 = vand.u32 %v4307, 65535
        %v4535 = vshra.s32 %v4307, 16
        %v4536 = vcvt.s32.f32 %v4534
        %v4537 = vcvt.s32.f32 %v4535
        %4538 = vmin.xlane.f32.xlu0 %v4537
        %v4539 = vpop.xlane.xlu0 %4538
        %vm4540 = vcmp.eq.f32.partialorder %v4537, %v4539
        %v4541 = vsel %vm4540, %v4536, inf
        %4542 = vmin.xlane.f32.xlu0 %v4541
        %v4543 = vpop.xlane.xlu0 %4542
        %v4544 = vcvt.f32.s32 %v4543
        %v4545 = vcvt.f32.s32 %v4539
        %v4546 = vshll.u32 %v4545, 16
        %v4547 = vadd.s32 %v4546, %v4544
        %v4548 = vand.u32 %v4308, 65535
        %v4549 = vshra.s32 %v4308, 16
        %v4550 = vcvt.s32.f32 %v4548
        %v4551 = vcvt.s32.f32 %v4549
        %4552 = vmin.xlane.f32.xlu0 %v4551
        %v4553 = vpop.xlane.xlu0 %4552
        %vm4554 = vcmp.eq.f32.partialorder %v4551, %v4553
        %v4555 = vsel %vm4554, %v4550, inf
        %4556 = vmin.xlane.f32.xlu0 %v4555
        %v4557 = vpop.xlane.xlu0 %4556
        %v4558 = vcvt.f32.s32 %v4557
        %v4559 = vcvt.f32.s32 %v4553
        %v4560 = vshll.u32 %v4559, 16
        %v4561 = vadd.s32 %v4560, %v4558
        %v4562 = vand.u32 %v4309, 65535
        %v4563 = vshra.s32 %v4309, 16
        %v4564 = vcvt.s32.f32 %v4562
        %v4565 = vcvt.s32.f32 %v4563
        %4566 = vmin.xlane.f32.xlu0 %v4565
        %v4567 = vpop.xlane.xlu0 %4566
        %vm4568 = vcmp.eq.f32.partialorder %v4565, %v4567
        %v4569 = vsel %vm4568, %v4564, inf
        %4570 = vmin.xlane.f32.xlu0 %v4569
        %v4571 = vpop.xlane.xlu0 %4570
        %v4572 = vcvt.f32.s32 %v4571
        %v4573 = vcvt.f32.s32 %v4567
        %v4574 = vshll.u32 %v4573, 16
        %v4575 = vadd.s32 %v4574, %v4572
        %v4576 = vand.u32 %v4310, 65535
        %v4577 = vshra.s32 %v4310, 16
        %v4578 = vcvt.s32.f32 %v4576
        %v4579 = vcvt.s32.f32 %v4577
        %4580 = vmin.xlane.f32.xlu0 %v4579
        %v4581 = vpop.xlane.xlu0 %4580
        %vm4582 = vcmp.eq.f32.partialorder %v4579, %v4581
        %v4583 = vsel %vm4582, %v4578, inf
        %4584 = vmin.xlane.f32.xlu0 %v4583
        %v4585 = vpop.xlane.xlu0 %4584
        %v4586 = vcvt.f32.s32 %v4585
        %v4587 = vcvt.f32.s32 %v4581
        %v4588 = vshll.u32 %v4587, 16
        %v4589 = vadd.s32 %v4588, %v4586
        %v4590 = vand.u32 %v4311, 65535
        %v4591 = vshra.s32 %v4311, 16
        %v4592 = vcvt.s32.f32 %v4590
        %v4593 = vcvt.s32.f32 %v4591
        %4594 = vmin.xlane.f32.xlu0 %v4593
        %v4595 = vpop.xlane.xlu0 %4594
        %vm4596 = vcmp.eq.f32.partialorder %v4593, %v4595
        %v4597 = vsel %vm4596, %v4592, inf
        %4598 = vmin.xlane.f32.xlu0 %v4597
        %v4599 = vpop.xlane.xlu0 %4598
        %v4600 = vcvt.f32.s32 %v4599
        %v4601 = vcvt.f32.s32 %v4595
        %v4602 = vshll.u32 %v4601, 16
        %v4603 = vadd.s32 %v4602, %v4600
        %v4604 = vand.u32 %v4312, 65535
        %v4605 = vshra.s32 %v4312, 16
        %v4606 = vcvt.s32.f32 %v4604
        %v4607 = vcvt.s32.f32 %v4605
        %4608 = vmin.xlane.f32.xlu0 %v4607
        %v4609 = vpop.xlane.xlu0 %4608
        %vm4610 = vcmp.eq.f32.partialorder %v4607, %v4609
        %v4611 = vsel %vm4610, %v4606, inf
        %4612 = vmin.xlane.f32.xlu0 %v4611
        %v4613 = vpop.xlane.xlu0 %4612
        %v4614 = vcvt.f32.s32 %v4613
        %v4615 = vcvt.f32.s32 %v4609
        %v4616 = vshll.u32 %v4615, 16
        %v4617 = vadd.s32 %v4616, %v4614
        %v4618 = vand.u32 %v4313, 65535
        %v4619 = vshra.s32 %v4313, 16
        %v4620 = vcvt.s32.f32 %v4618
        %v4621 = vcvt.s32.f32 %v4619
        %4622 = vmin.xlane.f32.xlu0 %v4621
        %v4623 = vpop.xlane.xlu0 %4622
        %vm4624 = vcmp.eq.f32.partialorder %v4621, %v4623
        %v4625 = vsel %vm4624, %v4620, inf
        %4626 = vmin.xlane.f32.xlu0 %v4625
        %v4627 = vpop.xlane.xlu0 %4626
        %v4628 = vcvt.f32.s32 %v4627
        %v4629 = vcvt.f32.s32 %v4623
        %v4630 = vshll.u32 %v4629, 16
        %v4631 = vadd.s32 %v4630, %v4628
        %v4632 = vand.u32 %v4314, 65535
        %v4633 = vshra.s32 %v4314, 16
        %v4634 = vcvt.s32.f32 %v4632
        %v4635 = vcvt.s32.f32 %v4633
        %4636 = vmin.xlane.f32.xlu0 %v4635
        %v4637 = vpop.xlane.xlu0 %4636
        %vm4638 = vcmp.eq.f32.partialorder %v4635, %v4637
        %v4639 = vsel %vm4638, %v4634, inf
        %4640 = vmin.xlane.f32.xlu0 %v4639
        %v4641 = vpop.xlane.xlu0 %4640
        %v4642 = vcvt.f32.s32 %v4641
        %v4643 = vcvt.f32.s32 %v4637
        %v4644 = vshll.u32 %v4643, 16
        %v4645 = vadd.s32 %v4644, %v4642
        %v4646 = vand.u32 %v4315, 65535
        %v4647 = vshra.s32 %v4315, 16
        %v4648 = vcvt.s32.f32 %v4646
        %v4649 = vcvt.s32.f32 %v4647
        %4650 = vmin.xlane.f32.xlu0 %v4649
        %v4651 = vpop.xlane.xlu0 %4650
        %vm4652 = vcmp.eq.f32.partialorder %v4649, %v4651
        %v4653 = vsel %vm4652, %v4648, inf
        %4654 = vmin.xlane.f32.xlu0 %v4653
        %v4655 = vpop.xlane.xlu0 %4654
        %v4656 = vcvt.f32.s32 %v4655
        %v4657 = vcvt.f32.s32 %v4651
        %v4658 = vshll.u32 %v4657, 16
        %v4659 = vadd.s32 %v4658, %v4656
        %v4660 = vand.u32 %v4316, 65535
        %v4661 = vshra.s32 %v4316, 16
        %v4662 = vcvt.s32.f32 %v4660
        %v4663 = vcvt.s32.f32 %v4661
        %4664 = vmin.xlane.f32.xlu0 %v4663
        %v4665 = vpop.xlane.xlu0 %4664
        %vm4666 = vcmp.eq.f32.partialorder %v4663, %v4665
        %v4667 = vsel %vm4666, %v4662, inf
        %4668 = vmin.xlane.f32.xlu0 %v4667
        %v4669 = vpop.xlane.xlu0 %4668
        %v4670 = vcvt.f32.s32 %v4669
        %v4671 = vcvt.f32.s32 %v4665
        %v4672 = vshll.u32 %v4671, 16
        %v4673 = vadd.s32 %v4672, %v4670
        %v4674 = vand.u32 %v4317, 65535
        %v4675 = vshra.s32 %v4317, 16
        %v4676 = vcvt.s32.f32 %v4674
        %v4677 = vcvt.s32.f32 %v4675
        %4678 = vmin.xlane.f32.xlu0 %v4677
        %v4679 = vpop.xlane.xlu0 %4678
        %vm4680 = vcmp.eq.f32.partialorder %v4677, %v4679
        %v4681 = vsel %vm4680, %v4676, inf
        %4682 = vmin.xlane.f32.xlu0 %v4681
        %v4683 = vpop.xlane.xlu0 %4682
        %v4684 = vcvt.f32.s32 %v4683
        %v4685 = vcvt.f32.s32 %v4679
        %v4686 = vshll.u32 %v4685, 16
        %v4687 = vadd.s32 %v4686, %v4684
        %v4688 = vand.u32 %v4318, 65535
        %v4689 = vshra.s32 %v4318, 16
        %v4690 = vcvt.s32.f32 %v4688
        %v4691 = vcvt.s32.f32 %v4689
        %4692 = vmin.xlane.f32.xlu0 %v4691
        %v4693 = vpop.xlane.xlu0 %4692
        %vm4694 = vcmp.eq.f32.partialorder %v4691, %v4693
        %v4695 = vsel %vm4694, %v4690, inf
        %4696 = vmin.xlane.f32.xlu0 %v4695
        %v4697 = vpop.xlane.xlu0 %4696
        %v4698 = vcvt.f32.s32 %v4697
        %v4699 = vcvt.f32.s32 %v4693
        %v4700 = vshll.u32 %v4699, 16
        %v4701 = vadd.s32 %v4700, %v4698
        %v4702 = vand.u32 %v4319, 65535
        %v4703 = vshra.s32 %v4319, 16
        %v4704 = vcvt.s32.f32 %v4702
        %v4705 = vcvt.s32.f32 %v4703
        %4706 = vmin.xlane.f32.xlu0 %v4705
        %v4707 = vpop.xlane.xlu0 %4706
        %vm4708 = vcmp.eq.f32.partialorder %v4705, %v4707
        %v4709 = vsel %vm4708, %v4704, inf
        %4710 = vmin.xlane.f32.xlu0 %v4709
        %v4711 = vpop.xlane.xlu0 %4710
        %v4712 = vcvt.f32.s32 %v4711
        %v4713 = vcvt.f32.s32 %v4707
        %v4714 = vshll.u32 %v4713, 16
        %v4715 = vadd.s32 %v4714, %v4712
        %v4716 = vand.u32 %v4320, 65535
        %v4717 = vshra.s32 %v4320, 16
        %v4718 = vcvt.s32.f32 %v4716
        %v4719 = vcvt.s32.f32 %v4717
        %4720 = vmin.xlane.f32.xlu0 %v4719
        %v4721 = vpop.xlane.xlu0 %4720
        %vm4722 = vcmp.eq.f32.partialorder %v4719, %v4721
        %v4723 = vsel %vm4722, %v4718, inf
        %4724 = vmin.xlane.f32.xlu0 %v4723
        %v4725 = vpop.xlane.xlu0 %4724
        %v4726 = vcvt.f32.s32 %v4725
        %v4727 = vcvt.f32.s32 %v4721
        %v4728 = vshll.u32 %v4727, 16
        %v4729 = vadd.s32 %v4728, %v4726
        %v4730 = vand.u32 %v4321, 65535
        %v4731 = vshra.s32 %v4321, 16
        %v4732 = vcvt.s32.f32 %v4730
        %v4733 = vcvt.s32.f32 %v4731
        %4734 = vmin.xlane.f32.xlu0 %v4733
        %v4735 = vpop.xlane.xlu0 %4734
        %vm4736 = vcmp.eq.f32.partialorder %v4733, %v4735
        %v4737 = vsel %vm4736, %v4732, inf
        %4738 = vmin.xlane.f32.xlu0 %v4737
        %v4739 = vpop.xlane.xlu0 %4738
        %v4740 = vcvt.f32.s32 %v4739
        %v4741 = vcvt.f32.s32 %v4735
        %v4742 = vshll.u32 %v4741, 16
        %v4743 = vadd.s32 %v4742, %v4740
        %v4744 = vand.u32 %v4322, 65535
        %v4745 = vshra.s32 %v4322, 16
        %v4746 = vcvt.s32.f32 %v4744
        %v4747 = vcvt.s32.f32 %v4745
        %4748 = vmin.xlane.f32.xlu0 %v4747
        %v4749 = vpop.xlane.xlu0 %4748
        %vm4750 = vcmp.eq.f32.partialorder %v4747, %v4749
        %v4751 = vsel %vm4750, %v4746, inf
        %4752 = vmin.xlane.f32.xlu0 %v4751
        %v4753 = vpop.xlane.xlu0 %4752
        %v4754 = vcvt.f32.s32 %v4753
        %v4755 = vcvt.f32.s32 %v4749
        %v4756 = vshll.u32 %v4755, 16
        %v4757 = vadd.s32 %v4756, %v4754
        %v4758 = vand.u32 %v4323, 65535
        %v4759 = vshra.s32 %v4323, 16
        %v4760 = vcvt.s32.f32 %v4758
        %v4761 = vcvt.s32.f32 %v4759
        %4762 = vmin.xlane.f32.xlu0 %v4761
        %v4763 = vpop.xlane.xlu0 %4762
        %vm4764 = vcmp.eq.f32.partialorder %v4761, %v4763
        %v4765 = vsel %vm4764, %v4760, inf
        %4766 = vmin.xlane.f32.xlu0 %v4765
        %v4767 = vpop.xlane.xlu0 %4766
        %v4768 = vcvt.f32.s32 %v4767
        %v4769 = vcvt.f32.s32 %v4763
        %v4770 = vshll.u32 %v4769, 16
        %v4771 = vadd.s32 %v4770, %v4768
        %vm4772 = vcmp.eq.s32.totalorder %v354, %v4337
        %vm4773 = vcmp.eq.s32.totalorder %v354, %v4351
        %vm4774 = vcmp.eq.s32.totalorder %v354, %v4365
        %vm4775 = vcmp.eq.s32.totalorder %v354, %v4379
        %vm4776 = vcmp.eq.s32.totalorder %v354, %v4393
        %vm4777 = vcmp.eq.s32.totalorder %v354, %v4407
        %vm4778 = vcmp.eq.s32.totalorder %v354, %v4421
        %vm4779 = vcmp.eq.s32.totalorder %v354, %v4435
        %vm4780 = vcmp.eq.s32.totalorder %v354, %v4449
        %vm4781 = vcmp.eq.s32.totalorder %v354, %v4463
        %vm4782 = vcmp.eq.s32.totalorder %v354, %v4477
        %vm4783 = vcmp.eq.s32.totalorder %v354, %v4491
        %vm4784 = vcmp.eq.s32.totalorder %v354, %v4505
        %vm4785 = vcmp.eq.s32.totalorder %v354, %v4519
        %vm4786 = vcmp.eq.s32.totalorder %v354, %v4533
        %vm4787 = vcmp.eq.s32.totalorder %v354, %v4547
        %vm4788 = vcmp.eq.s32.totalorder %v354, %v4561
        %vm4789 = vcmp.eq.s32.totalorder %v354, %v4575
        %vm4790 = vcmp.eq.s32.totalorder %v354, %v4589
        %vm4791 = vcmp.eq.s32.totalorder %v354, %v4603
        %vm4792 = vcmp.eq.s32.totalorder %v354, %v4617
        %vm4793 = vcmp.eq.s32.totalorder %v354, %v4631
        %vm4794 = vcmp.eq.s32.totalorder %v354, %v4645
        %vm4795 = vcmp.eq.s32.totalorder %v354, %v4659
        %vm4796 = vcmp.eq.s32.totalorder %v354, %v4673
        %vm4797 = vcmp.eq.s32.totalorder %v354, %v4687
        %vm4798 = vcmp.eq.s32.totalorder %v354, %v4701
        %vm4799 = vcmp.eq.s32.totalorder %v354, %v4715
        %vm4800 = vcmp.eq.s32.totalorder %v354, %v4729
        %vm4801 = vcmp.eq.s32.totalorder %v354, %v4743
        %vm4802 = vcmp.eq.s32.totalorder %v354, %v4757
        %vm4803 = vcmp.eq.s32.totalorder %v354, %v4771
        %v4804 = vsel %vm4772, 1, 0
        %v4805 = vsel %vm4773, 1, 0
        %v4806 = vsel %vm4774, 1, 0
        %v4807 = vsel %vm4775, 1, 0
        %v4808 = vsel %vm4776, 1, 0
        %v4809 = vsel %vm4777, 1, 0
        %v4810 = vsel %vm4778, 1, 0
        %v4811 = vsel %vm4779, 1, 0
        %v4812 = vsel %vm4780, 1, 0
        %v4813 = vsel %vm4781, 1, 0
        %v4814 = vsel %vm4782, 1, 0
        %v4815 = vsel %vm4783, 1, 0
        %v4816 = vsel %vm4784, 1, 0
        %v4817 = vsel %vm4785, 1, 0
        %v4818 = vsel %vm4786, 1, 0
        %v4819 = vsel %vm4787, 1, 0
        %v4820 = vsel %vm4788, 1, 0
        %v4821 = vsel %vm4789, 1, 0
        %v4822 = vsel %vm4790, 1, 0
        %v4823 = vsel %vm4791, 1, 0
        %v4824 = vsel %vm4792, 1, 0
        %v4825 = vsel %vm4793, 1, 0
        %v4826 = vsel %vm4794, 1, 0
        %v4827 = vsel %vm4795, 1, 0
        %v4828 = vsel %vm4796, 1, 0
        %v4829 = vsel %vm4797, 1, 0
        %v4830 = vsel %vm4798, 1, 0
        %v4831 = vsel %vm4799, 1, 0
        %v4832 = vsel %vm4800, 1, 0
        %v4833 = vsel %vm4801, 1, 0
        %v4834 = vsel %vm4802, 1, 0
        %v4835 = vsel %vm4803, 1, 0
        %v4836 = vcvt.s32.f32 %v4804
        %v4837 = vcvt.s32.f32 %v4805
        %v4838 = vcvt.s32.f32 %v4806
        %v4839 = vcvt.s32.f32 %v4807
        %v4840 = vcvt.s32.f32 %v4808
        %v4841 = vcvt.s32.f32 %v4809
        %v4842 = vcvt.s32.f32 %v4810
        %v4843 = vcvt.s32.f32 %v4811
        %v4844 = vcvt.s32.f32 %v4812
        %v4845 = vcvt.s32.f32 %v4813
        %v4846 = vcvt.s32.f32 %v4814
        %v4847 = vcvt.s32.f32 %v4815
        %v4848 = vcvt.s32.f32 %v4816
        %v4849 = vcvt.s32.f32 %v4817
        %v4850 = vcvt.s32.f32 %v4818
        %v4851 = vcvt.s32.f32 %v4819
        %v4852 = vcvt.s32.f32 %v4820
        %v4853 = vcvt.s32.f32 %v4821
        %v4854 = vcvt.s32.f32 %v4822
        %v4855 = vcvt.s32.f32 %v4823
        %v4856 = vcvt.s32.f32 %v4824
        %v4857 = vcvt.s32.f32 %v4825
        %v4858 = vcvt.s32.f32 %v4826
        %v4859 = vcvt.s32.f32 %v4827
        %v4860 = vcvt.s32.f32 %v4828
        %v4861 = vcvt.s32.f32 %v4829
        %v4862 = vcvt.s32.f32 %v4830
        %v4863 = vcvt.s32.f32 %v4831
        %v4864 = vcvt.s32.f32 %v4832
        %v4865 = vcvt.s32.f32 %v4833
        %v4866 = vcvt.s32.f32 %v4834
        %v4867 = vcvt.s32.f32 %v4835
        %s4868 = scalar_lea.vmem %s4, 256
        %v4869 = vld [vmem:[%s4868] sm:$0xff]
        %v4870 = vld [vmem:[%s4868 + $0x8] sm:$0xff]
        %v4871 = vld [vmem:[%s4868 + $0x10] sm:$0xff]
        %v4872 = vld [vmem:[%s4868 + $0x18] sm:$0xff]
        %v4873 = vld [vmem:[%s4868 + $0x20] sm:$0xff]
        %v4874 = vld [vmem:[%s4868 + $0x28] sm:$0xff]
        %v4875 = vld [vmem:[%s4868 + $0x30] sm:$0xff]
        %v4876 = vld [vmem:[%s4868 + $0x38] sm:$0xff]
        %v4877 = vld [vmem:[%s4868 + $0x40] sm:$0xff]
        %v4878 = vld [vmem:[%s4868 + $0x48] sm:$0xff]
        %v4879 = vld [vmem:[%s4868 + $0x50] sm:$0xff]
        %v4880 = vld [vmem:[%s4868 + $0x58] sm:$0xff]
        %v4881 = vld [vmem:[%s4868 + $0x60] sm:$0xff]
        %v4882 = vld [vmem:[%s4868 + $0x68] sm:$0xff]
        %v4883 = vld [vmem:[%s4868 + $0x70] sm:$0xff]
        %v4884 = vld [vmem:[%s4868 + $0x78] sm:$0xff]
        %4885 = vmatpush.msra.mxu0 %v4884
        %4886 = vmatpush.msra.mxu0 %v4883
        %4887 = vmatpush.msra.mxu0 %v4882
        %4888 = vmatpush.msra.mxu0 %v4881
        %4889 = vmatpush.msra.mxu0 %v4880
        %4890 = vmatpush.msra.mxu0 %v4879
        %4891 = vmatpush.msra.mxu0 %v4878
        %4892 = vmatpush.msra.mxu0 %v4877
        %4893 = vmatpush.msra.mxu0 %v4876
        %4894 = vmatpush.msra.mxu0 %v4875
        %4895 = vmatpush.msra.mxu0 %v4874
        %4896 = vmatpush.msra.mxu0 %v4873
        %4897 = vmatpush.msra.mxu0 %v4872
        %4898 = vmatpush.msra.mxu0 %v4871
        %4899 = vmatpush.msra.mxu0 %v4870
        %4900 = vmatpush.msra.mxu0 %v4869
        %4901 = vmatmul.f32.gmra.mxu0 %v4836
        %v4902 = vpop.f32.mrf.mxu0
        %v4903 = vadd.f32 0.0, %v4902
        %4904 = vmatmul.f32.gmra.mxu0 %v4837
        %v4905 = vpop.f32.mrf.mxu0
        %v4906 = vadd.f32 0.0, %v4905
        %4907 = vmatmul.f32.gmra.mxu0 %v4838
        %v4908 = vpop.f32.mrf.mxu0
        %v4909 = vadd.f32 0.0, %v4908
        %4910 = vmatmul.f32.gmra.mxu0 %v4839
        %v4911 = vpop.f32.mrf.mxu0
        %v4912 = vadd.f32 0.0, %v4911
        %4913 = vmatmul.f32.gmra.mxu0 %v4840
        %v4914 = vpop.f32.mrf.mxu0
        %v4915 = vadd.f32 0.0, %v4914
        %4916 = vmatmul.f32.gmra.mxu0 %v4841
        %v4917 = vpop.f32.mrf.mxu0
        %v4918 = vadd.f32 0.0, %v4917
        %4919 = vmatmul.f32.gmra.mxu0 %v4842
        %v4920 = vpop.f32.mrf.mxu0
        %v4921 = vadd.f32 0.0, %v4920
        %4922 = vmatmul.f32.gmra.mxu0 %v4843
        %v4923 = vpop.f32.mrf.mxu0
        %v4924 = vadd.f32 0.0, %v4923
        %4925 = vmatmul.f32.gmra.mxu0 %v4844
        %v4926 = vpop.f32.mrf.mxu0
        %v4927 = vadd.f32 0.0, %v4926
        %4928 = vmatmul.f32.gmra.mxu0 %v4845
        %v4929 = vpop.f32.mrf.mxu0
        %v4930 = vadd.f32 0.0, %v4929
        %4931 = vmatmul.f32.gmra.mxu0 %v4846
        %v4932 = vpop.f32.mrf.mxu0
        %v4933 = vadd.f32 0.0, %v4932
        %4934 = vmatmul.f32.gmra.mxu0 %v4847
        %v4935 = vpop.f32.mrf.mxu0
        %v4936 = vadd.f32 0.0, %v4935
        %4937 = vmatmul.f32.gmra.mxu0 %v4848
        %v4938 = vpop.f32.mrf.mxu0
        %v4939 = vadd.f32 0.0, %v4938
        %4940 = vmatmul.f32.gmra.mxu0 %v4849
        %v4941 = vpop.f32.mrf.mxu0
        %v4942 = vadd.f32 0.0, %v4941
        %4943 = vmatmul.f32.gmra.mxu0 %v4850
        %v4944 = vpop.f32.mrf.mxu0
        %v4945 = vadd.f32 0.0, %v4944
        %4946 = vmatmul.f32.gmra.mxu0 %v4851
        %v4947 = vpop.f32.mrf.mxu0
        %v4948 = vadd.f32 0.0, %v4947
        %4949 = vmatmul.f32.gmra.mxu0 %v4852
        %v4950 = vpop.f32.mrf.mxu0
        %v4951 = vadd.f32 0.0, %v4950
        %4952 = vmatmul.f32.gmra.mxu0 %v4853
        %v4953 = vpop.f32.mrf.mxu0
        %v4954 = vadd.f32 0.0, %v4953
        %4955 = vmatmul.f32.gmra.mxu0 %v4854
        %v4956 = vpop.f32.mrf.mxu0
        %v4957 = vadd.f32 0.0, %v4956
        %4958 = vmatmul.f32.gmra.mxu0 %v4855
        %v4959 = vpop.f32.mrf.mxu0
        %v4960 = vadd.f32 0.0, %v4959
        %4961 = vmatmul.f32.gmra.mxu0 %v4856
        %v4962 = vpop.f32.mrf.mxu0
        %v4963 = vadd.f32 0.0, %v4962
        %4964 = vmatmul.f32.gmra.mxu0 %v4857
        %v4965 = vpop.f32.mrf.mxu0
        %v4966 = vadd.f32 0.0, %v4965
        %4967 = vmatmul.f32.gmra.mxu0 %v4858
        %v4968 = vpop.f32.mrf.mxu0
        %v4969 = vadd.f32 0.0, %v4968
        %4970 = vmatmul.f32.gmra.mxu0 %v4859
        %v4971 = vpop.f32.mrf.mxu0
        %v4972 = vadd.f32 0.0, %v4971
        %4973 = vmatmul.f32.gmra.mxu0 %v4860
        %v4974 = vpop.f32.mrf.mxu0
        %v4975 = vadd.f32 0.0, %v4974
        %4976 = vmatmul.f32.gmra.mxu0 %v4861
        %v4977 = vpop.f32.mrf.mxu0
        %v4978 = vadd.f32 0.0, %v4977
        %4979 = vmatmul.f32.gmra.mxu0 %v4862
        %v4980 = vpop.f32.mrf.mxu0
        %v4981 = vadd.f32 0.0, %v4980
        %4982 = vmatmul.f32.gmra.mxu0 %v4863
        %v4983 = vpop.f32.mrf.mxu0
        %v4984 = vadd.f32 0.0, %v4983
        %4985 = vmatmul.f32.gmra.mxu0 %v4864
        %v4986 = vpop.f32.mrf.mxu0
        %v4987 = vadd.f32 0.0, %v4986
        %4988 = vmatmul.f32.gmra.mxu0 %v4865
        %v4989 = vpop.f32.mrf.mxu0
        %v4990 = vadd.f32 0.0, %v4989
        %4991 = vmatmul.f32.gmra.mxu0 %v4866
        %v4992 = vpop.f32.mrf.mxu0
        %v4993 = vadd.f32 0.0, %v4992
        %4994 = vmatmul.f32.gmra.mxu0 %v4867
        %v4995 = vpop.f32.mrf.mxu0
        %v4996 = vadd.f32 0.0, %v4995
        %4997 = vdwg.mxu0
        %s4998 = scalar_lea.vmem %s5, 16
        %v4999 = vld [vmem:[%s4998] sm:$0xff]
        %s5000 = scalar_lea.vmem %s6, 2
        %v5001 = vld [vmem:[%s5000] sm:$0x1]
        %v5003 = vperm.slane %v5001, 0
        %v5006 = vsel %vm574, %v4903, 0
        %v5009 = vsel %vm574, %v4906, 0
        %v5012 = vsel %vm574, %v4909, 0
        %v5015 = vsel %vm574, %v4912, 0
        %v5018 = vsel %vm574, %v4915, 0
        %v5021 = vsel %vm574, %v4918, 0
        %v5024 = vsel %vm574, %v4921, 0
        %v5027 = vsel %vm574, %v4924, 0
        %v5030 = vsel %vm574, %v4927, 0
        %v5033 = vsel %vm574, %v4930, 0
        %v5036 = vsel %vm574, %v4933, 0
        %v5039 = vsel %vm574, %v4936, 0
        %v5042 = vsel %vm574, %v4939, 0
        %v5045 = vsel %vm574, %v4942, 0
        %v5048 = vsel %vm574, %v4945, 0
        %v5051 = vsel %vm574, %v4948, 0
        %v5054 = vsel %vm574, %v4951, 0
        %v5057 = vsel %vm574, %v4954, 0
        %v5060 = vsel %vm574, %v4957, 0
        %v5063 = vsel %vm574, %v4960, 0
        %v5066 = vsel %vm574, %v4963, 0
        %v5069 = vsel %vm574, %v4966, 0
        %v5072 = vsel %vm574, %v4969, 0
        %v5075 = vsel %vm574, %v4972, 0
        %v5078 = vsel %vm574, %v4975, 0
        %v5081 = vsel %vm574, %v4978, 0
        %v5084 = vsel %vm574, %v4981, 0
        %v5087 = vsel %vm574, %v4984, 0
        %v5090 = vsel %vm574, %v4987, 0
        %v5093 = vsel %vm574, %v4990, 0
        %v5096 = vsel %vm574, %v4993, 0
        %v5099 = vsel %vm574, %v4996, 0
        %5101 = vmatpush.msra.mxu0 0.0
        %5102 = vmatpush.msra.mxu0 0.0
        %5103 = vmatpush.msra.mxu0 0.0
        %5104 = vmatpush.msra.mxu0 0.0
        %5105 = vmatpush.msra.mxu0 0.0
        %5106 = vmatpush.msra.mxu0 0.0
        %5107 = vmatpush.msra.mxu0 0.0
        %5108 = vmatpush.msra.mxu0 0.0
        %5109 = vmatpush.msra.mxu0 0.0
        %5110 = vmatpush.msra.mxu0 0.0
        %5111 = vmatpush.msra.mxu0 0.0
        %5112 = vmatpush.msra.mxu0 0.0
        %5113 = vmatpush.msra.mxu0 0.0
        %5114 = vmatpush.msra.mxu0 0.0
        %5115 = vmatpush.msra.mxu0 0.0
        %5116 = vmatpush.msra.mxu0 %v4999
        %5117 = vmatmul.f32.gmra.mxu0 %v5006
        %v5118 = vpop.f32.mrf.mxu0
        %v5119 = vadd.f32 %v5003, %v5118
        %5120 = vmatmul.f32.gmra.mxu0 %v5009
        %v5121 = vpop.f32.mrf.mxu0
        %v5122 = vadd.f32 %v5003, %v5121
        %5123 = vmatmul.f32.gmra.mxu0 %v5012
        %v5124 = vpop.f32.mrf.mxu0
        %v5125 = vadd.f32 %v5003, %v5124
        %5126 = vmatmul.f32.gmra.mxu0 %v5015
        %v5127 = vpop.f32.mrf.mxu0
        %v5128 = vadd.f32 %v5003, %v5127
        %5129 = vmatmul.f32.gmra.mxu0 %v5018
        %v5130 = vpop.f32.mrf.mxu0
        %v5131 = vadd.f32 %v5003, %v5130
        %5132 = vmatmul.f32.gmra.mxu0 %v5021
        %v5133 = vpop.f32.mrf.mxu0
        %v5134 = vadd.f32 %v5003, %v5133
        %5135 = vmatmul.f32.gmra.mxu0 %v5024
        %v5136 = vpop.f32.mrf.mxu0
        %v5137 = vadd.f32 %v5003, %v5136
        %5138 = vmatmul.f32.gmra.mxu0 %v5027
        %v5139 = vpop.f32.mrf.mxu0
        %v5140 = vadd.f32 %v5003, %v5139
        %5141 = vmatmul.f32.gmra.mxu0 %v5030
        %v5142 = vpop.f32.mrf.mxu0
        %v5143 = vadd.f32 %v5003, %v5142
        %5144 = vmatmul.f32.gmra.mxu0 %v5033
        %v5145 = vpop.f32.mrf.mxu0
        %v5146 = vadd.f32 %v5003, %v5145
        %5147 = vmatmul.f32.gmra.mxu0 %v5036
        %v5148 = vpop.f32.mrf.mxu0
        %v5149 = vadd.f32 %v5003, %v5148
        %5150 = vmatmul.f32.gmra.mxu0 %v5039
        %v5151 = vpop.f32.mrf.mxu0
        %v5152 = vadd.f32 %v5003, %v5151
        %5153 = vmatmul.f32.gmra.mxu0 %v5042
        %v5154 = vpop.f32.mrf.mxu0
        %v5155 = vadd.f32 %v5003, %v5154
        %5156 = vmatmul.f32.gmra.mxu0 %v5045
        %v5157 = vpop.f32.mrf.mxu0
        %v5158 = vadd.f32 %v5003, %v5157
        %5159 = vmatmul.f32.gmra.mxu0 %v5048
        %v5160 = vpop.f32.mrf.mxu0
        %v5161 = vadd.f32 %v5003, %v5160
        %5162 = vmatmul.f32.gmra.mxu0 %v5051
        %v5163 = vpop.f32.mrf.mxu0
        %v5164 = vadd.f32 %v5003, %v5163
        %5165 = vmatmul.f32.gmra.mxu0 %v5054
        %v5166 = vpop.f32.mrf.mxu0
        %v5167 = vadd.f32 %v5003, %v5166
        %5168 = vmatmul.f32.gmra.mxu0 %v5057
        %v5169 = vpop.f32.mrf.mxu0
        %v5170 = vadd.f32 %v5003, %v5169
        %5171 = vmatmul.f32.gmra.mxu0 %v5060
        %v5172 = vpop.f32.mrf.mxu0
        %v5173 = vadd.f32 %v5003, %v5172
        %5174 = vmatmul.f32.gmra.mxu0 %v5063
        %v5175 = vpop.f32.mrf.mxu0
        %v5176 = vadd.f32 %v5003, %v5175
        %5177 = vmatmul.f32.gmra.mxu0 %v5066
        %v5178 = vpop.f32.mrf.mxu0
        %v5179 = vadd.f32 %v5003, %v5178
        %5180 = vmatmul.f32.gmra.mxu0 %v5069
        %v5181 = vpop.f32.mrf.mxu0
        %v5182 = vadd.f32 %v5003, %v5181
        %5183 = vmatmul.f32.gmra.mxu0 %v5072
        %v5184 = vpop.f32.mrf.mxu0
        %v5185 = vadd.f32 %v5003, %v5184
        %5186 = vmatmul.f32.gmra.mxu0 %v5075
        %v5187 = vpop.f32.mrf.mxu0
        %v5188 = vadd.f32 %v5003, %v5187
        %5189 = vmatmul.f32.gmra.mxu0 %v5078
        %v5190 = vpop.f32.mrf.mxu0
        %v5191 = vadd.f32 %v5003, %v5190
        %5192 = vmatmul.f32.gmra.mxu0 %v5081
        %v5193 = vpop.f32.mrf.mxu0
        %v5194 = vadd.f32 %v5003, %v5193
        %5195 = vmatmul.f32.gmra.mxu0 %v5084
        %v5196 = vpop.f32.mrf.mxu0
        %v5197 = vadd.f32 %v5003, %v5196
        %5198 = vmatmul.f32.gmra.mxu0 %v5087
        %v5199 = vpop.f32.mrf.mxu0
        %v5200 = vadd.f32 %v5003, %v5199
        %5201 = vmatmul.f32.gmra.mxu0 %v5090
        %v5202 = vpop.f32.mrf.mxu0
        %v5203 = vadd.f32 %v5003, %v5202
        %5204 = vmatmul.f32.gmra.mxu0 %v5093
        %v5205 = vpop.f32.mrf.mxu0
        %v5206 = vadd.f32 %v5003, %v5205
        %5207 = vmatmul.f32.gmra.mxu0 %v5096
        %v5208 = vpop.f32.mrf.mxu0
        %v5209 = vadd.f32 %v5003, %v5208
        %5210 = vmatmul.f32.gmra.mxu0 %v5099
        %v5211 = vpop.f32.mrf.mxu0
        %v5212 = vadd.f32 %v5003, %v5211
        %5213 = vdwg.mxu0
        %v5214 = vsub.f32 %v3890, %v4903
        %v5215 = vsub.f32 %v3893, %v4906
        %v5216 = vsub.f32 %v3896, %v4909
        %v5217 = vsub.f32 %v3899, %v4912
        %v5218 = vsub.f32 %v3902, %v4915
        %v5219 = vsub.f32 %v3905, %v4918
        %v5220 = vsub.f32 %v3908, %v4921
        %v5221 = vsub.f32 %v3911, %v4924
        %v5222 = vsub.f32 %v3914, %v4927
        %v5223 = vsub.f32 %v3917, %v4930
        %v5224 = vsub.f32 %v3920, %v4933
        %v5225 = vsub.f32 %v3923, %v4936
        %v5226 = vsub.f32 %v3926, %v4939
        %v5227 = vsub.f32 %v3929, %v4942
        %v5228 = vsub.f32 %v3932, %v4945
        %v5229 = vsub.f32 %v3935, %v4948
        %v5230 = vsub.f32 %v3938, %v4951
        %v5231 = vsub.f32 %v3941, %v4954
        %v5232 = vsub.f32 %v3944, %v4957
        %v5233 = vsub.f32 %v3947, %v4960
        %v5234 = vsub.f32 %v3950, %v4963
        %v5235 = vsub.f32 %v3953, %v4966
        %v5236 = vsub.f32 %v3956, %v4969
        %v5237 = vsub.f32 %v3959, %v4972
        %v5238 = vsub.f32 %v3962, %v4975
        %v5239 = vsub.f32 %v3965, %v4978
        %v5240 = vsub.f32 %v3968, %v4981
        %v5241 = vsub.f32 %v3971, %v4984
        %v5242 = vsub.f32 %v3974, %v4987
        %v5243 = vsub.f32 %v3977, %v4990
        %v5244 = vsub.f32 %v3980, %v4993
        %v5245 = vsub.f32 %v3983, %v4996
        %v5246 = vmul.f32 %v5214, %v5214
        %v5247 = vmul.f32 %v5215, %v5215
        %v5248 = vmul.f32 %v5216, %v5216
        %v5249 = vmul.f32 %v5217, %v5217
        %v5250 = vmul.f32 %v5218, %v5218
        %v5251 = vmul.f32 %v5219, %v5219
        %v5252 = vmul.f32 %v5220, %v5220
        %v5253 = vmul.f32 %v5221, %v5221
        %v5254 = vmul.f32 %v5222, %v5222
        %v5255 = vmul.f32 %v5223, %v5223
        %v5256 = vmul.f32 %v5224, %v5224
        %v5257 = vmul.f32 %v5225, %v5225
        %v5258 = vmul.f32 %v5226, %v5226
        %v5259 = vmul.f32 %v5227, %v5227
        %v5260 = vmul.f32 %v5228, %v5228
        %v5261 = vmul.f32 %v5229, %v5229
        %v5262 = vmul.f32 %v5230, %v5230
        %v5263 = vmul.f32 %v5231, %v5231
        %v5264 = vmul.f32 %v5232, %v5232
        %v5265 = vmul.f32 %v5233, %v5233
        %v5266 = vmul.f32 %v5234, %v5234
        %v5267 = vmul.f32 %v5235, %v5235
        %v5268 = vmul.f32 %v5236, %v5236
        %v5269 = vmul.f32 %v5237, %v5237
        %v5270 = vmul.f32 %v5238, %v5238
        %v5271 = vmul.f32 %v5239, %v5239
        %v5272 = vmul.f32 %v5240, %v5240
        %v5273 = vmul.f32 %v5241, %v5241
        %v5274 = vmul.f32 %v5242, %v5242
        %v5275 = vmul.f32 %v5243, %v5243
        %v5276 = vmul.f32 %v5244, %v5244
        %v5277 = vmul.f32 %v5245, %v5245
        %v5278 = vsel %vm574, %v5246, 0.0
        %5279 = vadd.xlane.f32.xlu0 %v5278
        %v5280 = vpop.xlane.xlu0 %5279
        %v5281 = vsel %vm574, %v5247, 0.0
        %5282 = vadd.xlane.f32.xlu0 %v5281
        %v5283 = vpop.xlane.xlu0 %5282
        %v5284 = vsel %vm574, %v5248, 0.0
        %5285 = vadd.xlane.f32.xlu0 %v5284
        %v5286 = vpop.xlane.xlu0 %5285
        %v5287 = vsel %vm574, %v5249, 0.0
        %5288 = vadd.xlane.f32.xlu0 %v5287
        %v5289 = vpop.xlane.xlu0 %5288
        %v5290 = vsel %vm574, %v5250, 0.0
        %5291 = vadd.xlane.f32.xlu0 %v5290
        %v5292 = vpop.xlane.xlu0 %5291
        %v5293 = vsel %vm574, %v5251, 0.0
        %5294 = vadd.xlane.f32.xlu0 %v5293
        %v5295 = vpop.xlane.xlu0 %5294
        %v5296 = vsel %vm574, %v5252, 0.0
        %5297 = vadd.xlane.f32.xlu0 %v5296
        %v5298 = vpop.xlane.xlu0 %5297
        %v5299 = vsel %vm574, %v5253, 0.0
        %5300 = vadd.xlane.f32.xlu0 %v5299
        %v5301 = vpop.xlane.xlu0 %5300
        %v5302 = vsel %vm574, %v5254, 0.0
        %5303 = vadd.xlane.f32.xlu0 %v5302
        %v5304 = vpop.xlane.xlu0 %5303
        %v5305 = vsel %vm574, %v5255, 0.0
        %5306 = vadd.xlane.f32.xlu0 %v5305
        %v5307 = vpop.xlane.xlu0 %5306
        %v5308 = vsel %vm574, %v5256, 0.0
        %5309 = vadd.xlane.f32.xlu0 %v5308
        %v5310 = vpop.xlane.xlu0 %5309
        %v5311 = vsel %vm574, %v5257, 0.0
        %5312 = vadd.xlane.f32.xlu0 %v5311
        %v5313 = vpop.xlane.xlu0 %5312
        %v5314 = vsel %vm574, %v5258, 0.0
        %5315 = vadd.xlane.f32.xlu0 %v5314
        %v5316 = vpop.xlane.xlu0 %5315
        %v5317 = vsel %vm574, %v5259, 0.0
        %5318 = vadd.xlane.f32.xlu0 %v5317
        %v5319 = vpop.xlane.xlu0 %5318
        %v5320 = vsel %vm574, %v5260, 0.0
        %5321 = vadd.xlane.f32.xlu0 %v5320
        %v5322 = vpop.xlane.xlu0 %5321
        %v5323 = vsel %vm574, %v5261, 0.0
        %5324 = vadd.xlane.f32.xlu0 %v5323
        %v5325 = vpop.xlane.xlu0 %5324
        %v5326 = vsel %vm574, %v5262, 0.0
        %5327 = vadd.xlane.f32.xlu0 %v5326
        %v5328 = vpop.xlane.xlu0 %5327
        %v5329 = vsel %vm574, %v5263, 0.0
        %5330 = vadd.xlane.f32.xlu0 %v5329
        %v5331 = vpop.xlane.xlu0 %5330
        %v5332 = vsel %vm574, %v5264, 0.0
        %5333 = vadd.xlane.f32.xlu0 %v5332
        %v5334 = vpop.xlane.xlu0 %5333
        %v5335 = vsel %vm574, %v5265, 0.0
        %5336 = vadd.xlane.f32.xlu0 %v5335
        %v5337 = vpop.xlane.xlu0 %5336
        %v5338 = vsel %vm574, %v5266, 0.0
        %5339 = vadd.xlane.f32.xlu0 %v5338
        %v5340 = vpop.xlane.xlu0 %5339
        %v5341 = vsel %vm574, %v5267, 0.0
        %5342 = vadd.xlane.f32.xlu0 %v5341
        %v5343 = vpop.xlane.xlu0 %5342
        %v5344 = vsel %vm574, %v5268, 0.0
        %5345 = vadd.xlane.f32.xlu0 %v5344
        %v5346 = vpop.xlane.xlu0 %5345
        %v5347 = vsel %vm574, %v5269, 0.0
        %5348 = vadd.xlane.f32.xlu0 %v5347
        %v5349 = vpop.xlane.xlu0 %5348
        %v5350 = vsel %vm574, %v5270, 0.0
        %5351 = vadd.xlane.f32.xlu0 %v5350
        %v5352 = vpop.xlane.xlu0 %5351
        %v5353 = vsel %vm574, %v5271, 0.0
        %5354 = vadd.xlane.f32.xlu0 %v5353
        %v5355 = vpop.xlane.xlu0 %5354
        %v5356 = vsel %vm574, %v5272, 0.0
        %5357 = vadd.xlane.f32.xlu0 %v5356
        %v5358 = vpop.xlane.xlu0 %5357
        %v5359 = vsel %vm574, %v5273, 0.0
        %5360 = vadd.xlane.f32.xlu0 %v5359
        %v5361 = vpop.xlane.xlu0 %5360
        %v5362 = vsel %vm574, %v5274, 0.0
        %5363 = vadd.xlane.f32.xlu0 %v5362
        %v5364 = vpop.xlane.xlu0 %5363
        %v5365 = vsel %vm574, %v5275, 0.0
        %5366 = vadd.xlane.f32.xlu0 %v5365
        %v5367 = vpop.xlane.xlu0 %5366
        %v5368 = vsel %vm574, %v5276, 0.0
        %5369 = vadd.xlane.f32.xlu0 %v5368
        %v5370 = vpop.xlane.xlu0 %5369
        %v5371 = vsel %vm574, %v5277, 0.0
        %5372 = vadd.xlane.f32.xlu0 %v5371
        %v5373 = vpop.xlane.xlu0 %5372
        %v5374 = vmul.f32 %v5280, %v1965
        %v5375 = vmul.f32 %v5283, %v1965
        %v5376 = vmul.f32 %v5286, %v1965
        %v5377 = vmul.f32 %v5289, %v1965
        %v5378 = vmul.f32 %v5292, %v1965
        %v5379 = vmul.f32 %v5295, %v1965
        %v5380 = vmul.f32 %v5298, %v1965
        %v5381 = vmul.f32 %v5301, %v1965
        %v5382 = vmul.f32 %v5304, %v1965
        %v5383 = vmul.f32 %v5307, %v1965
        %v5384 = vmul.f32 %v5310, %v1965
        %v5385 = vmul.f32 %v5313, %v1965
        %v5386 = vmul.f32 %v5316, %v1965
        %v5387 = vmul.f32 %v5319, %v1965
        %v5388 = vmul.f32 %v5322, %v1965
        %v5389 = vmul.f32 %v5325, %v1965
        %v5390 = vmul.f32 %v5328, %v1965
        %v5391 = vmul.f32 %v5331, %v1965
        %v5392 = vmul.f32 %v5334, %v1965
        %v5393 = vmul.f32 %v5337, %v1965
        %v5394 = vmul.f32 %v5340, %v1965
        %v5395 = vmul.f32 %v5343, %v1965
        %v5396 = vmul.f32 %v5346, %v1965
        %v5397 = vmul.f32 %v5349, %v1965
        %v5398 = vmul.f32 %v5352, %v1965
        %v5399 = vmul.f32 %v5355, %v1965
        %v5400 = vmul.f32 %v5358, %v1965
        %v5401 = vmul.f32 %v5361, %v1965
        %v5402 = vmul.f32 %v5364, %v1965
        %v5403 = vmul.f32 %v5367, %v1965
        %v5404 = vmul.f32 %v5370, %v1965
        %v5405 = vmul.f32 %v5373, %v1965
        %v5406 = vcvt.s32.f32 %v4337
        %v5407 = vcvt.s32.f32 %v4351
        %v5408 = vcvt.s32.f32 %v4365
        %v5409 = vcvt.s32.f32 %v4379
        %v5410 = vcvt.s32.f32 %v4393
        %v5411 = vcvt.s32.f32 %v4407
        %v5412 = vcvt.s32.f32 %v4421
        %v5413 = vcvt.s32.f32 %v4435
        %v5414 = vcvt.s32.f32 %v4449
        %v5415 = vcvt.s32.f32 %v4463
        %v5416 = vcvt.s32.f32 %v4477
        %v5417 = vcvt.s32.f32 %v4491
        %v5418 = vcvt.s32.f32 %v4505
        %v5419 = vcvt.s32.f32 %v4519
        %v5420 = vcvt.s32.f32 %v4533
        %v5421 = vcvt.s32.f32 %v4547
        %v5422 = vcvt.s32.f32 %v4561
        %v5423 = vcvt.s32.f32 %v4575
        %v5424 = vcvt.s32.f32 %v4589
        %v5425 = vcvt.s32.f32 %v4603
        %v5426 = vcvt.s32.f32 %v4617
        %v5427 = vcvt.s32.f32 %v4631
        %v5428 = vcvt.s32.f32 %v4645
        %v5429 = vcvt.s32.f32 %v4659
        %v5430 = vcvt.s32.f32 %v4673
        %v5431 = vcvt.s32.f32 %v4687
        %v5432 = vcvt.s32.f32 %v4701
        %v5433 = vcvt.s32.f32 %v4715
        %v5434 = vcvt.s32.f32 %v4729
        %v5435 = vcvt.s32.f32 %v4743
        %v5436 = vcvt.s32.f32 %v4757
        %v5437 = vcvt.s32.f32 %v4771
        %v5438 = vsub.f32 %v3734, %v5119
        %v5439 = vsub.f32 %v3735, %v5122
        %v5440 = vsub.f32 %v3736, %v5125
        %v5441 = vsub.f32 %v3737, %v5128
        %v5442 = vsub.f32 %v3738, %v5131
        %v5443 = vsub.f32 %v3739, %v5134
        %v5444 = vsub.f32 %v3740, %v5137
        %v5445 = vsub.f32 %v3741, %v5140
        %v5446 = vsub.f32 %v3742, %v5143
        %v5447 = vsub.f32 %v3743, %v5146
        %v5448 = vsub.f32 %v3744, %v5149
        %v5449 = vsub.f32 %v3745, %v5152
        %v5450 = vsub.f32 %v3746, %v5155
        %v5451 = vsub.f32 %v3747, %v5158
        %v5452 = vsub.f32 %v3748, %v5161
        %v5453 = vsub.f32 %v3749, %v5164
        %v5454 = vsub.f32 %v3750, %v5167
        %v5455 = vsub.f32 %v3751, %v5170
        %v5456 = vsub.f32 %v3752, %v5173
        %v5457 = vsub.f32 %v3753, %v5176
        %v5458 = vsub.f32 %v3754, %v5179
        %v5459 = vsub.f32 %v3755, %v5182
        %v5460 = vsub.f32 %v3756, %v5185
        %v5461 = vsub.f32 %v3757, %v5188
        %v5462 = vsub.f32 %v3758, %v5191
        %v5463 = vsub.f32 %v3759, %v5194
        %v5464 = vsub.f32 %v3760, %v5197
        %v5465 = vsub.f32 %v3761, %v5200
        %v5466 = vsub.f32 %v3762, %v5203
        %v5467 = vsub.f32 %v3763, %v5206
        %v5468 = vsub.f32 %v3764, %v5209
        %v5469 = vsub.f32 %v3765, %v5212
        %s5470 = scalar_lea.vmem %s1, 96
        %v5471 = vld [vmem:[%s5470] sm:$0xff]
        %v5472 = vld [vmem:[%s5470 + $0x8] sm:$0xff]
        %v5473 = vld [vmem:[%s5470 + $0x10] sm:$0xff]
        %v5474 = vld [vmem:[%s5470 + $0x18] sm:$0xff]
        %s5475 = scalar_lea.vmem %s2, 3
        %v5476 = vld [vmem:[%s5475] sm:$0x1]
        %v5478 = vperm.slane %v5476, 0
        %v5481 = vsel %vm363, %v5438, 0
        %v5484 = vsel %vm363, %v5439, 0
        %v5487 = vsel %vm363, %v5440, 0
        %v5490 = vsel %vm363, %v5441, 0
        %v5493 = vsel %vm363, %v5442, 0
        %v5496 = vsel %vm363, %v5443, 0
        %v5499 = vsel %vm363, %v5444, 0
        %v5502 = vsel %vm363, %v5445, 0
        %v5505 = vsel %vm363, %v5446, 0
        %v5508 = vsel %vm363, %v5447, 0
        %v5511 = vsel %vm363, %v5448, 0
        %v5514 = vsel %vm363, %v5449, 0
        %v5517 = vsel %vm363, %v5450, 0
        %v5520 = vsel %vm363, %v5451, 0
        %v5523 = vsel %vm363, %v5452, 0
        %v5526 = vsel %vm363, %v5453, 0
        %v5529 = vsel %vm363, %v5454, 0
        %v5532 = vsel %vm363, %v5455, 0
        %v5535 = vsel %vm363, %v5456, 0
        %v5538 = vsel %vm363, %v5457, 0
        %v5541 = vsel %vm363, %v5458, 0
        %v5544 = vsel %vm363, %v5459, 0
        %v5547 = vsel %vm363, %v5460, 0
        %v5550 = vsel %vm363, %v5461, 0
        %v5553 = vsel %vm363, %v5462, 0
        %v5556 = vsel %vm363, %v5463, 0
        %v5559 = vsel %vm363, %v5464, 0
        %v5562 = vsel %vm363, %v5465, 0
        %v5565 = vsel %vm363, %v5466, 0
        %v5568 = vsel %vm363, %v5467, 0
        %v5571 = vsel %vm363, %v5468, 0
        %v5574 = vsel %vm363, %v5469, 0
        %5576 = vmatpush.msra.mxu0 0.0
        %5577 = vmatpush.msra.mxu0 0.0
        %5578 = vmatpush.msra.mxu0 0.0
        %5579 = vmatpush.msra.mxu0 0.0
        %5580 = vmatpush.msra.mxu0 0.0
        %5581 = vmatpush.msra.mxu0 0.0
        %5582 = vmatpush.msra.mxu0 0.0
        %5583 = vmatpush.msra.mxu0 0.0
        %5584 = vmatpush.msra.mxu0 0.0
        %5585 = vmatpush.msra.mxu0 0.0
        %5586 = vmatpush.msra.mxu0 0.0
        %5587 = vmatpush.msra.mxu0 0.0
        %5588 = vmatpush.msra.mxu0 %v5474
        %5589 = vmatpush.msra.mxu0 %v5473
        %5590 = vmatpush.msra.mxu0 %v5472
        %5591 = vmatpush.msra.mxu0 %v5471
        %5592 = vmatmul.f32.gmra.mxu0 %v5481
        %v5593 = vpop.f32.mrf.mxu0
        %v5594 = vadd.f32 %v5478, %v5593
        %5595 = vmatmul.f32.gmra.mxu0 %v5484
        %v5596 = vpop.f32.mrf.mxu0
        %v5597 = vadd.f32 %v5478, %v5596
        %5598 = vmatmul.f32.gmra.mxu0 %v5487
        %v5599 = vpop.f32.mrf.mxu0
        %v5600 = vadd.f32 %v5478, %v5599
        %5601 = vmatmul.f32.gmra.mxu0 %v5490
        %v5602 = vpop.f32.mrf.mxu0
        %v5603 = vadd.f32 %v5478, %v5602
        %5604 = vmatmul.f32.gmra.mxu0 %v5493
        %v5605 = vpop.f32.mrf.mxu0
        %v5606 = vadd.f32 %v5478, %v5605
        %5607 = vmatmul.f32.gmra.mxu0 %v5496
        %v5608 = vpop.f32.mrf.mxu0
        %v5609 = vadd.f32 %v5478, %v5608
        %5610 = vmatmul.f32.gmra.mxu0 %v5499
        %v5611 = vpop.f32.mrf.mxu0
        %v5612 = vadd.f32 %v5478, %v5611
        %5613 = vmatmul.f32.gmra.mxu0 %v5502
        %v5614 = vpop.f32.mrf.mxu0
        %v5615 = vadd.f32 %v5478, %v5614
        %5616 = vmatmul.f32.gmra.mxu0 %v5505
        %v5617 = vpop.f32.mrf.mxu0
        %v5618 = vadd.f32 %v5478, %v5617
        %5619 = vmatmul.f32.gmra.mxu0 %v5508
        %v5620 = vpop.f32.mrf.mxu0
        %v5621 = vadd.f32 %v5478, %v5620
        %5622 = vmatmul.f32.gmra.mxu0 %v5511
        %v5623 = vpop.f32.mrf.mxu0
        %v5624 = vadd.f32 %v5478, %v5623
        %5625 = vmatmul.f32.gmra.mxu0 %v5514
        %v5626 = vpop.f32.mrf.mxu0
        %v5627 = vadd.f32 %v5478, %v5626
        %5628 = vmatmul.f32.gmra.mxu0 %v5517
        %v5629 = vpop.f32.mrf.mxu0
        %v5630 = vadd.f32 %v5478, %v5629
        %5631 = vmatmul.f32.gmra.mxu0 %v5520
        %v5632 = vpop.f32.mrf.mxu0
        %v5633 = vadd.f32 %v5478, %v5632
        %5634 = vmatmul.f32.gmra.mxu0 %v5523
        %v5635 = vpop.f32.mrf.mxu0
        %v5636 = vadd.f32 %v5478, %v5635
        %5637 = vmatmul.f32.gmra.mxu0 %v5526
        %v5638 = vpop.f32.mrf.mxu0
        %v5639 = vadd.f32 %v5478, %v5638
        %5640 = vmatmul.f32.gmra.mxu0 %v5529
        %v5641 = vpop.f32.mrf.mxu0
        %v5642 = vadd.f32 %v5478, %v5641
        %5643 = vmatmul.f32.gmra.mxu0 %v5532
        %v5644 = vpop.f32.mrf.mxu0
        %v5645 = vadd.f32 %v5478, %v5644
        %5646 = vmatmul.f32.gmra.mxu0 %v5535
        %v5647 = vpop.f32.mrf.mxu0
        %v5648 = vadd.f32 %v5478, %v5647
        %5649 = vmatmul.f32.gmra.mxu0 %v5538
        %v5650 = vpop.f32.mrf.mxu0
        %v5651 = vadd.f32 %v5478, %v5650
        %5652 = vmatmul.f32.gmra.mxu0 %v5541
        %v5653 = vpop.f32.mrf.mxu0
        %v5654 = vadd.f32 %v5478, %v5653
        %5655 = vmatmul.f32.gmra.mxu0 %v5544
        %v5656 = vpop.f32.mrf.mxu0
        %v5657 = vadd.f32 %v5478, %v5656
        %5658 = vmatmul.f32.gmra.mxu0 %v5547
        %v5659 = vpop.f32.mrf.mxu0
        %v5660 = vadd.f32 %v5478, %v5659
        %5661 = vmatmul.f32.gmra.mxu0 %v5550
        %v5662 = vpop.f32.mrf.mxu0
        %v5663 = vadd.f32 %v5478, %v5662
        %5664 = vmatmul.f32.gmra.mxu0 %v5553
        %v5665 = vpop.f32.mrf.mxu0
        %v5666 = vadd.f32 %v5478, %v5665
        %5667 = vmatmul.f32.gmra.mxu0 %v5556
        %v5668 = vpop.f32.mrf.mxu0
        %v5669 = vadd.f32 %v5478, %v5668
        %5670 = vmatmul.f32.gmra.mxu0 %v5559
        %v5671 = vpop.f32.mrf.mxu0
        %v5672 = vadd.f32 %v5478, %v5671
        %5673 = vmatmul.f32.gmra.mxu0 %v5562
        %v5674 = vpop.f32.mrf.mxu0
        %v5675 = vadd.f32 %v5478, %v5674
        %5676 = vmatmul.f32.gmra.mxu0 %v5565
        %v5677 = vpop.f32.mrf.mxu0
        %v5678 = vadd.f32 %v5478, %v5677
        %5679 = vmatmul.f32.gmra.mxu0 %v5568
        %v5680 = vpop.f32.mrf.mxu0
        %v5681 = vadd.f32 %v5478, %v5680
        %5682 = vmatmul.f32.gmra.mxu0 %v5571
        %v5683 = vpop.f32.mrf.mxu0
        %v5684 = vadd.f32 %v5478, %v5683
        %5685 = vmatmul.f32.gmra.mxu0 %v5574
        %v5686 = vpop.f32.mrf.mxu0
        %v5687 = vadd.f32 %v5478, %v5686
        %5688 = vdwg.mxu0
        %s5689 = scalar_lea.vmem %s3, 24
        %v5690 = vld [vmem:[%s5689] sm:$0xff]
        %v5692 = vsel %vm574, %v5594, 0
        %v5695 = vsel %vm574, %v5597, 0
        %v5698 = vsel %vm574, %v5600, 0
        %v5701 = vsel %vm574, %v5603, 0
        %v5704 = vsel %vm574, %v5606, 0
        %v5707 = vsel %vm574, %v5609, 0
        %v5710 = vsel %vm574, %v5612, 0
        %v5713 = vsel %vm574, %v5615, 0
        %v5716 = vsel %vm574, %v5618, 0
        %v5719 = vsel %vm574, %v5621, 0
        %v5722 = vsel %vm574, %v5624, 0
        %v5725 = vsel %vm574, %v5627, 0
        %v5728 = vsel %vm574, %v5630, 0
        %v5731 = vsel %vm574, %v5633, 0
        %v5734 = vsel %vm574, %v5636, 0
        %v5737 = vsel %vm574, %v5639, 0
        %v5740 = vsel %vm574, %v5642, 0
        %v5743 = vsel %vm574, %v5645, 0
        %v5746 = vsel %vm574, %v5648, 0
        %v5749 = vsel %vm574, %v5651, 0
        %v5752 = vsel %vm574, %v5654, 0
        %v5755 = vsel %vm574, %v5657, 0
        %v5758 = vsel %vm574, %v5660, 0
        %v5761 = vsel %vm574, %v5663, 0
        %v5764 = vsel %vm574, %v5666, 0
        %v5767 = vsel %vm574, %v5669, 0
        %v5770 = vsel %vm574, %v5672, 0
        %v5773 = vsel %vm574, %v5675, 0
        %v5776 = vsel %vm574, %v5678, 0
        %v5779 = vsel %vm574, %v5681, 0
        %v5782 = vsel %vm574, %v5684, 0
        %v5785 = vsel %vm574, %v5687, 0
        %5787 = vmatpush.msra.mxu0 0.0
        %5788 = vmatpush.msra.mxu0 0.0
        %5789 = vmatpush.msra.mxu0 0.0
        %5790 = vmatpush.msra.mxu0 0.0
        %5791 = vmatpush.msra.mxu0 0.0
        %5792 = vmatpush.msra.mxu0 0.0
        %5793 = vmatpush.msra.mxu0 0.0
        %5794 = vmatpush.msra.mxu0 0.0
        %5795 = vmatpush.msra.mxu0 0.0
        %5796 = vmatpush.msra.mxu0 0.0
        %5797 = vmatpush.msra.mxu0 0.0
        %5798 = vmatpush.msra.mxu0 0.0
        %5799 = vmatpush.msra.mxu0 0.0
        %5800 = vmatpush.msra.mxu0 0.0
        %5801 = vmatpush.msra.mxu0 0.0
        %5802 = vmatpush.msra.mxu0 %v5690
        %5803 = vmatmul.f32.gmra.mxu0 %v5692
        %v5804 = vpop.f32.mrf.mxu0
        %v5805 = vadd.f32 0.0, %v5804
        %5806 = vmatmul.f32.gmra.mxu0 %v5695
        %v5807 = vpop.f32.mrf.mxu0
        %v5808 = vadd.f32 0.0, %v5807
        %5809 = vmatmul.f32.gmra.mxu0 %v5698
        %v5810 = vpop.f32.mrf.mxu0
        %v5811 = vadd.f32 0.0, %v5810
        %5812 = vmatmul.f32.gmra.mxu0 %v5701
        %v5813 = vpop.f32.mrf.mxu0
        %v5814 = vadd.f32 0.0, %v5813
        %5815 = vmatmul.f32.gmra.mxu0 %v5704
        %v5816 = vpop.f32.mrf.mxu0
        %v5817 = vadd.f32 0.0, %v5816
        %5818 = vmatmul.f32.gmra.mxu0 %v5707
        %v5819 = vpop.f32.mrf.mxu0
        %v5820 = vadd.f32 0.0, %v5819
        %5821 = vmatmul.f32.gmra.mxu0 %v5710
        %v5822 = vpop.f32.mrf.mxu0
        %v5823 = vadd.f32 0.0, %v5822
        %5824 = vmatmul.f32.gmra.mxu0 %v5713
        %v5825 = vpop.f32.mrf.mxu0
        %v5826 = vadd.f32 0.0, %v5825
        %5827 = vmatmul.f32.gmra.mxu0 %v5716
        %v5828 = vpop.f32.mrf.mxu0
        %v5829 = vadd.f32 0.0, %v5828
        %5830 = vmatmul.f32.gmra.mxu0 %v5719
        %v5831 = vpop.f32.mrf.mxu0
        %v5832 = vadd.f32 0.0, %v5831
        %5833 = vmatmul.f32.gmra.mxu0 %v5722
        %v5834 = vpop.f32.mrf.mxu0
        %v5835 = vadd.f32 0.0, %v5834
        %5836 = vmatmul.f32.gmra.mxu0 %v5725
        %v5837 = vpop.f32.mrf.mxu0
        %v5838 = vadd.f32 0.0, %v5837
        %5839 = vmatmul.f32.gmra.mxu0 %v5728
        %v5840 = vpop.f32.mrf.mxu0
        %v5841 = vadd.f32 0.0, %v5840
        %5842 = vmatmul.f32.gmra.mxu0 %v5731
        %v5843 = vpop.f32.mrf.mxu0
        %v5844 = vadd.f32 0.0, %v5843
        %5845 = vmatmul.f32.gmra.mxu0 %v5734
        %v5846 = vpop.f32.mrf.mxu0
        %v5847 = vadd.f32 0.0, %v5846
        %5848 = vmatmul.f32.gmra.mxu0 %v5737
        %v5849 = vpop.f32.mrf.mxu0
        %v5850 = vadd.f32 0.0, %v5849
        %5851 = vmatmul.f32.gmra.mxu0 %v5740
        %v5852 = vpop.f32.mrf.mxu0
        %v5853 = vadd.f32 0.0, %v5852
        %5854 = vmatmul.f32.gmra.mxu0 %v5743
        %v5855 = vpop.f32.mrf.mxu0
        %v5856 = vadd.f32 0.0, %v5855
        %5857 = vmatmul.f32.gmra.mxu0 %v5746
        %v5858 = vpop.f32.mrf.mxu0
        %v5859 = vadd.f32 0.0, %v5858
        %5860 = vmatmul.f32.gmra.mxu0 %v5749
        %v5861 = vpop.f32.mrf.mxu0
        %v5862 = vadd.f32 0.0, %v5861
        %5863 = vmatmul.f32.gmra.mxu0 %v5752
        %v5864 = vpop.f32.mrf.mxu0
        %v5865 = vadd.f32 0.0, %v5864
        %5866 = vmatmul.f32.gmra.mxu0 %v5755
        %v5867 = vpop.f32.mrf.mxu0
        %v5868 = vadd.f32 0.0, %v5867
        %5869 = vmatmul.f32.gmra.mxu0 %v5758
        %v5870 = vpop.f32.mrf.mxu0
        %v5871 = vadd.f32 0.0, %v5870
        %5872 = vmatmul.f32.gmra.mxu0 %v5761
        %v5873 = vpop.f32.mrf.mxu0
        %v5874 = vadd.f32 0.0, %v5873
        %5875 = vmatmul.f32.gmra.mxu0 %v5764
        %v5876 = vpop.f32.mrf.mxu0
        %v5877 = vadd.f32 0.0, %v5876
        %5878 = vmatmul.f32.gmra.mxu0 %v5767
        %v5879 = vpop.f32.mrf.mxu0
        %v5880 = vadd.f32 0.0, %v5879
        %5881 = vmatmul.f32.gmra.mxu0 %v5770
        %v5882 = vpop.f32.mrf.mxu0
        %v5883 = vadd.f32 0.0, %v5882
        %5884 = vmatmul.f32.gmra.mxu0 %v5773
        %v5885 = vpop.f32.mrf.mxu0
        %v5886 = vadd.f32 0.0, %v5885
        %5887 = vmatmul.f32.gmra.mxu0 %v5776
        %v5888 = vpop.f32.mrf.mxu0
        %v5889 = vadd.f32 0.0, %v5888
        %5890 = vmatmul.f32.gmra.mxu0 %v5779
        %v5891 = vpop.f32.mrf.mxu0
        %v5892 = vadd.f32 0.0, %v5891
        %5893 = vmatmul.f32.gmra.mxu0 %v5782
        %v5894 = vpop.f32.mrf.mxu0
        %v5895 = vadd.f32 0.0, %v5894
        %5896 = vmatmul.f32.gmra.mxu0 %v5785
        %v5897 = vpop.f32.mrf.mxu0
        %v5898 = vadd.f32 0.0, %v5897
        %5899 = vdwg.mxu0
        %5900 = vmax.xlane.f32.xlu0 %v5805
        %v5901 = vpop.xlane.xlu0 %5900
        %5902 = vmax.xlane.f32.xlu0 %v5808
        %v5903 = vpop.xlane.xlu0 %5902
        %5904 = vmax.xlane.f32.xlu0 %v5811
        %v5905 = vpop.xlane.xlu0 %5904
        %5906 = vmax.xlane.f32.xlu0 %v5814
        %v5907 = vpop.xlane.xlu0 %5906
        %5908 = vmax.xlane.f32.xlu0 %v5817
        %v5909 = vpop.xlane.xlu0 %5908
        %5910 = vmax.xlane.f32.xlu0 %v5820
        %v5911 = vpop.xlane.xlu0 %5910
        %5912 = vmax.xlane.f32.xlu0 %v5823
        %v5913 = vpop.xlane.xlu0 %5912
        %5914 = vmax.xlane.f32.xlu0 %v5826
        %v5915 = vpop.xlane.xlu0 %5914
        %5916 = vmax.xlane.f32.xlu0 %v5829
        %v5917 = vpop.xlane.xlu0 %5916
        %5918 = vmax.xlane.f32.xlu0 %v5832
        %v5919 = vpop.xlane.xlu0 %5918
        %5920 = vmax.xlane.f32.xlu0 %v5835
        %v5921 = vpop.xlane.xlu0 %5920
        %5922 = vmax.xlane.f32.xlu0 %v5838
        %v5923 = vpop.xlane.xlu0 %5922
        %5924 = vmax.xlane.f32.xlu0 %v5841
        %v5925 = vpop.xlane.xlu0 %5924
        %5926 = vmax.xlane.f32.xlu0 %v5844
        %v5927 = vpop.xlane.xlu0 %5926
        %5928 = vmax.xlane.f32.xlu0 %v5847
        %v5929 = vpop.xlane.xlu0 %5928
        %5930 = vmax.xlane.f32.xlu0 %v5850
        %v5931 = vpop.xlane.xlu0 %5930
        %5932 = vmax.xlane.f32.xlu0 %v5853
        %v5933 = vpop.xlane.xlu0 %5932
        %5934 = vmax.xlane.f32.xlu0 %v5856
        %v5935 = vpop.xlane.xlu0 %5934
        %5936 = vmax.xlane.f32.xlu0 %v5859
        %v5937 = vpop.xlane.xlu0 %5936
        %5938 = vmax.xlane.f32.xlu0 %v5862
        %v5939 = vpop.xlane.xlu0 %5938
        %5940 = vmax.xlane.f32.xlu0 %v5865
        %v5941 = vpop.xlane.xlu0 %5940
        %5942 = vmax.xlane.f32.xlu0 %v5868
        %v5943 = vpop.xlane.xlu0 %5942
        %5944 = vmax.xlane.f32.xlu0 %v5871
        %v5945 = vpop.xlane.xlu0 %5944
        %5946 = vmax.xlane.f32.xlu0 %v5874
        %v5947 = vpop.xlane.xlu0 %5946
        %5948 = vmax.xlane.f32.xlu0 %v5877
        %v5949 = vpop.xlane.xlu0 %5948
        %5950 = vmax.xlane.f32.xlu0 %v5880
        %v5951 = vpop.xlane.xlu0 %5950
        %5952 = vmax.xlane.f32.xlu0 %v5883
        %v5953 = vpop.xlane.xlu0 %5952
        %5954 = vmax.xlane.f32.xlu0 %v5886
        %v5955 = vpop.xlane.xlu0 %5954
        %5956 = vmax.xlane.f32.xlu0 %v5889
        %v5957 = vpop.xlane.xlu0 %5956
        %5958 = vmax.xlane.f32.xlu0 %v5892
        %v5959 = vpop.xlane.xlu0 %5958
        %5960 = vmax.xlane.f32.xlu0 %v5895
        %v5961 = vpop.xlane.xlu0 %5960
        %5962 = vmax.xlane.f32.xlu0 %v5898
        %v5963 = vpop.xlane.xlu0 %5962
        %vm5964 = vcmp.eq.f32.partialorder %v5805, %v5901
        %vm5965 = vcmp.eq.f32.partialorder %v5808, %v5903
        %vm5966 = vcmp.eq.f32.partialorder %v5811, %v5905
        %vm5967 = vcmp.eq.f32.partialorder %v5814, %v5907
        %vm5968 = vcmp.eq.f32.partialorder %v5817, %v5909
        %vm5969 = vcmp.eq.f32.partialorder %v5820, %v5911
        %vm5970 = vcmp.eq.f32.partialorder %v5823, %v5913
        %vm5971 = vcmp.eq.f32.partialorder %v5826, %v5915
        %vm5972 = vcmp.eq.f32.partialorder %v5829, %v5917
        %vm5973 = vcmp.eq.f32.partialorder %v5832, %v5919
        %vm5974 = vcmp.eq.f32.partialorder %v5835, %v5921
        %vm5975 = vcmp.eq.f32.partialorder %v5838, %v5923
        %vm5976 = vcmp.eq.f32.partialorder %v5841, %v5925
        %vm5977 = vcmp.eq.f32.partialorder %v5844, %v5927
        %vm5978 = vcmp.eq.f32.partialorder %v5847, %v5929
        %vm5979 = vcmp.eq.f32.partialorder %v5850, %v5931
        %vm5980 = vcmp.eq.f32.partialorder %v5853, %v5933
        %vm5981 = vcmp.eq.f32.partialorder %v5856, %v5935
        %vm5982 = vcmp.eq.f32.partialorder %v5859, %v5937
        %vm5983 = vcmp.eq.f32.partialorder %v5862, %v5939
        %vm5984 = vcmp.eq.f32.partialorder %v5865, %v5941
        %vm5985 = vcmp.eq.f32.partialorder %v5868, %v5943
        %vm5986 = vcmp.eq.f32.partialorder %v5871, %v5945
        %vm5987 = vcmp.eq.f32.partialorder %v5874, %v5947
        %vm5988 = vcmp.eq.f32.partialorder %v5877, %v5949
        %vm5989 = vcmp.eq.f32.partialorder %v5880, %v5951
        %vm5990 = vcmp.eq.f32.partialorder %v5883, %v5953
        %vm5991 = vcmp.eq.f32.partialorder %v5886, %v5955
        %vm5992 = vcmp.eq.f32.partialorder %v5889, %v5957
        %vm5993 = vcmp.eq.f32.partialorder %v5892, %v5959
        %vm5994 = vcmp.eq.f32.partialorder %v5895, %v5961
        %vm5995 = vcmp.eq.f32.partialorder %v5898, %v5963
        %v5996 = vsel %vm5964, %v354, 128
        %v5997 = vsel %vm5965, %v354, 128
        %v5998 = vsel %vm5966, %v354, 128
        %v5999 = vsel %vm5967, %v354, 128
        %v6000 = vsel %vm5968, %v354, 128
        %v6001 = vsel %vm5969, %v354, 128
        %v6002 = vsel %vm5970, %v354, 128
        %v6003 = vsel %vm5971, %v354, 128
        %v6004 = vsel %vm5972, %v354, 128
        %v6005 = vsel %vm5973, %v354, 128
        %v6006 = vsel %vm5974, %v354, 128
        %v6007 = vsel %vm5975, %v354, 128
        %v6008 = vsel %vm5976, %v354, 128
        %v6009 = vsel %vm5977, %v354, 128
        %v6010 = vsel %vm5978, %v354, 128
        %v6011 = vsel %vm5979, %v354, 128
        %v6012 = vsel %vm5980, %v354, 128
        %v6013 = vsel %vm5981, %v354, 128
        %v6014 = vsel %vm5982, %v354, 128
        %v6015 = vsel %vm5983, %v354, 128
        %v6016 = vsel %vm5984, %v354, 128
        %v6017 = vsel %vm5985, %v354, 128
        %v6018 = vsel %vm5986, %v354, 128
        %v6019 = vsel %vm5987, %v354, 128
        %v6020 = vsel %vm5988, %v354, 128
        %v6021 = vsel %vm5989, %v354, 128
        %v6022 = vsel %vm5990, %v354, 128
        %v6023 = vsel %vm5991, %v354, 128
        %v6024 = vsel %vm5992, %v354, 128
        %v6025 = vsel %vm5993, %v354, 128
        %v6026 = vsel %vm5994, %v354, 128
        %v6027 = vsel %vm5995, %v354, 128
        %v6028 = vand.u32 %v5996, 65535
        %v6029 = vshra.s32 %v5996, 16
        %v6030 = vcvt.s32.f32 %v6028
        %v6031 = vcvt.s32.f32 %v6029
        %6032 = vmin.xlane.f32.xlu0 %v6031
        %v6033 = vpop.xlane.xlu0 %6032
        %vm6034 = vcmp.eq.f32.partialorder %v6031, %v6033
        %v6035 = vsel %vm6034, %v6030, inf
        %6036 = vmin.xlane.f32.xlu0 %v6035
        %v6037 = vpop.xlane.xlu0 %6036
        %v6038 = vcvt.f32.s32 %v6037
        %v6039 = vcvt.f32.s32 %v6033
        %v6040 = vshll.u32 %v6039, 16
        %v6041 = vadd.s32 %v6040, %v6038
        %v6042 = vand.u32 %v5997, 65535
        %v6043 = vshra.s32 %v5997, 16
        %v6044 = vcvt.s32.f32 %v6042
        %v6045 = vcvt.s32.f32 %v6043
        %6046 = vmin.xlane.f32.xlu0 %v6045
        %v6047 = vpop.xlane.xlu0 %6046
        %vm6048 = vcmp.eq.f32.partialorder %v6045, %v6047
        %v6049 = vsel %vm6048, %v6044, inf
        %6050 = vmin.xlane.f32.xlu0 %v6049
        %v6051 = vpop.xlane.xlu0 %6050
        %v6052 = vcvt.f32.s32 %v6051
        %v6053 = vcvt.f32.s32 %v6047
        %v6054 = vshll.u32 %v6053, 16
        %v6055 = vadd.s32 %v6054, %v6052
        %v6056 = vand.u32 %v5998, 65535
        %v6057 = vshra.s32 %v5998, 16
        %v6058 = vcvt.s32.f32 %v6056
        %v6059 = vcvt.s32.f32 %v6057
        %6060 = vmin.xlane.f32.xlu0 %v6059
        %v6061 = vpop.xlane.xlu0 %6060
        %vm6062 = vcmp.eq.f32.partialorder %v6059, %v6061
        %v6063 = vsel %vm6062, %v6058, inf
        %6064 = vmin.xlane.f32.xlu0 %v6063
        %v6065 = vpop.xlane.xlu0 %6064
        %v6066 = vcvt.f32.s32 %v6065
        %v6067 = vcvt.f32.s32 %v6061
        %v6068 = vshll.u32 %v6067, 16
        %v6069 = vadd.s32 %v6068, %v6066
        %v6070 = vand.u32 %v5999, 65535
        %v6071 = vshra.s32 %v5999, 16
        %v6072 = vcvt.s32.f32 %v6070
        %v6073 = vcvt.s32.f32 %v6071
        %6074 = vmin.xlane.f32.xlu0 %v6073
        %v6075 = vpop.xlane.xlu0 %6074
        %vm6076 = vcmp.eq.f32.partialorder %v6073, %v6075
        %v6077 = vsel %vm6076, %v6072, inf
        %6078 = vmin.xlane.f32.xlu0 %v6077
        %v6079 = vpop.xlane.xlu0 %6078
        %v6080 = vcvt.f32.s32 %v6079
        %v6081 = vcvt.f32.s32 %v6075
        %v6082 = vshll.u32 %v6081, 16
        %v6083 = vadd.s32 %v6082, %v6080
        %v6084 = vand.u32 %v6000, 65535
        %v6085 = vshra.s32 %v6000, 16
        %v6086 = vcvt.s32.f32 %v6084
        %v6087 = vcvt.s32.f32 %v6085
        %6088 = vmin.xlane.f32.xlu0 %v6087
        %v6089 = vpop.xlane.xlu0 %6088
        %vm6090 = vcmp.eq.f32.partialorder %v6087, %v6089
        %v6091 = vsel %vm6090, %v6086, inf
        %6092 = vmin.xlane.f32.xlu0 %v6091
        %v6093 = vpop.xlane.xlu0 %6092
        %v6094 = vcvt.f32.s32 %v6093
        %v6095 = vcvt.f32.s32 %v6089
        %v6096 = vshll.u32 %v6095, 16
        %v6097 = vadd.s32 %v6096, %v6094
        %v6098 = vand.u32 %v6001, 65535
        %v6099 = vshra.s32 %v6001, 16
        %v6100 = vcvt.s32.f32 %v6098
        %v6101 = vcvt.s32.f32 %v6099
        %6102 = vmin.xlane.f32.xlu0 %v6101
        %v6103 = vpop.xlane.xlu0 %6102
        %vm6104 = vcmp.eq.f32.partialorder %v6101, %v6103
        %v6105 = vsel %vm6104, %v6100, inf
        %6106 = vmin.xlane.f32.xlu0 %v6105
        %v6107 = vpop.xlane.xlu0 %6106
        %v6108 = vcvt.f32.s32 %v6107
        %v6109 = vcvt.f32.s32 %v6103
        %v6110 = vshll.u32 %v6109, 16
        %v6111 = vadd.s32 %v6110, %v6108
        %v6112 = vand.u32 %v6002, 65535
        %v6113 = vshra.s32 %v6002, 16
        %v6114 = vcvt.s32.f32 %v6112
        %v6115 = vcvt.s32.f32 %v6113
        %6116 = vmin.xlane.f32.xlu0 %v6115
        %v6117 = vpop.xlane.xlu0 %6116
        %vm6118 = vcmp.eq.f32.partialorder %v6115, %v6117
        %v6119 = vsel %vm6118, %v6114, inf
        %6120 = vmin.xlane.f32.xlu0 %v6119
        %v6121 = vpop.xlane.xlu0 %6120
        %v6122 = vcvt.f32.s32 %v6121
        %v6123 = vcvt.f32.s32 %v6117
        %v6124 = vshll.u32 %v6123, 16
        %v6125 = vadd.s32 %v6124, %v6122
        %v6126 = vand.u32 %v6003, 65535
        %v6127 = vshra.s32 %v6003, 16
        %v6128 = vcvt.s32.f32 %v6126
        %v6129 = vcvt.s32.f32 %v6127
        %6130 = vmin.xlane.f32.xlu0 %v6129
        %v6131 = vpop.xlane.xlu0 %6130
        %vm6132 = vcmp.eq.f32.partialorder %v6129, %v6131
        %v6133 = vsel %vm6132, %v6128, inf
        %6134 = vmin.xlane.f32.xlu0 %v6133
        %v6135 = vpop.xlane.xlu0 %6134
        %v6136 = vcvt.f32.s32 %v6135
        %v6137 = vcvt.f32.s32 %v6131
        %v6138 = vshll.u32 %v6137, 16
        %v6139 = vadd.s32 %v6138, %v6136
        %v6140 = vand.u32 %v6004, 65535
        %v6141 = vshra.s32 %v6004, 16
        %v6142 = vcvt.s32.f32 %v6140
        %v6143 = vcvt.s32.f32 %v6141
        %6144 = vmin.xlane.f32.xlu0 %v6143
        %v6145 = vpop.xlane.xlu0 %6144
        %vm6146 = vcmp.eq.f32.partialorder %v6143, %v6145
        %v6147 = vsel %vm6146, %v6142, inf
        %6148 = vmin.xlane.f32.xlu0 %v6147
        %v6149 = vpop.xlane.xlu0 %6148
        %v6150 = vcvt.f32.s32 %v6149
        %v6151 = vcvt.f32.s32 %v6145
        %v6152 = vshll.u32 %v6151, 16
        %v6153 = vadd.s32 %v6152, %v6150
        %v6154 = vand.u32 %v6005, 65535
        %v6155 = vshra.s32 %v6005, 16
        %v6156 = vcvt.s32.f32 %v6154
        %v6157 = vcvt.s32.f32 %v6155
        %6158 = vmin.xlane.f32.xlu0 %v6157
        %v6159 = vpop.xlane.xlu0 %6158
        %vm6160 = vcmp.eq.f32.partialorder %v6157, %v6159
        %v6161 = vsel %vm6160, %v6156, inf
        %6162 = vmin.xlane.f32.xlu0 %v6161
        %v6163 = vpop.xlane.xlu0 %6162
        %v6164 = vcvt.f32.s32 %v6163
        %v6165 = vcvt.f32.s32 %v6159
        %v6166 = vshll.u32 %v6165, 16
        %v6167 = vadd.s32 %v6166, %v6164
        %v6168 = vand.u32 %v6006, 65535
        %v6169 = vshra.s32 %v6006, 16
        %v6170 = vcvt.s32.f32 %v6168
        %v6171 = vcvt.s32.f32 %v6169
        %6172 = vmin.xlane.f32.xlu0 %v6171
        %v6173 = vpop.xlane.xlu0 %6172
        %vm6174 = vcmp.eq.f32.partialorder %v6171, %v6173
        %v6175 = vsel %vm6174, %v6170, inf
        %6176 = vmin.xlane.f32.xlu0 %v6175
        %v6177 = vpop.xlane.xlu0 %6176
        %v6178 = vcvt.f32.s32 %v6177
        %v6179 = vcvt.f32.s32 %v6173
        %v6180 = vshll.u32 %v6179, 16
        %v6181 = vadd.s32 %v6180, %v6178
        %v6182 = vand.u32 %v6007, 65535
        %v6183 = vshra.s32 %v6007, 16
        %v6184 = vcvt.s32.f32 %v6182
        %v6185 = vcvt.s32.f32 %v6183
        %6186 = vmin.xlane.f32.xlu0 %v6185
        %v6187 = vpop.xlane.xlu0 %6186
        %vm6188 = vcmp.eq.f32.partialorder %v6185, %v6187
        %v6189 = vsel %vm6188, %v6184, inf
        %6190 = vmin.xlane.f32.xlu0 %v6189
        %v6191 = vpop.xlane.xlu0 %6190
        %v6192 = vcvt.f32.s32 %v6191
        %v6193 = vcvt.f32.s32 %v6187
        %v6194 = vshll.u32 %v6193, 16
        %v6195 = vadd.s32 %v6194, %v6192
        %v6196 = vand.u32 %v6008, 65535
        %v6197 = vshra.s32 %v6008, 16
        %v6198 = vcvt.s32.f32 %v6196
        %v6199 = vcvt.s32.f32 %v6197
        %6200 = vmin.xlane.f32.xlu0 %v6199
        %v6201 = vpop.xlane.xlu0 %6200
        %vm6202 = vcmp.eq.f32.partialorder %v6199, %v6201
        %v6203 = vsel %vm6202, %v6198, inf
        %6204 = vmin.xlane.f32.xlu0 %v6203
        %v6205 = vpop.xlane.xlu0 %6204
        %v6206 = vcvt.f32.s32 %v6205
        %v6207 = vcvt.f32.s32 %v6201
        %v6208 = vshll.u32 %v6207, 16
        %v6209 = vadd.s32 %v6208, %v6206
        %v6210 = vand.u32 %v6009, 65535
        %v6211 = vshra.s32 %v6009, 16
        %v6212 = vcvt.s32.f32 %v6210
        %v6213 = vcvt.s32.f32 %v6211
        %6214 = vmin.xlane.f32.xlu0 %v6213
        %v6215 = vpop.xlane.xlu0 %6214
        %vm6216 = vcmp.eq.f32.partialorder %v6213, %v6215
        %v6217 = vsel %vm6216, %v6212, inf
        %6218 = vmin.xlane.f32.xlu0 %v6217
        %v6219 = vpop.xlane.xlu0 %6218
        %v6220 = vcvt.f32.s32 %v6219
        %v6221 = vcvt.f32.s32 %v6215
        %v6222 = vshll.u32 %v6221, 16
        %v6223 = vadd.s32 %v6222, %v6220
        %v6224 = vand.u32 %v6010, 65535
        %v6225 = vshra.s32 %v6010, 16
        %v6226 = vcvt.s32.f32 %v6224
        %v6227 = vcvt.s32.f32 %v6225
        %6228 = vmin.xlane.f32.xlu0 %v6227
        %v6229 = vpop.xlane.xlu0 %6228
        %vm6230 = vcmp.eq.f32.partialorder %v6227, %v6229
        %v6231 = vsel %vm6230, %v6226, inf
        %6232 = vmin.xlane.f32.xlu0 %v6231
        %v6233 = vpop.xlane.xlu0 %6232
        %v6234 = vcvt.f32.s32 %v6233
        %v6235 = vcvt.f32.s32 %v6229
        %v6236 = vshll.u32 %v6235, 16
        %v6237 = vadd.s32 %v6236, %v6234
        %v6238 = vand.u32 %v6011, 65535
        %v6239 = vshra.s32 %v6011, 16
        %v6240 = vcvt.s32.f32 %v6238
        %v6241 = vcvt.s32.f32 %v6239
        %6242 = vmin.xlane.f32.xlu0 %v6241
        %v6243 = vpop.xlane.xlu0 %6242
        %vm6244 = vcmp.eq.f32.partialorder %v6241, %v6243
        %v6245 = vsel %vm6244, %v6240, inf
        %6246 = vmin.xlane.f32.xlu0 %v6245
        %v6247 = vpop.xlane.xlu0 %6246
        %v6248 = vcvt.f32.s32 %v6247
        %v6249 = vcvt.f32.s32 %v6243
        %v6250 = vshll.u32 %v6249, 16
        %v6251 = vadd.s32 %v6250, %v6248
        %v6252 = vand.u32 %v6012, 65535
        %v6253 = vshra.s32 %v6012, 16
        %v6254 = vcvt.s32.f32 %v6252
        %v6255 = vcvt.s32.f32 %v6253
        %6256 = vmin.xlane.f32.xlu0 %v6255
        %v6257 = vpop.xlane.xlu0 %6256
        %vm6258 = vcmp.eq.f32.partialorder %v6255, %v6257
        %v6259 = vsel %vm6258, %v6254, inf
        %6260 = vmin.xlane.f32.xlu0 %v6259
        %v6261 = vpop.xlane.xlu0 %6260
        %v6262 = vcvt.f32.s32 %v6261
        %v6263 = vcvt.f32.s32 %v6257
        %v6264 = vshll.u32 %v6263, 16
        %v6265 = vadd.s32 %v6264, %v6262
        %v6266 = vand.u32 %v6013, 65535
        %v6267 = vshra.s32 %v6013, 16
        %v6268 = vcvt.s32.f32 %v6266
        %v6269 = vcvt.s32.f32 %v6267
        %6270 = vmin.xlane.f32.xlu0 %v6269
        %v6271 = vpop.xlane.xlu0 %6270
        %vm6272 = vcmp.eq.f32.partialorder %v6269, %v6271
        %v6273 = vsel %vm6272, %v6268, inf
        %6274 = vmin.xlane.f32.xlu0 %v6273
        %v6275 = vpop.xlane.xlu0 %6274
        %v6276 = vcvt.f32.s32 %v6275
        %v6277 = vcvt.f32.s32 %v6271
        %v6278 = vshll.u32 %v6277, 16
        %v6279 = vadd.s32 %v6278, %v6276
        %v6280 = vand.u32 %v6014, 65535
        %v6281 = vshra.s32 %v6014, 16
        %v6282 = vcvt.s32.f32 %v6280
        %v6283 = vcvt.s32.f32 %v6281
        %6284 = vmin.xlane.f32.xlu0 %v6283
        %v6285 = vpop.xlane.xlu0 %6284
        %vm6286 = vcmp.eq.f32.partialorder %v6283, %v6285
        %v6287 = vsel %vm6286, %v6282, inf
        %6288 = vmin.xlane.f32.xlu0 %v6287
        %v6289 = vpop.xlane.xlu0 %6288
        %v6290 = vcvt.f32.s32 %v6289
        %v6291 = vcvt.f32.s32 %v6285
        %v6292 = vshll.u32 %v6291, 16
        %v6293 = vadd.s32 %v6292, %v6290
        %v6294 = vand.u32 %v6015, 65535
        %v6295 = vshra.s32 %v6015, 16
        %v6296 = vcvt.s32.f32 %v6294
        %v6297 = vcvt.s32.f32 %v6295
        %6298 = vmin.xlane.f32.xlu0 %v6297
        %v6299 = vpop.xlane.xlu0 %6298
        %vm6300 = vcmp.eq.f32.partialorder %v6297, %v6299
        %v6301 = vsel %vm6300, %v6296, inf
        %6302 = vmin.xlane.f32.xlu0 %v6301
        %v6303 = vpop.xlane.xlu0 %6302
        %v6304 = vcvt.f32.s32 %v6303
        %v6305 = vcvt.f32.s32 %v6299
        %v6306 = vshll.u32 %v6305, 16
        %v6307 = vadd.s32 %v6306, %v6304
        %v6308 = vand.u32 %v6016, 65535
        %v6309 = vshra.s32 %v6016, 16
        %v6310 = vcvt.s32.f32 %v6308
        %v6311 = vcvt.s32.f32 %v6309
        %6312 = vmin.xlane.f32.xlu0 %v6311
        %v6313 = vpop.xlane.xlu0 %6312
        %vm6314 = vcmp.eq.f32.partialorder %v6311, %v6313
        %v6315 = vsel %vm6314, %v6310, inf
        %6316 = vmin.xlane.f32.xlu0 %v6315
        %v6317 = vpop.xlane.xlu0 %6316
        %v6318 = vcvt.f32.s32 %v6317
        %v6319 = vcvt.f32.s32 %v6313
        %v6320 = vshll.u32 %v6319, 16
        %v6321 = vadd.s32 %v6320, %v6318
        %v6322 = vand.u32 %v6017, 65535
        %v6323 = vshra.s32 %v6017, 16
        %v6324 = vcvt.s32.f32 %v6322
        %v6325 = vcvt.s32.f32 %v6323
        %6326 = vmin.xlane.f32.xlu0 %v6325
        %v6327 = vpop.xlane.xlu0 %6326
        %vm6328 = vcmp.eq.f32.partialorder %v6325, %v6327
        %v6329 = vsel %vm6328, %v6324, inf
        %6330 = vmin.xlane.f32.xlu0 %v6329
        %v6331 = vpop.xlane.xlu0 %6330
        %v6332 = vcvt.f32.s32 %v6331
        %v6333 = vcvt.f32.s32 %v6327
        %v6334 = vshll.u32 %v6333, 16
        %v6335 = vadd.s32 %v6334, %v6332
        %v6336 = vand.u32 %v6018, 65535
        %v6337 = vshra.s32 %v6018, 16
        %v6338 = vcvt.s32.f32 %v6336
        %v6339 = vcvt.s32.f32 %v6337
        %6340 = vmin.xlane.f32.xlu0 %v6339
        %v6341 = vpop.xlane.xlu0 %6340
        %vm6342 = vcmp.eq.f32.partialorder %v6339, %v6341
        %v6343 = vsel %vm6342, %v6338, inf
        %6344 = vmin.xlane.f32.xlu0 %v6343
        %v6345 = vpop.xlane.xlu0 %6344
        %v6346 = vcvt.f32.s32 %v6345
        %v6347 = vcvt.f32.s32 %v6341
        %v6348 = vshll.u32 %v6347, 16
        %v6349 = vadd.s32 %v6348, %v6346
        %v6350 = vand.u32 %v6019, 65535
        %v6351 = vshra.s32 %v6019, 16
        %v6352 = vcvt.s32.f32 %v6350
        %v6353 = vcvt.s32.f32 %v6351
        %6354 = vmin.xlane.f32.xlu0 %v6353
        %v6355 = vpop.xlane.xlu0 %6354
        %vm6356 = vcmp.eq.f32.partialorder %v6353, %v6355
        %v6357 = vsel %vm6356, %v6352, inf
        %6358 = vmin.xlane.f32.xlu0 %v6357
        %v6359 = vpop.xlane.xlu0 %6358
        %v6360 = vcvt.f32.s32 %v6359
        %v6361 = vcvt.f32.s32 %v6355
        %v6362 = vshll.u32 %v6361, 16
        %v6363 = vadd.s32 %v6362, %v6360
        %v6364 = vand.u32 %v6020, 65535
        %v6365 = vshra.s32 %v6020, 16
        %v6366 = vcvt.s32.f32 %v6364
        %v6367 = vcvt.s32.f32 %v6365
        %6368 = vmin.xlane.f32.xlu0 %v6367
        %v6369 = vpop.xlane.xlu0 %6368
        %vm6370 = vcmp.eq.f32.partialorder %v6367, %v6369
        %v6371 = vsel %vm6370, %v6366, inf
        %6372 = vmin.xlane.f32.xlu0 %v6371
        %v6373 = vpop.xlane.xlu0 %6372
        %v6374 = vcvt.f32.s32 %v6373
        %v6375 = vcvt.f32.s32 %v6369
        %v6376 = vshll.u32 %v6375, 16
        %v6377 = vadd.s32 %v6376, %v6374
        %v6378 = vand.u32 %v6021, 65535
        %v6379 = vshra.s32 %v6021, 16
        %v6380 = vcvt.s32.f32 %v6378
        %v6381 = vcvt.s32.f32 %v6379
        %6382 = vmin.xlane.f32.xlu0 %v6381
        %v6383 = vpop.xlane.xlu0 %6382
        %vm6384 = vcmp.eq.f32.partialorder %v6381, %v6383
        %v6385 = vsel %vm6384, %v6380, inf
        %6386 = vmin.xlane.f32.xlu0 %v6385
        %v6387 = vpop.xlane.xlu0 %6386
        %v6388 = vcvt.f32.s32 %v6387
        %v6389 = vcvt.f32.s32 %v6383
        %v6390 = vshll.u32 %v6389, 16
        %v6391 = vadd.s32 %v6390, %v6388
        %v6392 = vand.u32 %v6022, 65535
        %v6393 = vshra.s32 %v6022, 16
        %v6394 = vcvt.s32.f32 %v6392
        %v6395 = vcvt.s32.f32 %v6393
        %6396 = vmin.xlane.f32.xlu0 %v6395
        %v6397 = vpop.xlane.xlu0 %6396
        %vm6398 = vcmp.eq.f32.partialorder %v6395, %v6397
        %v6399 = vsel %vm6398, %v6394, inf
        %6400 = vmin.xlane.f32.xlu0 %v6399
        %v6401 = vpop.xlane.xlu0 %6400
        %v6402 = vcvt.f32.s32 %v6401
        %v6403 = vcvt.f32.s32 %v6397
        %v6404 = vshll.u32 %v6403, 16
        %v6405 = vadd.s32 %v6404, %v6402
        %v6406 = vand.u32 %v6023, 65535
        %v6407 = vshra.s32 %v6023, 16
        %v6408 = vcvt.s32.f32 %v6406
        %v6409 = vcvt.s32.f32 %v6407
        %6410 = vmin.xlane.f32.xlu0 %v6409
        %v6411 = vpop.xlane.xlu0 %6410
        %vm6412 = vcmp.eq.f32.partialorder %v6409, %v6411
        %v6413 = vsel %vm6412, %v6408, inf
        %6414 = vmin.xlane.f32.xlu0 %v6413
        %v6415 = vpop.xlane.xlu0 %6414
        %v6416 = vcvt.f32.s32 %v6415
        %v6417 = vcvt.f32.s32 %v6411
        %v6418 = vshll.u32 %v6417, 16
        %v6419 = vadd.s32 %v6418, %v6416
        %v6420 = vand.u32 %v6024, 65535
        %v6421 = vshra.s32 %v6024, 16
        %v6422 = vcvt.s32.f32 %v6420
        %v6423 = vcvt.s32.f32 %v6421
        %6424 = vmin.xlane.f32.xlu0 %v6423
        %v6425 = vpop.xlane.xlu0 %6424
        %vm6426 = vcmp.eq.f32.partialorder %v6423, %v6425
        %v6427 = vsel %vm6426, %v6422, inf
        %6428 = vmin.xlane.f32.xlu0 %v6427
        %v6429 = vpop.xlane.xlu0 %6428
        %v6430 = vcvt.f32.s32 %v6429
        %v6431 = vcvt.f32.s32 %v6425
        %v6432 = vshll.u32 %v6431, 16
        %v6433 = vadd.s32 %v6432, %v6430
        %v6434 = vand.u32 %v6025, 65535
        %v6435 = vshra.s32 %v6025, 16
        %v6436 = vcvt.s32.f32 %v6434
        %v6437 = vcvt.s32.f32 %v6435
        %6438 = vmin.xlane.f32.xlu0 %v6437
        %v6439 = vpop.xlane.xlu0 %6438
        %vm6440 = vcmp.eq.f32.partialorder %v6437, %v6439
        %v6441 = vsel %vm6440, %v6436, inf
        %6442 = vmin.xlane.f32.xlu0 %v6441
        %v6443 = vpop.xlane.xlu0 %6442
        %v6444 = vcvt.f32.s32 %v6443
        %v6445 = vcvt.f32.s32 %v6439
        %v6446 = vshll.u32 %v6445, 16
        %v6447 = vadd.s32 %v6446, %v6444
        %v6448 = vand.u32 %v6026, 65535
        %v6449 = vshra.s32 %v6026, 16
        %v6450 = vcvt.s32.f32 %v6448
        %v6451 = vcvt.s32.f32 %v6449
        %6452 = vmin.xlane.f32.xlu0 %v6451
        %v6453 = vpop.xlane.xlu0 %6452
        %vm6454 = vcmp.eq.f32.partialorder %v6451, %v6453
        %v6455 = vsel %vm6454, %v6450, inf
        %6456 = vmin.xlane.f32.xlu0 %v6455
        %v6457 = vpop.xlane.xlu0 %6456
        %v6458 = vcvt.f32.s32 %v6457
        %v6459 = vcvt.f32.s32 %v6453
        %v6460 = vshll.u32 %v6459, 16
        %v6461 = vadd.s32 %v6460, %v6458
        %v6462 = vand.u32 %v6027, 65535
        %v6463 = vshra.s32 %v6027, 16
        %v6464 = vcvt.s32.f32 %v6462
        %v6465 = vcvt.s32.f32 %v6463
        %6466 = vmin.xlane.f32.xlu0 %v6465
        %v6467 = vpop.xlane.xlu0 %6466
        %vm6468 = vcmp.eq.f32.partialorder %v6465, %v6467
        %v6469 = vsel %vm6468, %v6464, inf
        %6470 = vmin.xlane.f32.xlu0 %v6469
        %v6471 = vpop.xlane.xlu0 %6470
        %v6472 = vcvt.f32.s32 %v6471
        %v6473 = vcvt.f32.s32 %v6467
        %v6474 = vshll.u32 %v6473, 16
        %v6475 = vadd.s32 %v6474, %v6472
        %vm6476 = vcmp.eq.s32.totalorder %v354, %v6041
        %vm6477 = vcmp.eq.s32.totalorder %v354, %v6055
        %vm6478 = vcmp.eq.s32.totalorder %v354, %v6069
        %vm6479 = vcmp.eq.s32.totalorder %v354, %v6083
        %vm6480 = vcmp.eq.s32.totalorder %v354, %v6097
        %vm6481 = vcmp.eq.s32.totalorder %v354, %v6111
        %vm6482 = vcmp.eq.s32.totalorder %v354, %v6125
        %vm6483 = vcmp.eq.s32.totalorder %v354, %v6139
        %vm6484 = vcmp.eq.s32.totalorder %v354, %v6153
        %vm6485 = vcmp.eq.s32.totalorder %v354, %v6167
        %vm6486 = vcmp.eq.s32.totalorder %v354, %v6181
        %vm6487 = vcmp.eq.s32.totalorder %v354, %v6195
        %vm6488 = vcmp.eq.s32.totalorder %v354, %v6209
        %vm6489 = vcmp.eq.s32.totalorder %v354, %v6223
        %vm6490 = vcmp.eq.s32.totalorder %v354, %v6237
        %vm6491 = vcmp.eq.s32.totalorder %v354, %v6251
        %vm6492 = vcmp.eq.s32.totalorder %v354, %v6265
        %vm6493 = vcmp.eq.s32.totalorder %v354, %v6279
        %vm6494 = vcmp.eq.s32.totalorder %v354, %v6293
        %vm6495 = vcmp.eq.s32.totalorder %v354, %v6307
        %vm6496 = vcmp.eq.s32.totalorder %v354, %v6321
        %vm6497 = vcmp.eq.s32.totalorder %v354, %v6335
        %vm6498 = vcmp.eq.s32.totalorder %v354, %v6349
        %vm6499 = vcmp.eq.s32.totalorder %v354, %v6363
        %vm6500 = vcmp.eq.s32.totalorder %v354, %v6377
        %vm6501 = vcmp.eq.s32.totalorder %v354, %v6391
        %vm6502 = vcmp.eq.s32.totalorder %v354, %v6405
        %vm6503 = vcmp.eq.s32.totalorder %v354, %v6419
        %vm6504 = vcmp.eq.s32.totalorder %v354, %v6433
        %vm6505 = vcmp.eq.s32.totalorder %v354, %v6447
        %vm6506 = vcmp.eq.s32.totalorder %v354, %v6461
        %vm6507 = vcmp.eq.s32.totalorder %v354, %v6475
        %v6508 = vsel %vm6476, 1, 0
        %v6509 = vsel %vm6477, 1, 0
        %v6510 = vsel %vm6478, 1, 0
        %v6511 = vsel %vm6479, 1, 0
        %v6512 = vsel %vm6480, 1, 0
        %v6513 = vsel %vm6481, 1, 0
        %v6514 = vsel %vm6482, 1, 0
        %v6515 = vsel %vm6483, 1, 0
        %v6516 = vsel %vm6484, 1, 0
        %v6517 = vsel %vm6485, 1, 0
        %v6518 = vsel %vm6486, 1, 0
        %v6519 = vsel %vm6487, 1, 0
        %v6520 = vsel %vm6488, 1, 0
        %v6521 = vsel %vm6489, 1, 0
        %v6522 = vsel %vm6490, 1, 0
        %v6523 = vsel %vm6491, 1, 0
        %v6524 = vsel %vm6492, 1, 0
        %v6525 = vsel %vm6493, 1, 0
        %v6526 = vsel %vm6494, 1, 0
        %v6527 = vsel %vm6495, 1, 0
        %v6528 = vsel %vm6496, 1, 0
        %v6529 = vsel %vm6497, 1, 0
        %v6530 = vsel %vm6498, 1, 0
        %v6531 = vsel %vm6499, 1, 0
        %v6532 = vsel %vm6500, 1, 0
        %v6533 = vsel %vm6501, 1, 0
        %v6534 = vsel %vm6502, 1, 0
        %v6535 = vsel %vm6503, 1, 0
        %v6536 = vsel %vm6504, 1, 0
        %v6537 = vsel %vm6505, 1, 0
        %v6538 = vsel %vm6506, 1, 0
        %v6539 = vsel %vm6507, 1, 0
        %v6540 = vcvt.s32.f32 %v6508
        %v6541 = vcvt.s32.f32 %v6509
        %v6542 = vcvt.s32.f32 %v6510
        %v6543 = vcvt.s32.f32 %v6511
        %v6544 = vcvt.s32.f32 %v6512
        %v6545 = vcvt.s32.f32 %v6513
        %v6546 = vcvt.s32.f32 %v6514
        %v6547 = vcvt.s32.f32 %v6515
        %v6548 = vcvt.s32.f32 %v6516
        %v6549 = vcvt.s32.f32 %v6517
        %v6550 = vcvt.s32.f32 %v6518
        %v6551 = vcvt.s32.f32 %v6519
        %v6552 = vcvt.s32.f32 %v6520
        %v6553 = vcvt.s32.f32 %v6521
        %v6554 = vcvt.s32.f32 %v6522
        %v6555 = vcvt.s32.f32 %v6523
        %v6556 = vcvt.s32.f32 %v6524
        %v6557 = vcvt.s32.f32 %v6525
        %v6558 = vcvt.s32.f32 %v6526
        %v6559 = vcvt.s32.f32 %v6527
        %v6560 = vcvt.s32.f32 %v6528
        %v6561 = vcvt.s32.f32 %v6529
        %v6562 = vcvt.s32.f32 %v6530
        %v6563 = vcvt.s32.f32 %v6531
        %v6564 = vcvt.s32.f32 %v6532
        %v6565 = vcvt.s32.f32 %v6533
        %v6566 = vcvt.s32.f32 %v6534
        %v6567 = vcvt.s32.f32 %v6535
        %v6568 = vcvt.s32.f32 %v6536
        %v6569 = vcvt.s32.f32 %v6537
        %v6570 = vcvt.s32.f32 %v6538
        %v6571 = vcvt.s32.f32 %v6539
        %s6572 = scalar_lea.vmem %s4, 384
        %v6573 = vld [vmem:[%s6572] sm:$0xff]
        %v6574 = vld [vmem:[%s6572 + $0x8] sm:$0xff]
        %v6575 = vld [vmem:[%s6572 + $0x10] sm:$0xff]
        %v6576 = vld [vmem:[%s6572 + $0x18] sm:$0xff]
        %v6577 = vld [vmem:[%s6572 + $0x20] sm:$0xff]
        %v6578 = vld [vmem:[%s6572 + $0x28] sm:$0xff]
        %v6579 = vld [vmem:[%s6572 + $0x30] sm:$0xff]
        %v6580 = vld [vmem:[%s6572 + $0x38] sm:$0xff]
        %v6581 = vld [vmem:[%s6572 + $0x40] sm:$0xff]
        %v6582 = vld [vmem:[%s6572 + $0x48] sm:$0xff]
        %v6583 = vld [vmem:[%s6572 + $0x50] sm:$0xff]
        %v6584 = vld [vmem:[%s6572 + $0x58] sm:$0xff]
        %v6585 = vld [vmem:[%s6572 + $0x60] sm:$0xff]
        %v6586 = vld [vmem:[%s6572 + $0x68] sm:$0xff]
        %v6587 = vld [vmem:[%s6572 + $0x70] sm:$0xff]
        %v6588 = vld [vmem:[%s6572 + $0x78] sm:$0xff]
        %6589 = vmatpush.msra.mxu0 %v6588
        %6590 = vmatpush.msra.mxu0 %v6587
        %6591 = vmatpush.msra.mxu0 %v6586
        %6592 = vmatpush.msra.mxu0 %v6585
        %6593 = vmatpush.msra.mxu0 %v6584
        %6594 = vmatpush.msra.mxu0 %v6583
        %6595 = vmatpush.msra.mxu0 %v6582
        %6596 = vmatpush.msra.mxu0 %v6581
        %6597 = vmatpush.msra.mxu0 %v6580
        %6598 = vmatpush.msra.mxu0 %v6579
        %6599 = vmatpush.msra.mxu0 %v6578
        %6600 = vmatpush.msra.mxu0 %v6577
        %6601 = vmatpush.msra.mxu0 %v6576
        %6602 = vmatpush.msra.mxu0 %v6575
        %6603 = vmatpush.msra.mxu0 %v6574
        %6604 = vmatpush.msra.mxu0 %v6573
        %6605 = vmatmul.f32.gmra.mxu0 %v6540
        %v6606 = vpop.f32.mrf.mxu0
        %v6607 = vadd.f32 0.0, %v6606
        %6608 = vmatmul.f32.gmra.mxu0 %v6541
        %v6609 = vpop.f32.mrf.mxu0
        %v6610 = vadd.f32 0.0, %v6609
        %6611 = vmatmul.f32.gmra.mxu0 %v6542
        %v6612 = vpop.f32.mrf.mxu0
        %v6613 = vadd.f32 0.0, %v6612
        %6614 = vmatmul.f32.gmra.mxu0 %v6543
        %v6615 = vpop.f32.mrf.mxu0
        %v6616 = vadd.f32 0.0, %v6615
        %6617 = vmatmul.f32.gmra.mxu0 %v6544
        %v6618 = vpop.f32.mrf.mxu0
        %v6619 = vadd.f32 0.0, %v6618
        %6620 = vmatmul.f32.gmra.mxu0 %v6545
        %v6621 = vpop.f32.mrf.mxu0
        %v6622 = vadd.f32 0.0, %v6621
        %6623 = vmatmul.f32.gmra.mxu0 %v6546
        %v6624 = vpop.f32.mrf.mxu0
        %v6625 = vadd.f32 0.0, %v6624
        %6626 = vmatmul.f32.gmra.mxu0 %v6547
        %v6627 = vpop.f32.mrf.mxu0
        %v6628 = vadd.f32 0.0, %v6627
        %6629 = vmatmul.f32.gmra.mxu0 %v6548
        %v6630 = vpop.f32.mrf.mxu0
        %v6631 = vadd.f32 0.0, %v6630
        %6632 = vmatmul.f32.gmra.mxu0 %v6549
        %v6633 = vpop.f32.mrf.mxu0
        %v6634 = vadd.f32 0.0, %v6633
        %6635 = vmatmul.f32.gmra.mxu0 %v6550
        %v6636 = vpop.f32.mrf.mxu0
        %v6637 = vadd.f32 0.0, %v6636
        %6638 = vmatmul.f32.gmra.mxu0 %v6551
        %v6639 = vpop.f32.mrf.mxu0
        %v6640 = vadd.f32 0.0, %v6639
        %6641 = vmatmul.f32.gmra.mxu0 %v6552
        %v6642 = vpop.f32.mrf.mxu0
        %v6643 = vadd.f32 0.0, %v6642
        %6644 = vmatmul.f32.gmra.mxu0 %v6553
        %v6645 = vpop.f32.mrf.mxu0
        %v6646 = vadd.f32 0.0, %v6645
        %6647 = vmatmul.f32.gmra.mxu0 %v6554
        %v6648 = vpop.f32.mrf.mxu0
        %v6649 = vadd.f32 0.0, %v6648
        %6650 = vmatmul.f32.gmra.mxu0 %v6555
        %v6651 = vpop.f32.mrf.mxu0
        %v6652 = vadd.f32 0.0, %v6651
        %6653 = vmatmul.f32.gmra.mxu0 %v6556
        %v6654 = vpop.f32.mrf.mxu0
        %v6655 = vadd.f32 0.0, %v6654
        %6656 = vmatmul.f32.gmra.mxu0 %v6557
        %v6657 = vpop.f32.mrf.mxu0
        %v6658 = vadd.f32 0.0, %v6657
        %6659 = vmatmul.f32.gmra.mxu0 %v6558
        %v6660 = vpop.f32.mrf.mxu0
        %v6661 = vadd.f32 0.0, %v6660
        %6662 = vmatmul.f32.gmra.mxu0 %v6559
        %v6663 = vpop.f32.mrf.mxu0
        %v6664 = vadd.f32 0.0, %v6663
        %6665 = vmatmul.f32.gmra.mxu0 %v6560
        %v6666 = vpop.f32.mrf.mxu0
        %v6667 = vadd.f32 0.0, %v6666
        %6668 = vmatmul.f32.gmra.mxu0 %v6561
        %v6669 = vpop.f32.mrf.mxu0
        %v6670 = vadd.f32 0.0, %v6669
        %6671 = vmatmul.f32.gmra.mxu0 %v6562
        %v6672 = vpop.f32.mrf.mxu0
        %v6673 = vadd.f32 0.0, %v6672
        %6674 = vmatmul.f32.gmra.mxu0 %v6563
        %v6675 = vpop.f32.mrf.mxu0
        %v6676 = vadd.f32 0.0, %v6675
        %6677 = vmatmul.f32.gmra.mxu0 %v6564
        %v6678 = vpop.f32.mrf.mxu0
        %v6679 = vadd.f32 0.0, %v6678
        %6680 = vmatmul.f32.gmra.mxu0 %v6565
        %v6681 = vpop.f32.mrf.mxu0
        %v6682 = vadd.f32 0.0, %v6681
        %6683 = vmatmul.f32.gmra.mxu0 %v6566
        %v6684 = vpop.f32.mrf.mxu0
        %v6685 = vadd.f32 0.0, %v6684
        %6686 = vmatmul.f32.gmra.mxu0 %v6567
        %v6687 = vpop.f32.mrf.mxu0
        %v6688 = vadd.f32 0.0, %v6687
        %6689 = vmatmul.f32.gmra.mxu0 %v6568
        %v6690 = vpop.f32.mrf.mxu0
        %v6691 = vadd.f32 0.0, %v6690
        %6692 = vmatmul.f32.gmra.mxu0 %v6569
        %v6693 = vpop.f32.mrf.mxu0
        %v6694 = vadd.f32 0.0, %v6693
        %6695 = vmatmul.f32.gmra.mxu0 %v6570
        %v6696 = vpop.f32.mrf.mxu0
        %v6697 = vadd.f32 0.0, %v6696
        %6698 = vmatmul.f32.gmra.mxu0 %v6571
        %v6699 = vpop.f32.mrf.mxu0
        %v6700 = vadd.f32 0.0, %v6699
        %6701 = vdwg.mxu0
        %s6702 = scalar_lea.vmem %s5, 24
        %v6703 = vld [vmem:[%s6702] sm:$0xff]
        %s6704 = scalar_lea.vmem %s6, 3
        %v6705 = vld [vmem:[%s6704] sm:$0x1]
        %v6707 = vperm.slane %v6705, 0
        %v6710 = vsel %vm574, %v6607, 0
        %v6713 = vsel %vm574, %v6610, 0
        %v6716 = vsel %vm574, %v6613, 0
        %v6719 = vsel %vm574, %v6616, 0
        %v6722 = vsel %vm574, %v6619, 0
        %v6725 = vsel %vm574, %v6622, 0
        %v6728 = vsel %vm574, %v6625, 0
        %v6731 = vsel %vm574, %v6628, 0
        %v6734 = vsel %vm574, %v6631, 0
        %v6737 = vsel %vm574, %v6634, 0
        %v6740 = vsel %vm574, %v6637, 0
        %v6743 = vsel %vm574, %v6640, 0
        %v6746 = vsel %vm574, %v6643, 0
        %v6749 = vsel %vm574, %v6646, 0
        %v6752 = vsel %vm574, %v6649, 0
        %v6755 = vsel %vm574, %v6652, 0
        %v6758 = vsel %vm574, %v6655, 0
        %v6761 = vsel %vm574, %v6658, 0
        %v6764 = vsel %vm574, %v6661, 0
        %v6767 = vsel %vm574, %v6664, 0
        %v6770 = vsel %vm574, %v6667, 0
        %v6773 = vsel %vm574, %v6670, 0
        %v6776 = vsel %vm574, %v6673, 0
        %v6779 = vsel %vm574, %v6676, 0
        %v6782 = vsel %vm574, %v6679, 0
        %v6785 = vsel %vm574, %v6682, 0
        %v6788 = vsel %vm574, %v6685, 0
        %v6791 = vsel %vm574, %v6688, 0
        %v6794 = vsel %vm574, %v6691, 0
        %v6797 = vsel %vm574, %v6694, 0
        %v6800 = vsel %vm574, %v6697, 0
        %v6803 = vsel %vm574, %v6700, 0
        %6805 = vmatpush.msra.mxu0 0.0
        %6806 = vmatpush.msra.mxu0 0.0
        %6807 = vmatpush.msra.mxu0 0.0
        %6808 = vmatpush.msra.mxu0 0.0
        %6809 = vmatpush.msra.mxu0 0.0
        %6810 = vmatpush.msra.mxu0 0.0
        %6811 = vmatpush.msra.mxu0 0.0
        %6812 = vmatpush.msra.mxu0 0.0
        %6813 = vmatpush.msra.mxu0 0.0
        %6814 = vmatpush.msra.mxu0 0.0
        %6815 = vmatpush.msra.mxu0 0.0
        %6816 = vmatpush.msra.mxu0 0.0
        %6817 = vmatpush.msra.mxu0 0.0
        %6818 = vmatpush.msra.mxu0 0.0
        %6819 = vmatpush.msra.mxu0 0.0
        %6820 = vmatpush.msra.mxu0 %v6703
        %6821 = vmatmul.f32.gmra.mxu0 %v6710
        %v6822 = vpop.f32.mrf.mxu0
        %v6823 = vadd.f32 %v6707, %v6822
        %6824 = vmatmul.f32.gmra.mxu0 %v6713
        %v6825 = vpop.f32.mrf.mxu0
        %v6826 = vadd.f32 %v6707, %v6825
        %6827 = vmatmul.f32.gmra.mxu0 %v6716
        %v6828 = vpop.f32.mrf.mxu0
        %v6829 = vadd.f32 %v6707, %v6828
        %6830 = vmatmul.f32.gmra.mxu0 %v6719
        %v6831 = vpop.f32.mrf.mxu0
        %v6832 = vadd.f32 %v6707, %v6831
        %6833 = vmatmul.f32.gmra.mxu0 %v6722
        %v6834 = vpop.f32.mrf.mxu0
        %v6835 = vadd.f32 %v6707, %v6834
        %6836 = vmatmul.f32.gmra.mxu0 %v6725
        %v6837 = vpop.f32.mrf.mxu0
        %v6838 = vadd.f32 %v6707, %v6837
        %6839 = vmatmul.f32.gmra.mxu0 %v6728
        %v6840 = vpop.f32.mrf.mxu0
        %v6841 = vadd.f32 %v6707, %v6840
        %6842 = vmatmul.f32.gmra.mxu0 %v6731
        %v6843 = vpop.f32.mrf.mxu0
        %v6844 = vadd.f32 %v6707, %v6843
        %6845 = vmatmul.f32.gmra.mxu0 %v6734
        %v6846 = vpop.f32.mrf.mxu0
        %v6847 = vadd.f32 %v6707, %v6846
        %6848 = vmatmul.f32.gmra.mxu0 %v6737
        %v6849 = vpop.f32.mrf.mxu0
        %v6850 = vadd.f32 %v6707, %v6849
        %6851 = vmatmul.f32.gmra.mxu0 %v6740
        %v6852 = vpop.f32.mrf.mxu0
        %v6853 = vadd.f32 %v6707, %v6852
        %6854 = vmatmul.f32.gmra.mxu0 %v6743
        %v6855 = vpop.f32.mrf.mxu0
        %v6856 = vadd.f32 %v6707, %v6855
        %6857 = vmatmul.f32.gmra.mxu0 %v6746
        %v6858 = vpop.f32.mrf.mxu0
        %v6859 = vadd.f32 %v6707, %v6858
        %6860 = vmatmul.f32.gmra.mxu0 %v6749
        %v6861 = vpop.f32.mrf.mxu0
        %v6862 = vadd.f32 %v6707, %v6861
        %6863 = vmatmul.f32.gmra.mxu0 %v6752
        %v6864 = vpop.f32.mrf.mxu0
        %v6865 = vadd.f32 %v6707, %v6864
        %6866 = vmatmul.f32.gmra.mxu0 %v6755
        %v6867 = vpop.f32.mrf.mxu0
        %v6868 = vadd.f32 %v6707, %v6867
        %6869 = vmatmul.f32.gmra.mxu0 %v6758
        %v6870 = vpop.f32.mrf.mxu0
        %v6871 = vadd.f32 %v6707, %v6870
        %6872 = vmatmul.f32.gmra.mxu0 %v6761
        %v6873 = vpop.f32.mrf.mxu0
        %v6874 = vadd.f32 %v6707, %v6873
        %6875 = vmatmul.f32.gmra.mxu0 %v6764
        %v6876 = vpop.f32.mrf.mxu0
        %v6877 = vadd.f32 %v6707, %v6876
        %6878 = vmatmul.f32.gmra.mxu0 %v6767
        %v6879 = vpop.f32.mrf.mxu0
        %v6880 = vadd.f32 %v6707, %v6879
        %6881 = vmatmul.f32.gmra.mxu0 %v6770
        %v6882 = vpop.f32.mrf.mxu0
        %v6883 = vadd.f32 %v6707, %v6882
        %6884 = vmatmul.f32.gmra.mxu0 %v6773
        %v6885 = vpop.f32.mrf.mxu0
        %v6886 = vadd.f32 %v6707, %v6885
        %6887 = vmatmul.f32.gmra.mxu0 %v6776
        %v6888 = vpop.f32.mrf.mxu0
        %v6889 = vadd.f32 %v6707, %v6888
        %6890 = vmatmul.f32.gmra.mxu0 %v6779
        %v6891 = vpop.f32.mrf.mxu0
        %v6892 = vadd.f32 %v6707, %v6891
        %6893 = vmatmul.f32.gmra.mxu0 %v6782
        %v6894 = vpop.f32.mrf.mxu0
        %v6895 = vadd.f32 %v6707, %v6894
        %6896 = vmatmul.f32.gmra.mxu0 %v6785
        %v6897 = vpop.f32.mrf.mxu0
        %v6898 = vadd.f32 %v6707, %v6897
        %6899 = vmatmul.f32.gmra.mxu0 %v6788
        %v6900 = vpop.f32.mrf.mxu0
        %v6901 = vadd.f32 %v6707, %v6900
        %6902 = vmatmul.f32.gmra.mxu0 %v6791
        %v6903 = vpop.f32.mrf.mxu0
        %v6904 = vadd.f32 %v6707, %v6903
        %6905 = vmatmul.f32.gmra.mxu0 %v6794
        %v6906 = vpop.f32.mrf.mxu0
        %v6907 = vadd.f32 %v6707, %v6906
        %6908 = vmatmul.f32.gmra.mxu0 %v6797
        %v6909 = vpop.f32.mrf.mxu0
        %v6910 = vadd.f32 %v6707, %v6909
        %6911 = vmatmul.f32.gmra.mxu0 %v6800
        %v6912 = vpop.f32.mrf.mxu0
        %v6913 = vadd.f32 %v6707, %v6912
        %6914 = vmatmul.f32.gmra.mxu0 %v6803
        %v6915 = vpop.f32.mrf.mxu0
        %v6916 = vadd.f32 %v6707, %v6915
        %6917 = vdwg.mxu0
        %v6918 = vsub.f32 %v5594, %v6607
        %v6919 = vsub.f32 %v5597, %v6610
        %v6920 = vsub.f32 %v5600, %v6613
        %v6921 = vsub.f32 %v5603, %v6616
        %v6922 = vsub.f32 %v5606, %v6619
        %v6923 = vsub.f32 %v5609, %v6622
        %v6924 = vsub.f32 %v5612, %v6625
        %v6925 = vsub.f32 %v5615, %v6628
        %v6926 = vsub.f32 %v5618, %v6631
        %v6927 = vsub.f32 %v5621, %v6634
        %v6928 = vsub.f32 %v5624, %v6637
        %v6929 = vsub.f32 %v5627, %v6640
        %v6930 = vsub.f32 %v5630, %v6643
        %v6931 = vsub.f32 %v5633, %v6646
        %v6932 = vsub.f32 %v5636, %v6649
        %v6933 = vsub.f32 %v5639, %v6652
        %v6934 = vsub.f32 %v5642, %v6655
        %v6935 = vsub.f32 %v5645, %v6658
        %v6936 = vsub.f32 %v5648, %v6661
        %v6937 = vsub.f32 %v5651, %v6664
        %v6938 = vsub.f32 %v5654, %v6667
        %v6939 = vsub.f32 %v5657, %v6670
        %v6940 = vsub.f32 %v5660, %v6673
        %v6941 = vsub.f32 %v5663, %v6676
        %v6942 = vsub.f32 %v5666, %v6679
        %v6943 = vsub.f32 %v5669, %v6682
        %v6944 = vsub.f32 %v5672, %v6685
        %v6945 = vsub.f32 %v5675, %v6688
        %v6946 = vsub.f32 %v5678, %v6691
        %v6947 = vsub.f32 %v5681, %v6694
        %v6948 = vsub.f32 %v5684, %v6697
        %v6949 = vsub.f32 %v5687, %v6700
        %v6950 = vmul.f32 %v6918, %v6918
        %v6951 = vmul.f32 %v6919, %v6919
        %v6952 = vmul.f32 %v6920, %v6920
        %v6953 = vmul.f32 %v6921, %v6921
        %v6954 = vmul.f32 %v6922, %v6922
        %v6955 = vmul.f32 %v6923, %v6923
        %v6956 = vmul.f32 %v6924, %v6924
        %v6957 = vmul.f32 %v6925, %v6925
        %v6958 = vmul.f32 %v6926, %v6926
        %v6959 = vmul.f32 %v6927, %v6927
        %v6960 = vmul.f32 %v6928, %v6928
        %v6961 = vmul.f32 %v6929, %v6929
        %v6962 = vmul.f32 %v6930, %v6930
        %v6963 = vmul.f32 %v6931, %v6931
        %v6964 = vmul.f32 %v6932, %v6932
        %v6965 = vmul.f32 %v6933, %v6933
        %v6966 = vmul.f32 %v6934, %v6934
        %v6967 = vmul.f32 %v6935, %v6935
        %v6968 = vmul.f32 %v6936, %v6936
        %v6969 = vmul.f32 %v6937, %v6937
        %v6970 = vmul.f32 %v6938, %v6938
        %v6971 = vmul.f32 %v6939, %v6939
        %v6972 = vmul.f32 %v6940, %v6940
        %v6973 = vmul.f32 %v6941, %v6941
        %v6974 = vmul.f32 %v6942, %v6942
        %v6975 = vmul.f32 %v6943, %v6943
        %v6976 = vmul.f32 %v6944, %v6944
        %v6977 = vmul.f32 %v6945, %v6945
        %v6978 = vmul.f32 %v6946, %v6946
        %v6979 = vmul.f32 %v6947, %v6947
        %v6980 = vmul.f32 %v6948, %v6948
        %v6981 = vmul.f32 %v6949, %v6949
        %v6982 = vsel %vm574, %v6950, 0.0
        %6983 = vadd.xlane.f32.xlu0 %v6982
        %v6984 = vpop.xlane.xlu0 %6983
        %v6985 = vsel %vm574, %v6951, 0.0
        %6986 = vadd.xlane.f32.xlu0 %v6985
        %v6987 = vpop.xlane.xlu0 %6986
        %v6988 = vsel %vm574, %v6952, 0.0
        %6989 = vadd.xlane.f32.xlu0 %v6988
        %v6990 = vpop.xlane.xlu0 %6989
        %v6991 = vsel %vm574, %v6953, 0.0
        %6992 = vadd.xlane.f32.xlu0 %v6991
        %v6993 = vpop.xlane.xlu0 %6992
        %v6994 = vsel %vm574, %v6954, 0.0
        %6995 = vadd.xlane.f32.xlu0 %v6994
        %v6996 = vpop.xlane.xlu0 %6995
        %v6997 = vsel %vm574, %v6955, 0.0
        %6998 = vadd.xlane.f32.xlu0 %v6997
        %v6999 = vpop.xlane.xlu0 %6998
        %v7000 = vsel %vm574, %v6956, 0.0
        %7001 = vadd.xlane.f32.xlu0 %v7000
        %v7002 = vpop.xlane.xlu0 %7001
        %v7003 = vsel %vm574, %v6957, 0.0
        %7004 = vadd.xlane.f32.xlu0 %v7003
        %v7005 = vpop.xlane.xlu0 %7004
        %v7006 = vsel %vm574, %v6958, 0.0
        %7007 = vadd.xlane.f32.xlu0 %v7006
        %v7008 = vpop.xlane.xlu0 %7007
        %v7009 = vsel %vm574, %v6959, 0.0
        %7010 = vadd.xlane.f32.xlu0 %v7009
        %v7011 = vpop.xlane.xlu0 %7010
        %v7012 = vsel %vm574, %v6960, 0.0
        %7013 = vadd.xlane.f32.xlu0 %v7012
        %v7014 = vpop.xlane.xlu0 %7013
        %v7015 = vsel %vm574, %v6961, 0.0
        %7016 = vadd.xlane.f32.xlu0 %v7015
        %v7017 = vpop.xlane.xlu0 %7016
        %v7018 = vsel %vm574, %v6962, 0.0
        %7019 = vadd.xlane.f32.xlu0 %v7018
        %v7020 = vpop.xlane.xlu0 %7019
        %v7021 = vsel %vm574, %v6963, 0.0
        %7022 = vadd.xlane.f32.xlu0 %v7021
        %v7023 = vpop.xlane.xlu0 %7022
        %v7024 = vsel %vm574, %v6964, 0.0
        %7025 = vadd.xlane.f32.xlu0 %v7024
        %v7026 = vpop.xlane.xlu0 %7025
        %v7027 = vsel %vm574, %v6965, 0.0
        %7028 = vadd.xlane.f32.xlu0 %v7027
        %v7029 = vpop.xlane.xlu0 %7028
        %v7030 = vsel %vm574, %v6966, 0.0
        %7031 = vadd.xlane.f32.xlu0 %v7030
        %v7032 = vpop.xlane.xlu0 %7031
        %v7033 = vsel %vm574, %v6967, 0.0
        %7034 = vadd.xlane.f32.xlu0 %v7033
        %v7035 = vpop.xlane.xlu0 %7034
        %v7036 = vsel %vm574, %v6968, 0.0
        %7037 = vadd.xlane.f32.xlu0 %v7036
        %v7038 = vpop.xlane.xlu0 %7037
        %v7039 = vsel %vm574, %v6969, 0.0
        %7040 = vadd.xlane.f32.xlu0 %v7039
        %v7041 = vpop.xlane.xlu0 %7040
        %v7042 = vsel %vm574, %v6970, 0.0
        %7043 = vadd.xlane.f32.xlu0 %v7042
        %v7044 = vpop.xlane.xlu0 %7043
        %v7045 = vsel %vm574, %v6971, 0.0
        %7046 = vadd.xlane.f32.xlu0 %v7045
        %v7047 = vpop.xlane.xlu0 %7046
        %v7048 = vsel %vm574, %v6972, 0.0
        %7049 = vadd.xlane.f32.xlu0 %v7048
        %v7050 = vpop.xlane.xlu0 %7049
        %v7051 = vsel %vm574, %v6973, 0.0
        %7052 = vadd.xlane.f32.xlu0 %v7051
        %v7053 = vpop.xlane.xlu0 %7052
        %v7054 = vsel %vm574, %v6974, 0.0
        %7055 = vadd.xlane.f32.xlu0 %v7054
        %v7056 = vpop.xlane.xlu0 %7055
        %v7057 = vsel %vm574, %v6975, 0.0
        %7058 = vadd.xlane.f32.xlu0 %v7057
        %v7059 = vpop.xlane.xlu0 %7058
        %v7060 = vsel %vm574, %v6976, 0.0
        %7061 = vadd.xlane.f32.xlu0 %v7060
        %v7062 = vpop.xlane.xlu0 %7061
        %v7063 = vsel %vm574, %v6977, 0.0
        %7064 = vadd.xlane.f32.xlu0 %v7063
        %v7065 = vpop.xlane.xlu0 %7064
        %v7066 = vsel %vm574, %v6978, 0.0
        %7067 = vadd.xlane.f32.xlu0 %v7066
        %v7068 = vpop.xlane.xlu0 %7067
        %v7069 = vsel %vm574, %v6979, 0.0
        %7070 = vadd.xlane.f32.xlu0 %v7069
        %v7071 = vpop.xlane.xlu0 %7070
        %v7072 = vsel %vm574, %v6980, 0.0
        %7073 = vadd.xlane.f32.xlu0 %v7072
        %v7074 = vpop.xlane.xlu0 %7073
        %v7075 = vsel %vm574, %v6981, 0.0
        %7076 = vadd.xlane.f32.xlu0 %v7075
        %v7077 = vpop.xlane.xlu0 %7076
        %v7078 = vmul.f32 %v6984, %v1965
        %v7079 = vmul.f32 %v6987, %v1965
        %v7080 = vmul.f32 %v6990, %v1965
        %v7081 = vmul.f32 %v6993, %v1965
        %v7082 = vmul.f32 %v6996, %v1965
        %v7083 = vmul.f32 %v6999, %v1965
        %v7084 = vmul.f32 %v7002, %v1965
        %v7085 = vmul.f32 %v7005, %v1965
        %v7086 = vmul.f32 %v7008, %v1965
        %v7087 = vmul.f32 %v7011, %v1965
        %v7088 = vmul.f32 %v7014, %v1965
        %v7089 = vmul.f32 %v7017, %v1965
        %v7090 = vmul.f32 %v7020, %v1965
        %v7091 = vmul.f32 %v7023, %v1965
        %v7092 = vmul.f32 %v7026, %v1965
        %v7093 = vmul.f32 %v7029, %v1965
        %v7094 = vmul.f32 %v7032, %v1965
        %v7095 = vmul.f32 %v7035, %v1965
        %v7096 = vmul.f32 %v7038, %v1965
        %v7097 = vmul.f32 %v7041, %v1965
        %v7098 = vmul.f32 %v7044, %v1965
        %v7099 = vmul.f32 %v7047, %v1965
        %v7100 = vmul.f32 %v7050, %v1965
        %v7101 = vmul.f32 %v7053, %v1965
        %v7102 = vmul.f32 %v7056, %v1965
        %v7103 = vmul.f32 %v7059, %v1965
        %v7104 = vmul.f32 %v7062, %v1965
        %v7105 = vmul.f32 %v7065, %v1965
        %v7106 = vmul.f32 %v7068, %v1965
        %v7107 = vmul.f32 %v7071, %v1965
        %v7108 = vmul.f32 %v7074, %v1965
        %v7109 = vmul.f32 %v7077, %v1965
        %v7110 = vcvt.s32.f32 %v6041
        %v7111 = vcvt.s32.f32 %v6055
        %v7112 = vcvt.s32.f32 %v6069
        %v7113 = vcvt.s32.f32 %v6083
        %v7114 = vcvt.s32.f32 %v6097
        %v7115 = vcvt.s32.f32 %v6111
        %v7116 = vcvt.s32.f32 %v6125
        %v7117 = vcvt.s32.f32 %v6139
        %v7118 = vcvt.s32.f32 %v6153
        %v7119 = vcvt.s32.f32 %v6167
        %v7120 = vcvt.s32.f32 %v6181
        %v7121 = vcvt.s32.f32 %v6195
        %v7122 = vcvt.s32.f32 %v6209
        %v7123 = vcvt.s32.f32 %v6223
        %v7124 = vcvt.s32.f32 %v6237
        %v7125 = vcvt.s32.f32 %v6251
        %v7126 = vcvt.s32.f32 %v6265
        %v7127 = vcvt.s32.f32 %v6279
        %v7128 = vcvt.s32.f32 %v6293
        %v7129 = vcvt.s32.f32 %v6307
        %v7130 = vcvt.s32.f32 %v6321
        %v7131 = vcvt.s32.f32 %v6335
        %v7132 = vcvt.s32.f32 %v6349
        %v7133 = vcvt.s32.f32 %v6363
        %v7134 = vcvt.s32.f32 %v6377
        %v7135 = vcvt.s32.f32 %v6391
        %v7136 = vcvt.s32.f32 %v6405
        %v7137 = vcvt.s32.f32 %v6419
        %v7138 = vcvt.s32.f32 %v6433
        %v7139 = vcvt.s32.f32 %v6447
        %v7140 = vcvt.s32.f32 %v6461
        %v7141 = vcvt.s32.f32 %v6475
        %v7142 = vsub.f32 %v5438, %v6823
        %v7143 = vsub.f32 %v5439, %v6826
        %v7144 = vsub.f32 %v5440, %v6829
        %v7145 = vsub.f32 %v5441, %v6832
        %v7146 = vsub.f32 %v5442, %v6835
        %v7147 = vsub.f32 %v5443, %v6838
        %v7148 = vsub.f32 %v5444, %v6841
        %v7149 = vsub.f32 %v5445, %v6844
        %v7150 = vsub.f32 %v5446, %v6847
        %v7151 = vsub.f32 %v5447, %v6850
        %v7152 = vsub.f32 %v5448, %v6853
        %v7153 = vsub.f32 %v5449, %v6856
        %v7154 = vsub.f32 %v5450, %v6859
        %v7155 = vsub.f32 %v5451, %v6862
        %v7156 = vsub.f32 %v5452, %v6865
        %v7157 = vsub.f32 %v5453, %v6868
        %v7158 = vsub.f32 %v5454, %v6871
        %v7159 = vsub.f32 %v5455, %v6874
        %v7160 = vsub.f32 %v5456, %v6877
        %v7161 = vsub.f32 %v5457, %v6880
        %v7162 = vsub.f32 %v5458, %v6883
        %v7163 = vsub.f32 %v5459, %v6886
        %v7164 = vsub.f32 %v5460, %v6889
        %v7165 = vsub.f32 %v5461, %v6892
        %v7166 = vsub.f32 %v5462, %v6895
        %v7167 = vsub.f32 %v5463, %v6898
        %v7168 = vsub.f32 %v5464, %v6901
        %v7169 = vsub.f32 %v5465, %v6904
        %v7170 = vsub.f32 %v5466, %v6907
        %v7171 = vsub.f32 %v5467, %v6910
        %v7172 = vsub.f32 %v5468, %v6913
        %v7173 = vsub.f32 %v5469, %v6916
        %v7174 = vsub.f32 %v321, %v7142
        %v7175 = vsub.f32 %v322, %v7143
        %v7176 = vsub.f32 %v323, %v7144
        %v7177 = vsub.f32 %v324, %v7145
        %v7178 = vsub.f32 %v325, %v7146
        %v7179 = vsub.f32 %v326, %v7147
        %v7180 = vsub.f32 %v327, %v7148
        %v7181 = vsub.f32 %v328, %v7149
        %v7182 = vsub.f32 %v329, %v7150
        %v7183 = vsub.f32 %v330, %v7151
        %v7184 = vsub.f32 %v331, %v7152
        %v7185 = vsub.f32 %v332, %v7153
        %v7186 = vsub.f32 %v333, %v7154
        %v7187 = vsub.f32 %v334, %v7155
        %v7188 = vsub.f32 %v335, %v7156
        %v7189 = vsub.f32 %v336, %v7157
        %v7190 = vsub.f32 %v337, %v7158
        %v7191 = vsub.f32 %v338, %v7159
        %v7192 = vsub.f32 %v339, %v7160
        %v7193 = vsub.f32 %v340, %v7161
        %v7194 = vsub.f32 %v341, %v7162
        %v7195 = vsub.f32 %v342, %v7163
        %v7196 = vsub.f32 %v343, %v7164
        %v7197 = vsub.f32 %v344, %v7165
        %v7198 = vsub.f32 %v345, %v7166
        %v7199 = vsub.f32 %v346, %v7167
        %v7200 = vsub.f32 %v347, %v7168
        %v7201 = vsub.f32 %v348, %v7169
        %v7202 = vsub.f32 %v349, %v7170
        %v7203 = vsub.f32 %v350, %v7171
        %v7204 = vsub.f32 %v351, %v7172
        %v7205 = vsub.f32 %v352, %v7173
        %7206 = vst.msk [vmem:[%s318] sm:$0xff] %vm363, %v7174
        %7207 = vst.msk [vmem:[%s318 + $0x8] sm:$0xff] %vm363, %v7175
        %7208 = vst.msk [vmem:[%s318 + $0x10] sm:$0xff] %vm363, %v7176
        %7209 = vst.msk [vmem:[%s318 + $0x18] sm:$0xff] %vm363, %v7177
        %7210 = vst.msk [vmem:[%s318 + $0x20] sm:$0xff] %vm363, %v7178
        %7211 = vst.msk [vmem:[%s318 + $0x28] sm:$0xff] %vm363, %v7179
        %7212 = vst.msk [vmem:[%s318 + $0x30] sm:$0xff] %vm363, %v7180
        %7213 = vst.msk [vmem:[%s318 + $0x38] sm:$0xff] %vm363, %v7181
        %7214 = vst.msk [vmem:[%s318 + $0x40] sm:$0xff] %vm363, %v7182
        %7215 = vst.msk [vmem:[%s318 + $0x48] sm:$0xff] %vm363, %v7183
        %7216 = vst.msk [vmem:[%s318 + $0x50] sm:$0xff] %vm363, %v7184
        %7217 = vst.msk [vmem:[%s318 + $0x58] sm:$0xff] %vm363, %v7185
        %7218 = vst.msk [vmem:[%s318 + $0x60] sm:$0xff] %vm363, %v7186
        %7219 = vst.msk [vmem:[%s318 + $0x68] sm:$0xff] %vm363, %v7187
        %7220 = vst.msk [vmem:[%s318 + $0x70] sm:$0xff] %vm363, %v7188
        %7221 = vst.msk [vmem:[%s318 + $0x78] sm:$0xff] %vm363, %v7189
        %7222 = vst.msk [vmem:[%s318 + $0x80] sm:$0xff] %vm363, %v7190
        %7223 = vst.msk [vmem:[%s318 + $0x88] sm:$0xff] %vm363, %v7191
        %7224 = vst.msk [vmem:[%s318 + $0x90] sm:$0xff] %vm363, %v7192
        %7225 = vst.msk [vmem:[%s318 + $0x98] sm:$0xff] %vm363, %v7193
        %7226 = vst.msk [vmem:[%s318 + $0xa0] sm:$0xff] %vm363, %v7194
        %7227 = vst.msk [vmem:[%s318 + $0xa8] sm:$0xff] %vm363, %v7195
        %7228 = vst.msk [vmem:[%s318 + $0xb0] sm:$0xff] %vm363, %v7196
        %7229 = vst.msk [vmem:[%s318 + $0xb8] sm:$0xff] %vm363, %v7197
        %7230 = vst.msk [vmem:[%s318 + $0xc0] sm:$0xff] %vm363, %v7198
        %7231 = vst.msk [vmem:[%s318 + $0xc8] sm:$0xff] %vm363, %v7199
        %7232 = vst.msk [vmem:[%s318 + $0xd0] sm:$0xff] %vm363, %v7200
        %7233 = vst.msk [vmem:[%s318 + $0xd8] sm:$0xff] %vm363, %v7201
        %7234 = vst.msk [vmem:[%s318 + $0xe0] sm:$0xff] %vm363, %v7202
        %7235 = vst.msk [vmem:[%s318 + $0xe8] sm:$0xff] %vm363, %v7203
        %7236 = vst.msk [vmem:[%s318 + $0xf0] sm:$0xff] %vm363, %v7204
        %7237 = vst.msk [vmem:[%s318 + $0xf8] sm:$0xff] %vm363, %v7205
        %7238 = vrot.lane.b32.xlu0 %v2186, 8
        %v7239 = vpop.permute.xlu0 %7238
        %7240 = vrot.lane.b32.xlu0 %v2189, 8
        %v7241 = vpop.permute.xlu0 %7240
        %7242 = vrot.lane.b32.xlu0 %v2192, 8
        %v7243 = vpop.permute.xlu0 %7242
        %7244 = vrot.lane.b32.xlu0 %v2195, 8
        %v7245 = vpop.permute.xlu0 %7244
        %7246 = vrot.lane.b32.xlu0 %v2198, 8
        %v7247 = vpop.permute.xlu0 %7246
        %7248 = vrot.lane.b32.xlu0 %v2201, 8
        %v7249 = vpop.permute.xlu0 %7248
        %7250 = vrot.lane.b32.xlu0 %v2204, 8
        %v7251 = vpop.permute.xlu0 %7250
        %7252 = vrot.lane.b32.xlu0 %v2207, 8
        %v7253 = vpop.permute.xlu0 %7252
        %7254 = vrot.lane.b32.xlu0 %v2210, 8
        %v7255 = vpop.permute.xlu0 %7254
        %7256 = vrot.lane.b32.xlu0 %v2213, 8
        %v7257 = vpop.permute.xlu0 %7256
        %7258 = vrot.lane.b32.xlu0 %v2216, 8
        %v7259 = vpop.permute.xlu0 %7258
        %7260 = vrot.lane.b32.xlu0 %v2219, 8
        %v7261 = vpop.permute.xlu0 %7260
        %7262 = vrot.lane.b32.xlu0 %v2222, 8
        %v7263 = vpop.permute.xlu0 %7262
        %7264 = vrot.lane.b32.xlu0 %v2225, 8
        %v7265 = vpop.permute.xlu0 %7264
        %7266 = vrot.lane.b32.xlu0 %v2228, 8
        %v7267 = vpop.permute.xlu0 %7266
        %7268 = vrot.lane.b32.xlu0 %v2231, 8
        %v7269 = vpop.permute.xlu0 %7268
        %7270 = vrot.lane.b32.xlu0 %v2234, 8
        %v7271 = vpop.permute.xlu0 %7270
        %7272 = vrot.lane.b32.xlu0 %v2237, 8
        %v7273 = vpop.permute.xlu0 %7272
        %7274 = vrot.lane.b32.xlu0 %v2240, 8
        %v7275 = vpop.permute.xlu0 %7274
        %7276 = vrot.lane.b32.xlu0 %v2243, 8
        %v7277 = vpop.permute.xlu0 %7276
        %7278 = vrot.lane.b32.xlu0 %v2246, 8
        %v7279 = vpop.permute.xlu0 %7278
        %7280 = vrot.lane.b32.xlu0 %v2249, 8
        %v7281 = vpop.permute.xlu0 %7280
        %7282 = vrot.lane.b32.xlu0 %v2252, 8
        %v7283 = vpop.permute.xlu0 %7282
        %7284 = vrot.lane.b32.xlu0 %v2255, 8
        %v7285 = vpop.permute.xlu0 %7284
        %7286 = vrot.lane.b32.xlu0 %v2258, 8
        %v7287 = vpop.permute.xlu0 %7286
        %7288 = vrot.lane.b32.xlu0 %v2261, 8
        %v7289 = vpop.permute.xlu0 %7288
        %7290 = vrot.lane.b32.xlu0 %v2264, 8
        %v7291 = vpop.permute.xlu0 %7290
        %7292 = vrot.lane.b32.xlu0 %v2267, 8
        %v7293 = vpop.permute.xlu0 %7292
        %7294 = vrot.lane.b32.xlu0 %v2270, 8
        %v7295 = vpop.permute.xlu0 %7294
        %7296 = vrot.lane.b32.xlu0 %v2273, 8
        %v7297 = vpop.permute.xlu0 %7296
        %7298 = vrot.lane.b32.xlu0 %v2276, 8
        %v7299 = vpop.permute.xlu0 %7298
        %7300 = vrot.lane.b32.xlu0 %v2279, 8
        %v7301 = vpop.permute.xlu0 %7300
        %7334 = vrot.lane.b32.xlu0 %v3890, 16
        %v7335 = vpop.permute.xlu0 %7334
        %7336 = vrot.lane.b32.xlu0 %v3893, 16
        %v7337 = vpop.permute.xlu0 %7336
        %7338 = vrot.lane.b32.xlu0 %v3896, 16
        %v7339 = vpop.permute.xlu0 %7338
        %7340 = vrot.lane.b32.xlu0 %v3899, 16
        %v7341 = vpop.permute.xlu0 %7340
        %7342 = vrot.lane.b32.xlu0 %v3902, 16
        %v7343 = vpop.permute.xlu0 %7342
        %7344 = vrot.lane.b32.xlu0 %v3905, 16
        %v7345 = vpop.permute.xlu0 %7344
        %7346 = vrot.lane.b32.xlu0 %v3908, 16
        %v7347 = vpop.permute.xlu0 %7346
        %7348 = vrot.lane.b32.xlu0 %v3911, 16
        %v7349 = vpop.permute.xlu0 %7348
        %7350 = vrot.lane.b32.xlu0 %v3914, 16
        %v7351 = vpop.permute.xlu0 %7350
        %7352 = vrot.lane.b32.xlu0 %v3917, 16
        %v7353 = vpop.permute.xlu0 %7352
        %7354 = vrot.lane.b32.xlu0 %v3920, 16
        %v7355 = vpop.permute.xlu0 %7354
        %7356 = vrot.lane.b32.xlu0 %v3923, 16
        %v7357 = vpop.permute.xlu0 %7356
        %7358 = vrot.lane.b32.xlu0 %v3926, 16
        %v7359 = vpop.permute.xlu0 %7358
        %7360 = vrot.lane.b32.xlu0 %v3929, 16
        %v7361 = vpop.permute.xlu0 %7360
        %7362 = vrot.lane.b32.xlu0 %v3932, 16
        %v7363 = vpop.permute.xlu0 %7362
        %7364 = vrot.lane.b32.xlu0 %v3935, 16
        %v7365 = vpop.permute.xlu0 %7364
        %7366 = vrot.lane.b32.xlu0 %v3938, 16
        %v7367 = vpop.permute.xlu0 %7366
        %7368 = vrot.lane.b32.xlu0 %v3941, 16
        %v7369 = vpop.permute.xlu0 %7368
        %7370 = vrot.lane.b32.xlu0 %v3944, 16
        %v7371 = vpop.permute.xlu0 %7370
        %7372 = vrot.lane.b32.xlu0 %v3947, 16
        %v7373 = vpop.permute.xlu0 %7372
        %7374 = vrot.lane.b32.xlu0 %v3950, 16
        %v7375 = vpop.permute.xlu0 %7374
        %7376 = vrot.lane.b32.xlu0 %v3953, 16
        %v7377 = vpop.permute.xlu0 %7376
        %7378 = vrot.lane.b32.xlu0 %v3956, 16
        %v7379 = vpop.permute.xlu0 %7378
        %7380 = vrot.lane.b32.xlu0 %v3959, 16
        %v7381 = vpop.permute.xlu0 %7380
        %7382 = vrot.lane.b32.xlu0 %v3962, 16
        %v7383 = vpop.permute.xlu0 %7382
        %7384 = vrot.lane.b32.xlu0 %v3965, 16
        %v7385 = vpop.permute.xlu0 %7384
        %7386 = vrot.lane.b32.xlu0 %v3968, 16
        %v7387 = vpop.permute.xlu0 %7386
        %7388 = vrot.lane.b32.xlu0 %v3971, 16
        %v7389 = vpop.permute.xlu0 %7388
        %7390 = vrot.lane.b32.xlu0 %v3974, 16
        %v7391 = vpop.permute.xlu0 %7390
        %7392 = vrot.lane.b32.xlu0 %v3977, 16
        %v7393 = vpop.permute.xlu0 %7392
        %7394 = vrot.lane.b32.xlu0 %v3980, 16
        %v7395 = vpop.permute.xlu0 %7394
        %7396 = vrot.lane.b32.xlu0 %v3983, 16
        %v7397 = vpop.permute.xlu0 %7396
        %7430 = vrot.lane.b32.xlu0 %v5594, 24
        %v7431 = vpop.permute.xlu0 %7430
        %7432 = vrot.lane.b32.xlu0 %v5597, 24
        %v7433 = vpop.permute.xlu0 %7432
        %7434 = vrot.lane.b32.xlu0 %v5600, 24
        %v7435 = vpop.permute.xlu0 %7434
        %7436 = vrot.lane.b32.xlu0 %v5603, 24
        %v7437 = vpop.permute.xlu0 %7436
        %7438 = vrot.lane.b32.xlu0 %v5606, 24
        %v7439 = vpop.permute.xlu0 %7438
        %7440 = vrot.lane.b32.xlu0 %v5609, 24
        %v7441 = vpop.permute.xlu0 %7440
        %7442 = vrot.lane.b32.xlu0 %v5612, 24
        %v7443 = vpop.permute.xlu0 %7442
        %7444 = vrot.lane.b32.xlu0 %v5615, 24
        %v7445 = vpop.permute.xlu0 %7444
        %7446 = vrot.lane.b32.xlu0 %v5618, 24
        %v7447 = vpop.permute.xlu0 %7446
        %7448 = vrot.lane.b32.xlu0 %v5621, 24
        %v7449 = vpop.permute.xlu0 %7448
        %7450 = vrot.lane.b32.xlu0 %v5624, 24
        %v7451 = vpop.permute.xlu0 %7450
        %7452 = vrot.lane.b32.xlu0 %v5627, 24
        %v7453 = vpop.permute.xlu0 %7452
        %7454 = vrot.lane.b32.xlu0 %v5630, 24
        %v7455 = vpop.permute.xlu0 %7454
        %7456 = vrot.lane.b32.xlu0 %v5633, 24
        %v7457 = vpop.permute.xlu0 %7456
        %7458 = vrot.lane.b32.xlu0 %v5636, 24
        %v7459 = vpop.permute.xlu0 %7458
        %7460 = vrot.lane.b32.xlu0 %v5639, 24
        %v7461 = vpop.permute.xlu0 %7460
        %7462 = vrot.lane.b32.xlu0 %v5642, 24
        %v7463 = vpop.permute.xlu0 %7462
        %7464 = vrot.lane.b32.xlu0 %v5645, 24
        %v7465 = vpop.permute.xlu0 %7464
        %7466 = vrot.lane.b32.xlu0 %v5648, 24
        %v7467 = vpop.permute.xlu0 %7466
        %7468 = vrot.lane.b32.xlu0 %v5651, 24
        %v7469 = vpop.permute.xlu0 %7468
        %7470 = vrot.lane.b32.xlu0 %v5654, 24
        %v7471 = vpop.permute.xlu0 %7470
        %7472 = vrot.lane.b32.xlu0 %v5657, 24
        %v7473 = vpop.permute.xlu0 %7472
        %7474 = vrot.lane.b32.xlu0 %v5660, 24
        %v7475 = vpop.permute.xlu0 %7474
        %7476 = vrot.lane.b32.xlu0 %v5663, 24
        %v7477 = vpop.permute.xlu0 %7476
        %7478 = vrot.lane.b32.xlu0 %v5666, 24
        %v7479 = vpop.permute.xlu0 %7478
        %7480 = vrot.lane.b32.xlu0 %v5669, 24
        %v7481 = vpop.permute.xlu0 %7480
        %7482 = vrot.lane.b32.xlu0 %v5672, 24
        %v7483 = vpop.permute.xlu0 %7482
        %7484 = vrot.lane.b32.xlu0 %v5675, 24
        %v7485 = vpop.permute.xlu0 %7484
        %7486 = vrot.lane.b32.xlu0 %v5678, 24
        %v7487 = vpop.permute.xlu0 %7486
        %7488 = vrot.lane.b32.xlu0 %v5681, 24
        %v7489 = vpop.permute.xlu0 %7488
        %7490 = vrot.lane.b32.xlu0 %v5684, 24
        %v7491 = vpop.permute.xlu0 %7490
        %7492 = vrot.lane.b32.xlu0 %v5687, 24
        %v7493 = vpop.permute.xlu0 %7492
        %v7526 = vsel %vm574, %v478, %v7239
        %v7527 = vsel %vm574, %v481, %v7241
        %v7528 = vsel %vm574, %v484, %v7243
        %v7529 = vsel %vm574, %v487, %v7245
        %v7530 = vsel %vm574, %v490, %v7247
        %v7531 = vsel %vm574, %v493, %v7249
        %v7532 = vsel %vm574, %v496, %v7251
        %v7533 = vsel %vm574, %v499, %v7253
        %v7534 = vsel %vm574, %v502, %v7255
        %v7535 = vsel %vm574, %v505, %v7257
        %v7536 = vsel %vm574, %v508, %v7259
        %v7537 = vsel %vm574, %v511, %v7261
        %v7538 = vsel %vm574, %v514, %v7263
        %v7539 = vsel %vm574, %v517, %v7265
        %v7540 = vsel %vm574, %v520, %v7267
        %v7541 = vsel %vm574, %v523, %v7269
        %v7542 = vsel %vm574, %v526, %v7271
        %v7543 = vsel %vm574, %v529, %v7273
        %v7544 = vsel %vm574, %v532, %v7275
        %v7545 = vsel %vm574, %v535, %v7277
        %v7546 = vsel %vm574, %v538, %v7279
        %v7547 = vsel %vm574, %v541, %v7281
        %v7548 = vsel %vm574, %v544, %v7283
        %v7549 = vsel %vm574, %v547, %v7285
        %v7550 = vsel %vm574, %v550, %v7287
        %v7551 = vsel %vm574, %v553, %v7289
        %v7552 = vsel %vm574, %v556, %v7291
        %v7553 = vsel %vm574, %v559, %v7293
        %v7554 = vsel %vm574, %v562, %v7295
        %v7555 = vsel %vm574, %v565, %v7297
        %v7556 = vsel %vm574, %v568, %v7299
        %v7557 = vsel %vm574, %v571, %v7301
        %vm7558 = vcmask 130048
        %v7559 = vsel %vm7558, %v7526, %v7335
        %v7560 = vsel %vm7558, %v7527, %v7337
        %v7561 = vsel %vm7558, %v7528, %v7339
        %v7562 = vsel %vm7558, %v7529, %v7341
        %v7563 = vsel %vm7558, %v7530, %v7343
        %v7564 = vsel %vm7558, %v7531, %v7345
        %v7565 = vsel %vm7558, %v7532, %v7347
        %v7566 = vsel %vm7558, %v7533, %v7349
        %v7567 = vsel %vm7558, %v7534, %v7351
        %v7568 = vsel %vm7558, %v7535, %v7353
        %v7569 = vsel %vm7558, %v7536, %v7355
        %v7570 = vsel %vm7558, %v7537, %v7357
        %v7571 = vsel %vm7558, %v7538, %v7359
        %v7572 = vsel %vm7558, %v7539, %v7361
        %v7573 = vsel %vm7558, %v7540, %v7363
        %v7574 = vsel %vm7558, %v7541, %v7365
        %v7575 = vsel %vm7558, %v7542, %v7367
        %v7576 = vsel %vm7558, %v7543, %v7369
        %v7577 = vsel %vm7558, %v7544, %v7371
        %v7578 = vsel %vm7558, %v7545, %v7373
        %v7579 = vsel %vm7558, %v7546, %v7375
        %v7580 = vsel %vm7558, %v7547, %v7377
        %v7581 = vsel %vm7558, %v7548, %v7379
        %v7582 = vsel %vm7558, %v7549, %v7381
        %v7583 = vsel %vm7558, %v7550, %v7383
        %v7584 = vsel %vm7558, %v7551, %v7385
        %v7585 = vsel %vm7558, %v7552, %v7387
        %v7586 = vsel %vm7558, %v7553, %v7389
        %v7587 = vsel %vm7558, %v7554, %v7391
        %v7588 = vsel %vm7558, %v7555, %v7393
        %v7589 = vsel %vm7558, %v7556, %v7395
        %v7590 = vsel %vm7558, %v7557, %v7397
        %vm7591 = vcmask 195584
        %v7592 = vsel %vm7591, %v7559, %v7431
        %v7593 = vsel %vm7591, %v7560, %v7433
        %v7594 = vsel %vm7591, %v7561, %v7435
        %v7595 = vsel %vm7591, %v7562, %v7437
        %v7596 = vsel %vm7591, %v7563, %v7439
        %v7597 = vsel %vm7591, %v7564, %v7441
        %v7598 = vsel %vm7591, %v7565, %v7443
        %v7599 = vsel %vm7591, %v7566, %v7445
        %v7600 = vsel %vm7591, %v7567, %v7447
        %v7601 = vsel %vm7591, %v7568, %v7449
        %v7602 = vsel %vm7591, %v7569, %v7451
        %v7603 = vsel %vm7591, %v7570, %v7453
        %v7604 = vsel %vm7591, %v7571, %v7455
        %v7605 = vsel %vm7591, %v7572, %v7457
        %v7606 = vsel %vm7591, %v7573, %v7459
        %v7607 = vsel %vm7591, %v7574, %v7461
        %v7608 = vsel %vm7591, %v7575, %v7463
        %v7609 = vsel %vm7591, %v7576, %v7465
        %v7610 = vsel %vm7591, %v7577, %v7467
        %v7611 = vsel %vm7591, %v7578, %v7469
        %v7612 = vsel %vm7591, %v7579, %v7471
        %v7613 = vsel %vm7591, %v7580, %v7473
        %v7614 = vsel %vm7591, %v7581, %v7475
        %v7615 = vsel %vm7591, %v7582, %v7477
        %v7616 = vsel %vm7591, %v7583, %v7479
        %v7617 = vsel %vm7591, %v7584, %v7481
        %v7618 = vsel %vm7591, %v7585, %v7483
        %v7619 = vsel %vm7591, %v7586, %v7485
        %v7620 = vsel %vm7591, %v7587, %v7487
        %v7621 = vsel %vm7591, %v7588, %v7489
        %v7622 = vsel %vm7591, %v7589, %v7491
        %v7623 = vsel %vm7591, %v7590, %v7493
        %v7624 = vsel %vm363, %v7592, %v1998
        %v7625 = vsel %vm363, %v7593, %v1999
        %v7626 = vsel %vm363, %v7594, %v2000
        %v7627 = vsel %vm363, %v7595, %v2001
        %v7628 = vsel %vm363, %v7596, %v2002
        %v7629 = vsel %vm363, %v7597, %v2003
        %v7630 = vsel %vm363, %v7598, %v2004
        %v7631 = vsel %vm363, %v7599, %v2005
        %v7632 = vsel %vm363, %v7600, %v2006
        %v7633 = vsel %vm363, %v7601, %v2007
        %v7634 = vsel %vm363, %v7602, %v2008
        %v7635 = vsel %vm363, %v7603, %v2009
        %v7636 = vsel %vm363, %v7604, %v2010
        %v7637 = vsel %vm363, %v7605, %v2011
        %v7638 = vsel %vm363, %v7606, %v2012
        %v7639 = vsel %vm363, %v7607, %v2013
        %v7640 = vsel %vm363, %v7608, %v2014
        %v7641 = vsel %vm363, %v7609, %v2015
        %v7642 = vsel %vm363, %v7610, %v2016
        %v7643 = vsel %vm363, %v7611, %v2017
        %v7644 = vsel %vm363, %v7612, %v2018
        %v7645 = vsel %vm363, %v7613, %v2019
        %v7646 = vsel %vm363, %v7614, %v2020
        %v7647 = vsel %vm363, %v7615, %v2021
        %v7648 = vsel %vm363, %v7616, %v2022
        %v7649 = vsel %vm363, %v7617, %v2023
        %v7650 = vsel %vm363, %v7618, %v2024
        %v7651 = vsel %vm363, %v7619, %v2025
        %v7652 = vsel %vm363, %v7620, %v2026
        %v7653 = vsel %vm363, %v7621, %v2027
        %v7654 = vsel %vm363, %v7622, %v2028
        %v7655 = vsel %vm363, %v7623, %v2029
        %vm7656 = vcmask 269312
        %v7657 = vsel %vm7656, %v7624, %v3702
        %v7658 = vsel %vm7656, %v7625, %v3703
        %v7659 = vsel %vm7656, %v7626, %v3704
        %v7660 = vsel %vm7656, %v7627, %v3705
        %v7661 = vsel %vm7656, %v7628, %v3706
        %v7662 = vsel %vm7656, %v7629, %v3707
        %v7663 = vsel %vm7656, %v7630, %v3708
        %v7664 = vsel %vm7656, %v7631, %v3709
        %v7665 = vsel %vm7656, %v7632, %v3710
        %v7666 = vsel %vm7656, %v7633, %v3711
        %v7667 = vsel %vm7656, %v7634, %v3712
        %v7668 = vsel %vm7656, %v7635, %v3713
        %v7669 = vsel %vm7656, %v7636, %v3714
        %v7670 = vsel %vm7656, %v7637, %v3715
        %v7671 = vsel %vm7656, %v7638, %v3716
        %v7672 = vsel %vm7656, %v7639, %v3717
        %v7673 = vsel %vm7656, %v7640, %v3718
        %v7674 = vsel %vm7656, %v7641, %v3719
        %v7675 = vsel %vm7656, %v7642, %v3720
        %v7676 = vsel %vm7656, %v7643, %v3721
        %v7677 = vsel %vm7656, %v7644, %v3722
        %v7678 = vsel %vm7656, %v7645, %v3723
        %v7679 = vsel %vm7656, %v7646, %v3724
        %v7680 = vsel %vm7656, %v7647, %v3725
        %v7681 = vsel %vm7656, %v7648, %v3726
        %v7682 = vsel %vm7656, %v7649, %v3727
        %v7683 = vsel %vm7656, %v7650, %v3728
        %v7684 = vsel %vm7656, %v7651, %v3729
        %v7685 = vsel %vm7656, %v7652, %v3730
        %v7686 = vsel %vm7656, %v7653, %v3731
        %v7687 = vsel %vm7656, %v7654, %v3732
        %v7688 = vsel %vm7656, %v7655, %v3733
        %vm7689 = vcmask 277504
        %v7690 = vsel %vm7689, %v7657, %v5406
        %v7691 = vsel %vm7689, %v7658, %v5407
        %v7692 = vsel %vm7689, %v7659, %v5408
        %v7693 = vsel %vm7689, %v7660, %v5409
        %v7694 = vsel %vm7689, %v7661, %v5410
        %v7695 = vsel %vm7689, %v7662, %v5411
        %v7696 = vsel %vm7689, %v7663, %v5412
        %v7697 = vsel %vm7689, %v7664, %v5413
        %v7698 = vsel %vm7689, %v7665, %v5414
        %v7699 = vsel %vm7689, %v7666, %v5415
        %v7700 = vsel %vm7689, %v7667, %v5416
        %v7701 = vsel %vm7689, %v7668, %v5417
        %v7702 = vsel %vm7689, %v7669, %v5418
        %v7703 = vsel %vm7689, %v7670, %v5419
        %v7704 = vsel %vm7689, %v7671, %v5420
        %v7705 = vsel %vm7689, %v7672, %v5421
        %v7706 = vsel %vm7689, %v7673, %v5422
        %v7707 = vsel %vm7689, %v7674, %v5423
        %v7708 = vsel %vm7689, %v7675, %v5424
        %v7709 = vsel %vm7689, %v7676, %v5425
        %v7710 = vsel %vm7689, %v7677, %v5426
        %v7711 = vsel %vm7689, %v7678, %v5427
        %v7712 = vsel %vm7689, %v7679, %v5428
        %v7713 = vsel %vm7689, %v7680, %v5429
        %v7714 = vsel %vm7689, %v7681, %v5430
        %v7715 = vsel %vm7689, %v7682, %v5431
        %v7716 = vsel %vm7689, %v7683, %v5432
        %v7717 = vsel %vm7689, %v7684, %v5433
        %v7718 = vsel %vm7689, %v7685, %v5434
        %v7719 = vsel %vm7689, %v7686, %v5435
        %v7720 = vsel %vm7689, %v7687, %v5436
        %v7721 = vsel %vm7689, %v7688, %v5437
        %vm7722 = vcmask 285696
        %v7723 = vsel %vm7722, %v7690, %v7110
        %v7724 = vsel %vm7722, %v7691, %v7111
        %v7725 = vsel %vm7722, %v7692, %v7112
        %v7726 = vsel %vm7722, %v7693, %v7113
        %v7727 = vsel %vm7722, %v7694, %v7114
        %v7728 = vsel %vm7722, %v7695, %v7115
        %v7729 = vsel %vm7722, %v7696, %v7116
        %v7730 = vsel %vm7722, %v7697, %v7117
        %v7731 = vsel %vm7722, %v7698, %v7118
        %v7732 = vsel %vm7722, %v7699, %v7119
        %v7733 = vsel %vm7722, %v7700, %v7120
        %v7734 = vsel %vm7722, %v7701, %v7121
        %v7735 = vsel %vm7722, %v7702, %v7122
        %v7736 = vsel %vm7722, %v7703, %v7123
        %v7737 = vsel %vm7722, %v7704, %v7124
        %v7738 = vsel %vm7722, %v7705, %v7125
        %v7739 = vsel %vm7722, %v7706, %v7126
        %v7740 = vsel %vm7722, %v7707, %v7127
        %v7741 = vsel %vm7722, %v7708, %v7128
        %v7742 = vsel %vm7722, %v7709, %v7129
        %v7743 = vsel %vm7722, %v7710, %v7130
        %v7744 = vsel %vm7722, %v7711, %v7131
        %v7745 = vsel %vm7722, %v7712, %v7132
        %v7746 = vsel %vm7722, %v7713, %v7133
        %v7747 = vsel %vm7722, %v7714, %v7134
        %v7748 = vsel %vm7722, %v7715, %v7135
        %v7749 = vsel %vm7722, %v7716, %v7136
        %v7750 = vsel %vm7722, %v7717, %v7137
        %v7751 = vsel %vm7722, %v7718, %v7138
        %v7752 = vsel %vm7722, %v7719, %v7139
        %v7753 = vsel %vm7722, %v7720, %v7140
        %v7754 = vsel %vm7722, %v7721, %v7141
        %vm7755 = vcmask 293888
        %v7756 = vsel %vm7755, %v7723, %v1966
        %v7757 = vsel %vm7755, %v7724, %v1967
        %v7758 = vsel %vm7755, %v7725, %v1968
        %v7759 = vsel %vm7755, %v7726, %v1969
        %v7760 = vsel %vm7755, %v7727, %v1970
        %v7761 = vsel %vm7755, %v7728, %v1971
        %v7762 = vsel %vm7755, %v7729, %v1972
        %v7763 = vsel %vm7755, %v7730, %v1973
        %v7764 = vsel %vm7755, %v7731, %v1974
        %v7765 = vsel %vm7755, %v7732, %v1975
        %v7766 = vsel %vm7755, %v7733, %v1976
        %v7767 = vsel %vm7755, %v7734, %v1977
        %v7768 = vsel %vm7755, %v7735, %v1978
        %v7769 = vsel %vm7755, %v7736, %v1979
        %v7770 = vsel %vm7755, %v7737, %v1980
        %v7771 = vsel %vm7755, %v7738, %v1981
        %v7772 = vsel %vm7755, %v7739, %v1982
        %v7773 = vsel %vm7755, %v7740, %v1983
        %v7774 = vsel %vm7755, %v7741, %v1984
        %v7775 = vsel %vm7755, %v7742, %v1985
        %v7776 = vsel %vm7755, %v7743, %v1986
        %v7777 = vsel %vm7755, %v7744, %v1987
        %v7778 = vsel %vm7755, %v7745, %v1988
        %v7779 = vsel %vm7755, %v7746, %v1989
        %v7780 = vsel %vm7755, %v7747, %v1990
        %v7781 = vsel %vm7755, %v7748, %v1991
        %v7782 = vsel %vm7755, %v7749, %v1992
        %v7783 = vsel %vm7755, %v7750, %v1993
        %v7784 = vsel %vm7755, %v7751, %v1994
        %v7785 = vsel %vm7755, %v7752, %v1995
        %v7786 = vsel %vm7755, %v7753, %v1996
        %v7787 = vsel %vm7755, %v7754, %v1997
        %vm7788 = vcmask 302080
        %v7789 = vsel %vm7788, %v7756, %v3670
        %v7790 = vsel %vm7788, %v7757, %v3671
        %v7791 = vsel %vm7788, %v7758, %v3672
        %v7792 = vsel %vm7788, %v7759, %v3673
        %v7793 = vsel %vm7788, %v7760, %v3674
        %v7794 = vsel %vm7788, %v7761, %v3675
        %v7795 = vsel %vm7788, %v7762, %v3676
        %v7796 = vsel %vm7788, %v7763, %v3677
        %v7797 = vsel %vm7788, %v7764, %v3678
        %v7798 = vsel %vm7788, %v7765, %v3679
        %v7799 = vsel %vm7788, %v7766, %v3680
        %v7800 = vsel %vm7788, %v7767, %v3681
        %v7801 = vsel %vm7788, %v7768, %v3682
        %v7802 = vsel %vm7788, %v7769, %v3683
        %v7803 = vsel %vm7788, %v7770, %v3684
        %v7804 = vsel %vm7788, %v7771, %v3685
        %v7805 = vsel %vm7788, %v7772, %v3686
        %v7806 = vsel %vm7788, %v7773, %v3687
        %v7807 = vsel %vm7788, %v7774, %v3688
        %v7808 = vsel %vm7788, %v7775, %v3689
        %v7809 = vsel %vm7788, %v7776, %v3690
        %v7810 = vsel %vm7788, %v7777, %v3691
        %v7811 = vsel %vm7788, %v7778, %v3692
        %v7812 = vsel %vm7788, %v7779, %v3693
        %v7813 = vsel %vm7788, %v7780, %v3694
        %v7814 = vsel %vm7788, %v7781, %v3695
        %v7815 = vsel %vm7788, %v7782, %v3696
        %v7816 = vsel %vm7788, %v7783, %v3697
        %v7817 = vsel %vm7788, %v7784, %v3698
        %v7818 = vsel %vm7788, %v7785, %v3699
        %v7819 = vsel %vm7788, %v7786, %v3700
        %v7820 = vsel %vm7788, %v7787, %v3701
        %vm7821 = vcmask 310272
        %v7822 = vsel %vm7821, %v7789, %v5374
        %v7823 = vsel %vm7821, %v7790, %v5375
        %v7824 = vsel %vm7821, %v7791, %v5376
        %v7825 = vsel %vm7821, %v7792, %v5377
        %v7826 = vsel %vm7821, %v7793, %v5378
        %v7827 = vsel %vm7821, %v7794, %v5379
        %v7828 = vsel %vm7821, %v7795, %v5380
        %v7829 = vsel %vm7821, %v7796, %v5381
        %v7830 = vsel %vm7821, %v7797, %v5382
        %v7831 = vsel %vm7821, %v7798, %v5383
        %v7832 = vsel %vm7821, %v7799, %v5384
        %v7833 = vsel %vm7821, %v7800, %v5385
        %v7834 = vsel %vm7821, %v7801, %v5386
        %v7835 = vsel %vm7821, %v7802, %v5387
        %v7836 = vsel %vm7821, %v7803, %v5388
        %v7837 = vsel %vm7821, %v7804, %v5389
        %v7838 = vsel %vm7821, %v7805, %v5390
        %v7839 = vsel %vm7821, %v7806, %v5391
        %v7840 = vsel %vm7821, %v7807, %v5392
        %v7841 = vsel %vm7821, %v7808, %v5393
        %v7842 = vsel %vm7821, %v7809, %v5394
        %v7843 = vsel %vm7821, %v7810, %v5395
        %v7844 = vsel %vm7821, %v7811, %v5396
        %v7845 = vsel %vm7821, %v7812, %v5397
        %v7846 = vsel %vm7821, %v7813, %v5398
        %v7847 = vsel %vm7821, %v7814, %v5399
        %v7848 = vsel %vm7821, %v7815, %v5400
        %v7849 = vsel %vm7821, %v7816, %v5401
        %v7850 = vsel %vm7821, %v7817, %v5402
        %v7851 = vsel %vm7821, %v7818, %v5403
        %v7852 = vsel %vm7821, %v7819, %v5404
        %v7853 = vsel %vm7821, %v7820, %v5405
        %vm7854 = vcmask 318464
        %v7855 = vsel %vm7854, %v7822, %v7078
        %v7856 = vsel %vm7854, %v7823, %v7079
        %v7857 = vsel %vm7854, %v7824, %v7080
        %v7858 = vsel %vm7854, %v7825, %v7081
        %v7859 = vsel %vm7854, %v7826, %v7082
        %v7860 = vsel %vm7854, %v7827, %v7083
        %v7861 = vsel %vm7854, %v7828, %v7084
        %v7862 = vsel %vm7854, %v7829, %v7085
        %v7863 = vsel %vm7854, %v7830, %v7086
        %v7864 = vsel %vm7854, %v7831, %v7087
        %v7865 = vsel %vm7854, %v7832, %v7088
        %v7866 = vsel %vm7854, %v7833, %v7089
        %v7867 = vsel %vm7854, %v7834, %v7090
        %v7868 = vsel %vm7854, %v7835, %v7091
        %v7869 = vsel %vm7854, %v7836, %v7092
        %v7870 = vsel %vm7854, %v7837, %v7093
        %v7871 = vsel %vm7854, %v7838, %v7094
        %v7872 = vsel %vm7854, %v7839, %v7095
        %v7873 = vsel %vm7854, %v7840, %v7096
        %v7874 = vsel %vm7854, %v7841, %v7097
        %v7875 = vsel %vm7854, %v7842, %v7098
        %v7876 = vsel %vm7854, %v7843, %v7099
        %v7877 = vsel %vm7854, %v7844, %v7100
        %v7878 = vsel %vm7854, %v7845, %v7101
        %v7879 = vsel %vm7854, %v7846, %v7102
        %v7880 = vsel %vm7854, %v7847, %v7103
        %v7881 = vsel %vm7854, %v7848, %v7104
        %v7882 = vsel %vm7854, %v7849, %v7105
        %v7883 = vsel %vm7854, %v7850, %v7106
        %v7884 = vsel %vm7854, %v7851, %v7107
        %v7885 = vsel %vm7854, %v7852, %v7108
        %v7886 = vsel %vm7854, %v7853, %v7109
        %vm7887 = vcmask 326656
        %v7888 = vsel %vm7887, %v7855, 0.0
        %v7889 = vsel %vm7887, %v7856, 0.0
        %v7890 = vsel %vm7887, %v7857, 0.0
        %v7891 = vsel %vm7887, %v7858, 0.0
        %v7892 = vsel %vm7887, %v7859, 0.0
        %v7893 = vsel %vm7887, %v7860, 0.0
        %v7894 = vsel %vm7887, %v7861, 0.0
        %v7895 = vsel %vm7887, %v7862, 0.0
        %v7896 = vsel %vm7887, %v7863, 0.0
        %v7897 = vsel %vm7887, %v7864, 0.0
        %v7898 = vsel %vm7887, %v7865, 0.0
        %v7899 = vsel %vm7887, %v7866, 0.0
        %v7900 = vsel %vm7887, %v7867, 0.0
        %v7901 = vsel %vm7887, %v7868, 0.0
        %v7902 = vsel %vm7887, %v7869, 0.0
        %v7903 = vsel %vm7887, %v7870, 0.0
        %v7904 = vsel %vm7887, %v7871, 0.0
        %v7905 = vsel %vm7887, %v7872, 0.0
        %v7906 = vsel %vm7887, %v7873, 0.0
        %v7907 = vsel %vm7887, %v7874, 0.0
        %v7908 = vsel %vm7887, %v7875, 0.0
        %v7909 = vsel %vm7887, %v7876, 0.0
        %v7910 = vsel %vm7887, %v7877, 0.0
        %v7911 = vsel %vm7887, %v7878, 0.0
        %v7912 = vsel %vm7887, %v7879, 0.0
        %v7913 = vsel %vm7887, %v7880, 0.0
        %v7914 = vsel %vm7887, %v7881, 0.0
        %v7915 = vsel %vm7887, %v7882, 0.0
        %v7916 = vsel %vm7887, %v7883, 0.0
        %v7917 = vsel %vm7887, %v7884, 0.0
        %v7918 = vsel %vm7887, %v7885, 0.0
        %v7919 = vsel %vm7887, %v7886, 0.0
        %7920 = vst [vmem:[%s307] sm:$0xff] %v7888
        %7921 = vst [vmem:[%s307 + $0x8] sm:$0xff] %v7889
        %7922 = vst [vmem:[%s307 + $0x10] sm:$0xff] %v7890
        %7923 = vst [vmem:[%s307 + $0x18] sm:$0xff] %v7891
        %7924 = vst [vmem:[%s307 + $0x20] sm:$0xff] %v7892
        %7925 = vst [vmem:[%s307 + $0x28] sm:$0xff] %v7893
        %7926 = vst [vmem:[%s307 + $0x30] sm:$0xff] %v7894
        %7927 = vst [vmem:[%s307 + $0x38] sm:$0xff] %v7895
        %7928 = vst [vmem:[%s307 + $0x40] sm:$0xff] %v7896
        %7929 = vst [vmem:[%s307 + $0x48] sm:$0xff] %v7897
        %7930 = vst [vmem:[%s307 + $0x50] sm:$0xff] %v7898
        %7931 = vst [vmem:[%s307 + $0x58] sm:$0xff] %v7899
        %7932 = vst [vmem:[%s307 + $0x60] sm:$0xff] %v7900
        %7933 = vst [vmem:[%s307 + $0x68] sm:$0xff] %v7901
        %7934 = vst [vmem:[%s307 + $0x70] sm:$0xff] %v7902
        %7935 = vst [vmem:[%s307 + $0x78] sm:$0xff] %v7903
        %7936 = vst [vmem:[%s307 + $0x80] sm:$0xff] %v7904
        %7937 = vst [vmem:[%s307 + $0x88] sm:$0xff] %v7905
        %7938 = vst [vmem:[%s307 + $0x90] sm:$0xff] %v7906
        %7939 = vst [vmem:[%s307 + $0x98] sm:$0xff] %v7907
        %7940 = vst [vmem:[%s307 + $0xa0] sm:$0xff] %v7908
        %7941 = vst [vmem:[%s307 + $0xa8] sm:$0xff] %v7909
        %7942 = vst [vmem:[%s307 + $0xb0] sm:$0xff] %v7910
        %7943 = vst [vmem:[%s307 + $0xb8] sm:$0xff] %v7911
        %7944 = vst [vmem:[%s307 + $0xc0] sm:$0xff] %v7912
        %7945 = vst [vmem:[%s307 + $0xc8] sm:$0xff] %v7913
        %7946 = vst [vmem:[%s307 + $0xd0] sm:$0xff] %v7914
        %7947 = vst [vmem:[%s307 + $0xd8] sm:$0xff] %v7915
        %7948 = vst [vmem:[%s307 + $0xe0] sm:$0xff] %v7916
        %7949 = vst [vmem:[%s307 + $0xe8] sm:$0xff] %v7917
        %7950 = vst [vmem:[%s307 + $0xf0] sm:$0xff] %v7918
        %7951 = vst [vmem:[%s307 + $0xf8] sm:$0xff] %v7919
        %s7952 = smul.u32 32, %s23
        %p7953 = scmp.lt.s32.totalorder %s7952, 63
        %s7954 = scalar_select %p7953, %s7952, 63
        %s7955 = smul.addr %s7954, 8
        %s7956 = scalar_lea.vmem %s7, %s7955
        %s7957 = sand.u32 %s209, 1
        %s7958 = scalar_lea.sflag [#allocation3], %s7957
        %s7959 = sand.u32 %s209, 1
        %s7960 = smul.addr %s7959, 256
        %s7961 = scalar_lea.vmem [#allocation2], %s7960
        // Predicated region
        $region49: #{tpu_custom_call.1} parent=47 // pred_check
          %p7962 = pneg %p193
        $region50: #{tpu_custom_call.1} parent=47 // pred_check_branch
          %7964 = sbr.rel (%p7962) target = $region52
        $region51: #{tpu_custom_call.1} parent=47 // pred_region
          %s7965 = smul.u32 32, %s23
        $region52: #{tpu_custom_call.1} parent=47 // pred_fallthru
          _
        // Predicated region
        $region53: #{tpu_custom_call.1} parent=47 // pred_check
          %p7966 = pneg %p219
        $region54: #{tpu_custom_call.1} parent=47 // pred_check_branch
          %7968 = sbr.rel (%p7966) target = $region56
        $region55: #{tpu_custom_call.1} parent=47 // pred_region
          %s7969 = smul.u32 32, %s23
          %7971 = vsyncadd %s7958, 0
          %s7972 = smul.addr %s7969, 8
          %s7973 = scalar_lea.hbm %s8, %s7972
          %s7974 = sshll.u32 %s7961, 4
          %s7975 = int_to_ptr.vmem [resolvable:$true] %s7974
          %s7976 = sshll.u32 %s7973, 4
          %s7977 = int_to_ptr.hbm [resolvable:$true] %s7976
          %7982 = dma.vmem_to_hbm [thread:$0]  %s7975, 4096, %s7977, %s7958, 128, 128, 8
        $region56: #{tpu_custom_call.1} parent=47 // pred_fallthru
          _
      $region48: #{tpu_custom_call.1} parent=5 // pred_fallthru
        _
      %p7983 = scmp.le.s32.totalorder 2, %s18
      // Predicated region
      $region57: #{tpu_custom_call.1} parent=5 // pred_check
        %p7984 = pneg %p7983
      $region58: #{tpu_custom_call.1} parent=5 // pred_check_branch
        %7986 = sbr.rel (%p7984) target = $region60
      $region59: #{tpu_custom_call.1} parent=5 // pred_region
        %s7987 = ssub.s32 %s18, 2
        // Predicated region
        $region61: #{tpu_custom_call.1} parent=59 // pred_check
          %p7988 = pneg %p199
        $region62: #{tpu_custom_call.1} parent=59 // pred_check_branch
          %7990 = sbr.rel (%p7988) target = $region64
        $region63: #{tpu_custom_call.1} parent=59 // pred_region
          %s7991 = smul.u32 32, %s24
          %p7992 = scmp.lt.s32.totalorder %s7991, 63
          %s7993 = scalar_select %p7992, %s7991, 63
          %s7994 = smul.addr %s7993, 8
          %s7995 = scalar_lea.vmem %s7, %s7994
        $region64: #{tpu_custom_call.1} parent=59 // pred_fallthru
          _
        // Predicated region
        $region65: #{tpu_custom_call.1} parent=59 // pred_check
          %p7996 = pneg %p225
        $region66: #{tpu_custom_call.1} parent=59 // pred_check_branch
          %7998 = sbr.rel (%p7996) target = $region68
        $region67: #{tpu_custom_call.1} parent=59 // pred_region
          %s7999 = sand.u32 %s210, 1
          %s8000 = scalar_lea.sflag [#allocation3], %s7999
          %s8001 = sand.u32 %s210, 1
          %s8002 = smul.addr %s8001, 256
          %s8003 = scalar_lea.vmem [#allocation2], %s8002
          %8005 = dma.done %s8000, 4096
        $region68: #{tpu_custom_call.1} parent=59 // pred_fallthru
          _
      $region60: #{tpu_custom_call.1} parent=5 // pred_fallthru
        _
    $region6: #{tpu_custom_call.1} parent=1 // loop_footer
      %s22 = sadd.s32 1, %s18
    $region7: #{tpu_custom_call.1} parent=1 // loop_footer_branch
      %17 = sbr.rel target = $region3
    $region8: #{tpu_custom_call.1} parent=1 // loop_exit
      _
    %8006 = vsyncpa [#allocation3], 1
    %s8007 = scalar_lea.sflag [#allocation3], 1
    %8008 = vsyncpa %s8007, 1

</llo_original>
